<compile_context>
chip_gen: v6e
topology: v6e:2x2x1
jax: 0.10.0
libtpu: 0.0.40
codegen_flags: <defaults>
</compile_context>

<pallas_src>
import functools

import numpy as np
import jax
import jax.numpy as jnp
from jax import lax
from jax.experimental import pallas as pl
from jax.experimental.pallas import tpu as pltpu

BN_EPS = 1e-5

# --------------------------------------------------------------------------
# ScalableCnn config (small demo sizes; alpha=beta=gamma=1 => no scaling).
# --------------------------------------------------------------------------
INITIAL_RESOLUTION = (16, 16)          # stand-in for (n_mels, n_time_bins)
CONV_INPUTS = [1, 8, 16, 16]
CONV_OUTPUTS = [8, 16, 16, 16]
NUM_CLASSES = 10
LIN_OUT_PAD = 128                      # lane-dense padded classifier width
BATCH_TILE = 16                        # images per grid step: 256 layer-0 MXU rows (v6e/v7x);
                                       # use 8 on v5e (128 rows). Keep B//BATCH_TILE >= 2 for v7x.

nb_max_pooling = int(np.floor(min(np.log2(INITIAL_RESOLUTION[0]),
                                  int(np.log2(INITIAL_RESOLUTION[1])))))
nb_model_pooling = min(len(CONV_INPUTS), nb_max_pooling)
assert nb_model_pooling == len(CONV_INPUTS)   # every block has a MaxPool here


def _layer_dims():
    h, w = INITIAL_RESOLUTION
    dims = []
    for cin, cout in zip(CONV_INPUTS, CONV_OUTPUTS):
        assert h % 2 == 0 and w % 2 == 0, "each block assumes even H, W"
        dims.append((h, w, cin, cout))
        h, w = h // 2, w // 2
    return dims, (h, w)


LAYER_DIMS, FINAL_HW = _layer_dims()
DENSE_IN = FINAL_HW[0] * FINAL_HW[1] * CONV_OUTPUTS[-1]   # calc_initial_dense_input
# TODO(synk): single-dot classifier assumes a 1x1 final spatial map (true for 16x16 / 4 pools);
# general Hf*Wf>1 would need per-row flatten selections.
assert FINAL_HW == (1, 1)


# --------------------------------------------------------------------------
# Host-side, one-time parameter preparation: BN folding, per-dy block-banded
# conv weights, even/odd pooling + row-shift selection matrices, classifier
# permutation + 128-lane padding.
# --------------------------------------------------------------------------
def prepare_fused_params(params, bt):
    n_layers = len(LAYER_DIMS)
    layer_arrays = []
    for li, ((H, W, Cin, Cout), p) in enumerate(zip(LAYER_DIMS, params["convs"])):
        w = np.asarray(p["w"], np.float32)                       # (3,3,Cin,Cout), HWIO
        s = (np.asarray(p["gamma"], np.float32)
             / np.sqrt(np.asarray(p["var"], np.float32) + BN_EPS))
        b = ((np.asarray(p["cb"], np.float32) - np.asarray(p["mean"], np.float32)) * s
             + np.asarray(p["beta"], np.float32))                # conv-bias + BN bias, folded
        ws = w * s[None, None, None, :]                          # BN scale folded into weights

        # Per-dy block-banded weight over the UNPADDED x axis: output column block x_out gets
        # contributions from input blocks x_in = x_out + dx - 1; out-of-range bands are simply
        # dropped, which implements the conv zero padding with no halo columns.
        wband = np.zeros((3, W * Cin, W * Cout), np.float32)
        for dy in range(3):
            for xo in range(W):
                for dx in range(3):
                    xi = xo + dx - 1
                    if 0 <= xi < W:
                        wband[dy, xi * Cin:(xi + 1) * Cin,
                              xo * Cout:(xo + 1) * Cout] = ws[dy, dx]
        bias = np.tile(b, W)[None, :]                            # (1, W*Cout)

        Ho, Wo = H // 2, W // 2
        eye = np.eye(Cout, dtype=np.float32)
        sce = np.zeros((W * Cout, Wo * Cout), np.float32)        # even x blocks
        sco = np.zeros_like(sce)                                 # odd  x blocks
        for xo in range(Wo):
            sce[(2 * xo) * Cout:(2 * xo + 1) * Cout, xo * Cout:(xo + 1) * Cout] = eye
            sco[(2 * xo + 1) * Cout:(2 * xo + 2) * Cout, xo * Cout:(xo + 1) * Cout] = eye

        BtH, BtHo = bt * H, bt * Ho

        def row_sel(src_of_q):
            m = np.zeros((BtHo, BtH), np.float32)
            for q in range(BtHo):
                src = src_of_q(q)
                if src is not None:
                    m[q, src] = 1.0
            return m

        # Center even/odd row selections: output row q pools input rows 2q, 2q+1 (never crosses
        # an image boundary because H is even and images are stacked contiguously).
        sre_c = row_sel(lambda q: 2 * q)
        sro_c = row_sel(lambda q: 2 * q + 1)

        arrs = [jnp.asarray(wband[0], jnp.bfloat16),
                jnp.asarray(wband[1], jnp.bfloat16),
                jnp.asarray(wband[2], jnp.bfloat16),
                jnp.asarray(bias),
                jnp.asarray(sce), jnp.asarray(sco),
                jnp.asarray(sre_c), jnp.asarray(sro_c)]

        if li != n_layers - 1:
            # Shifted selections that directly produce the NEXT layer's "row above" / "row below"
            # conv slabs (zero rows at per-image top/bottom edges).  Valid to push the selection
            # through the max because each row is one-hot (or all zero).
            sre_dn = row_sel(lambda q: 2 * (q - 1) if q % Ho != 0 else None)
            sro_dn = row_sel(lambda q: 2 * (q - 1) + 1 if q % Ho != 0 else None)
            sre_up = row_sel(lambda q: 2 * (q + 1) if q % Ho != Ho - 1 else None)
            sro_up = row_sel(lambda q: 2 * (q + 1) + 1 if q % Ho != Ho - 1 else None)
            arrs += [jnp.asarray(sre_dn), jnp.asarray(sro_dn),
                     jnp.asarray(sre_up), jnp.asarray(sro_up)]
        layer_arrays.append(arrs)

    # Classifier: torch NCHW-flatten rows -> our (y, x, c) feature order; pad 10 -> 128 lanes
    # so the final store is unmasked.  (Identity permutation here since Hf=Wf=1.)
    wl, bl = params["lin"]                                       # (DENSE_IN, 10), (10,)
    Hf, Wf = FINAL_HW
    Cf = CONV_OUTPUTS[-1]
    wl = np.asarray(wl, np.float32).reshape(Cf, Hf, Wf, NUM_CLASSES)
    wl = wl.transpose(1, 2, 0, 3).reshape(Hf * Wf * Cf, NUM_CLASSES)
    wl_pad = np.zeros((DENSE_IN, LIN_OUT_PAD), np.float32)
    wl_pad[:, :NUM_CLASSES] = wl
    bl_pad = np.zeros((1, LIN_OUT_PAD), np.float32)
    bl_pad[0, :NUM_CLASSES] = np.asarray(bl, np.float32)
    return dict(layers=layer_arrays,
                wl=jnp.asarray(wl_pad, jnp.bfloat16),
                bl=jnp.asarray(bl_pad))


# --------------------------------------------------------------------------
# Fused Pallas kernel: whole network for BATCH_TILE images per grid step.
# --------------------------------------------------------------------------
def _fused_cnn_kernel(*refs, layer_dims):
    it = iter(refs)
    # Batch-stacked activations: (Bt*H, W*Cin) f32, rows = (image, y), cols = (x, c).
    a_c = next(it)[...]          # image rows
    a_dn = next(it)[...]         # row above  (zero at per-image top edge)
    a_up = next(it)[...]         # row below  (zero at per-image bottom edge)

    n_layers = len(layer_dims)
    for li, (H, W, Cin, Cout) in enumerate(layer_dims):
        last = li == n_layers - 1
        w0 = next(it); w1 = next(it); w2 = next(it); b = next(it)
        sce = next(it); sco = next(it)
        sre_c = next(it); sro_c = next(it)
        if not last:
            sre_dn = next(it); sro_dn = next(it)
            sre_up = next(it); sro_up = next(it)

        # Conv+BN: 3 block-banded matmuls (bf16 operands, f32 accumulate) + broadcast bias; ReLU6.
        y = jnp.dot(a_dn.astype(jnp.bfloat16), w0[...], preferred_element_type=jnp.float32)
        y = y + jnp.dot(a_c.astype(jnp.bfloat16), w1[...], preferred_element_type=jnp.float32)
        y = y + jnp.dot(a_up.astype(jnp.bfloat16), w2[...], preferred_element_type=jnp.float32)
        y = jnp.clip(y + b[...], 0.0, 6.0)                       # (Bt*H, W*Cout)

        # 2x2 / stride-2 max pool, x direction: exact even/odd x-block selections + VPU max.
        px = jnp.maximum(jnp.dot(y, sce[...], preferred_element_type=jnp.float32),
                         jnp.dot(y, sco[...], preferred_element_type=jnp.float32))

        # y direction (and the next layer's shifted conv slabs) via one-hot row selections.
        a_c = jnp.maximum(jnp.dot(sre_c[...], px, preferred_element_type=jnp.float32),
                          jnp.dot(sro_c[...], px, preferred_element_type=jnp.float32))
        if not last:
            a_dn = jnp.maximum(jnp.dot(sre_dn[...], px, preferred_element_type=jnp.float32),
                               jnp.dot(sro_dn[...], px, preferred_element_type=jnp.float32))
            a_up = jnp.maximum(jnp.dot(sre_up[...], px, preferred_element_type=jnp.float32),
                               jnp.dot(sro_up[...], px, preferred_element_type=jnp.float32))

    # Flatten (FINAL_HW == (1,1): rows are already images) + Linear, one MXU dot,
    # sublane- and lane-dense unmasked (Bt, 128) store.
    wl = next(it); bl = next(it); o_ref = next(it)
    o_ref[...] = (jnp.dot(a_c.astype(jnp.bfloat16), wl[...],
                          preferred_element_type=jnp.float32) + bl[...])


def scalable_cnn_forward(x, fused, *, bt=BATCH_TILE):
    """x: (B, H, W) spectrograms (torch does x.view(-1, 1, H, W)). Returns (B, 10)."""
    B, H0, W0 = x.shape
    assert (H0, W0) == INITIAL_RESOLUTION and CONV_INPUTS[0] == 1
    assert B % bt == 0, "batch must be a multiple of the batch tile"

    xf = x.astype(jnp.float32)
    # Host-side per-image row shifts feeding the first conv (zero rows at top/bottom edges).
    x_dn = jnp.pad(xf, ((0, 0), (1, 0), (0, 0)))[:, :H0, :]
    x_up = jnp.pad(xf, ((0, 0), (0, 1), (0, 0)))[:, 1:, :]
    stack = lambda a: a.reshape(B * H0, W0)          # batch-stacked sublane rows

    inputs = [stack(xf), stack(x_dn), stack(x_up)]
    in_specs = [pl.BlockSpec((bt * H0, W0), lambda i: (i, 0)) for _ in range(3)]
    for arrs in fused["layers"]:
        for arr in arrs:
            inputs.append(arr)
            in_specs.append(pl.BlockSpec(arr.shape, lambda i: (0, 0)))
    inputs += [fused["wl"], fused["bl"]]
    in_specs += [pl.BlockSpec(fused["wl"].shape, lambda i: (0, 0)),
                 pl.BlockSpec(fused["bl"].shape, lambda i: (0, 0))]

    kernel = functools.partial(_fused_cnn_kernel, layer_dims=LAYER_DIMS)
    out = pl.pallas_call(
        kernel,
        out_shape=jax.ShapeDtypeStruct((B, LIN_OUT_PAD), jnp.float32),
        grid=(B // bt,),
        in_specs=in_specs,
        out_specs=pl.BlockSpec((bt, LIN_OUT_PAD), lambda i: (i, 0)),
        compiler_params=pltpu.CompilerParams(
            dimension_semantics=("parallel",),       # batch blocks split across v7x TCs
        ),
    )(*inputs)
    return out[:, :NUM_CLASSES]


# --------------------------------------------------------------------------
# Pure-JAX (f32) reference and parameter init.
# --------------------------------------------------------------------------
def reference_forward(x, params):
    h = x[:, :, :, None].astype(jnp.float32)
    for p in params["convs"]:
        h = lax.conv_general_dilated(h, p["w"], window_strides=(1, 1),
                                     padding=((1, 1), (1, 1)),
                                     dimension_numbers=("NHWC", "HWIO", "NHWC"),
                                     precision=lax.Precision.HIGHEST)
        h = h + p["cb"]
        h = (h - p["mean"]) / jnp.sqrt(p["var"] + BN_EPS) * p["gamma"] + p["beta"]
        h = jnp.clip(h, 0.0, 6.0)
        h = lax.reduce_window(h, -jnp.inf, lax.max, (1, 2, 2, 1), (1, 2, 2, 1), "VALID")
    B = h.shape[0]
    flat = jnp.transpose(h, (0, 3, 1, 2)).reshape(B, -1)     # NCHW flatten, like torch
    wl, bl = params["lin"]
    return jnp.dot(flat, wl, precision=lax.Precision.HIGHEST) + bl


def init_params(key):
    params = {"convs": [], "lin": None}
    for cin, cout in zip(CONV_INPUTS, CONV_OUTPUTS):
        key, kw, kb, kg, kbe, km, kv = jax.random.split(key, 7)
        fan_in = 3 * 3 * cin
        params["convs"].append(dict(
            w=jax.random.normal(kw, (3, 3, cin, cout), jnp.float32) / np.sqrt(fan_in),
            cb=0.1 * jax.random.normal(kb, (cout,), jnp.float32),
            gamma=jax.random.uniform(kg, (cout,), jnp.float32, 0.8, 1.2),
            beta=0.1 * jax.random.normal(kbe, (cout,), jnp.float32),
            mean=0.1 * jax.random.normal(km, (cout,), jnp.float32),
            var=jax.random.uniform(kv, (cout,), jnp.float32, 0.8, 1.2),
        ))
    key, kw, kb = jax.random.split(key, 3)
    params["lin"] = (
        jax.random.normal(kw, (DENSE_IN, NUM_CLASSES), jnp.float32) / np.sqrt(DENSE_IN),
        0.1 * jax.random.normal(kb, (NUM_CLASSES,), jnp.float32),
    )
    return params


if __name__ == "__main__":
    key = jax.random.PRNGKey(0)
    pkey, xkey = jax.random.split(key)
    params = init_params(pkey)
    fused = prepare_fused_params(params, BATCH_TILE)     # one-time host-side folding

    B = 2 * BATCH_TILE                                   # >= 2 grid steps (v7x dual-TC)
    x = jax.random.normal(xkey, (B, INITIAL_RESOLUTION[0], INITIAL_RESOLUTION[1]),
                          jnp.float32)

    out = scalable_cnn_forward(x, fused)
    out = jax.block_until_ready(out)
    assert out.shape == (B, NUM_CLASSES)

    ref = reference_forward(x, params)
    # bf16 MXU operands (per perf review) -> tolerance loosened vs. the f32 reference.
    np.testing.assert_allclose(np.asarray(out), np.asarray(ref), rtol=5e-2, atol=5e-2)

    print("KERNEL_OK")
</pallas_src>

<mosaic_0001>
module attributes {stable_mosaic.version = 11 : i64} {
  func.func @_fused_cnn_kernel(%arg0: i32, %arg1: memref<256x16xf32, #tpu.memory_space<vmem>>, %arg2: memref<256x16xf32, #tpu.memory_space<vmem>>, %arg3: memref<256x16xf32, #tpu.memory_space<vmem>>, %arg4: memref<16x128xbf16, #tpu.memory_space<vmem>>, %arg5: memref<16x128xbf16, #tpu.memory_space<vmem>>, %arg6: memref<16x128xbf16, #tpu.memory_space<vmem>>, %arg7: memref<1x128xf32, #tpu.memory_space<vmem>>, %arg8: memref<128x64xf32, #tpu.memory_space<vmem>>, %arg9: memref<128x64xf32, #tpu.memory_space<vmem>>, %arg10: memref<128x256xf32, #tpu.memory_space<vmem>>, %arg11: memref<128x256xf32, #tpu.memory_space<vmem>>, %arg12: memref<128x256xf32, #tpu.memory_space<vmem>>, %arg13: memref<128x256xf32, #tpu.memory_space<vmem>>, %arg14: memref<128x256xf32, #tpu.memory_space<vmem>>, %arg15: memref<128x256xf32, #tpu.memory_space<vmem>>, %arg16: memref<64x128xbf16, #tpu.memory_space<vmem>>, %arg17: memref<64x128xbf16, #tpu.memory_space<vmem>>, %arg18: memref<64x128xbf16, #tpu.memory_space<vmem>>, %arg19: memref<1x128xf32, #tpu.memory_space<vmem>>, %arg20: memref<128x64xf32, #tpu.memory_space<vmem>>, %arg21: memref<128x64xf32, #tpu.memory_space<vmem>>, %arg22: memref<64x128xf32, #tpu.memory_space<vmem>>, %arg23: memref<64x128xf32, #tpu.memory_space<vmem>>, %arg24: memref<64x128xf32, #tpu.memory_space<vmem>>, %arg25: memref<64x128xf32, #tpu.memory_space<vmem>>, %arg26: memref<64x128xf32, #tpu.memory_space<vmem>>, %arg27: memref<64x128xf32, #tpu.memory_space<vmem>>, %arg28: memref<64x64xbf16, #tpu.memory_space<vmem>>, %arg29: memref<64x64xbf16, #tpu.memory_space<vmem>>, %arg30: memref<64x64xbf16, #tpu.memory_space<vmem>>, %arg31: memref<1x64xf32, #tpu.memory_space<vmem>>, %arg32: memref<64x32xf32, #tpu.memory_space<vmem>>, %arg33: memref<64x32xf32, #tpu.memory_space<vmem>>, %arg34: memref<32x64xf32, #tpu.memory_space<vmem>>, %arg35: memref<32x64xf32, #tpu.memory_space<vmem>>, %arg36: memref<32x64xf32, #tpu.memory_space<vmem>>, %arg37: memref<32x64xf32, #tpu.memory_space<vmem>>, %arg38: memref<32x64xf32, #tpu.memory_space<vmem>>, %arg39: memref<32x64xf32, #tpu.memory_space<vmem>>, %arg40: memref<32x32xbf16, #tpu.memory_space<vmem>>, %arg41: memref<32x32xbf16, #tpu.memory_space<vmem>>, %arg42: memref<32x32xbf16, #tpu.memory_space<vmem>>, %arg43: memref<1x32xf32, #tpu.memory_space<vmem>>, %arg44: memref<32x16xf32, #tpu.memory_space<vmem>>, %arg45: memref<32x16xf32, #tpu.memory_space<vmem>>, %arg46: memref<16x32xf32, #tpu.memory_space<vmem>>, %arg47: memref<16x32xf32, #tpu.memory_space<vmem>>, %arg48: memref<16x128xbf16, #tpu.memory_space<vmem>>, %arg49: memref<1x128xf32, #tpu.memory_space<vmem>>, %arg50: memref<16x128xf32, #tpu.memory_space<vmem>>) attributes {dimension_semantics = [#tpu.dimension_semantics<parallel>], iteration_bounds = array<i64: 2>, scalar_prefetch = 0 : i64, scratch_operands = 0 : i64, tpu.core_type = #tpu.core_type<tc>, window_params = [{transform_indices = @transform_0, window_bounds = array<i64: 256, 16>}, {transform_indices = @transform_1, window_bounds = array<i64: 256, 16>}, {transform_indices = @transform_2, window_bounds = array<i64: 256, 16>}, {pipeline_mode = #tpu.pipeline_mode<synchronous>, transform_indices = @transform_3, window_bounds = array<i64: 16, 128>}, {pipeline_mode = #tpu.pipeline_mode<synchronous>, transform_indices = @transform_4, window_bounds = array<i64: 16, 128>}, {pipeline_mode = #tpu.pipeline_mode<synchronous>, transform_indices = @transform_5, window_bounds = array<i64: 16, 128>}, {pipeline_mode = #tpu.pipeline_mode<synchronous>, transform_indices = @transform_6, window_bounds = array<i64: 1, 128>}, {pipeline_mode = #tpu.pipeline_mode<synchronous>, transform_indices = @transform_7, window_bounds = array<i64: 128, 64>}, {pipeline_mode = #tpu.pipeline_mode<synchronous>, transform_indices = @transform_8, window_bounds = array<i64: 128, 64>}, {pipeline_mode = #tpu.pipeline_mode<synchronous>, transform_indices = @transform_9, window_bounds = array<i64: 128, 256>}, {pipeline_mode = #tpu.pipeline_mode<synchronous>, transform_indices = @transform_10, window_bounds = array<i64: 128, 256>}, {pipeline_mode = #tpu.pipeline_mode<synchronous>, transform_indices = @transform_11, window_bounds = array<i64: 128, 256>}, {pipeline_mode = #tpu.pipeline_mode<synchronous>, transform_indices = @transform_12, window_bounds = array<i64: 128, 256>}, {pipeline_mode = #tpu.pipeline_mode<synchronous>, transform_indices = @transform_13, window_bounds = array<i64: 128, 256>}, {pipeline_mode = #tpu.pipeline_mode<synchronous>, transform_indices = @transform_14, window_bounds = array<i64: 128, 256>}, {pipeline_mode = #tpu.pipeline_mode<synchronous>, transform_indices = @transform_15, window_bounds = array<i64: 64, 128>}, {pipeline_mode = #tpu.pipeline_mode<synchronous>, transform_indices = @transform_16, window_bounds = array<i64: 64, 128>}, {pipeline_mode = #tpu.pipeline_mode<synchronous>, transform_indices = @transform_17, window_bounds = array<i64: 64, 128>}, {pipeline_mode = #tpu.pipeline_mode<synchronous>, transform_indices = @transform_18, window_bounds = array<i64: 1, 128>}, {pipeline_mode = #tpu.pipeline_mode<synchronous>, transform_indices = @transform_19, window_bounds = array<i64: 128, 64>}, {pipeline_mode = #tpu.pipeline_mode<synchronous>, transform_indices = @transform_20, window_bounds = array<i64: 128, 64>}, {pipeline_mode = #tpu.pipeline_mode<synchronous>, transform_indices = @transform_21, window_bounds = array<i64: 64, 128>}, {pipeline_mode = #tpu.pipeline_mode<synchronous>, transform_indices = @transform_22, window_bounds = array<i64: 64, 128>}, {pipeline_mode = #tpu.pipeline_mode<synchronous>, transform_indices = @transform_23, window_bounds = array<i64: 64, 128>}, {pipeline_mode = #tpu.pipeline_mode<synchronous>, transform_indices = @transform_24, window_bounds = array<i64: 64, 128>}, {pipeline_mode = #tpu.pipeline_mode<synchronous>, transform_indices = @transform_25, window_bounds = array<i64: 64, 128>}, {pipeline_mode = #tpu.pipeline_mode<synchronous>, transform_indices = @transform_26, window_bounds = array<i64: 64, 128>}, {pipeline_mode = #tpu.pipeline_mode<synchronous>, transform_indices = @transform_27, window_bounds = array<i64: 64, 64>}, {pipeline_mode = #tpu.pipeline_mode<synchronous>, transform_indices = @transform_28, window_bounds = array<i64: 64, 64>}, {pipeline_mode = #tpu.pipeline_mode<synchronous>, transform_indices = @transform_29, window_bounds = array<i64: 64, 64>}, {pipeline_mode = #tpu.pipeline_mode<synchronous>, transform_indices = @transform_30, window_bounds = array<i64: 1, 64>}, {pipeline_mode = #tpu.pipeline_mode<synchronous>, transform_indices = @transform_31, window_bounds = array<i64: 64, 32>}, {pipeline_mode = #tpu.pipeline_mode<synchronous>, transform_indices = @transform_32, window_bounds = array<i64: 64, 32>}, {pipeline_mode = #tpu.pipeline_mode<synchronous>, transform_indices = @transform_33, window_bounds = array<i64: 32, 64>}, {pipeline_mode = #tpu.pipeline_mode<synchronous>, transform_indices = @transform_34, window_bounds = array<i64: 32, 64>}, {pipeline_mode = #tpu.pipeline_mode<synchronous>, transform_indices = @transform_35, window_bounds = array<i64: 32, 64>}, {pipeline_mode = #tpu.pipeline_mode<synchronous>, transform_indices = @transform_36, window_bounds = array<i64: 32, 64>}, {pipeline_mode = #tpu.pipeline_mode<synchronous>, transform_indices = @transform_37, window_bounds = array<i64: 32, 64>}, {pipeline_mode = #tpu.pipeline_mode<synchronous>, transform_indices = @transform_38, window_bounds = array<i64: 32, 64>}, {pipeline_mode = #tpu.pipeline_mode<synchronous>, transform_indices = @transform_39, window_bounds = array<i64: 32, 32>}, {pipeline_mode = #tpu.pipeline_mode<synchronous>, transform_indices = @transform_40, window_bounds = array<i64: 32, 32>}, {pipeline_mode = #tpu.pipeline_mode<synchronous>, transform_indices = @transform_41, window_bounds = array<i64: 32, 32>}, {pipeline_mode = #tpu.pipeline_mode<synchronous>, transform_indices = @transform_42, window_bounds = array<i64: 1, 32>}, {pipeline_mode = #tpu.pipeline_mode<synchronous>, transform_indices = @transform_43, window_bounds = array<i64: 32, 16>}, {pipeline_mode = #tpu.pipeline_mode<synchronous>, transform_indices = @transform_44, window_bounds = array<i64: 32, 16>}, {pipeline_mode = #tpu.pipeline_mode<synchronous>, transform_indices = @transform_45, window_bounds = array<i64: 16, 32>}, {pipeline_mode = #tpu.pipeline_mode<synchronous>, transform_indices = @transform_46, window_bounds = array<i64: 16, 32>}, {pipeline_mode = #tpu.pipeline_mode<synchronous>, transform_indices = @transform_47, window_bounds = array<i64: 16, 128>}, {pipeline_mode = #tpu.pipeline_mode<synchronous>, transform_indices = @transform_48, window_bounds = array<i64: 1, 128>}, {transform_indices = @transform_49, window_bounds = array<i64: 16, 128>}]} {
    %c0 = arith.constant 0 : index
    %c0_0 = arith.constant 0 : index
    %0 = vector.load %arg1[%c0, %c0_0] : memref<256x16xf32, #tpu.memory_space<vmem>>, vector<256x16xf32>
    %c0_1 = arith.constant 0 : index
    %c0_2 = arith.constant 0 : index
    %1 = vector.load %arg2[%c0_1, %c0_2] : memref<256x16xf32, #tpu.memory_space<vmem>>, vector<256x16xf32>
    %c0_3 = arith.constant 0 : index
    %c0_4 = arith.constant 0 : index
    %2 = vector.load %arg3[%c0_3, %c0_4] : memref<256x16xf32, #tpu.memory_space<vmem>>, vector<256x16xf32>
    %3 = arith.truncf %1 : vector<256x16xf32> to vector<256x16xbf16>
    %c0_5 = arith.constant 0 : index
    %c0_6 = arith.constant 0 : index
    %4 = vector.load %arg4[%c0_5, %c0_6] : memref<16x128xbf16, #tpu.memory_space<vmem>>, vector<16x128xbf16>
    %cst = arith.constant dense<0.000000e+00> : vector<256x128xf32>
    %5 = tpu.matmul %3, %4, %cst {dimension_numbers = #tpu.dot_dimension_numbers<[1], [0], [0], [1], [0, 0, 1, 1], [], []>} : vector<256x16xbf16>, vector<16x128xbf16>, vector<256x128xf32> -> vector<256x128xf32>
    %6 = arith.truncf %0 : vector<256x16xf32> to vector<256x16xbf16>
    %c0_7 = arith.constant 0 : index
    %c0_8 = arith.constant 0 : index
    %7 = vector.load %arg5[%c0_7, %c0_8] : memref<16x128xbf16, #tpu.memory_space<vmem>>, vector<16x128xbf16>
    %cst_9 = arith.constant dense<0.000000e+00> : vector<256x128xf32>
    %8 = tpu.matmul %6, %7, %cst_9 {dimension_numbers = #tpu.dot_dimension_numbers<[1], [0], [0], [1], [0, 0, 1, 1], [], []>} : vector<256x16xbf16>, vector<16x128xbf16>, vector<256x128xf32> -> vector<256x128xf32>
    %9 = arith.addf %5, %8 : vector<256x128xf32>
    %10 = arith.truncf %2 : vector<256x16xf32> to vector<256x16xbf16>
    %c0_10 = arith.constant 0 : index
    %c0_11 = arith.constant 0 : index
    %11 = vector.load %arg6[%c0_10, %c0_11] : memref<16x128xbf16, #tpu.memory_space<vmem>>, vector<16x128xbf16>
    %cst_12 = arith.constant dense<0.000000e+00> : vector<256x128xf32>
    %12 = tpu.matmul %10, %11, %cst_12 {dimension_numbers = #tpu.dot_dimension_numbers<[1], [0], [0], [1], [0, 0, 1, 1], [], []>} : vector<256x16xbf16>, vector<16x128xbf16>, vector<256x128xf32> -> vector<256x128xf32>
    %13 = arith.addf %9, %12 : vector<256x128xf32>
    %c0_13 = arith.constant 0 : index
    %c0_14 = arith.constant 0 : index
    %14 = vector.load %arg7[%c0_13, %c0_14] : memref<1x128xf32, #tpu.memory_space<vmem>>, vector<1x128xf32>
    %15 = vector.broadcast %14 : vector<1x128xf32> to vector<256x128xf32>
    %16 = arith.addf %13, %15 : vector<256x128xf32>
    %cst_15 = arith.constant 0.000000e+00 : f32
    %cst_16 = arith.constant 6.000000e+00 : f32
    %17 = vector.broadcast %cst_15 : f32 to vector<256x128xf32>
    %18 = arith.maximumf %17, %16 : vector<256x128xf32>
    %19 = vector.broadcast %cst_16 : f32 to vector<256x128xf32>
    %20 = arith.minimumf %19, %18 : vector<256x128xf32>
    %c0_17 = arith.constant 0 : index
    %c0_18 = arith.constant 0 : index
    %21 = vector.load %arg8[%c0_17, %c0_18] : memref<128x64xf32, #tpu.memory_space<vmem>>, vector<128x64xf32>
    %cst_19 = arith.constant dense<0.000000e+00> : vector<256x64xf32>
    %22 = tpu.matmul %20, %21, %cst_19 {dimension_numbers = #tpu.dot_dimension_numbers<[1], [0], [0], [1], [0, 0, 1, 1], [], []>} : vector<256x128xf32>, vector<128x64xf32>, vector<256x64xf32> -> vector<256x64xf32>
    %c0_20 = arith.constant 0 : index
    %c0_21 = arith.constant 0 : index
    %23 = vector.load %arg9[%c0_20, %c0_21] : memref<128x64xf32, #tpu.memory_space<vmem>>, vector<128x64xf32>
    %cst_22 = arith.constant dense<0.000000e+00> : vector<256x64xf32>
    %24 = tpu.matmul %20, %23, %cst_22 {dimension_numbers = #tpu.dot_dimension_numbers<[1], [0], [0], [1], [0, 0, 1, 1], [], []>} : vector<256x128xf32>, vector<128x64xf32>, vector<256x64xf32> -> vector<256x64xf32>
    %25 = arith.maximumf %22, %24 : vector<256x64xf32>
    %c0_23 = arith.constant 0 : index
    %c0_24 = arith.constant 0 : index
    %26 = vector.load %arg10[%c0_23, %c0_24] : memref<128x256xf32, #tpu.memory_space<vmem>>, vector<128x256xf32>
    %cst_25 = arith.constant dense<0.000000e+00> : vector<128x64xf32>
    %27 = tpu.matmul %26, %25, %cst_25 {dimension_numbers = #tpu.dot_dimension_numbers<[1], [0], [0], [1], [0, 0, 1, 1], [], []>} : vector<128x256xf32>, vector<256x64xf32>, vector<128x64xf32> -> vector<128x64xf32>
    %c0_26 = arith.constant 0 : index
    %c0_27 = arith.constant 0 : index
    %28 = vector.load %arg11[%c0_26, %c0_27] : memref<128x256xf32, #tpu.memory_space<vmem>>, vector<128x256xf32>
    %cst_28 = arith.constant dense<0.000000e+00> : vector<128x64xf32>
    %29 = tpu.matmul %28, %25, %cst_28 {dimension_numbers = #tpu.dot_dimension_numbers<[1], [0], [0], [1], [0, 0, 1, 1], [], []>} : vector<128x256xf32>, vector<256x64xf32>, vector<128x64xf32> -> vector<128x64xf32>
    %30 = arith.maximumf %27, %29 : vector<128x64xf32>
    %c0_29 = arith.constant 0 : index
    %c0_30 = arith.constant 0 : index
    %31 = vector.load %arg12[%c0_29, %c0_30] : memref<128x256xf32, #tpu.memory_space<vmem>>, vector<128x256xf32>
    %cst_31 = arith.constant dense<0.000000e+00> : vector<128x64xf32>
    %32 = tpu.matmul %31, %25, %cst_31 {dimension_numbers = #tpu.dot_dimension_numbers<[1], [0], [0], [1], [0, 0, 1, 1], [], []>} : vector<128x256xf32>, vector<256x64xf32>, vector<128x64xf32> -> vector<128x64xf32>
    %c0_32 = arith.constant 0 : index
    %c0_33 = arith.constant 0 : index
    %33 = vector.load %arg13[%c0_32, %c0_33] : memref<128x256xf32, #tpu.memory_space<vmem>>, vector<128x256xf32>
    %cst_34 = arith.constant dense<0.000000e+00> : vector<128x64xf32>
    %34 = tpu.matmul %33, %25, %cst_34 {dimension_numbers = #tpu.dot_dimension_numbers<[1], [0], [0], [1], [0, 0, 1, 1], [], []>} : vector<128x256xf32>, vector<256x64xf32>, vector<128x64xf32> -> vector<128x64xf32>
    %35 = arith.maximumf %32, %34 : vector<128x64xf32>
    %c0_35 = arith.constant 0 : index
    %c0_36 = arith.constant 0 : index
    %36 = vector.load %arg14[%c0_35, %c0_36] : memref<128x256xf32, #tpu.memory_space<vmem>>, vector<128x256xf32>
    %cst_37 = arith.constant dense<0.000000e+00> : vector<128x64xf32>
    %37 = tpu.matmul %36, %25, %cst_37 {dimension_numbers = #tpu.dot_dimension_numbers<[1], [0], [0], [1], [0, 0, 1, 1], [], []>} : vector<128x256xf32>, vector<256x64xf32>, vector<128x64xf32> -> vector<128x64xf32>
    %c0_38 = arith.constant 0 : index
    %c0_39 = arith.constant 0 : index
    %38 = vector.load %arg15[%c0_38, %c0_39] : memref<128x256xf32, #tpu.memory_space<vmem>>, vector<128x256xf32>
    %cst_40 = arith.constant dense<0.000000e+00> : vector<128x64xf32>
    %39 = tpu.matmul %38, %25, %cst_40 {dimension_numbers = #tpu.dot_dimension_numbers<[1], [0], [0], [1], [0, 0, 1, 1], [], []>} : vector<128x256xf32>, vector<256x64xf32>, vector<128x64xf32> -> vector<128x64xf32>
    %40 = arith.maximumf %37, %39 : vector<128x64xf32>
    %41 = arith.truncf %35 : vector<128x64xf32> to vector<128x64xbf16>
    %c0_41 = arith.constant 0 : index
    %c0_42 = arith.constant 0 : index
    %42 = vector.load %arg16[%c0_41, %c0_42] : memref<64x128xbf16, #tpu.memory_space<vmem>>, vector<64x128xbf16>
    %cst_43 = arith.constant dense<0.000000e+00> : vector<128x128xf32>
    %43 = tpu.matmul %41, %42, %cst_43 {dimension_numbers = #tpu.dot_dimension_numbers<[1], [0], [0], [1], [0, 0, 1, 1], [], []>} : vector<128x64xbf16>, vector<64x128xbf16>, vector<128x128xf32> -> vector<128x128xf32>
    %44 = arith.truncf %30 : vector<128x64xf32> to vector<128x64xbf16>
    %c0_44 = arith.constant 0 : index
    %c0_45 = arith.constant 0 : index
    %45 = vector.load %arg17[%c0_44, %c0_45] : memref<64x128xbf16, #tpu.memory_space<vmem>>, vector<64x128xbf16>
    %cst_46 = arith.constant dense<0.000000e+00> : vector<128x128xf32>
    %46 = tpu.matmul %44, %45, %cst_46 {dimension_numbers = #tpu.dot_dimension_numbers<[1], [0], [0], [1], [0, 0, 1, 1], [], []>} : vector<128x64xbf16>, vector<64x128xbf16>, vector<128x128xf32> -> vector<128x128xf32>
    %47 = arith.addf %43, %46 : vector<128x128xf32>
    %48 = arith.truncf %40 : vector<128x64xf32> to vector<128x64xbf16>
    %c0_47 = arith.constant 0 : index
    %c0_48 = arith.constant 0 : index
    %49 = vector.load %arg18[%c0_47, %c0_48] : memref<64x128xbf16, #tpu.memory_space<vmem>>, vector<64x128xbf16>
    %cst_49 = arith.constant dense<0.000000e+00> : vector<128x128xf32>
    %50 = tpu.matmul %48, %49, %cst_49 {dimension_numbers = #tpu.dot_dimension_numbers<[1], [0], [0], [1], [0, 0, 1, 1], [], []>} : vector<128x64xbf16>, vector<64x128xbf16>, vector<128x128xf32> -> vector<128x128xf32>
    %51 = arith.addf %47, %50 : vector<128x128xf32>
    %c0_50 = arith.constant 0 : index
    %c0_51 = arith.constant 0 : index
    %52 = vector.load %arg19[%c0_50, %c0_51] : memref<1x128xf32, #tpu.memory_space<vmem>>, vector<1x128xf32>
    %53 = vector.broadcast %52 : vector<1x128xf32> to vector<128x128xf32>
    %54 = arith.addf %51, %53 : vector<128x128xf32>
    %cst_52 = arith.constant 0.000000e+00 : f32
    %cst_53 = arith.constant 6.000000e+00 : f32
    %55 = vector.broadcast %cst_52 : f32 to vector<128x128xf32>
    %56 = arith.maximumf %55, %54 : vector<128x128xf32>
    %57 = vector.broadcast %cst_53 : f32 to vector<128x128xf32>
    %58 = arith.minimumf %57, %56 : vector<128x128xf32>
    %c0_54 = arith.constant 0 : index
    %c0_55 = arith.constant 0 : index
    %59 = vector.load %arg20[%c0_54, %c0_55] : memref<128x64xf32, #tpu.memory_space<vmem>>, vector<128x64xf32>
    %cst_56 = arith.constant dense<0.000000e+00> : vector<128x64xf32>
    %60 = tpu.matmul %58, %59, %cst_56 {dimension_numbers = #tpu.dot_dimension_numbers<[1], [0], [0], [1], [0, 0, 1, 1], [], []>} : vector<128x128xf32>, vector<128x64xf32>, vector<128x64xf32> -> vector<128x64xf32>
    %c0_57 = arith.constant 0 : index
    %c0_58 = arith.constant 0 : index
    %61 = vector.load %arg21[%c0_57, %c0_58] : memref<128x64xf32, #tpu.memory_space<vmem>>, vector<128x64xf32>
    %cst_59 = arith.constant dense<0.000000e+00> : vector<128x64xf32>
    %62 = tpu.matmul %58, %61, %cst_59 {dimension_numbers = #tpu.dot_dimension_numbers<[1], [0], [0], [1], [0, 0, 1, 1], [], []>} : vector<128x128xf32>, vector<128x64xf32>, vector<128x64xf32> -> vector<128x64xf32>
    %63 = arith.maximumf %60, %62 : vector<128x64xf32>
    %c0_60 = arith.constant 0 : index
    %c0_61 = arith.constant 0 : index
    %64 = vector.load %arg22[%c0_60, %c0_61] : memref<64x128xf32, #tpu.memory_space<vmem>>, vector<64x128xf32>
    %cst_62 = arith.constant dense<0.000000e+00> : vector<64x64xf32>
    %65 = tpu.matmul %64, %63, %cst_62 {dimension_numbers = #tpu.dot_dimension_numbers<[1], [0], [0], [1], [0, 0, 1, 1], [], []>} : vector<64x128xf32>, vector<128x64xf32>, vector<64x64xf32> -> vector<64x64xf32>
    %c0_63 = arith.constant 0 : index
    %c0_64 = arith.constant 0 : index
    %66 = vector.load %arg23[%c0_63, %c0_64] : memref<64x128xf32, #tpu.memory_space<vmem>>, vector<64x128xf32>
    %cst_65 = arith.constant dense<0.000000e+00> : vector<64x64xf32>
    %67 = tpu.matmul %66, %63, %cst_65 {dimension_numbers = #tpu.dot_dimension_numbers<[1], [0], [0], [1], [0, 0, 1, 1], [], []>} : vector<64x128xf32>, vector<128x64xf32>, vector<64x64xf32> -> vector<64x64xf32>
    %68 = arith.maximumf %65, %67 : vector<64x64xf32>
    %c0_66 = arith.constant 0 : index
    %c0_67 = arith.constant 0 : index
    %69 = vector.load %arg24[%c0_66, %c0_67] : memref<64x128xf32, #tpu.memory_space<vmem>>, vector<64x128xf32>
    %cst_68 = arith.constant dense<0.000000e+00> : vector<64x64xf32>
    %70 = tpu.matmul %69, %63, %cst_68 {dimension_numbers = #tpu.dot_dimension_numbers<[1], [0], [0], [1], [0, 0, 1, 1], [], []>} : vector<64x128xf32>, vector<128x64xf32>, vector<64x64xf32> -> vector<64x64xf32>
    %c0_69 = arith.constant 0 : index
    %c0_70 = arith.constant 0 : index
    %71 = vector.load %arg25[%c0_69, %c0_70] : memref<64x128xf32, #tpu.memory_space<vmem>>, vector<64x128xf32>
    %cst_71 = arith.constant dense<0.000000e+00> : vector<64x64xf32>
    %72 = tpu.matmul %71, %63, %cst_71 {dimension_numbers = #tpu.dot_dimension_numbers<[1], [0], [0], [1], [0, 0, 1, 1], [], []>} : vector<64x128xf32>, vector<128x64xf32>, vector<64x64xf32> -> vector<64x64xf32>
    %73 = arith.maximumf %70, %72 : vector<64x64xf32>
    %c0_72 = arith.constant 0 : index
    %c0_73 = arith.constant 0 : index
    %74 = vector.load %arg26[%c0_72, %c0_73] : memref<64x128xf32, #tpu.memory_space<vmem>>, vector<64x128xf32>
    %cst_74 = arith.constant dense<0.000000e+00> : vector<64x64xf32>
    %75 = tpu.matmul %74, %63, %cst_74 {dimension_numbers = #tpu.dot_dimension_numbers<[1], [0], [0], [1], [0, 0, 1, 1], [], []>} : vector<64x128xf32>, vector<128x64xf32>, vector<64x64xf32> -> vector<64x64xf32>
    %c0_75 = arith.constant 0 : index
    %c0_76 = arith.constant 0 : index
    %76 = vector.load %arg27[%c0_75, %c0_76] : memref<64x128xf32, #tpu.memory_space<vmem>>, vector<64x128xf32>
    %cst_77 = arith.constant dense<0.000000e+00> : vector<64x64xf32>
    %77 = tpu.matmul %76, %63, %cst_77 {dimension_numbers = #tpu.dot_dimension_numbers<[1], [0], [0], [1], [0, 0, 1, 1], [], []>} : vector<64x128xf32>, vector<128x64xf32>, vector<64x64xf32> -> vector<64x64xf32>
    %78 = arith.maximumf %75, %77 : vector<64x64xf32>
    %79 = arith.truncf %73 : vector<64x64xf32> to vector<64x64xbf16>
    %c0_78 = arith.constant 0 : index
    %c0_79 = arith.constant 0 : index
    %80 = vector.load %arg28[%c0_78, %c0_79] : memref<64x64xbf16, #tpu.memory_space<vmem>>, vector<64x64xbf16>
    %cst_80 = arith.constant dense<0.000000e+00> : vector<64x64xf32>
    %81 = tpu.matmul %79, %80, %cst_80 {dimension_numbers = #tpu.dot_dimension_numbers<[1], [0], [0], [1], [0, 0, 1, 1], [], []>} : vector<64x64xbf16>, vector<64x64xbf16>, vector<64x64xf32> -> vector<64x64xf32>
    %82 = arith.truncf %68 : vector<64x64xf32> to vector<64x64xbf16>
    %c0_81 = arith.constant 0 : index
    %c0_82 = arith.constant 0 : index
    %83 = vector.load %arg29[%c0_81, %c0_82] : memref<64x64xbf16, #tpu.memory_space<vmem>>, vector<64x64xbf16>
    %cst_83 = arith.constant dense<0.000000e+00> : vector<64x64xf32>
    %84 = tpu.matmul %82, %83, %cst_83 {dimension_numbers = #tpu.dot_dimension_numbers<[1], [0], [0], [1], [0, 0, 1, 1], [], []>} : vector<64x64xbf16>, vector<64x64xbf16>, vector<64x64xf32> -> vector<64x64xf32>
    %85 = arith.addf %81, %84 : vector<64x64xf32>
    %86 = arith.truncf %78 : vector<64x64xf32> to vector<64x64xbf16>
    %c0_84 = arith.constant 0 : index
    %c0_85 = arith.constant 0 : index
    %87 = vector.load %arg30[%c0_84, %c0_85] : memref<64x64xbf16, #tpu.memory_space<vmem>>, vector<64x64xbf16>
    %cst_86 = arith.constant dense<0.000000e+00> : vector<64x64xf32>
    %88 = tpu.matmul %86, %87, %cst_86 {dimension_numbers = #tpu.dot_dimension_numbers<[1], [0], [0], [1], [0, 0, 1, 1], [], []>} : vector<64x64xbf16>, vector<64x64xbf16>, vector<64x64xf32> -> vector<64x64xf32>
    %89 = arith.addf %85, %88 : vector<64x64xf32>
    %c0_87 = arith.constant 0 : index
    %c0_88 = arith.constant 0 : index
    %90 = vector.load %arg31[%c0_87, %c0_88] : memref<1x64xf32, #tpu.memory_space<vmem>>, vector<1x64xf32>
    %91 = vector.broadcast %90 : vector<1x64xf32> to vector<64x64xf32>
    %92 = arith.addf %89, %91 : vector<64x64xf32>
    %cst_89 = arith.constant 0.000000e+00 : f32
    %cst_90 = arith.constant 6.000000e+00 : f32
    %93 = vector.broadcast %cst_89 : f32 to vector<64x64xf32>
    %94 = arith.maximumf %93, %92 : vector<64x64xf32>
    %95 = vector.broadcast %cst_90 : f32 to vector<64x64xf32>
    %96 = arith.minimumf %95, %94 : vector<64x64xf32>
    %c0_91 = arith.constant 0 : index
    %c0_92 = arith.constant 0 : index
    %97 = vector.load %arg32[%c0_91, %c0_92] : memref<64x32xf32, #tpu.memory_space<vmem>>, vector<64x32xf32>
    %cst_93 = arith.constant dense<0.000000e+00> : vector<64x32xf32>
    %98 = tpu.matmul %96, %97, %cst_93 {dimension_numbers = #tpu.dot_dimension_numbers<[1], [0], [0], [1], [0, 0, 1, 1], [], []>} : vector<64x64xf32>, vector<64x32xf32>, vector<64x32xf32> -> vector<64x32xf32>
    %c0_94 = arith.constant 0 : index
    %c0_95 = arith.constant 0 : index
    %99 = vector.load %arg33[%c0_94, %c0_95] : memref<64x32xf32, #tpu.memory_space<vmem>>, vector<64x32xf32>
    %cst_96 = arith.constant dense<0.000000e+00> : vector<64x32xf32>
    %100 = tpu.matmul %96, %99, %cst_96 {dimension_numbers = #tpu.dot_dimension_numbers<[1], [0], [0], [1], [0, 0, 1, 1], [], []>} : vector<64x64xf32>, vector<64x32xf32>, vector<64x32xf32> -> vector<64x32xf32>
    %101 = arith.maximumf %98, %100 : vector<64x32xf32>
    %c0_97 = arith.constant 0 : index
    %c0_98 = arith.constant 0 : index
    %102 = vector.load %arg34[%c0_97, %c0_98] : memref<32x64xf32, #tpu.memory_space<vmem>>, vector<32x64xf32>
    %cst_99 = arith.constant dense<0.000000e+00> : vector<32x32xf32>
    %103 = tpu.matmul %102, %101, %cst_99 {dimension_numbers = #tpu.dot_dimension_numbers<[1], [0], [0], [1], [0, 0, 1, 1], [], []>} : vector<32x64xf32>, vector<64x32xf32>, vector<32x32xf32> -> vector<32x32xf32>
    %c0_100 = arith.constant 0 : index
    %c0_101 = arith.constant 0 : index
    %104 = vector.load %arg35[%c0_100, %c0_101] : memref<32x64xf32, #tpu.memory_space<vmem>>, vector<32x64xf32>
    %cst_102 = arith.constant dense<0.000000e+00> : vector<32x32xf32>
    %105 = tpu.matmul %104, %101, %cst_102 {dimension_numbers = #tpu.dot_dimension_numbers<[1], [0], [0], [1], [0, 0, 1, 1], [], []>} : vector<32x64xf32>, vector<64x32xf32>, vector<32x32xf32> -> vector<32x32xf32>
    %106 = arith.maximumf %103, %105 : vector<32x32xf32>
    %c0_103 = arith.constant 0 : index
    %c0_104 = arith.constant 0 : index
    %107 = vector.load %arg36[%c0_103, %c0_104] : memref<32x64xf32, #tpu.memory_space<vmem>>, vector<32x64xf32>
    %cst_105 = arith.constant dense<0.000000e+00> : vector<32x32xf32>
    %108 = tpu.matmul %107, %101, %cst_105 {dimension_numbers = #tpu.dot_dimension_numbers<[1], [0], [0], [1], [0, 0, 1, 1], [], []>} : vector<32x64xf32>, vector<64x32xf32>, vector<32x32xf32> -> vector<32x32xf32>
    %c0_106 = arith.constant 0 : index
    %c0_107 = arith.constant 0 : index
    %109 = vector.load %arg37[%c0_106, %c0_107] : memref<32x64xf32, #tpu.memory_space<vmem>>, vector<32x64xf32>
    %cst_108 = arith.constant dense<0.000000e+00> : vector<32x32xf32>
    %110 = tpu.matmul %109, %101, %cst_108 {dimension_numbers = #tpu.dot_dimension_numbers<[1], [0], [0], [1], [0, 0, 1, 1], [], []>} : vector<32x64xf32>, vector<64x32xf32>, vector<32x32xf32> -> vector<32x32xf32>
    %111 = arith.maximumf %108, %110 : vector<32x32xf32>
    %c0_109 = arith.constant 0 : index
    %c0_110 = arith.constant 0 : index
    %112 = vector.load %arg38[%c0_109, %c0_110] : memref<32x64xf32, #tpu.memory_space<vmem>>, vector<32x64xf32>
    %cst_111 = arith.constant dense<0.000000e+00> : vector<32x32xf32>
    %113 = tpu.matmul %112, %101, %cst_111 {dimension_numbers = #tpu.dot_dimension_numbers<[1], [0], [0], [1], [0, 0, 1, 1], [], []>} : vector<32x64xf32>, vector<64x32xf32>, vector<32x32xf32> -> vector<32x32xf32>
    %c0_112 = arith.constant 0 : index
    %c0_113 = arith.constant 0 : index
    %114 = vector.load %arg39[%c0_112, %c0_113] : memref<32x64xf32, #tpu.memory_space<vmem>>, vector<32x64xf32>
    %cst_114 = arith.constant dense<0.000000e+00> : vector<32x32xf32>
    %115 = tpu.matmul %114, %101, %cst_114 {dimension_numbers = #tpu.dot_dimension_numbers<[1], [0], [0], [1], [0, 0, 1, 1], [], []>} : vector<32x64xf32>, vector<64x32xf32>, vector<32x32xf32> -> vector<32x32xf32>
    %116 = arith.maximumf %113, %115 : vector<32x32xf32>
    %117 = arith.truncf %111 : vector<32x32xf32> to vector<32x32xbf16>
    %c0_115 = arith.constant 0 : index
    %c0_116 = arith.constant 0 : index
    %118 = vector.load %arg40[%c0_115, %c0_116] : memref<32x32xbf16, #tpu.memory_space<vmem>>, vector<32x32xbf16>
    %cst_117 = arith.constant dense<0.000000e+00> : vector<32x32xf32>
    %119 = tpu.matmul %117, %118, %cst_117 {dimension_numbers = #tpu.dot_dimension_numbers<[1], [0], [0], [1], [0, 0, 1, 1], [], []>} : vector<32x32xbf16>, vector<32x32xbf16>, vector<32x32xf32> -> vector<32x32xf32>
    %120 = arith.truncf %106 : vector<32x32xf32> to vector<32x32xbf16>
    %c0_118 = arith.constant 0 : index
    %c0_119 = arith.constant 0 : index
    %121 = vector.load %arg41[%c0_118, %c0_119] : memref<32x32xbf16, #tpu.memory_space<vmem>>, vector<32x32xbf16>
    %cst_120 = arith.constant dense<0.000000e+00> : vector<32x32xf32>
    %122 = tpu.matmul %120, %121, %cst_120 {dimension_numbers = #tpu.dot_dimension_numbers<[1], [0], [0], [1], [0, 0, 1, 1], [], []>} : vector<32x32xbf16>, vector<32x32xbf16>, vector<32x32xf32> -> vector<32x32xf32>
    %123 = arith.addf %119, %122 : vector<32x32xf32>
    %124 = arith.truncf %116 : vector<32x32xf32> to vector<32x32xbf16>
    %c0_121 = arith.constant 0 : index
    %c0_122 = arith.constant 0 : index
    %125 = vector.load %arg42[%c0_121, %c0_122] : memref<32x32xbf16, #tpu.memory_space<vmem>>, vector<32x32xbf16>
    %cst_123 = arith.constant dense<0.000000e+00> : vector<32x32xf32>
    %126 = tpu.matmul %124, %125, %cst_123 {dimension_numbers = #tpu.dot_dimension_numbers<[1], [0], [0], [1], [0, 0, 1, 1], [], []>} : vector<32x32xbf16>, vector<32x32xbf16>, vector<32x32xf32> -> vector<32x32xf32>
    %127 = arith.addf %123, %126 : vector<32x32xf32>
    %c0_124 = arith.constant 0 : index
    %c0_125 = arith.constant 0 : index
    %128 = vector.load %arg43[%c0_124, %c0_125] : memref<1x32xf32, #tpu.memory_space<vmem>>, vector<1x32xf32>
    %129 = vector.broadcast %128 : vector<1x32xf32> to vector<32x32xf32>
    %130 = arith.addf %127, %129 : vector<32x32xf32>
    %cst_126 = arith.constant 0.000000e+00 : f32
    %cst_127 = arith.constant 6.000000e+00 : f32
    %131 = vector.broadcast %cst_126 : f32 to vector<32x32xf32>
    %132 = arith.maximumf %131, %130 : vector<32x32xf32>
    %133 = vector.broadcast %cst_127 : f32 to vector<32x32xf32>
    %134 = arith.minimumf %133, %132 : vector<32x32xf32>
    %c0_128 = arith.constant 0 : index
    %c0_129 = arith.constant 0 : index
    %135 = vector.load %arg44[%c0_128, %c0_129] : memref<32x16xf32, #tpu.memory_space<vmem>>, vector<32x16xf32>
    %cst_130 = arith.constant dense<0.000000e+00> : vector<32x16xf32>
    %136 = tpu.matmul %134, %135, %cst_130 {dimension_numbers = #tpu.dot_dimension_numbers<[1], [0], [0], [1], [0, 0, 1, 1], [], []>} : vector<32x32xf32>, vector<32x16xf32>, vector<32x16xf32> -> vector<32x16xf32>
    %c0_131 = arith.constant 0 : index
    %c0_132 = arith.constant 0 : index
    %137 = vector.load %arg45[%c0_131, %c0_132] : memref<32x16xf32, #tpu.memory_space<vmem>>, vector<32x16xf32>
    %cst_133 = arith.constant dense<0.000000e+00> : vector<32x16xf32>
    %138 = tpu.matmul %134, %137, %cst_133 {dimension_numbers = #tpu.dot_dimension_numbers<[1], [0], [0], [1], [0, 0, 1, 1], [], []>} : vector<32x32xf32>, vector<32x16xf32>, vector<32x16xf32> -> vector<32x16xf32>
    %139 = arith.maximumf %136, %138 : vector<32x16xf32>
    %c0_134 = arith.constant 0 : index
    %c0_135 = arith.constant 0 : index
    %140 = vector.load %arg46[%c0_134, %c0_135] : memref<16x32xf32, #tpu.memory_space<vmem>>, vector<16x32xf32>
    %cst_136 = arith.constant dense<0.000000e+00> : vector<16x16xf32>
    %141 = tpu.matmul %140, %139, %cst_136 {dimension_numbers = #tpu.dot_dimension_numbers<[1], [0], [0], [1], [0, 0, 1, 1], [], []>} : vector<16x32xf32>, vector<32x16xf32>, vector<16x16xf32> -> vector<16x16xf32>
    %c0_137 = arith.constant 0 : index
    %c0_138 = arith.constant 0 : index
    %142 = vector.load %arg47[%c0_137, %c0_138] : memref<16x32xf32, #tpu.memory_space<vmem>>, vector<16x32xf32>
    %cst_139 = arith.constant dense<0.000000e+00> : vector<16x16xf32>
    %143 = tpu.matmul %142, %139, %cst_139 {dimension_numbers = #tpu.dot_dimension_numbers<[1], [0], [0], [1], [0, 0, 1, 1], [], []>} : vector<16x32xf32>, vector<32x16xf32>, vector<16x16xf32> -> vector<16x16xf32>
    %144 = arith.maximumf %141, %143 : vector<16x16xf32>
    %145 = arith.truncf %144 : vector<16x16xf32> to vector<16x16xbf16>
    %c0_140 = arith.constant 0 : index
    %c0_141 = arith.constant 0 : index
    %146 = vector.load %arg48[%c0_140, %c0_141] : memref<16x128xbf16, #tpu.memory_space<vmem>>, vector<16x128xbf16>
    %cst_142 = arith.constant dense<0.000000e+00> : vector<16x128xf32>
    %147 = tpu.matmul %145, %146, %cst_142 {dimension_numbers = #tpu.dot_dimension_numbers<[1], [0], [0], [1], [0, 0, 1, 1], [], []>} : vector<16x16xbf16>, vector<16x128xbf16>, vector<16x128xf32> -> vector<16x128xf32>
    %c0_143 = arith.constant 0 : index
    %c0_144 = arith.constant 0 : index
    %148 = vector.load %arg49[%c0_143, %c0_144] : memref<1x128xf32, #tpu.memory_space<vmem>>, vector<1x128xf32>
    %149 = vector.broadcast %148 : vector<1x128xf32> to vector<16x128xf32>
    %150 = arith.addf %147, %149 : vector<16x128xf32>
    %c0_145 = arith.constant 0 : index
    %c0_146 = arith.constant 0 : index
    %151 = vector.load %arg50[%c0_145, %c0_146] : memref<16x128xf32, #tpu.memory_space<vmem>>, vector<16x128xf32>
    tpu.vector_store %arg50[%c0_145, %c0_146], %150 {strides = array<i32>} : memref<16x128xf32, #tpu.memory_space<vmem>>, vector<16x128xf32>,
    return
  }
  func.func @transform_0(%arg0: i32) -> (i32, i32) {
    %c0_i32 = arith.constant 0 : i32
    %c0_i32_0 = arith.constant 0 : i32
    return %arg0, %c0_i32 : i32, i32
  }
  func.func @transform_1(%arg0: i32) -> (i32, i32) {
    %c0_i32 = arith.constant 0 : i32
    %c0_i32_0 = arith.constant 0 : i32
    return %arg0, %c0_i32 : i32, i32
  }
  func.func @transform_2(%arg0: i32) -> (i32, i32) {
    %c0_i32 = arith.constant 0 : i32
    %c0_i32_0 = arith.constant 0 : i32
    return %arg0, %c0_i32 : i32, i32
  }
  func.func @transform_3(%arg0: i32) -> (i32, i32) {
    %c0_i32 = arith.constant 0 : i32
    %c0_i32_0 = arith.constant 0 : i32
    %c0_i32_1 = arith.constant 0 : i32
    return %c0_i32, %c0_i32_0 : i32, i32
  }
  func.func @transform_4(%arg0: i32) -> (i32, i32) {
    %c0_i32 = arith.constant 0 : i32
    %c0_i32_0 = arith.constant 0 : i32
    %c0_i32_1 = arith.constant 0 : i32
    return %c0_i32, %c0_i32_0 : i32, i32
  }
  func.func @transform_5(%arg0: i32) -> (i32, i32) {
    %c0_i32 = arith.constant 0 : i32
    %c0_i32_0 = arith.constant 0 : i32
    %c0_i32_1 = arith.constant 0 : i32
    return %c0_i32, %c0_i32_0 : i32, i32
  }
  func.func @transform_6(%arg0: i32) -> (i32, i32) {
    %c0_i32 = arith.constant 0 : i32
    %c0_i32_0 = arith.constant 0 : i32
    %c0_i32_1 = arith.constant 0 : i32
    return %c0_i32, %c0_i32_0 : i32, i32
  }
  func.func @transform_7(%arg0: i32) -> (i32, i32) {
    %c0_i32 = arith.constant 0 : i32
    %c0_i32_0 = arith.constant 0 : i32
    %c0_i32_1 = arith.constant 0 : i32
    return %c0_i32, %c0_i32_0 : i32, i32
  }
  func.func @transform_8(%arg0: i32) -> (i32, i32) {
    %c0_i32 = arith.constant 0 : i32
    %c0_i32_0 = arith.constant 0 : i32
    %c0_i32_1 = arith.constant 0 : i32
    return %c0_i32, %c0_i32_0 : i32, i32
  }
  func.func @transform_9(%arg0: i32) -> (i32, i32) {
    %c0_i32 = arith.constant 0 : i32
    %c0_i32_0 = arith.constant 0 : i32
    %c0_i32_1 = arith.constant 0 : i32
    return %c0_i32, %c0_i32_0 : i32, i32
  }
  func.func @transform_10(%arg0: i32) -> (i32, i32) {
    %c0_i32 = arith.constant 0 : i32
    %c0_i32_0 = arith.constant 0 : i32
    %c0_i32_1 = arith.constant 0 : i32
    return %c0_i32, %c0_i32_0 : i32, i32
  }
  func.func @transform_11(%arg0: i32) -> (i32, i32) {
    %c0_i32 = arith.constant 0 : i32
    %c0_i32_0 = arith.constant 0 : i32
    %c0_i32_1 = arith.constant 0 : i32
    return %c0_i32, %c0_i32_0 : i32, i32
  }
  func.func @transform_12(%arg0: i32) -> (i32, i32) {
    %c0_i32 = arith.constant 0 : i32
    %c0_i32_0 = arith.constant 0 : i32
    %c0_i32_1 = arith.constant 0 : i32
    return %c0_i32, %c0_i32_0 : i32, i32
  }
  func.func @transform_13(%arg0: i32) -> (i32, i32) {
    %c0_i32 = arith.constant 0 : i32
    %c0_i32_0 = arith.constant 0 : i32
    %c0_i32_1 = arith.constant 0 : i32
    return %c0_i32, %c0_i32_0 : i32, i32
  }
  func.func @transform_14(%arg0: i32) -> (i32, i32) {
    %c0_i32 = arith.constant 0 : i32
    %c0_i32_0 = arith.constant 0 : i32
    %c0_i32_1 = arith.constant 0 : i32
    return %c0_i32, %c0_i32_0 : i32, i32
  }
  func.func @transform_15(%arg0: i32) -> (i32, i32) {
    %c0_i32 = arith.constant 0 : i32
    %c0_i32_0 = arith.constant 0 : i32
    %c0_i32_1 = arith.constant 0 : i32
    return %c0_i32, %c0_i32_0 : i32, i32
  }
  func.func @transform_16(%arg0: i32) -> (i32, i32) {
    %c0_i32 = arith.constant 0 : i32
    %c0_i32_0 = arith.constant 0 : i32
    %c0_i32_1 = arith.constant 0 : i32
    return %c0_i32, %c0_i32_0 : i32, i32
  }
  func.func @transform_17(%arg0: i32) -> (i32, i32) {
    %c0_i32 = arith.constant 0 : i32
    %c0_i32_0 = arith.constant 0 : i32
    %c0_i32_1 = arith.constant 0 : i32
    return %c0_i32, %c0_i32_0 : i32, i32
  }
  func.func @transform_18(%arg0: i32) -> (i32, i32) {
    %c0_i32 = arith.constant 0 : i32
    %c0_i32_0 = arith.constant 0 : i32
    %c0_i32_1 = arith.constant 0 : i32
    return %c0_i32, %c0_i32_0 : i32, i32
  }
  func.func @transform_19(%arg0: i32) -> (i32, i32) {
    %c0_i32 = arith.constant 0 : i32
    %c0_i32_0 = arith.constant 0 : i32
    %c0_i32_1 = arith.constant 0 : i32
    return %c0_i32, %c0_i32_0 : i32, i32
  }
  func.func @transform_20(%arg0: i32) -> (i32, i32) {
    %c0_i32 = arith.constant 0 : i32
    %c0_i32_0 = arith.constant 0 : i32
    %c0_i32_1 = arith.constant 0 : i32
    return %c0_i32, %c0_i32_0 : i32, i32
  }
  func.func @transform_21(%arg0: i32) -> (i32, i32) {
    %c0_i32 = arith.constant 0 : i32
    %c0_i32_0 = arith.constant 0 : i32
    %c0_i32_1 = arith.constant 0 : i32
    return %c0_i32, %c0_i32_0 : i32, i32
  }
  func.func @transform_22(%arg0: i32) -> (i32, i32) {
    %c0_i32 = arith.constant 0 : i32
    %c0_i32_0 = arith.constant 0 : i32
    %c0_i32_1 = arith.constant 0 : i32
    return %c0_i32, %c0_i32_0 : i32, i32
  }
  func.func @transform_23(%arg0: i32) -> (i32, i32) {
    %c0_i32 = arith.constant 0 : i32
    %c0_i32_0 = arith.constant 0 : i32
    %c0_i32_1 = arith.constant 0 : i32
    return %c0_i32, %c0_i32_0 : i32, i32
  }
  func.func @transform_24(%arg0: i32) -> (i32, i32) {
    %c0_i32 = arith.constant 0 : i32
    %c0_i32_0 = arith.constant 0 : i32
    %c0_i32_1 = arith.constant 0 : i32
    return %c0_i32, %c0_i32_0 : i32, i32
  }
  func.func @transform_25(%arg0: i32) -> (i32, i32) {
    %c0_i32 = arith.constant 0 : i32
    %c0_i32_0 = arith.constant 0 : i32
    %c0_i32_1 = arith.constant 0 : i32
    return %c0_i32, %c0_i32_0 : i32, i32
  }
  func.func @transform_26(%arg0: i32) -> (i32, i32) {
    %c0_i32 = arith.constant 0 : i32
    %c0_i32_0 = arith.constant 0 : i32
    %c0_i32_1 = arith.constant 0 : i32
    return %c0_i32, %c0_i32_0 : i32, i32
  }
  func.func @transform_27(%arg0: i32) -> (i32, i32) {
    %c0_i32 = arith.constant 0 : i32
    %c0_i32_0 = arith.constant 0 : i32
    %c0_i32_1 = arith.constant 0 : i32
    return %c0_i32, %c0_i32_0 : i32, i32
  }
  func.func @transform_28(%arg0: i32) -> (i32, i32) {
    %c0_i32 = arith.constant 0 : i32
    %c0_i32_0 = arith.constant 0 : i32
    %c0_i32_1 = arith.constant 0 : i32
    return %c0_i32, %c0_i32_0 : i32, i32
  }
  func.func @transform_29(%arg0: i32) -> (i32, i32) {
    %c0_i32 = arith.constant 0 : i32
    %c0_i32_0 = arith.constant 0 : i32
    %c0_i32_1 = arith.constant 0 : i32
    return %c0_i32, %c0_i32_0 : i32, i32
  }
  func.func @transform_30(%arg0: i32) -> (i32, i32) {
    %c0_i32 = arith.constant 0 : i32
    %c0_i32_0 = arith.constant 0 : i32
    %c0_i32_1 = arith.constant 0 : i32
    return %c0_i32, %c0_i32_0 : i32, i32
  }
  func.func @transform_31(%arg0: i32) -> (i32, i32) {
    %c0_i32 = arith.constant 0 : i32
    %c0_i32_0 = arith.constant 0 : i32
    %c0_i32_1 = arith.constant 0 : i32
    return %c0_i32, %c0_i32_0 : i32, i32
  }
  func.func @transform_32(%arg0: i32) -> (i32, i32) {
    %c0_i32 = arith.constant 0 : i32
    %c0_i32_0 = arith.constant 0 : i32
    %c0_i32_1 = arith.constant 0 : i32
    return %c0_i32, %c0_i32_0 : i32, i32
  }
  func.func @transform_33(%arg0: i32) -> (i32, i32) {
    %c0_i32 = arith.constant 0 : i32
    %c0_i32_0 = arith.constant 0 : i32
    %c0_i32_1 = arith.constant 0 : i32
    return %c0_i32, %c0_i32_0 : i32, i32
  }
  func.func @transform_34(%arg0: i32) -> (i32, i32) {
    %c0_i32 = arith.constant 0 : i32
    %c0_i32_0 = arith.constant 0 : i32
    %c0_i32_1 = arith.constant 0 : i32
    return %c0_i32, %c0_i32_0 : i32, i32
  }
  func.func @transform_35(%arg0: i32) -> (i32, i32) {
    %c0_i32 = arith.constant 0 : i32
    %c0_i32_0 = arith.constant 0 : i32
    %c0_i32_1 = arith.constant 0 : i32
    return %c0_i32, %c0_i32_0 : i32, i32
  }
  func.func @transform_36(%arg0: i32) -> (i32, i32) {
    %c0_i32 = arith.constant 0 : i32
    %c0_i32_0 = arith.constant 0 : i32
    %c0_i32_1 = arith.constant 0 : i32
    return %c0_i32, %c0_i32_0 : i32, i32
  }
  func.func @transform_37(%arg0: i32) -> (i32, i32) {
    %c0_i32 = arith.constant 0 : i32
    %c0_i32_0 = arith.constant 0 : i32
    %c0_i32_1 = arith.constant 0 : i32
    return %c0_i32, %c0_i32_0 : i32, i32
  }
  func.func @transform_38(%arg0: i32) -> (i32, i32) {
    %c0_i32 = arith.constant 0 : i32
    %c0_i32_0 = arith.constant 0 : i32
    %c0_i32_1 = arith.constant 0 : i32
    return %c0_i32, %c0_i32_0 : i32, i32
  }
  func.func @transform_39(%arg0: i32) -> (i32, i32) {
    %c0_i32 = arith.constant 0 : i32
    %c0_i32_0 = arith.constant 0 : i32
    %c0_i32_1 = arith.constant 0 : i32
    return %c0_i32, %c0_i32_0 : i32, i32
  }
  func.func @transform_40(%arg0: i32) -> (i32, i32) {
    %c0_i32 = arith.constant 0 : i32
    %c0_i32_0 = arith.constant 0 : i32
    %c0_i32_1 = arith.constant 0 : i32
    return %c0_i32, %c0_i32_0 : i32, i32
  }
  func.func @transform_41(%arg0: i32) -> (i32, i32) {
    %c0_i32 = arith.constant 0 : i32
    %c0_i32_0 = arith.constant 0 : i32
    %c0_i32_1 = arith.constant 0 : i32
    return %c0_i32, %c0_i32_0 : i32, i32
  }
  func.func @transform_42(%arg0: i32) -> (i32, i32) {
    %c0_i32 = arith.constant 0 : i32
    %c0_i32_0 = arith.constant 0 : i32
    %c0_i32_1 = arith.constant 0 : i32
    return %c0_i32, %c0_i32_0 : i32, i32
  }
  func.func @transform_43(%arg0: i32) -> (i32, i32) {
    %c0_i32 = arith.constant 0 : i32
    %c0_i32_0 = arith.constant 0 : i32
    %c0_i32_1 = arith.constant 0 : i32
    return %c0_i32, %c0_i32_0 : i32, i32
  }
  func.func @transform_44(%arg0: i32) -> (i32, i32) {
    %c0_i32 = arith.constant 0 : i32
    %c0_i32_0 = arith.constant 0 : i32
    %c0_i32_1 = arith.constant 0 : i32
    return %c0_i32, %c0_i32_0 : i32, i32
  }
  func.func @transform_45(%arg0: i32) -> (i32, i32) {
    %c0_i32 = arith.constant 0 : i32
    %c0_i32_0 = arith.constant 0 : i32
    %c0_i32_1 = arith.constant 0 : i32
    return %c0_i32, %c0_i32_0 : i32, i32
  }
  func.func @transform_46(%arg0: i32) -> (i32, i32) {
    %c0_i32 = arith.constant 0 : i32
    %c0_i32_0 = arith.constant 0 : i32
    %c0_i32_1 = arith.constant 0 : i32
    return %c0_i32, %c0_i32_0 : i32, i32
  }
  func.func @transform_47(%arg0: i32) -> (i32, i32) {
    %c0_i32 = arith.constant 0 : i32
    %c0_i32_0 = arith.constant 0 : i32
    %c0_i32_1 = arith.constant 0 : i32
    return %c0_i32, %c0_i32_0 : i32, i32
  }
  func.func @transform_48(%arg0: i32) -> (i32, i32) {
    %c0_i32 = arith.constant 0 : i32
    %c0_i32_0 = arith.constant 0 : i32
    %c0_i32_1 = arith.constant 0 : i32
    return %c0_i32, %c0_i32_0 : i32, i32
  }
  func.func @transform_49(%arg0: i32) -> (i32, i32) {
    %c0_i32 = arith.constant 0 : i32
    %c0_i32_0 = arith.constant 0 : i32
    return %arg0, %c0_i32 : i32, i32
  }
}

</mosaic_0001>

<llo_original>
// kernel: tpu_custom_call.1
$region0: #{tpu_custom_call.1}
  #allocation0 [shape = 'u32[]', space=smem, size = 0x4, offset = 0x4, fixed_abs, tag = 'smem constant byte address 0x4 - core index']
  #allocation1 [shape = 'u32[144,128]{1,0:T(1,128)}', space=vmem, size = 0x12000, scoped, tag = 'internal scratch']
  %s0 = inlined_call_operand.smem [shape: u32[50], index: -1, kind: input, shape index: {}]
  %s1 = sld [smem:[%s0]]
  %s2 = scalar_lea.smem %s0, 1
  %s3 = sld [smem:[%s2]]
  %s4 = scalar_lea.smem %s0, 2
  %s5 = sld [smem:[%s4]]
  %s6 = scalar_lea.smem %s0, 3
  %s7 = sld [smem:[%s6]]
  %s8 = scalar_lea.smem %s0, 4
  %s9 = sld [smem:[%s8]]
  %s10 = scalar_lea.smem %s0, 5
  %s11 = sld [smem:[%s10]]
  %s12 = scalar_lea.smem %s0, 6
  %s13 = sld [smem:[%s12]]
  %s14 = scalar_lea.smem %s0, 7
  %s15 = sld [smem:[%s14]]
  %s16 = scalar_lea.smem %s0, 8
  %s17 = sld [smem:[%s16]]
  %s18 = scalar_lea.smem %s0, 9
  %s19 = sld [smem:[%s18]]
  %s20 = scalar_lea.smem %s0, 10
  %s21 = sld [smem:[%s20]]
  %s22 = scalar_lea.smem %s0, 11
  %s23 = sld [smem:[%s22]]
  %s24 = scalar_lea.smem %s0, 12
  %s25 = sld [smem:[%s24]]
  %s26 = scalar_lea.smem %s0, 13
  %s27 = sld [smem:[%s26]]
  %s28 = scalar_lea.smem %s0, 14
  %s29 = sld [smem:[%s28]]
  %s30 = scalar_lea.smem %s0, 15
  %s31 = sld [smem:[%s30]]
  %s32 = scalar_lea.smem %s0, 16
  %s33 = sld [smem:[%s32]]
  %s34 = scalar_lea.smem %s0, 17
  %s35 = sld [smem:[%s34]]
  %s36 = scalar_lea.smem %s0, 18
  %s37 = sld [smem:[%s36]]
  %s38 = scalar_lea.smem %s0, 19
  %s39 = sld [smem:[%s38]]
  %s40 = scalar_lea.smem %s0, 20
  %s41 = sld [smem:[%s40]]
  %s42 = scalar_lea.smem %s0, 21
  %s43 = sld [smem:[%s42]]
  %s44 = scalar_lea.smem %s0, 22
  %s45 = sld [smem:[%s44]]
  %s46 = scalar_lea.smem %s0, 23
  %s47 = sld [smem:[%s46]]
  %s48 = scalar_lea.smem %s0, 24
  %s49 = sld [smem:[%s48]]
  %s50 = scalar_lea.smem %s0, 25
  %s51 = sld [smem:[%s50]]
  %s52 = scalar_lea.smem %s0, 26
  %s53 = sld [smem:[%s52]]
  %s54 = scalar_lea.smem %s0, 27
  %s55 = sld [smem:[%s54]]
  %s56 = scalar_lea.smem %s0, 28
  %s57 = sld [smem:[%s56]]
  %s58 = scalar_lea.smem %s0, 29
  %s59 = sld [smem:[%s58]]
  %s60 = scalar_lea.smem %s0, 30
  %s61 = sld [smem:[%s60]]
  %s62 = scalar_lea.smem %s0, 31
  %s63 = sld [smem:[%s62]]
  %s64 = scalar_lea.smem %s0, 32
  %s65 = sld [smem:[%s64]]
  %s66 = scalar_lea.smem %s0, 33
  %s67 = sld [smem:[%s66]]
  %s68 = scalar_lea.smem %s0, 34
  %s69 = sld [smem:[%s68]]
  %s70 = scalar_lea.smem %s0, 35
  %s71 = sld [smem:[%s70]]
  %s72 = scalar_lea.smem %s0, 36
  %s73 = sld [smem:[%s72]]
  %s74 = scalar_lea.smem %s0, 37
  %s75 = sld [smem:[%s74]]
  %s76 = scalar_lea.smem %s0, 38
  %s77 = sld [smem:[%s76]]
  %s78 = scalar_lea.smem %s0, 39
  %s79 = sld [smem:[%s78]]
  %s80 = scalar_lea.smem %s0, 40
  %s81 = sld [smem:[%s80]]
  %s82 = scalar_lea.smem %s0, 41
  %s83 = sld [smem:[%s82]]
  %s84 = scalar_lea.smem %s0, 42
  %s85 = sld [smem:[%s84]]
  %s86 = scalar_lea.smem %s0, 43
  %s87 = sld [smem:[%s86]]
  %s88 = scalar_lea.smem %s0, 44
  %s89 = sld [smem:[%s88]]
  %s90 = scalar_lea.smem %s0, 45
  %s91 = sld [smem:[%s90]]
  %s92 = scalar_lea.smem %s0, 46
  %s93 = sld [smem:[%s92]]
  %s94 = scalar_lea.smem %s0, 47
  %s95 = sld [smem:[%s94]]
  %s96 = scalar_lea.smem %s0, 48
  %s97 = sld [smem:[%s96]]
  %s98 = scalar_lea.smem %s0, 49
  %s99 = sld [smem:[%s98]]
  %s100 = sld [smem:[#allocation0]]
  $region277: #{tpu_custom_call.1} parent=0
    _
  %s102 = ssub.s32 1, %s100
  %s103 = scalar_select 0, %s102, %s100
  $region1: #{tpu_custom_call.1} parent=0
    #allocation2 [shape = 'u8[4096]{0}', space=vmem, size = 0x1000, scoped, tag = 'input window, operand 3, single buffered']
    #allocation3 [shape = 's32[2]{0}', space=sflag, size = 0x8, scoped, tag = 'scoped memory for tpu_custom_call.1']
    #allocation4 [shape = 's32[2]{0}', space=sflag, size = 0x8, scoped, tag = 'scoped memory for tpu_custom_call.1']
    #allocation5 [shape = 'u8[4096]{0}', space=vmem, size = 0x1000, scoped, tag = 'input window, operand 4, single buffered']
    #allocation6 [shape = 's32[1]{0}', space=sflag, size = 0x4, scoped, tag = 'scoped memory for tpu_custom_call.1']
    #allocation7 [shape = 'u8[4096]{0}', space=vmem, size = 0x1000, scoped, tag = 'input window, operand 5, single buffered']
    #allocation8 [shape = 'u8[512]{0}', space=vmem, size = 0x400, scoped, tag = 'input window, operand 6, single buffered']
    #allocation9 [shape = 's32[1]{0}', space=sflag, size = 0x4, scoped, tag = 'scoped memory for tpu_custom_call.1']
    #allocation10 [shape = 'u8[512]{0}', space=vmem, size = 0x400, scoped, tag = 'input window, operand 30, single buffered']
    #allocation11 [shape = 'u8[8192]{0}', space=vmem, size = 0x2000, scoped, tag = 'input window, operand 39, single buffered']
    #allocation12 [shape = 's32[1]{0}', space=sflag, size = 0x4, scoped, tag = 'scoped memory for tpu_custom_call.1']
    #allocation13 [shape = 'u8[8192]{0}', space=vmem, size = 0x2000, scoped, tag = 'input window, operand 40, single buffered']
    #allocation14 [shape = 'u8[8192]{0}', space=vmem, size = 0x2000, scoped, tag = 'input window, operand 41, single buffered']
    #allocation15 [shape = 's32[1]{0}', space=sflag, size = 0x4, scoped, tag = 'scoped memory for tpu_custom_call.1']
    #allocation16 [shape = 'u8[512]{0}', space=vmem, size = 0x400, scoped, tag = 'input window, operand 42, single buffered']
    #allocation17 [shape = 'u8[8192]{0}', space=vmem, size = 0x2000, scoped, tag = 'input window, operand 45, single buffered']
    #allocation18 [shape = 's32[1]{0}', space=sflag, size = 0x4, scoped, tag = 'scoped memory for tpu_custom_call.1']
    #allocation19 [shape = 'u8[8192]{0}', space=vmem, size = 0x2000, scoped, tag = 'input window, operand 46, single buffered']
    #allocation20 [shape = 'u8[4096]{0}', space=vmem, size = 0x1000, scoped, tag = 'input window, operand 47, single buffered']
    #allocation21 [shape = 's32[1]{0}', space=sflag, size = 0x4, scoped, tag = 'scoped memory for tpu_custom_call.1']
    #allocation22 [shape = 'u8[16384]{0}', space=vmem, size = 0x4000, scoped, tag = 'output window, operand 0']
    %104 = vsyncpa [#allocation3], 0
    %105 = vsyncpa [#allocation6], 0
    %106 = vsyncpa [#allocation9], 0
    %107 = vsyncpa [#allocation12], 0
    %108 = vsyncpa [#allocation15], 0
    %109 = vsyncpa [#allocation18], 0
    %110 = vsyncpa [#allocation21], 0
    %111 = vsyncpa [#allocation4], 0
    %s112 = scalar_lea.sflag [#allocation4], 1
    %113 = vsyncpa %s112, 0
    loop: start=0, step=1, limit=4
    $region2: #{tpu_custom_call.1} parent=1 // loop_pre_header
      _
    $region3: #{tpu_custom_call.1} parent=1 // loop_header
      %s115 = sphi 0, %s119
      %p116 = scmp.ge.s32.totalorder %s115, 4
      %s125 = sphi 0, %s127
      %s128 = sphi 0, %s125
      %s129 = sphi 0, %s128
      %s145 = sphi 0, %s129
      %s151 = sphi 0, %s153
      %s154 = sphi 0, %s151
      %s155 = sphi 0, %s154
      %s171 = sphi 0, %s155
      %s177 = sphi 0, %s179
      %s180 = sphi 0, %s177
      %s181 = sphi 0, %s180
      %s197 = sphi 0, %s181
      %s201 = sphi 0, %s201
      %s203 = sphi 0, %s201
      %s204 = sphi 0, %s203
      %s218 = sphi 0, %s204
      %s222 = sphi 0, %s222
      %s224 = sphi 0, %s222
      %s225 = sphi 0, %s224
      %s239 = sphi 0, %s225
      %s243 = sphi 0, %s243
      %s245 = sphi 0, %s243
      %s246 = sphi 0, %s245
      %s260 = sphi 0, %s246
      %s264 = sphi 0, %s264
      %s266 = sphi 0, %s264
      %s267 = sphi 0, %s266
      %s281 = sphi 0, %s267
      %s285 = sphi 0, %s285
      %s287 = sphi 0, %s285
      %s288 = sphi 0, %s287
      %s302 = sphi 0, %s288
      %s306 = sphi 0, %s306
      %s308 = sphi 0, %s306
      %s309 = sphi 0, %s308
      %s323 = sphi 0, %s309
      %s327 = sphi 0, %s327
      %s329 = sphi 0, %s327
      %s330 = sphi 0, %s329
      %s344 = sphi 0, %s330
      %s348 = sphi 0, %s348
      %s350 = sphi 0, %s348
      %s351 = sphi 0, %s350
      %s365 = sphi 0, %s351
      %s369 = sphi 0, %s369
      %s371 = sphi 0, %s369
      %s372 = sphi 0, %s371
      %s386 = sphi 0, %s372
      %s390 = sphi 0, %s390
      %s392 = sphi 0, %s390
      %s393 = sphi 0, %s392
      %s407 = sphi 0, %s393
      %s411 = sphi 0, %s411
      %s413 = sphi 0, %s411
      %s414 = sphi 0, %s413
      %s428 = sphi 0, %s414
      %s432 = sphi 0, %s432
      %s434 = sphi 0, %s432
      %s435 = sphi 0, %s434
      %s449 = sphi 0, %s435
      %s453 = sphi 0, %s453
      %s455 = sphi 0, %s453
      %s456 = sphi 0, %s455
      %s470 = sphi 0, %s456
      %s474 = sphi 0, %s474
      %s476 = sphi 0, %s474
      %s477 = sphi 0, %s476
      %s491 = sphi 0, %s477
      %s495 = sphi 0, %s495
      %s497 = sphi 0, %s495
      %s498 = sphi 0, %s497
      %s512 = sphi 0, %s498
      %s516 = sphi 0, %s516
      %s518 = sphi 0, %s516
      %s519 = sphi 0, %s518
      %s533 = sphi 0, %s519
      %s537 = sphi 0, %s537
      %s539 = sphi 0, %s537
      %s540 = sphi 0, %s539
      %s554 = sphi 0, %s540
      %s558 = sphi 0, %s558
      %s560 = sphi 0, %s558
      %s561 = sphi 0, %s560
      %s575 = sphi 0, %s561
      %s579 = sphi 0, %s579
      %s581 = sphi 0, %s579
      %s582 = sphi 0, %s581
      %s596 = sphi 0, %s582
      %s600 = sphi 0, %s600
      %s602 = sphi 0, %s600
      %s603 = sphi 0, %s602
      %s617 = sphi 0, %s603
      %s621 = sphi 0, %s621
      %s623 = sphi 0, %s621
      %s624 = sphi 0, %s623
      %s638 = sphi 0, %s624
      %s642 = sphi 0, %s642
      %s644 = sphi 0, %s642
      %s645 = sphi 0, %s644
      %s659 = sphi 0, %s645
      %s663 = sphi 0, %s663
      %s665 = sphi 0, %s663
      %s666 = sphi 0, %s665
      %s680 = sphi 0, %s666
      %s684 = sphi 0, %s684
      %s686 = sphi 0, %s684
      %s687 = sphi 0, %s686
      %s701 = sphi 0, %s687
      %s705 = sphi 0, %s705
      %s707 = sphi 0, %s705
      %s708 = sphi 0, %s707
      %s722 = sphi 0, %s708
      %s726 = sphi 0, %s726
      %s728 = sphi 0, %s726
      %s729 = sphi 0, %s728
      %s743 = sphi 0, %s729
      %s747 = sphi 0, %s747
      %s749 = sphi 0, %s747
      %s750 = sphi 0, %s749
      %s764 = sphi 0, %s750
      %s768 = sphi 0, %s768
      %s770 = sphi 0, %s768
      %s771 = sphi 0, %s770
      %s785 = sphi 0, %s771
      %s789 = sphi 0, %s789
      %s791 = sphi 0, %s789
      %s792 = sphi 0, %s791
      %s806 = sphi 0, %s792
      %s810 = sphi 0, %s810
      %s812 = sphi 0, %s810
      %s813 = sphi 0, %s812
      %s827 = sphi 0, %s813
      %s831 = sphi 0, %s831
      %s833 = sphi 0, %s831
      %s834 = sphi 0, %s833
      %s848 = sphi 0, %s834
      %s852 = sphi 0, %s852
      %s854 = sphi 0, %s852
      %s855 = sphi 0, %s854
      %s869 = sphi 0, %s855
      %s873 = sphi 0, %s873
      %s875 = sphi 0, %s873
      %s876 = sphi 0, %s875
      %s890 = sphi 0, %s876
      %s894 = sphi 0, %s894
      %s896 = sphi 0, %s894
      %s897 = sphi 0, %s896
      %s911 = sphi 0, %s897
      %s915 = sphi 0, %s915
      %s917 = sphi 0, %s915
      %s918 = sphi 0, %s917
      %s932 = sphi 0, %s918
      %s936 = sphi 0, %s936
      %s938 = sphi 0, %s936
      %s939 = sphi 0, %s938
      %s953 = sphi 0, %s939
      %s957 = sphi 0, %s957
      %s959 = sphi 0, %s957
      %s960 = sphi 0, %s959
      %s974 = sphi 0, %s960
      %s978 = sphi 0, %s978
      %s980 = sphi 0, %s978
      %s981 = sphi 0, %s980
      %s995 = sphi 0, %s981
      %s999 = sphi 0, %s999
      %s1001 = sphi 0, %s999
      %s1002 = sphi 0, %s1001
      %s1016 = sphi 0, %s1002
      %s1020 = sphi 0, %s1020
      %s1022 = sphi 0, %s1020
      %s1023 = sphi 0, %s1022
      %s1037 = sphi 0, %s1023
      %s1041 = sphi 0, %s1041
      %s1043 = sphi 0, %s1041
      %s1044 = sphi 0, %s1043
      %s1058 = sphi 0, %s1044
      %s1062 = sphi 0, %s1062
      %s1064 = sphi 0, %s1062
      %s1065 = sphi 0, %s1064
      %s1079 = sphi 0, %s1065
      %s1083 = sphi 0, %s1083
      %s1085 = sphi 0, %s1083
      %s1086 = sphi 0, %s1085
      %s1100 = sphi 0, %s1086
      %s1104 = sphi 0, %s1104
      %s1106 = sphi 0, %s1104
      %s1107 = sphi 0, %s1106
      %s1121 = sphi 0, %s1107
      %s1125 = sphi 0, %s1125
      %s1127 = sphi 0, %s1125
      %s1128 = sphi 0, %s1127
      %s1142 = sphi 0, %s1128
      %s1146 = sphi 0, %s1146
      %s1148 = sphi 0, %s1146
      %s1149 = sphi 0, %s1148
      %s1163 = sphi 0, %s1149
      %s1169 = sphi 0, %s1171
      %s1172 = sphi 0, %s1169
      %s1173 = sphi 0, %s1172
      %s1189 = sphi 0, %s1173
    $region4: #{tpu_custom_call.1} parent=1 // loop_header_branch
      %118 = sbr.rel (%p116) target = $region8
    $region5: #{tpu_custom_call.1} parent=1 // loop_body
      %s120 = ssub.s32 %s115, 1
      %s121 = ssub.s32 %s115, 2
      %s122 = sadd.s32 %s115, 1
      %s123 = ssub.s32 %s115, %s122
      %p124 = scmp.eq.s32.totalorder %s123, 0
      %s126 = sadd.s32 %s125, 1
      %s127 = scalar_select %p124, %s125, %s126
      %p130 = pneg %p124
      %p131 = scmp.eq.s32.totalorder %s115, 1
      %p132 = por %p130, %p131
      %p133 = scmp.ne.s32.totalorder %s125, %s128
      %p134 = scmp.eq.s32.totalorder %s115, 0
      %p135 = por %p133, %p134
      %p136 = scmp.ne.s32.totalorder %s125, %s128
      %p137 = scmp.eq.s32.totalorder %s120, 1
      %p138 = por %p136, %p137
      %p139 = scmp.ne.s32.totalorder %s128, %s129
      %p140 = scmp.eq.s32.totalorder %s120, 0
      %p141 = por %p139, %p140
      %p142 = scmp.ne.s32.totalorder %s128, %s129
      %p143 = scmp.eq.s32.totalorder %s121, 1
      %p144 = por %p142, %p143
      %p146 = scmp.ne.s32.totalorder %s129, %s145
      %p147 = scmp.eq.s32.totalorder %s121, 0
      %p148 = por %p146, %p147
      %s149 = ssub.s32 %s115, %s122
      %p150 = scmp.eq.s32.totalorder %s149, 0
      %s152 = sadd.s32 %s151, 1
      %s153 = scalar_select %p150, %s151, %s152
      %p156 = pneg %p150
      %p157 = scmp.eq.s32.totalorder %s115, 1
      %p158 = por %p156, %p157
      %p159 = scmp.ne.s32.totalorder %s151, %s154
      %p160 = scmp.eq.s32.totalorder %s115, 0
      %p161 = por %p159, %p160
      %p162 = scmp.ne.s32.totalorder %s151, %s154
      %p163 = scmp.eq.s32.totalorder %s120, 1
      %p164 = por %p162, %p163
      %p165 = scmp.ne.s32.totalorder %s154, %s155
      %p166 = scmp.eq.s32.totalorder %s120, 0
      %p167 = por %p165, %p166
      %p168 = scmp.ne.s32.totalorder %s154, %s155
      %p169 = scmp.eq.s32.totalorder %s121, 1
      %p170 = por %p168, %p169
      %p172 = scmp.ne.s32.totalorder %s155, %s171
      %p173 = scmp.eq.s32.totalorder %s121, 0
      %p174 = por %p172, %p173
      %s175 = ssub.s32 %s115, %s122
      %p176 = scmp.eq.s32.totalorder %s175, 0
      %s178 = sadd.s32 %s177, 1
      %s179 = scalar_select %p176, %s177, %s178
      %p182 = pneg %p176
      %p183 = scmp.eq.s32.totalorder %s115, 1
      %p184 = por %p182, %p183
      %p185 = scmp.ne.s32.totalorder %s177, %s180
      %p186 = scmp.eq.s32.totalorder %s115, 0
      %p187 = por %p185, %p186
      %p188 = scmp.ne.s32.totalorder %s177, %s180
      %p189 = scmp.eq.s32.totalorder %s120, 1
      %p190 = por %p188, %p189
      %p191 = scmp.ne.s32.totalorder %s180, %s181
      %p192 = scmp.eq.s32.totalorder %s120, 0
      %p193 = por %p191, %p192
      %p194 = scmp.ne.s32.totalorder %s180, %s181
      %p195 = scmp.eq.s32.totalorder %s121, 1
      %p196 = por %p194, %p195
      %p198 = scmp.ne.s32.totalorder %s181, %s197
      %p199 = scmp.eq.s32.totalorder %s121, 0
      %p200 = por %p198, %p199
      %s202 = sadd.s32 %s201, 1
      %p205 = scmp.eq.s32.totalorder %s115, 1
      %p206 = scmp.ne.s32.totalorder %s201, %s203
      %p207 = scmp.eq.s32.totalorder %s115, 0
      %p208 = por %p206, %p207
      %p209 = scmp.ne.s32.totalorder %s201, %s203
      %p210 = scmp.eq.s32.totalorder %s120, 1
      %p211 = por %p209, %p210
      %p212 = scmp.ne.s32.totalorder %s203, %s204
      %p213 = scmp.eq.s32.totalorder %s120, 0
      %p214 = por %p212, %p213
      %p215 = scmp.ne.s32.totalorder %s203, %s204
      %p216 = scmp.eq.s32.totalorder %s121, 1
      %p217 = por %p215, %p216
      %p219 = scmp.ne.s32.totalorder %s204, %s218
      %p220 = scmp.eq.s32.totalorder %s121, 0
      %p221 = por %p219, %p220
      %s223 = sadd.s32 %s222, 1
      %p226 = scmp.eq.s32.totalorder %s115, 1
      %p227 = scmp.ne.s32.totalorder %s222, %s224
      %p228 = scmp.eq.s32.totalorder %s115, 0
      %p229 = por %p227, %p228
      %p230 = scmp.ne.s32.totalorder %s222, %s224
      %p231 = scmp.eq.s32.totalorder %s120, 1
      %p232 = por %p230, %p231
      %p233 = scmp.ne.s32.totalorder %s224, %s225
      %p234 = scmp.eq.s32.totalorder %s120, 0
      %p235 = por %p233, %p234
      %p236 = scmp.ne.s32.totalorder %s224, %s225
      %p237 = scmp.eq.s32.totalorder %s121, 1
      %p238 = por %p236, %p237
      %p240 = scmp.ne.s32.totalorder %s225, %s239
      %p241 = scmp.eq.s32.totalorder %s121, 0
      %p242 = por %p240, %p241
      %s244 = sadd.s32 %s243, 1
      %p247 = scmp.eq.s32.totalorder %s115, 1
      %p248 = scmp.ne.s32.totalorder %s243, %s245
      %p249 = scmp.eq.s32.totalorder %s115, 0
      %p250 = por %p248, %p249
      %p251 = scmp.ne.s32.totalorder %s243, %s245
      %p252 = scmp.eq.s32.totalorder %s120, 1
      %p253 = por %p251, %p252
      %p254 = scmp.ne.s32.totalorder %s245, %s246
      %p255 = scmp.eq.s32.totalorder %s120, 0
      %p256 = por %p254, %p255
      %p257 = scmp.ne.s32.totalorder %s245, %s246
      %p258 = scmp.eq.s32.totalorder %s121, 1
      %p259 = por %p257, %p258
      %p261 = scmp.ne.s32.totalorder %s246, %s260
      %p262 = scmp.eq.s32.totalorder %s121, 0
      %p263 = por %p261, %p262
      %s265 = sadd.s32 %s264, 1
      %p268 = scmp.eq.s32.totalorder %s115, 1
      %p269 = scmp.ne.s32.totalorder %s264, %s266
      %p270 = scmp.eq.s32.totalorder %s115, 0
      %p271 = por %p269, %p270
      %p272 = scmp.ne.s32.totalorder %s264, %s266
      %p273 = scmp.eq.s32.totalorder %s120, 1
      %p274 = por %p272, %p273
      %p275 = scmp.ne.s32.totalorder %s266, %s267
      %p276 = scmp.eq.s32.totalorder %s120, 0
      %p277 = por %p275, %p276
      %p278 = scmp.ne.s32.totalorder %s266, %s267
      %p279 = scmp.eq.s32.totalorder %s121, 1
      %p280 = por %p278, %p279
      %p282 = scmp.ne.s32.totalorder %s267, %s281
      %p283 = scmp.eq.s32.totalorder %s121, 0
      %p284 = por %p282, %p283
      %s286 = sadd.s32 %s285, 1
      %p289 = scmp.eq.s32.totalorder %s115, 1
      %p290 = scmp.ne.s32.totalorder %s285, %s287
      %p291 = scmp.eq.s32.totalorder %s115, 0
      %p292 = por %p290, %p291
      %p293 = scmp.ne.s32.totalorder %s285, %s287
      %p294 = scmp.eq.s32.totalorder %s120, 1
      %p295 = por %p293, %p294
      %p296 = scmp.ne.s32.totalorder %s287, %s288
      %p297 = scmp.eq.s32.totalorder %s120, 0
      %p298 = por %p296, %p297
      %p299 = scmp.ne.s32.totalorder %s287, %s288
      %p300 = scmp.eq.s32.totalorder %s121, 1
      %p301 = por %p299, %p300
      %p303 = scmp.ne.s32.totalorder %s288, %s302
      %p304 = scmp.eq.s32.totalorder %s121, 0
      %p305 = por %p303, %p304
      %s307 = sadd.s32 %s306, 1
      %p310 = scmp.eq.s32.totalorder %s115, 1
      %p311 = scmp.ne.s32.totalorder %s306, %s308
      %p312 = scmp.eq.s32.totalorder %s115, 0
      %p313 = por %p311, %p312
      %p314 = scmp.ne.s32.totalorder %s306, %s308
      %p315 = scmp.eq.s32.totalorder %s120, 1
      %p316 = por %p314, %p315
      %p317 = scmp.ne.s32.totalorder %s308, %s309
      %p318 = scmp.eq.s32.totalorder %s120, 0
      %p319 = por %p317, %p318
      %p320 = scmp.ne.s32.totalorder %s308, %s309
      %p321 = scmp.eq.s32.totalorder %s121, 1
      %p322 = por %p320, %p321
      %p324 = scmp.ne.s32.totalorder %s309, %s323
      %p325 = scmp.eq.s32.totalorder %s121, 0
      %p326 = por %p324, %p325
      %s328 = sadd.s32 %s327, 1
      %p331 = scmp.eq.s32.totalorder %s115, 1
      %p332 = scmp.ne.s32.totalorder %s327, %s329
      %p333 = scmp.eq.s32.totalorder %s115, 0
      %p334 = por %p332, %p333
      %p335 = scmp.ne.s32.totalorder %s327, %s329
      %p336 = scmp.eq.s32.totalorder %s120, 1
      %p337 = por %p335, %p336
      %p338 = scmp.ne.s32.totalorder %s329, %s330
      %p339 = scmp.eq.s32.totalorder %s120, 0
      %p340 = por %p338, %p339
      %p341 = scmp.ne.s32.totalorder %s329, %s330
      %p342 = scmp.eq.s32.totalorder %s121, 1
      %p343 = por %p341, %p342
      %p345 = scmp.ne.s32.totalorder %s330, %s344
      %p346 = scmp.eq.s32.totalorder %s121, 0
      %p347 = por %p345, %p346
      %s349 = sadd.s32 %s348, 1
      %p352 = scmp.eq.s32.totalorder %s115, 1
      %p353 = scmp.ne.s32.totalorder %s348, %s350
      %p354 = scmp.eq.s32.totalorder %s115, 0
      %p355 = por %p353, %p354
      %p356 = scmp.ne.s32.totalorder %s348, %s350
      %p357 = scmp.eq.s32.totalorder %s120, 1
      %p358 = por %p356, %p357
      %p359 = scmp.ne.s32.totalorder %s350, %s351
      %p360 = scmp.eq.s32.totalorder %s120, 0
      %p361 = por %p359, %p360
      %p362 = scmp.ne.s32.totalorder %s350, %s351
      %p363 = scmp.eq.s32.totalorder %s121, 1
      %p364 = por %p362, %p363
      %p366 = scmp.ne.s32.totalorder %s351, %s365
      %p367 = scmp.eq.s32.totalorder %s121, 0
      %p368 = por %p366, %p367
      %s370 = sadd.s32 %s369, 1
      %p373 = scmp.eq.s32.totalorder %s115, 1
      %p374 = scmp.ne.s32.totalorder %s369, %s371
      %p375 = scmp.eq.s32.totalorder %s115, 0
      %p376 = por %p374, %p375
      %p377 = scmp.ne.s32.totalorder %s369, %s371
      %p378 = scmp.eq.s32.totalorder %s120, 1
      %p379 = por %p377, %p378
      %p380 = scmp.ne.s32.totalorder %s371, %s372
      %p381 = scmp.eq.s32.totalorder %s120, 0
      %p382 = por %p380, %p381
      %p383 = scmp.ne.s32.totalorder %s371, %s372
      %p384 = scmp.eq.s32.totalorder %s121, 1
      %p385 = por %p383, %p384
      %p387 = scmp.ne.s32.totalorder %s372, %s386
      %p388 = scmp.eq.s32.totalorder %s121, 0
      %p389 = por %p387, %p388
      %s391 = sadd.s32 %s390, 1
      %p394 = scmp.eq.s32.totalorder %s115, 1
      %p395 = scmp.ne.s32.totalorder %s390, %s392
      %p396 = scmp.eq.s32.totalorder %s115, 0
      %p397 = por %p395, %p396
      %p398 = scmp.ne.s32.totalorder %s390, %s392
      %p399 = scmp.eq.s32.totalorder %s120, 1
      %p400 = por %p398, %p399
      %p401 = scmp.ne.s32.totalorder %s392, %s393
      %p402 = scmp.eq.s32.totalorder %s120, 0
      %p403 = por %p401, %p402
      %p404 = scmp.ne.s32.totalorder %s392, %s393
      %p405 = scmp.eq.s32.totalorder %s121, 1
      %p406 = por %p404, %p405
      %p408 = scmp.ne.s32.totalorder %s393, %s407
      %p409 = scmp.eq.s32.totalorder %s121, 0
      %p410 = por %p408, %p409
      %s412 = sadd.s32 %s411, 1
      %p415 = scmp.eq.s32.totalorder %s115, 1
      %p416 = scmp.ne.s32.totalorder %s411, %s413
      %p417 = scmp.eq.s32.totalorder %s115, 0
      %p418 = por %p416, %p417
      %p419 = scmp.ne.s32.totalorder %s411, %s413
      %p420 = scmp.eq.s32.totalorder %s120, 1
      %p421 = por %p419, %p420
      %p422 = scmp.ne.s32.totalorder %s413, %s414
      %p423 = scmp.eq.s32.totalorder %s120, 0
      %p424 = por %p422, %p423
      %p425 = scmp.ne.s32.totalorder %s413, %s414
      %p426 = scmp.eq.s32.totalorder %s121, 1
      %p427 = por %p425, %p426
      %p429 = scmp.ne.s32.totalorder %s414, %s428
      %p430 = scmp.eq.s32.totalorder %s121, 0
      %p431 = por %p429, %p430
      %s433 = sadd.s32 %s432, 1
      %p436 = scmp.eq.s32.totalorder %s115, 1
      %p437 = scmp.ne.s32.totalorder %s432, %s434
      %p438 = scmp.eq.s32.totalorder %s115, 0
      %p439 = por %p437, %p438
      %p440 = scmp.ne.s32.totalorder %s432, %s434
      %p441 = scmp.eq.s32.totalorder %s120, 1
      %p442 = por %p440, %p441
      %p443 = scmp.ne.s32.totalorder %s434, %s435
      %p444 = scmp.eq.s32.totalorder %s120, 0
      %p445 = por %p443, %p444
      %p446 = scmp.ne.s32.totalorder %s434, %s435
      %p447 = scmp.eq.s32.totalorder %s121, 1
      %p448 = por %p446, %p447
      %p450 = scmp.ne.s32.totalorder %s435, %s449
      %p451 = scmp.eq.s32.totalorder %s121, 0
      %p452 = por %p450, %p451
      %s454 = sadd.s32 %s453, 1
      %p457 = scmp.eq.s32.totalorder %s115, 1
      %p458 = scmp.ne.s32.totalorder %s453, %s455
      %p459 = scmp.eq.s32.totalorder %s115, 0
      %p460 = por %p458, %p459
      %p461 = scmp.ne.s32.totalorder %s453, %s455
      %p462 = scmp.eq.s32.totalorder %s120, 1
      %p463 = por %p461, %p462
      %p464 = scmp.ne.s32.totalorder %s455, %s456
      %p465 = scmp.eq.s32.totalorder %s120, 0
      %p466 = por %p464, %p465
      %p467 = scmp.ne.s32.totalorder %s455, %s456
      %p468 = scmp.eq.s32.totalorder %s121, 1
      %p469 = por %p467, %p468
      %p471 = scmp.ne.s32.totalorder %s456, %s470
      %p472 = scmp.eq.s32.totalorder %s121, 0
      %p473 = por %p471, %p472
      %s475 = sadd.s32 %s474, 1
      %p478 = scmp.eq.s32.totalorder %s115, 1
      %p479 = scmp.ne.s32.totalorder %s474, %s476
      %p480 = scmp.eq.s32.totalorder %s115, 0
      %p481 = por %p479, %p480
      %p482 = scmp.ne.s32.totalorder %s474, %s476
      %p483 = scmp.eq.s32.totalorder %s120, 1
      %p484 = por %p482, %p483
      %p485 = scmp.ne.s32.totalorder %s476, %s477
      %p486 = scmp.eq.s32.totalorder %s120, 0
      %p487 = por %p485, %p486
      %p488 = scmp.ne.s32.totalorder %s476, %s477
      %p489 = scmp.eq.s32.totalorder %s121, 1
      %p490 = por %p488, %p489
      %p492 = scmp.ne.s32.totalorder %s477, %s491
      %p493 = scmp.eq.s32.totalorder %s121, 0
      %p494 = por %p492, %p493
      %s496 = sadd.s32 %s495, 1
      %p499 = scmp.eq.s32.totalorder %s115, 1
      %p500 = scmp.ne.s32.totalorder %s495, %s497
      %p501 = scmp.eq.s32.totalorder %s115, 0
      %p502 = por %p500, %p501
      %p503 = scmp.ne.s32.totalorder %s495, %s497
      %p504 = scmp.eq.s32.totalorder %s120, 1
      %p505 = por %p503, %p504
      %p506 = scmp.ne.s32.totalorder %s497, %s498
      %p507 = scmp.eq.s32.totalorder %s120, 0
      %p508 = por %p506, %p507
      %p509 = scmp.ne.s32.totalorder %s497, %s498
      %p510 = scmp.eq.s32.totalorder %s121, 1
      %p511 = por %p509, %p510
      %p513 = scmp.ne.s32.totalorder %s498, %s512
      %p514 = scmp.eq.s32.totalorder %s121, 0
      %p515 = por %p513, %p514
      %s517 = sadd.s32 %s516, 1
      %p520 = scmp.eq.s32.totalorder %s115, 1
      %p521 = scmp.ne.s32.totalorder %s516, %s518
      %p522 = scmp.eq.s32.totalorder %s115, 0
      %p523 = por %p521, %p522
      %p524 = scmp.ne.s32.totalorder %s516, %s518
      %p525 = scmp.eq.s32.totalorder %s120, 1
      %p526 = por %p524, %p525
      %p527 = scmp.ne.s32.totalorder %s518, %s519
      %p528 = scmp.eq.s32.totalorder %s120, 0
      %p529 = por %p527, %p528
      %p530 = scmp.ne.s32.totalorder %s518, %s519
      %p531 = scmp.eq.s32.totalorder %s121, 1
      %p532 = por %p530, %p531
      %p534 = scmp.ne.s32.totalorder %s519, %s533
      %p535 = scmp.eq.s32.totalorder %s121, 0
      %p536 = por %p534, %p535
      %s538 = sadd.s32 %s537, 1
      %p541 = scmp.eq.s32.totalorder %s115, 1
      %p542 = scmp.ne.s32.totalorder %s537, %s539
      %p543 = scmp.eq.s32.totalorder %s115, 0
      %p544 = por %p542, %p543
      %p545 = scmp.ne.s32.totalorder %s537, %s539
      %p546 = scmp.eq.s32.totalorder %s120, 1
      %p547 = por %p545, %p546
      %p548 = scmp.ne.s32.totalorder %s539, %s540
      %p549 = scmp.eq.s32.totalorder %s120, 0
      %p550 = por %p548, %p549
      %p551 = scmp.ne.s32.totalorder %s539, %s540
      %p552 = scmp.eq.s32.totalorder %s121, 1
      %p553 = por %p551, %p552
      %p555 = scmp.ne.s32.totalorder %s540, %s554
      %p556 = scmp.eq.s32.totalorder %s121, 0
      %p557 = por %p555, %p556
      %s559 = sadd.s32 %s558, 1
      %p562 = scmp.eq.s32.totalorder %s115, 1
      %p563 = scmp.ne.s32.totalorder %s558, %s560
      %p564 = scmp.eq.s32.totalorder %s115, 0
      %p565 = por %p563, %p564
      %p566 = scmp.ne.s32.totalorder %s558, %s560
      %p567 = scmp.eq.s32.totalorder %s120, 1
      %p568 = por %p566, %p567
      %p569 = scmp.ne.s32.totalorder %s560, %s561
      %p570 = scmp.eq.s32.totalorder %s120, 0
      %p571 = por %p569, %p570
      %p572 = scmp.ne.s32.totalorder %s560, %s561
      %p573 = scmp.eq.s32.totalorder %s121, 1
      %p574 = por %p572, %p573
      %p576 = scmp.ne.s32.totalorder %s561, %s575
      %p577 = scmp.eq.s32.totalorder %s121, 0
      %p578 = por %p576, %p577
      %s580 = sadd.s32 %s579, 1
      %p583 = scmp.eq.s32.totalorder %s115, 1
      %p584 = scmp.ne.s32.totalorder %s579, %s581
      %p585 = scmp.eq.s32.totalorder %s115, 0
      %p586 = por %p584, %p585
      %p587 = scmp.ne.s32.totalorder %s579, %s581
      %p588 = scmp.eq.s32.totalorder %s120, 1
      %p589 = por %p587, %p588
      %p590 = scmp.ne.s32.totalorder %s581, %s582
      %p591 = scmp.eq.s32.totalorder %s120, 0
      %p592 = por %p590, %p591
      %p593 = scmp.ne.s32.totalorder %s581, %s582
      %p594 = scmp.eq.s32.totalorder %s121, 1
      %p595 = por %p593, %p594
      %p597 = scmp.ne.s32.totalorder %s582, %s596
      %p598 = scmp.eq.s32.totalorder %s121, 0
      %p599 = por %p597, %p598
      %s601 = sadd.s32 %s600, 1
      %p604 = scmp.eq.s32.totalorder %s115, 1
      %p605 = scmp.ne.s32.totalorder %s600, %s602
      %p606 = scmp.eq.s32.totalorder %s115, 0
      %p607 = por %p605, %p606
      %p608 = scmp.ne.s32.totalorder %s600, %s602
      %p609 = scmp.eq.s32.totalorder %s120, 1
      %p610 = por %p608, %p609
      %p611 = scmp.ne.s32.totalorder %s602, %s603
      %p612 = scmp.eq.s32.totalorder %s120, 0
      %p613 = por %p611, %p612
      %p614 = scmp.ne.s32.totalorder %s602, %s603
      %p615 = scmp.eq.s32.totalorder %s121, 1
      %p616 = por %p614, %p615
      %p618 = scmp.ne.s32.totalorder %s603, %s617
      %p619 = scmp.eq.s32.totalorder %s121, 0
      %p620 = por %p618, %p619
      %s622 = sadd.s32 %s621, 1
      %p625 = scmp.eq.s32.totalorder %s115, 1
      %p626 = scmp.ne.s32.totalorder %s621, %s623
      %p627 = scmp.eq.s32.totalorder %s115, 0
      %p628 = por %p626, %p627
      %p629 = scmp.ne.s32.totalorder %s621, %s623
      %p630 = scmp.eq.s32.totalorder %s120, 1
      %p631 = por %p629, %p630
      %p632 = scmp.ne.s32.totalorder %s623, %s624
      %p633 = scmp.eq.s32.totalorder %s120, 0
      %p634 = por %p632, %p633
      %p635 = scmp.ne.s32.totalorder %s623, %s624
      %p636 = scmp.eq.s32.totalorder %s121, 1
      %p637 = por %p635, %p636
      %p639 = scmp.ne.s32.totalorder %s624, %s638
      %p640 = scmp.eq.s32.totalorder %s121, 0
      %p641 = por %p639, %p640
      %s643 = sadd.s32 %s642, 1
      %p646 = scmp.eq.s32.totalorder %s115, 1
      %p647 = scmp.ne.s32.totalorder %s642, %s644
      %p648 = scmp.eq.s32.totalorder %s115, 0
      %p649 = por %p647, %p648
      %p650 = scmp.ne.s32.totalorder %s642, %s644
      %p651 = scmp.eq.s32.totalorder %s120, 1
      %p652 = por %p650, %p651
      %p653 = scmp.ne.s32.totalorder %s644, %s645
      %p654 = scmp.eq.s32.totalorder %s120, 0
      %p655 = por %p653, %p654
      %p656 = scmp.ne.s32.totalorder %s644, %s645
      %p657 = scmp.eq.s32.totalorder %s121, 1
      %p658 = por %p656, %p657
      %p660 = scmp.ne.s32.totalorder %s645, %s659
      %p661 = scmp.eq.s32.totalorder %s121, 0
      %p662 = por %p660, %p661
      %s664 = sadd.s32 %s663, 1
      %p667 = scmp.eq.s32.totalorder %s115, 1
      %p668 = scmp.ne.s32.totalorder %s663, %s665
      %p669 = scmp.eq.s32.totalorder %s115, 0
      %p670 = por %p668, %p669
      %p671 = scmp.ne.s32.totalorder %s663, %s665
      %p672 = scmp.eq.s32.totalorder %s120, 1
      %p673 = por %p671, %p672
      %p674 = scmp.ne.s32.totalorder %s665, %s666
      %p675 = scmp.eq.s32.totalorder %s120, 0
      %p676 = por %p674, %p675
      %p677 = scmp.ne.s32.totalorder %s665, %s666
      %p678 = scmp.eq.s32.totalorder %s121, 1
      %p679 = por %p677, %p678
      %p681 = scmp.ne.s32.totalorder %s666, %s680
      %p682 = scmp.eq.s32.totalorder %s121, 0
      %p683 = por %p681, %p682
      %s685 = sadd.s32 %s684, 1
      %p688 = scmp.eq.s32.totalorder %s115, 1
      %p689 = scmp.ne.s32.totalorder %s684, %s686
      %p690 = scmp.eq.s32.totalorder %s115, 0
      %p691 = por %p689, %p690
      %p692 = scmp.ne.s32.totalorder %s684, %s686
      %p693 = scmp.eq.s32.totalorder %s120, 1
      %p694 = por %p692, %p693
      %p695 = scmp.ne.s32.totalorder %s686, %s687
      %p696 = scmp.eq.s32.totalorder %s120, 0
      %p697 = por %p695, %p696
      %p698 = scmp.ne.s32.totalorder %s686, %s687
      %p699 = scmp.eq.s32.totalorder %s121, 1
      %p700 = por %p698, %p699
      %p702 = scmp.ne.s32.totalorder %s687, %s701
      %p703 = scmp.eq.s32.totalorder %s121, 0
      %p704 = por %p702, %p703
      %s706 = sadd.s32 %s705, 1
      %p709 = scmp.eq.s32.totalorder %s115, 1
      %p710 = scmp.ne.s32.totalorder %s705, %s707
      %p711 = scmp.eq.s32.totalorder %s115, 0
      %p712 = por %p710, %p711
      %p713 = scmp.ne.s32.totalorder %s705, %s707
      %p714 = scmp.eq.s32.totalorder %s120, 1
      %p715 = por %p713, %p714
      %p716 = scmp.ne.s32.totalorder %s707, %s708
      %p717 = scmp.eq.s32.totalorder %s120, 0
      %p718 = por %p716, %p717
      %p719 = scmp.ne.s32.totalorder %s707, %s708
      %p720 = scmp.eq.s32.totalorder %s121, 1
      %p721 = por %p719, %p720
      %p723 = scmp.ne.s32.totalorder %s708, %s722
      %p724 = scmp.eq.s32.totalorder %s121, 0
      %p725 = por %p723, %p724
      %s727 = sadd.s32 %s726, 1
      %p730 = scmp.eq.s32.totalorder %s115, 1
      %p731 = scmp.ne.s32.totalorder %s726, %s728
      %p732 = scmp.eq.s32.totalorder %s115, 0
      %p733 = por %p731, %p732
      %p734 = scmp.ne.s32.totalorder %s726, %s728
      %p735 = scmp.eq.s32.totalorder %s120, 1
      %p736 = por %p734, %p735
      %p737 = scmp.ne.s32.totalorder %s728, %s729
      %p738 = scmp.eq.s32.totalorder %s120, 0
      %p739 = por %p737, %p738
      %p740 = scmp.ne.s32.totalorder %s728, %s729
      %p741 = scmp.eq.s32.totalorder %s121, 1
      %p742 = por %p740, %p741
      %p744 = scmp.ne.s32.totalorder %s729, %s743
      %p745 = scmp.eq.s32.totalorder %s121, 0
      %p746 = por %p744, %p745
      %s748 = sadd.s32 %s747, 1
      %p751 = scmp.eq.s32.totalorder %s115, 1
      %p752 = scmp.ne.s32.totalorder %s747, %s749
      %p753 = scmp.eq.s32.totalorder %s115, 0
      %p754 = por %p752, %p753
      %p755 = scmp.ne.s32.totalorder %s747, %s749
      %p756 = scmp.eq.s32.totalorder %s120, 1
      %p757 = por %p755, %p756
      %p758 = scmp.ne.s32.totalorder %s749, %s750
      %p759 = scmp.eq.s32.totalorder %s120, 0
      %p760 = por %p758, %p759
      %p761 = scmp.ne.s32.totalorder %s749, %s750
      %p762 = scmp.eq.s32.totalorder %s121, 1
      %p763 = por %p761, %p762
      %p765 = scmp.ne.s32.totalorder %s750, %s764
      %p766 = scmp.eq.s32.totalorder %s121, 0
      %p767 = por %p765, %p766
      %s769 = sadd.s32 %s768, 1
      %p772 = scmp.eq.s32.totalorder %s115, 1
      %p773 = scmp.ne.s32.totalorder %s768, %s770
      %p774 = scmp.eq.s32.totalorder %s115, 0
      %p775 = por %p773, %p774
      %p776 = scmp.ne.s32.totalorder %s768, %s770
      %p777 = scmp.eq.s32.totalorder %s120, 1
      %p778 = por %p776, %p777
      %p779 = scmp.ne.s32.totalorder %s770, %s771
      %p780 = scmp.eq.s32.totalorder %s120, 0
      %p781 = por %p779, %p780
      %p782 = scmp.ne.s32.totalorder %s770, %s771
      %p783 = scmp.eq.s32.totalorder %s121, 1
      %p784 = por %p782, %p783
      %p786 = scmp.ne.s32.totalorder %s771, %s785
      %p787 = scmp.eq.s32.totalorder %s121, 0
      %p788 = por %p786, %p787
      %s790 = sadd.s32 %s789, 1
      %p793 = scmp.eq.s32.totalorder %s115, 1
      %p794 = scmp.ne.s32.totalorder %s789, %s791
      %p795 = scmp.eq.s32.totalorder %s115, 0
      %p796 = por %p794, %p795
      %p797 = scmp.ne.s32.totalorder %s789, %s791
      %p798 = scmp.eq.s32.totalorder %s120, 1
      %p799 = por %p797, %p798
      %p800 = scmp.ne.s32.totalorder %s791, %s792
      %p801 = scmp.eq.s32.totalorder %s120, 0
      %p802 = por %p800, %p801
      %p803 = scmp.ne.s32.totalorder %s791, %s792
      %p804 = scmp.eq.s32.totalorder %s121, 1
      %p805 = por %p803, %p804
      %p807 = scmp.ne.s32.totalorder %s792, %s806
      %p808 = scmp.eq.s32.totalorder %s121, 0
      %p809 = por %p807, %p808
      %s811 = sadd.s32 %s810, 1
      %p814 = scmp.eq.s32.totalorder %s115, 1
      %p815 = scmp.ne.s32.totalorder %s810, %s812
      %p816 = scmp.eq.s32.totalorder %s115, 0
      %p817 = por %p815, %p816
      %p818 = scmp.ne.s32.totalorder %s810, %s812
      %p819 = scmp.eq.s32.totalorder %s120, 1
      %p820 = por %p818, %p819
      %p821 = scmp.ne.s32.totalorder %s812, %s813
      %p822 = scmp.eq.s32.totalorder %s120, 0
      %p823 = por %p821, %p822
      %p824 = scmp.ne.s32.totalorder %s812, %s813
      %p825 = scmp.eq.s32.totalorder %s121, 1
      %p826 = por %p824, %p825
      %p828 = scmp.ne.s32.totalorder %s813, %s827
      %p829 = scmp.eq.s32.totalorder %s121, 0
      %p830 = por %p828, %p829
      %s832 = sadd.s32 %s831, 1
      %p835 = scmp.eq.s32.totalorder %s115, 1
      %p836 = scmp.ne.s32.totalorder %s831, %s833
      %p837 = scmp.eq.s32.totalorder %s115, 0
      %p838 = por %p836, %p837
      %p839 = scmp.ne.s32.totalorder %s831, %s833
      %p840 = scmp.eq.s32.totalorder %s120, 1
      %p841 = por %p839, %p840
      %p842 = scmp.ne.s32.totalorder %s833, %s834
      %p843 = scmp.eq.s32.totalorder %s120, 0
      %p844 = por %p842, %p843
      %p845 = scmp.ne.s32.totalorder %s833, %s834
      %p846 = scmp.eq.s32.totalorder %s121, 1
      %p847 = por %p845, %p846
      %p849 = scmp.ne.s32.totalorder %s834, %s848
      %p850 = scmp.eq.s32.totalorder %s121, 0
      %p851 = por %p849, %p850
      %s853 = sadd.s32 %s852, 1
      %p856 = scmp.eq.s32.totalorder %s115, 1
      %p857 = scmp.ne.s32.totalorder %s852, %s854
      %p858 = scmp.eq.s32.totalorder %s115, 0
      %p859 = por %p857, %p858
      %p860 = scmp.ne.s32.totalorder %s852, %s854
      %p861 = scmp.eq.s32.totalorder %s120, 1
      %p862 = por %p860, %p861
      %p863 = scmp.ne.s32.totalorder %s854, %s855
      %p864 = scmp.eq.s32.totalorder %s120, 0
      %p865 = por %p863, %p864
      %p866 = scmp.ne.s32.totalorder %s854, %s855
      %p867 = scmp.eq.s32.totalorder %s121, 1
      %p868 = por %p866, %p867
      %p870 = scmp.ne.s32.totalorder %s855, %s869
      %p871 = scmp.eq.s32.totalorder %s121, 0
      %p872 = por %p870, %p871
      %s874 = sadd.s32 %s873, 1
      %p877 = scmp.eq.s32.totalorder %s115, 1
      %p878 = scmp.ne.s32.totalorder %s873, %s875
      %p879 = scmp.eq.s32.totalorder %s115, 0
      %p880 = por %p878, %p879
      %p881 = scmp.ne.s32.totalorder %s873, %s875
      %p882 = scmp.eq.s32.totalorder %s120, 1
      %p883 = por %p881, %p882
      %p884 = scmp.ne.s32.totalorder %s875, %s876
      %p885 = scmp.eq.s32.totalorder %s120, 0
      %p886 = por %p884, %p885
      %p887 = scmp.ne.s32.totalorder %s875, %s876
      %p888 = scmp.eq.s32.totalorder %s121, 1
      %p889 = por %p887, %p888
      %p891 = scmp.ne.s32.totalorder %s876, %s890
      %p892 = scmp.eq.s32.totalorder %s121, 0
      %p893 = por %p891, %p892
      %s895 = sadd.s32 %s894, 1
      %p898 = scmp.eq.s32.totalorder %s115, 1
      %p899 = scmp.ne.s32.totalorder %s894, %s896
      %p900 = scmp.eq.s32.totalorder %s115, 0
      %p901 = por %p899, %p900
      %p902 = scmp.ne.s32.totalorder %s894, %s896
      %p903 = scmp.eq.s32.totalorder %s120, 1
      %p904 = por %p902, %p903
      %p905 = scmp.ne.s32.totalorder %s896, %s897
      %p906 = scmp.eq.s32.totalorder %s120, 0
      %p907 = por %p905, %p906
      %p908 = scmp.ne.s32.totalorder %s896, %s897
      %p909 = scmp.eq.s32.totalorder %s121, 1
      %p910 = por %p908, %p909
      %p912 = scmp.ne.s32.totalorder %s897, %s911
      %p913 = scmp.eq.s32.totalorder %s121, 0
      %p914 = por %p912, %p913
      %s916 = sadd.s32 %s915, 1
      %p919 = scmp.eq.s32.totalorder %s115, 1
      %p920 = scmp.ne.s32.totalorder %s915, %s917
      %p921 = scmp.eq.s32.totalorder %s115, 0
      %p922 = por %p920, %p921
      %p923 = scmp.ne.s32.totalorder %s915, %s917
      %p924 = scmp.eq.s32.totalorder %s120, 1
      %p925 = por %p923, %p924
      %p926 = scmp.ne.s32.totalorder %s917, %s918
      %p927 = scmp.eq.s32.totalorder %s120, 0
      %p928 = por %p926, %p927
      %p929 = scmp.ne.s32.totalorder %s917, %s918
      %p930 = scmp.eq.s32.totalorder %s121, 1
      %p931 = por %p929, %p930
      %p933 = scmp.ne.s32.totalorder %s918, %s932
      %p934 = scmp.eq.s32.totalorder %s121, 0
      %p935 = por %p933, %p934
      %s937 = sadd.s32 %s936, 1
      %p940 = scmp.eq.s32.totalorder %s115, 1
      %p941 = scmp.ne.s32.totalorder %s936, %s938
      %p942 = scmp.eq.s32.totalorder %s115, 0
      %p943 = por %p941, %p942
      %p944 = scmp.ne.s32.totalorder %s936, %s938
      %p945 = scmp.eq.s32.totalorder %s120, 1
      %p946 = por %p944, %p945
      %p947 = scmp.ne.s32.totalorder %s938, %s939
      %p948 = scmp.eq.s32.totalorder %s120, 0
      %p949 = por %p947, %p948
      %p950 = scmp.ne.s32.totalorder %s938, %s939
      %p951 = scmp.eq.s32.totalorder %s121, 1
      %p952 = por %p950, %p951
      %p954 = scmp.ne.s32.totalorder %s939, %s953
      %p955 = scmp.eq.s32.totalorder %s121, 0
      %p956 = por %p954, %p955
      %s958 = sadd.s32 %s957, 1
      %p961 = scmp.eq.s32.totalorder %s115, 1
      %p962 = scmp.ne.s32.totalorder %s957, %s959
      %p963 = scmp.eq.s32.totalorder %s115, 0
      %p964 = por %p962, %p963
      %p965 = scmp.ne.s32.totalorder %s957, %s959
      %p966 = scmp.eq.s32.totalorder %s120, 1
      %p967 = por %p965, %p966
      %p968 = scmp.ne.s32.totalorder %s959, %s960
      %p969 = scmp.eq.s32.totalorder %s120, 0
      %p970 = por %p968, %p969
      %p971 = scmp.ne.s32.totalorder %s959, %s960
      %p972 = scmp.eq.s32.totalorder %s121, 1
      %p973 = por %p971, %p972
      %p975 = scmp.ne.s32.totalorder %s960, %s974
      %p976 = scmp.eq.s32.totalorder %s121, 0
      %p977 = por %p975, %p976
      %s979 = sadd.s32 %s978, 1
      %p982 = scmp.eq.s32.totalorder %s115, 1
      %p983 = scmp.ne.s32.totalorder %s978, %s980
      %p984 = scmp.eq.s32.totalorder %s115, 0
      %p985 = por %p983, %p984
      %p986 = scmp.ne.s32.totalorder %s978, %s980
      %p987 = scmp.eq.s32.totalorder %s120, 1
      %p988 = por %p986, %p987
      %p989 = scmp.ne.s32.totalorder %s980, %s981
      %p990 = scmp.eq.s32.totalorder %s120, 0
      %p991 = por %p989, %p990
      %p992 = scmp.ne.s32.totalorder %s980, %s981
      %p993 = scmp.eq.s32.totalorder %s121, 1
      %p994 = por %p992, %p993
      %p996 = scmp.ne.s32.totalorder %s981, %s995
      %p997 = scmp.eq.s32.totalorder %s121, 0
      %p998 = por %p996, %p997
      %s1000 = sadd.s32 %s999, 1
      %p1003 = scmp.eq.s32.totalorder %s115, 1
      %p1004 = scmp.ne.s32.totalorder %s999, %s1001
      %p1005 = scmp.eq.s32.totalorder %s115, 0
      %p1006 = por %p1004, %p1005
      %p1007 = scmp.ne.s32.totalorder %s999, %s1001
      %p1008 = scmp.eq.s32.totalorder %s120, 1
      %p1009 = por %p1007, %p1008
      %p1010 = scmp.ne.s32.totalorder %s1001, %s1002
      %p1011 = scmp.eq.s32.totalorder %s120, 0
      %p1012 = por %p1010, %p1011
      %p1013 = scmp.ne.s32.totalorder %s1001, %s1002
      %p1014 = scmp.eq.s32.totalorder %s121, 1
      %p1015 = por %p1013, %p1014
      %p1017 = scmp.ne.s32.totalorder %s1002, %s1016
      %p1018 = scmp.eq.s32.totalorder %s121, 0
      %p1019 = por %p1017, %p1018
      %s1021 = sadd.s32 %s1020, 1
      %p1024 = scmp.eq.s32.totalorder %s115, 1
      %p1025 = scmp.ne.s32.totalorder %s1020, %s1022
      %p1026 = scmp.eq.s32.totalorder %s115, 0
      %p1027 = por %p1025, %p1026
      %p1028 = scmp.ne.s32.totalorder %s1020, %s1022
      %p1029 = scmp.eq.s32.totalorder %s120, 1
      %p1030 = por %p1028, %p1029
      %p1031 = scmp.ne.s32.totalorder %s1022, %s1023
      %p1032 = scmp.eq.s32.totalorder %s120, 0
      %p1033 = por %p1031, %p1032
      %p1034 = scmp.ne.s32.totalorder %s1022, %s1023
      %p1035 = scmp.eq.s32.totalorder %s121, 1
      %p1036 = por %p1034, %p1035
      %p1038 = scmp.ne.s32.totalorder %s1023, %s1037
      %p1039 = scmp.eq.s32.totalorder %s121, 0
      %p1040 = por %p1038, %p1039
      %s1042 = sadd.s32 %s1041, 1
      %p1045 = scmp.eq.s32.totalorder %s115, 1
      %p1046 = scmp.ne.s32.totalorder %s1041, %s1043
      %p1047 = scmp.eq.s32.totalorder %s115, 0
      %p1048 = por %p1046, %p1047
      %p1049 = scmp.ne.s32.totalorder %s1041, %s1043
      %p1050 = scmp.eq.s32.totalorder %s120, 1
      %p1051 = por %p1049, %p1050
      %p1052 = scmp.ne.s32.totalorder %s1043, %s1044
      %p1053 = scmp.eq.s32.totalorder %s120, 0
      %p1054 = por %p1052, %p1053
      %p1055 = scmp.ne.s32.totalorder %s1043, %s1044
      %p1056 = scmp.eq.s32.totalorder %s121, 1
      %p1057 = por %p1055, %p1056
      %p1059 = scmp.ne.s32.totalorder %s1044, %s1058
      %p1060 = scmp.eq.s32.totalorder %s121, 0
      %p1061 = por %p1059, %p1060
      %s1063 = sadd.s32 %s1062, 1
      %p1066 = scmp.eq.s32.totalorder %s115, 1
      %p1067 = scmp.ne.s32.totalorder %s1062, %s1064
      %p1068 = scmp.eq.s32.totalorder %s115, 0
      %p1069 = por %p1067, %p1068
      %p1070 = scmp.ne.s32.totalorder %s1062, %s1064
      %p1071 = scmp.eq.s32.totalorder %s120, 1
      %p1072 = por %p1070, %p1071
      %p1073 = scmp.ne.s32.totalorder %s1064, %s1065
      %p1074 = scmp.eq.s32.totalorder %s120, 0
      %p1075 = por %p1073, %p1074
      %p1076 = scmp.ne.s32.totalorder %s1064, %s1065
      %p1077 = scmp.eq.s32.totalorder %s121, 1
      %p1078 = por %p1076, %p1077
      %p1080 = scmp.ne.s32.totalorder %s1065, %s1079
      %p1081 = scmp.eq.s32.totalorder %s121, 0
      %p1082 = por %p1080, %p1081
      %s1084 = sadd.s32 %s1083, 1
      %p1087 = scmp.eq.s32.totalorder %s115, 1
      %p1088 = scmp.ne.s32.totalorder %s1083, %s1085
      %p1089 = scmp.eq.s32.totalorder %s115, 0
      %p1090 = por %p1088, %p1089
      %p1091 = scmp.ne.s32.totalorder %s1083, %s1085
      %p1092 = scmp.eq.s32.totalorder %s120, 1
      %p1093 = por %p1091, %p1092
      %p1094 = scmp.ne.s32.totalorder %s1085, %s1086
      %p1095 = scmp.eq.s32.totalorder %s120, 0
      %p1096 = por %p1094, %p1095
      %p1097 = scmp.ne.s32.totalorder %s1085, %s1086
      %p1098 = scmp.eq.s32.totalorder %s121, 1
      %p1099 = por %p1097, %p1098
      %p1101 = scmp.ne.s32.totalorder %s1086, %s1100
      %p1102 = scmp.eq.s32.totalorder %s121, 0
      %p1103 = por %p1101, %p1102
      %s1105 = sadd.s32 %s1104, 1
      %p1108 = scmp.eq.s32.totalorder %s115, 1
      %p1109 = scmp.ne.s32.totalorder %s1104, %s1106
      %p1110 = scmp.eq.s32.totalorder %s115, 0
      %p1111 = por %p1109, %p1110
      %p1112 = scmp.ne.s32.totalorder %s1104, %s1106
      %p1113 = scmp.eq.s32.totalorder %s120, 1
      %p1114 = por %p1112, %p1113
      %p1115 = scmp.ne.s32.totalorder %s1106, %s1107
      %p1116 = scmp.eq.s32.totalorder %s120, 0
      %p1117 = por %p1115, %p1116
      %p1118 = scmp.ne.s32.totalorder %s1106, %s1107
      %p1119 = scmp.eq.s32.totalorder %s121, 1
      %p1120 = por %p1118, %p1119
      %p1122 = scmp.ne.s32.totalorder %s1107, %s1121
      %p1123 = scmp.eq.s32.totalorder %s121, 0
      %p1124 = por %p1122, %p1123
      %s1126 = sadd.s32 %s1125, 1
      %p1129 = scmp.eq.s32.totalorder %s115, 1
      %p1130 = scmp.ne.s32.totalorder %s1125, %s1127
      %p1131 = scmp.eq.s32.totalorder %s115, 0
      %p1132 = por %p1130, %p1131
      %p1133 = scmp.ne.s32.totalorder %s1125, %s1127
      %p1134 = scmp.eq.s32.totalorder %s120, 1
      %p1135 = por %p1133, %p1134
      %p1136 = scmp.ne.s32.totalorder %s1127, %s1128
      %p1137 = scmp.eq.s32.totalorder %s120, 0
      %p1138 = por %p1136, %p1137
      %p1139 = scmp.ne.s32.totalorder %s1127, %s1128
      %p1140 = scmp.eq.s32.totalorder %s121, 1
      %p1141 = por %p1139, %p1140
      %p1143 = scmp.ne.s32.totalorder %s1128, %s1142
      %p1144 = scmp.eq.s32.totalorder %s121, 0
      %p1145 = por %p1143, %p1144
      %s1147 = sadd.s32 %s1146, 1
      %p1150 = scmp.eq.s32.totalorder %s115, 1
      %p1151 = scmp.ne.s32.totalorder %s1146, %s1148
      %p1152 = scmp.eq.s32.totalorder %s115, 0
      %p1153 = por %p1151, %p1152
      %p1154 = scmp.ne.s32.totalorder %s1146, %s1148
      %p1155 = scmp.eq.s32.totalorder %s120, 1
      %p1156 = por %p1154, %p1155
      %p1157 = scmp.ne.s32.totalorder %s1148, %s1149
      %p1158 = scmp.eq.s32.totalorder %s120, 0
      %p1159 = por %p1157, %p1158
      %p1160 = scmp.ne.s32.totalorder %s1148, %s1149
      %p1161 = scmp.eq.s32.totalorder %s121, 1
      %p1162 = por %p1160, %p1161
      %p1164 = scmp.ne.s32.totalorder %s1149, %s1163
      %p1165 = scmp.eq.s32.totalorder %s121, 0
      %p1166 = por %p1164, %p1165
      %s1167 = ssub.s32 %s115, %s122
      %p1168 = scmp.eq.s32.totalorder %s1167, 0
      %s1170 = sadd.s32 %s1169, 1
      %s1171 = scalar_select %p1168, %s1169, %s1170
      %p1174 = pneg %p1168
      %p1175 = scmp.eq.s32.totalorder %s115, 1
      %p1176 = por %p1174, %p1175
      %p1177 = scmp.ne.s32.totalorder %s1169, %s1172
      %p1178 = scmp.eq.s32.totalorder %s115, 0
      %p1179 = por %p1177, %p1178
      %p1180 = scmp.ne.s32.totalorder %s1169, %s1172
      %p1181 = scmp.eq.s32.totalorder %s120, 1
      %p1182 = por %p1180, %p1181
      %p1183 = scmp.ne.s32.totalorder %s1172, %s1173
      %p1184 = scmp.eq.s32.totalorder %s120, 0
      %p1185 = por %p1183, %p1184
      %p1186 = scmp.ne.s32.totalorder %s1172, %s1173
      %p1187 = scmp.eq.s32.totalorder %s121, 1
      %p1188 = por %p1186, %p1187
      %p1190 = scmp.ne.s32.totalorder %s1173, %s1189
      %p1191 = scmp.eq.s32.totalorder %s121, 0
      %p1192 = por %p1190, %p1191
      %p1193 = scmp.le.s32.totalorder 1, %s115
      %p1194 = scmp.lt.s32.totalorder %s115, 3
      %p1195 = pnand %p1193, %p1194
      %p1196 = pneg %p1195
      // Predicated region
      $region9: #{tpu_custom_call.1} parent=5 // pred_check
        _
      $region10: #{tpu_custom_call.1} parent=5 // pred_check_branch
        %1198 = sbr.rel (%p1195) target = $region12
      $region11: #{tpu_custom_call.1} parent=5 // pred_region
        %s1199 = ssub.s32 %s115, 1
        // Predicated region
        $region13: #{tpu_custom_call.1} parent=11 // pred_check
          %p1200 = pneg %p214
        $region14: #{tpu_custom_call.1} parent=11 // pred_check_branch
          %1202 = sbr.rel (%p1200) target = $region16
        $region15: #{tpu_custom_call.1} parent=11 // pred_region
          %s1204 = ssub.s32 128, 128
          %1205 = vsyncadd [#allocation3], %s1204
          %s1206 = sshll.u32 [#allocation2], 4
          %s1207 = int_to_ptr.vmem [resolvable:$true] %s1206
          %1212 = dma.hbm_to_vmem [thread:$0]  %s7, 128, %s1207, [#allocation3], 64, 64, 4
        $region16: #{tpu_custom_call.1} parent=11 // pred_fallthru
          _
        // Predicated region
        $region17: #{tpu_custom_call.1} parent=11 // pred_check
          %p1213 = pneg %p235
        $region18: #{tpu_custom_call.1} parent=11 // pred_check_branch
          %1215 = sbr.rel (%p1213) target = $region20
        $region19: #{tpu_custom_call.1} parent=11 // pred_region
          %s1217 = ssub.s32 128, 128
          %1218 = vsyncadd [#allocation6], %s1217
          %s1219 = sshll.u32 [#allocation5], 4
          %s1220 = int_to_ptr.vmem [resolvable:$true] %s1219
          %1225 = dma.hbm_to_vmem [thread:$0]  %s9, 128, %s1220, [#allocation6], 64, 64, 4
        $region20: #{tpu_custom_call.1} parent=11 // pred_fallthru
          _
        // Predicated region
        $region21: #{tpu_custom_call.1} parent=11 // pred_check
          %p1226 = pneg %p256
        $region22: #{tpu_custom_call.1} parent=11 // pred_check_branch
          %1228 = sbr.rel (%p1226) target = $region24
        $region23: #{tpu_custom_call.1} parent=11 // pred_region
          %s1230 = ssub.s32 128, 128
          %1231 = vsyncadd [#allocation6], %s1230
          %s1232 = sshll.u32 [#allocation7], 4
          %s1233 = int_to_ptr.vmem [resolvable:$true] %s1232
          %1238 = dma.hbm_to_vmem [thread:$0]  %s11, 128, %s1233, [#allocation6], 64, 64, 4
        $region24: #{tpu_custom_call.1} parent=11 // pred_fallthru
          _
        // Predicated region
        $region25: #{tpu_custom_call.1} parent=11 // pred_check
          %p1239 = pneg %p277
        $region26: #{tpu_custom_call.1} parent=11 // pred_check_branch
          %1241 = sbr.rel (%p1239) target = $region28
        $region27: #{tpu_custom_call.1} parent=11 // pred_region
          %s1243 = ssub.s32 16, 16
          %1244 = vsyncadd [#allocation9], %s1243
          %s1246 = sshll.u32 [#allocation8], 4
          %s1247 = int_to_ptr.vmem [resolvable:$true] %s1246
          %1249 = dma.hbm_to_vmem [thread:$0]  %s13, 16, %s1247, [#allocation9]
        $region28: #{tpu_custom_call.1} parent=11 // pred_fallthru
          _
        // Predicated region
        $region29: #{tpu_custom_call.1} parent=11 // pred_check
          %p1250 = pneg %p298
        $region30: #{tpu_custom_call.1} parent=11 // pred_check_branch
          %1252 = sbr.rel (%p1250) target = $region32
        $region31: #{tpu_custom_call.1} parent=11 // pred_region
          _
        $region32: #{tpu_custom_call.1} parent=11 // pred_fallthru
          _
        // Predicated region
        $region33: #{tpu_custom_call.1} parent=11 // pred_check
          %p1253 = pneg %p319
        $region34: #{tpu_custom_call.1} parent=11 // pred_check_branch
          %1255 = sbr.rel (%p1253) target = $region36
        $region35: #{tpu_custom_call.1} parent=11 // pred_region
          _
        $region36: #{tpu_custom_call.1} parent=11 // pred_fallthru
          _
        // Predicated region
        $region37: #{tpu_custom_call.1} parent=11 // pred_check
          %p1256 = pneg %p340
        $region38: #{tpu_custom_call.1} parent=11 // pred_check_branch
          %1258 = sbr.rel (%p1256) target = $region40
        $region39: #{tpu_custom_call.1} parent=11 // pred_region
          _
        $region40: #{tpu_custom_call.1} parent=11 // pred_fallthru
          _
        // Predicated region
        $region41: #{tpu_custom_call.1} parent=11 // pred_check
          %p1259 = pneg %p361
        $region42: #{tpu_custom_call.1} parent=11 // pred_check_branch
          %1261 = sbr.rel (%p1259) target = $region44
        $region43: #{tpu_custom_call.1} parent=11 // pred_region
          _
        $region44: #{tpu_custom_call.1} parent=11 // pred_fallthru
          _
        // Predicated region
        $region45: #{tpu_custom_call.1} parent=11 // pred_check
          %p1262 = pneg %p382
        $region46: #{tpu_custom_call.1} parent=11 // pred_check_branch
          %1264 = sbr.rel (%p1262) target = $region48
        $region47: #{tpu_custom_call.1} parent=11 // pred_region
          _
        $region48: #{tpu_custom_call.1} parent=11 // pred_fallthru
          _
        // Predicated region
        $region49: #{tpu_custom_call.1} parent=11 // pred_check
          %p1265 = pneg %p403
        $region50: #{tpu_custom_call.1} parent=11 // pred_check_branch
          %1267 = sbr.rel (%p1265) target = $region52
        $region51: #{tpu_custom_call.1} parent=11 // pred_region
          _
        $region52: #{tpu_custom_call.1} parent=11 // pred_fallthru
          _
        // Predicated region
        $region53: #{tpu_custom_call.1} parent=11 // pred_check
          %p1268 = pneg %p424
        $region54: #{tpu_custom_call.1} parent=11 // pred_check_branch
          %1270 = sbr.rel (%p1268) target = $region56
        $region55: #{tpu_custom_call.1} parent=11 // pred_region
          _
        $region56: #{tpu_custom_call.1} parent=11 // pred_fallthru
          _
        // Predicated region
        $region57: #{tpu_custom_call.1} parent=11 // pred_check
          %p1271 = pneg %p445
        $region58: #{tpu_custom_call.1} parent=11 // pred_check_branch
          %1273 = sbr.rel (%p1271) target = $region60
        $region59: #{tpu_custom_call.1} parent=11 // pred_region
          _
        $region60: #{tpu_custom_call.1} parent=11 // pred_fallthru
          _
        // Predicated region
        $region61: #{tpu_custom_call.1} parent=11 // pred_check
          %p1274 = pneg %p466
        $region62: #{tpu_custom_call.1} parent=11 // pred_check_branch
          %1276 = sbr.rel (%p1274) target = $region64
        $region63: #{tpu_custom_call.1} parent=11 // pred_region
          _
        $region64: #{tpu_custom_call.1} parent=11 // pred_fallthru
          _
        // Predicated region
        $region65: #{tpu_custom_call.1} parent=11 // pred_check
          %p1277 = pneg %p487
        $region66: #{tpu_custom_call.1} parent=11 // pred_check_branch
          %1279 = sbr.rel (%p1277) target = $region68
        $region67: #{tpu_custom_call.1} parent=11 // pred_region
          _
        $region68: #{tpu_custom_call.1} parent=11 // pred_fallthru
          _
        // Predicated region
        $region69: #{tpu_custom_call.1} parent=11 // pred_check
          %p1280 = pneg %p508
        $region70: #{tpu_custom_call.1} parent=11 // pred_check_branch
          %1282 = sbr.rel (%p1280) target = $region72
        $region71: #{tpu_custom_call.1} parent=11 // pred_region
          _
        $region72: #{tpu_custom_call.1} parent=11 // pred_fallthru
          _
        // Predicated region
        $region73: #{tpu_custom_call.1} parent=11 // pred_check
          %p1283 = pneg %p529
        $region74: #{tpu_custom_call.1} parent=11 // pred_check_branch
          %1285 = sbr.rel (%p1283) target = $region76
        $region75: #{tpu_custom_call.1} parent=11 // pred_region
          _
        $region76: #{tpu_custom_call.1} parent=11 // pred_fallthru
          _
        // Predicated region
        $region77: #{tpu_custom_call.1} parent=11 // pred_check
          %p1286 = pneg %p550
        $region78: #{tpu_custom_call.1} parent=11 // pred_check_branch
          %1288 = sbr.rel (%p1286) target = $region80
        $region79: #{tpu_custom_call.1} parent=11 // pred_region
          _
        $region80: #{tpu_custom_call.1} parent=11 // pred_fallthru
          _
        // Predicated region
        $region81: #{tpu_custom_call.1} parent=11 // pred_check
          %p1289 = pneg %p571
        $region82: #{tpu_custom_call.1} parent=11 // pred_check_branch
          %1291 = sbr.rel (%p1289) target = $region84
        $region83: #{tpu_custom_call.1} parent=11 // pred_region
          _
        $region84: #{tpu_custom_call.1} parent=11 // pred_fallthru
          _
        // Predicated region
        $region85: #{tpu_custom_call.1} parent=11 // pred_check
          %p1292 = pneg %p592
        $region86: #{tpu_custom_call.1} parent=11 // pred_check_branch
          %1294 = sbr.rel (%p1292) target = $region88
        $region87: #{tpu_custom_call.1} parent=11 // pred_region
          _
        $region88: #{tpu_custom_call.1} parent=11 // pred_fallthru
          _
        // Predicated region
        $region89: #{tpu_custom_call.1} parent=11 // pred_check
          %p1295 = pneg %p613
        $region90: #{tpu_custom_call.1} parent=11 // pred_check_branch
          %1297 = sbr.rel (%p1295) target = $region92
        $region91: #{tpu_custom_call.1} parent=11 // pred_region
          _
        $region92: #{tpu_custom_call.1} parent=11 // pred_fallthru
          _
        // Predicated region
        $region93: #{tpu_custom_call.1} parent=11 // pred_check
          %p1298 = pneg %p634
        $region94: #{tpu_custom_call.1} parent=11 // pred_check_branch
          %1300 = sbr.rel (%p1298) target = $region96
        $region95: #{tpu_custom_call.1} parent=11 // pred_region
          _
        $region96: #{tpu_custom_call.1} parent=11 // pred_fallthru
          _
        // Predicated region
        $region97: #{tpu_custom_call.1} parent=11 // pred_check
          %p1301 = pneg %p655
        $region98: #{tpu_custom_call.1} parent=11 // pred_check_branch
          %1303 = sbr.rel (%p1301) target = $region100
        $region99: #{tpu_custom_call.1} parent=11 // pred_region
          _
        $region100: #{tpu_custom_call.1} parent=11 // pred_fallthru
          _
        // Predicated region
        $region101: #{tpu_custom_call.1} parent=11 // pred_check
          %p1304 = pneg %p676
        $region102: #{tpu_custom_call.1} parent=11 // pred_check_branch
          %1306 = sbr.rel (%p1304) target = $region104
        $region103: #{tpu_custom_call.1} parent=11 // pred_region
          _
        $region104: #{tpu_custom_call.1} parent=11 // pred_fallthru
          _
        // Predicated region
        $region105: #{tpu_custom_call.1} parent=11 // pred_check
          %p1307 = pneg %p697
        $region106: #{tpu_custom_call.1} parent=11 // pred_check_branch
          %1309 = sbr.rel (%p1307) target = $region108
        $region107: #{tpu_custom_call.1} parent=11 // pred_region
          _
        $region108: #{tpu_custom_call.1} parent=11 // pred_fallthru
          _
        // Predicated region
        $region109: #{tpu_custom_call.1} parent=11 // pred_check
          %p1310 = pneg %p718
        $region110: #{tpu_custom_call.1} parent=11 // pred_check_branch
          %1312 = sbr.rel (%p1310) target = $region112
        $region111: #{tpu_custom_call.1} parent=11 // pred_region
          _
        $region112: #{tpu_custom_call.1} parent=11 // pred_fallthru
          _
        // Predicated region
        $region113: #{tpu_custom_call.1} parent=11 // pred_check
          %p1313 = pneg %p739
        $region114: #{tpu_custom_call.1} parent=11 // pred_check_branch
          %1315 = sbr.rel (%p1313) target = $region116
        $region115: #{tpu_custom_call.1} parent=11 // pred_region
          _
        $region116: #{tpu_custom_call.1} parent=11 // pred_fallthru
          _
        // Predicated region
        $region117: #{tpu_custom_call.1} parent=11 // pred_check
          %p1316 = pneg %p760
        $region118: #{tpu_custom_call.1} parent=11 // pred_check_branch
          %1318 = sbr.rel (%p1316) target = $region120
        $region119: #{tpu_custom_call.1} parent=11 // pred_region
          _
        $region120: #{tpu_custom_call.1} parent=11 // pred_fallthru
          _
        // Predicated region
        $region121: #{tpu_custom_call.1} parent=11 // pred_check
          %p1319 = pneg %p781
        $region122: #{tpu_custom_call.1} parent=11 // pred_check_branch
          %1321 = sbr.rel (%p1319) target = $region124
        $region123: #{tpu_custom_call.1} parent=11 // pred_region
          %s1323 = ssub.s32 16, 16
          %1324 = vsyncadd [#allocation9], %s1323
          %s1326 = sshll.u32 [#allocation10], 4
          %s1327 = int_to_ptr.vmem [resolvable:$true] %s1326
          %1329 = dma.hbm_to_vmem [thread:$0]  %s61, 16, %s1327, [#allocation9]
        $region124: #{tpu_custom_call.1} parent=11 // pred_fallthru
          _
        // Predicated region
        $region125: #{tpu_custom_call.1} parent=11 // pred_check
          %p1330 = pneg %p802
        $region126: #{tpu_custom_call.1} parent=11 // pred_check_branch
          %1332 = sbr.rel (%p1330) target = $region128
        $region127: #{tpu_custom_call.1} parent=11 // pred_region
          _
        $region128: #{tpu_custom_call.1} parent=11 // pred_fallthru
          _
        // Predicated region
        $region129: #{tpu_custom_call.1} parent=11 // pred_check
          %p1333 = pneg %p823
        $region130: #{tpu_custom_call.1} parent=11 // pred_check_branch
          %1335 = sbr.rel (%p1333) target = $region132
        $region131: #{tpu_custom_call.1} parent=11 // pred_region
          _
        $region132: #{tpu_custom_call.1} parent=11 // pred_fallthru
          _
        // Predicated region
        $region133: #{tpu_custom_call.1} parent=11 // pred_check
          %p1336 = pneg %p844
        $region134: #{tpu_custom_call.1} parent=11 // pred_check_branch
          %1338 = sbr.rel (%p1336) target = $region136
        $region135: #{tpu_custom_call.1} parent=11 // pred_region
          _
        $region136: #{tpu_custom_call.1} parent=11 // pred_fallthru
          _
        // Predicated region
        $region137: #{tpu_custom_call.1} parent=11 // pred_check
          %p1339 = pneg %p865
        $region138: #{tpu_custom_call.1} parent=11 // pred_check_branch
          %1341 = sbr.rel (%p1339) target = $region140
        $region139: #{tpu_custom_call.1} parent=11 // pred_region
          _
        $region140: #{tpu_custom_call.1} parent=11 // pred_fallthru
          _
        // Predicated region
        $region141: #{tpu_custom_call.1} parent=11 // pred_check
          %p1342 = pneg %p886
        $region142: #{tpu_custom_call.1} parent=11 // pred_check_branch
          %1344 = sbr.rel (%p1342) target = $region144
        $region143: #{tpu_custom_call.1} parent=11 // pred_region
          _
        $region144: #{tpu_custom_call.1} parent=11 // pred_fallthru
          _
        // Predicated region
        $region145: #{tpu_custom_call.1} parent=11 // pred_check
          %p1345 = pneg %p907
        $region146: #{tpu_custom_call.1} parent=11 // pred_check_branch
          %1347 = sbr.rel (%p1345) target = $region148
        $region147: #{tpu_custom_call.1} parent=11 // pred_region
          _
        $region148: #{tpu_custom_call.1} parent=11 // pred_fallthru
          _
        // Predicated region
        $region149: #{tpu_custom_call.1} parent=11 // pred_check
          %p1348 = pneg %p928
        $region150: #{tpu_custom_call.1} parent=11 // pred_check_branch
          %1350 = sbr.rel (%p1348) target = $region152
        $region151: #{tpu_custom_call.1} parent=11 // pred_region
          _
        $region152: #{tpu_custom_call.1} parent=11 // pred_fallthru
          _
        // Predicated region
        $region153: #{tpu_custom_call.1} parent=11 // pred_check
          %p1351 = pneg %p949
        $region154: #{tpu_custom_call.1} parent=11 // pred_check_branch
          %1353 = sbr.rel (%p1351) target = $region156
        $region155: #{tpu_custom_call.1} parent=11 // pred_region
          _
        $region156: #{tpu_custom_call.1} parent=11 // pred_fallthru
          _
        // Predicated region
        $region157: #{tpu_custom_call.1} parent=11 // pred_check
          %p1354 = pneg %p970
        $region158: #{tpu_custom_call.1} parent=11 // pred_check_branch
          %1356 = sbr.rel (%p1354) target = $region160
        $region159: #{tpu_custom_call.1} parent=11 // pred_region
          %s1358 = ssub.s32 256, 256
          %1359 = vsyncadd [#allocation12], %s1358
          %s1360 = sshll.u32 [#allocation11], 4
          %s1361 = int_to_ptr.vmem [resolvable:$true] %s1360
          %1366 = dma.hbm_to_vmem [thread:$0]  %s79, 256, %s1361, [#allocation12], 64, 64, 4
        $region160: #{tpu_custom_call.1} parent=11 // pred_fallthru
          _
        // Predicated region
        $region161: #{tpu_custom_call.1} parent=11 // pred_check
          %p1367 = pneg %p991
        $region162: #{tpu_custom_call.1} parent=11 // pred_check_branch
          %1369 = sbr.rel (%p1367) target = $region164
        $region163: #{tpu_custom_call.1} parent=11 // pred_region
          %s1371 = ssub.s32 256, 256
          %1372 = vsyncadd [#allocation12], %s1371
          %s1373 = sshll.u32 [#allocation13], 4
          %s1374 = int_to_ptr.vmem [resolvable:$true] %s1373
          %1379 = dma.hbm_to_vmem [thread:$0]  %s81, 256, %s1374, [#allocation12], 64, 64, 4
        $region164: #{tpu_custom_call.1} parent=11 // pred_fallthru
          _
        // Predicated region
        $region165: #{tpu_custom_call.1} parent=11 // pred_check
          %p1380 = pneg %p1012
        $region166: #{tpu_custom_call.1} parent=11 // pred_check_branch
          %1382 = sbr.rel (%p1380) target = $region168
        $region167: #{tpu_custom_call.1} parent=11 // pred_region
          %s1384 = ssub.s32 256, 256
          %1385 = vsyncadd [#allocation15], %s1384
          %s1386 = sshll.u32 [#allocation14], 4
          %s1387 = int_to_ptr.vmem [resolvable:$true] %s1386
          %1392 = dma.hbm_to_vmem [thread:$0]  %s83, 256, %s1387, [#allocation15], 64, 64, 4
        $region168: #{tpu_custom_call.1} parent=11 // pred_fallthru
          _
        // Predicated region
        $region169: #{tpu_custom_call.1} parent=11 // pred_check
          %p1393 = pneg %p1033
        $region170: #{tpu_custom_call.1} parent=11 // pred_check_branch
          %1395 = sbr.rel (%p1393) target = $region172
        $region171: #{tpu_custom_call.1} parent=11 // pred_region
          %s1397 = ssub.s32 16, 16
          %1398 = vsyncadd [#allocation15], %s1397
          %s1400 = sshll.u32 [#allocation16], 4
          %s1401 = int_to_ptr.vmem [resolvable:$true] %s1400
          %1403 = dma.hbm_to_vmem [thread:$0]  %s85, 16, %s1401, [#allocation15]
        $region172: #{tpu_custom_call.1} parent=11 // pred_fallthru
          _
        // Predicated region
        $region173: #{tpu_custom_call.1} parent=11 // pred_check
          %p1404 = pneg %p1054
        $region174: #{tpu_custom_call.1} parent=11 // pred_check_branch
          %1406 = sbr.rel (%p1404) target = $region176
        $region175: #{tpu_custom_call.1} parent=11 // pred_region
          _
        $region176: #{tpu_custom_call.1} parent=11 // pred_fallthru
          _
        // Predicated region
        $region177: #{tpu_custom_call.1} parent=11 // pred_check
          %p1407 = pneg %p1075
        $region178: #{tpu_custom_call.1} parent=11 // pred_check_branch
          %1409 = sbr.rel (%p1407) target = $region180
        $region179: #{tpu_custom_call.1} parent=11 // pred_region
          _
        $region180: #{tpu_custom_call.1} parent=11 // pred_fallthru
          _
        // Predicated region
        $region181: #{tpu_custom_call.1} parent=11 // pred_check
          %p1410 = pneg %p1096
        $region182: #{tpu_custom_call.1} parent=11 // pred_check_branch
          %1412 = sbr.rel (%p1410) target = $region184
        $region183: #{tpu_custom_call.1} parent=11 // pred_region
          %s1414 = ssub.s32 256, 256
          %1415 = vsyncadd [#allocation18], %s1414
          %s1416 = sshll.u32 [#allocation17], 4
          %s1417 = int_to_ptr.vmem [resolvable:$true] %s1416
          %1422 = dma.hbm_to_vmem [thread:$0]  %s91, 256, %s1417, [#allocation18], 128, 128, 8
        $region184: #{tpu_custom_call.1} parent=11 // pred_fallthru
          _
        // Predicated region
        $region185: #{tpu_custom_call.1} parent=11 // pred_check
          %p1423 = pneg %p1117
        $region186: #{tpu_custom_call.1} parent=11 // pred_check_branch
          %1425 = sbr.rel (%p1423) target = $region188
        $region187: #{tpu_custom_call.1} parent=11 // pred_region
          %s1427 = ssub.s32 256, 256
          %1428 = vsyncadd [#allocation18], %s1427
          %s1429 = sshll.u32 [#allocation19], 4
          %s1430 = int_to_ptr.vmem [resolvable:$true] %s1429
          %1435 = dma.hbm_to_vmem [thread:$0]  %s93, 256, %s1430, [#allocation18], 128, 128, 8
        $region188: #{tpu_custom_call.1} parent=11 // pred_fallthru
          _
        // Predicated region
        $region189: #{tpu_custom_call.1} parent=11 // pred_check
          %p1436 = pneg %p1138
        $region190: #{tpu_custom_call.1} parent=11 // pred_check_branch
          %1438 = sbr.rel (%p1436) target = $region192
        $region191: #{tpu_custom_call.1} parent=11 // pred_region
          %s1440 = ssub.s32 128, 128
          %1441 = vsyncadd [#allocation21], %s1440
          %s1442 = sshll.u32 [#allocation20], 4
          %s1443 = int_to_ptr.vmem [resolvable:$true] %s1442
          %1448 = dma.hbm_to_vmem [thread:$0]  %s95, 128, %s1443, [#allocation21], 64, 64, 4
        $region192: #{tpu_custom_call.1} parent=11 // pred_fallthru
          _
        // Predicated region
        $region193: #{tpu_custom_call.1} parent=11 // pred_check
          %p1449 = pneg %p1159
        $region194: #{tpu_custom_call.1} parent=11 // pred_check_branch
          %1451 = sbr.rel (%p1449) target = $region196
        $region195: #{tpu_custom_call.1} parent=11 // pred_region
          _
        $region196: #{tpu_custom_call.1} parent=11 // pred_fallthru
          _
      $region12: #{tpu_custom_call.1} parent=5 // pred_fallthru
        _
      %p1452 = scmp.lt.s32.totalorder %s115, 2
      // Predicated region
      $region197: #{tpu_custom_call.1} parent=5 // pred_check
        %p1453 = pneg %p1452
      $region198: #{tpu_custom_call.1} parent=5 // pred_check_branch
        %1455 = sbr.rel (%p1453) target = $region200
      $region199: #{tpu_custom_call.1} parent=5 // pred_region
        // Predicated region
        $region201: #{tpu_custom_call.1} parent=199 // pred_check
          %p1456 = pneg %p135
        $region202: #{tpu_custom_call.1} parent=199 // pred_check_branch
          %1458 = sbr.rel (%p1456) target = $region204
        $region203: #{tpu_custom_call.1} parent=199 // pred_region
          %s1459 = smul.u32 32, %s115
          %p1460 = scmp.lt.s32.totalorder %s1459, 63
          %s1461 = scalar_select %p1460, %s1459, 63
          %s1462 = smul.addr %s1461, 8
          %s1463 = scalar_lea.vmem %s1, %s1462
          %s1464 = smul.u32 32, %s115
        $region204: #{tpu_custom_call.1} parent=199 // pred_fallthru
          _
        // Predicated region
        $region205: #{tpu_custom_call.1} parent=199 // pred_check
          %p1465 = pneg %p161
        $region206: #{tpu_custom_call.1} parent=199 // pred_check_branch
          %1467 = sbr.rel (%p1465) target = $region208
        $region207: #{tpu_custom_call.1} parent=199 // pred_region
          %s1468 = smul.u32 32, %s115
          %p1469 = scmp.lt.s32.totalorder %s1468, 63
          %s1470 = scalar_select %p1469, %s1468, 63
          %s1471 = smul.addr %s1470, 8
          %s1472 = scalar_lea.vmem %s3, %s1471
          %s1473 = smul.u32 32, %s115
        $region208: #{tpu_custom_call.1} parent=199 // pred_fallthru
          _
        // Predicated region
        $region209: #{tpu_custom_call.1} parent=199 // pred_check
          %p1474 = pneg %p187
        $region210: #{tpu_custom_call.1} parent=199 // pred_check_branch
          %1476 = sbr.rel (%p1474) target = $region212
        $region211: #{tpu_custom_call.1} parent=199 // pred_region
          %s1477 = smul.u32 32, %s115
          %p1478 = scmp.lt.s32.totalorder %s1477, 63
          %s1479 = scalar_select %p1478, %s1477, 63
          %s1480 = smul.addr %s1479, 8
          %s1481 = scalar_lea.vmem %s5, %s1480
          %s1482 = smul.u32 32, %s115
        $region212: #{tpu_custom_call.1} parent=199 // pred_fallthru
          _
      $region200: #{tpu_custom_call.1} parent=5 // pred_fallthru
        _
      %p1483 = scmp.le.s32.totalorder 1, %s115
      %p1484 = scmp.lt.s32.totalorder %s115, 3
      %p1485 = pnand %p1483, %p1484
      %p1486 = pneg %p1485
      // Predicated region
      $region213: #{tpu_custom_call.1} parent=5 // pred_check
        _
      $region214: #{tpu_custom_call.1} parent=5 // pred_check_branch
        %1488 = sbr.rel (%p1485) target = $region216
      $region215: #{tpu_custom_call.1} parent=5 // pred_region
        %s1489 = ssub.s32 %s115, 1
        // Predicated region
        $region217: #{tpu_custom_call.1} parent=215 // pred_check
          %p1490 = pneg %p214
        $region218: #{tpu_custom_call.1} parent=215 // pred_check_branch
          %1492 = sbr.rel (%p1490) target = $region220
        $region219: #{tpu_custom_call.1} parent=215 // pred_region
          %1493 = dma.done [#allocation3], 128
        $region220: #{tpu_custom_call.1} parent=215 // pred_fallthru
          _
        // Predicated region
        $region221: #{tpu_custom_call.1} parent=215 // pred_check
          %p1494 = pneg %p235
        $region222: #{tpu_custom_call.1} parent=215 // pred_check_branch
          %1496 = sbr.rel (%p1494) target = $region224
        $region223: #{tpu_custom_call.1} parent=215 // pred_region
          %1497 = dma.done [#allocation6], 128
        $region224: #{tpu_custom_call.1} parent=215 // pred_fallthru
          _
        // Predicated region
        $region225: #{tpu_custom_call.1} parent=215 // pred_check
          %p1498 = pneg %p256
        $region226: #{tpu_custom_call.1} parent=215 // pred_check_branch
          %1500 = sbr.rel (%p1498) target = $region228
        $region227: #{tpu_custom_call.1} parent=215 // pred_region
          %1501 = dma.done [#allocation6], 128
        $region228: #{tpu_custom_call.1} parent=215 // pred_fallthru
          _
        // Predicated region
        $region229: #{tpu_custom_call.1} parent=215 // pred_check
          %p1502 = pneg %p277
        $region230: #{tpu_custom_call.1} parent=215 // pred_check_branch
          %1504 = sbr.rel (%p1502) target = $region232
        $region231: #{tpu_custom_call.1} parent=215 // pred_region
          %1505 = dma.done [#allocation9], 16
        $region232: #{tpu_custom_call.1} parent=215 // pred_fallthru
          _
        // Predicated region
        $region233: #{tpu_custom_call.1} parent=215 // pred_check
          %p1506 = pneg %p781
        $region234: #{tpu_custom_call.1} parent=215 // pred_check_branch
          %1508 = sbr.rel (%p1506) target = $region236
        $region235: #{tpu_custom_call.1} parent=215 // pred_region
          %1509 = dma.done [#allocation9], 16
        $region236: #{tpu_custom_call.1} parent=215 // pred_fallthru
          _
        // Predicated region
        $region237: #{tpu_custom_call.1} parent=215 // pred_check
          %p1510 = pneg %p970
        $region238: #{tpu_custom_call.1} parent=215 // pred_check_branch
          %1512 = sbr.rel (%p1510) target = $region240
        $region239: #{tpu_custom_call.1} parent=215 // pred_region
          %1513 = dma.done [#allocation12], 256
        $region240: #{tpu_custom_call.1} parent=215 // pred_fallthru
          _
        // Predicated region
        $region241: #{tpu_custom_call.1} parent=215 // pred_check
          %p1514 = pneg %p991
        $region242: #{tpu_custom_call.1} parent=215 // pred_check_branch
          %1516 = sbr.rel (%p1514) target = $region244
        $region243: #{tpu_custom_call.1} parent=215 // pred_region
          %1517 = dma.done [#allocation12], 256
        $region244: #{tpu_custom_call.1} parent=215 // pred_fallthru
          _
        // Predicated region
        $region245: #{tpu_custom_call.1} parent=215 // pred_check
          %p1518 = pneg %p1012
        $region246: #{tpu_custom_call.1} parent=215 // pred_check_branch
          %1520 = sbr.rel (%p1518) target = $region248
        $region247: #{tpu_custom_call.1} parent=215 // pred_region
          %1521 = dma.done [#allocation15], 256
        $region248: #{tpu_custom_call.1} parent=215 // pred_fallthru
          _
        // Predicated region
        $region249: #{tpu_custom_call.1} parent=215 // pred_check
          %p1522 = pneg %p1033
        $region250: #{tpu_custom_call.1} parent=215 // pred_check_branch
          %1524 = sbr.rel (%p1522) target = $region252
        $region251: #{tpu_custom_call.1} parent=215 // pred_region
          %1525 = dma.done [#allocation15], 16
        $region252: #{tpu_custom_call.1} parent=215 // pred_fallthru
          _
        // Predicated region
        $region253: #{tpu_custom_call.1} parent=215 // pred_check
          %p1526 = pneg %p1096
        $region254: #{tpu_custom_call.1} parent=215 // pred_check_branch
          %1528 = sbr.rel (%p1526) target = $region256
        $region255: #{tpu_custom_call.1} parent=215 // pred_region
          %1529 = dma.done [#allocation18], 256
        $region256: #{tpu_custom_call.1} parent=215 // pred_fallthru
          _
        // Predicated region
        $region257: #{tpu_custom_call.1} parent=215 // pred_check
          %p1530 = pneg %p1117
        $region258: #{tpu_custom_call.1} parent=215 // pred_check_branch
          %1532 = sbr.rel (%p1530) target = $region260
        $region259: #{tpu_custom_call.1} parent=215 // pred_region
          %1533 = dma.done [#allocation18], 256
        $region260: #{tpu_custom_call.1} parent=215 // pred_fallthru
          _
        // Predicated region
        $region261: #{tpu_custom_call.1} parent=215 // pred_check
          %p1534 = pneg %p1138
        $region262: #{tpu_custom_call.1} parent=215 // pred_check_branch
          %1536 = sbr.rel (%p1534) target = $region264
        $region263: #{tpu_custom_call.1} parent=215 // pred_region
          %1537 = dma.done [#allocation21], 128
        $region264: #{tpu_custom_call.1} parent=215 // pred_fallthru
          _
        %s1538 = smul.u32 32, %s120
        %p1539 = scmp.lt.s32.totalorder %s1538, 63
        %s1540 = scalar_select %p1539, %s1538, 63
        %s1541 = smul.addr %s1540, 8
        %s1542 = scalar_lea.vmem %s1, %s1541
        %p1543 = pneg %p141
        %p1544 = pneg %p138
        %s1545 = smul.u32 32, %s120
        %p1546 = scmp.lt.s32.totalorder %s1545, 63
        %s1547 = scalar_select %p1546, %s1545, 63
        %s1548 = smul.addr %s1547, 8
        %s1549 = scalar_lea.vmem %s3, %s1548
        %p1550 = pneg %p167
        %p1551 = pneg %p164
        %s1552 = smul.u32 32, %s120
        %p1553 = scmp.lt.s32.totalorder %s1552, 63
        %s1554 = scalar_select %p1553, %s1552, 63
        %s1555 = smul.addr %s1554, 8
        %s1556 = scalar_lea.vmem %s5, %s1555
        %p1557 = pneg %p193
        %p1558 = pneg %p190
        %p1559 = pneg %p214
        %p1560 = pneg %p211
        %p1561 = pneg %p235
        %p1562 = pneg %p232
        %p1563 = pneg %p256
        %p1564 = pneg %p253
        %p1565 = pneg %p277
        %p1566 = pneg %p274
        %p1567 = pneg %p298
        %p1568 = pneg %p295
        %p1569 = pneg %p319
        %p1570 = pneg %p316
        %p1571 = pneg %p340
        %p1572 = pneg %p337
        %p1573 = pneg %p361
        %p1574 = pneg %p358
        %p1575 = pneg %p382
        %p1576 = pneg %p379
        %p1577 = pneg %p403
        %p1578 = pneg %p400
        %p1579 = pneg %p424
        %p1580 = pneg %p421
        %p1581 = pneg %p445
        %p1582 = pneg %p442
        %p1583 = pneg %p466
        %p1584 = pneg %p463
        %p1585 = pneg %p487
        %p1586 = pneg %p484
        %p1587 = pneg %p508
        %p1588 = pneg %p505
        %p1589 = pneg %p529
        %p1590 = pneg %p526
        %p1591 = pneg %p550
        %p1592 = pneg %p547
        %p1593 = pneg %p571
        %p1594 = pneg %p568
        %p1595 = pneg %p592
        %p1596 = pneg %p589
        %p1597 = pneg %p613
        %p1598 = pneg %p610
        %p1599 = pneg %p634
        %p1600 = pneg %p631
        %p1601 = pneg %p655
        %p1602 = pneg %p652
        %p1603 = pneg %p676
        %p1604 = pneg %p673
        %p1605 = pneg %p697
        %p1606 = pneg %p694
        %p1607 = pneg %p718
        %p1608 = pneg %p715
        %p1609 = pneg %p739
        %p1610 = pneg %p736
        %p1611 = pneg %p760
        %p1612 = pneg %p757
        %p1613 = pneg %p781
        %p1614 = pneg %p778
        %p1615 = pneg %p802
        %p1616 = pneg %p799
        %p1617 = pneg %p823
        %p1618 = pneg %p820
        %p1619 = pneg %p844
        %p1620 = pneg %p841
        %p1621 = pneg %p865
        %p1622 = pneg %p862
        %p1623 = pneg %p886
        %p1624 = pneg %p883
        %p1625 = pneg %p907
        %p1626 = pneg %p904
        %p1627 = pneg %p928
        %p1628 = pneg %p925
        %p1629 = pneg %p949
        %p1630 = pneg %p946
        %p1631 = pneg %p970
        %p1632 = pneg %p967
        %p1633 = pneg %p991
        %p1634 = pneg %p988
        %p1635 = pneg %p1012
        %p1636 = pneg %p1009
        %p1637 = pneg %p1033
        %p1638 = pneg %p1030
        %p1639 = pneg %p1054
        %p1640 = pneg %p1051
        %p1641 = pneg %p1075
        %p1642 = pneg %p1072
        %p1643 = pneg %p1096
        %p1644 = pneg %p1093
        %p1645 = pneg %p1117
        %p1646 = pneg %p1114
        %p1647 = pneg %p1138
        %p1648 = pneg %p1135
        %p1649 = pneg %p1159
        %p1650 = pneg %p1156
        %p1651 = pneg %p1185
        %p1652 = pneg %p1182
        %s1653 = sand.u32 %s1172, 1
        %s1654 = scalar_lea.sflag [#allocation4], %s1653
        %s1655 = sand.u32 %s1172, 1
        %s1656 = smul.addr %s1655, 16
        %s1657 = scalar_lea.vmem [#allocation22], %s1656
        %s1658 = smul.u32 32, %s120
        %p1659 = scmp.lt.s32.totalorder %s1658, 63
        %s1660 = scalar_select %p1659, %s1658, 63
        %s1661 = smul.addr %s1660, 8
        %s1662 = scalar_lea.vmem %s1, %s1661
        %s1663 = smul.u32 32, %s120
        %s1664 = smul.u32 32, %s120
        %p1665 = scmp.lt.s32.totalorder %s1664, 63
        %s1666 = scalar_select %p1665, %s1664, 63
        %s1667 = smul.addr %s1666, 8
        %s1668 = scalar_lea.vmem %s3, %s1667
        %s1669 = smul.u32 32, %s120
        %s1670 = smul.u32 32, %s120
        %p1671 = scmp.lt.s32.totalorder %s1670, 63
        %s1672 = scalar_select %p1671, %s1670, 63
        %s1673 = smul.addr %s1672, 8
        %s1674 = scalar_lea.vmem %s5, %s1673
        %s1675 = smul.u32 32, %s120
        %s1676 = smul.u32 2, %s120
        %v1678 = vld [vmem:[%s1662] sm:$0xff]
        %v1679 = vld [vmem:[%s1662 + $0x8] sm:$0xff]
        %v1680 = vld [vmem:[%s1662 + $0x10] sm:$0xff]
        %v1681 = vld [vmem:[%s1662 + $0x18] sm:$0xff]
        %v1682 = vld [vmem:[%s1662 + $0x20] sm:$0xff]
        %v1683 = vld [vmem:[%s1662 + $0x28] sm:$0xff]
        %v1684 = vld [vmem:[%s1662 + $0x30] sm:$0xff]
        %v1685 = vld [vmem:[%s1662 + $0x38] sm:$0xff]
        %v1686 = vld [vmem:[%s1662 + $0x40] sm:$0xff]
        %v1687 = vld [vmem:[%s1662 + $0x48] sm:$0xff]
        %v1688 = vld [vmem:[%s1662 + $0x50] sm:$0xff]
        %v1689 = vld [vmem:[%s1662 + $0x58] sm:$0xff]
        %v1690 = vld [vmem:[%s1662 + $0x60] sm:$0xff]
        %v1691 = vld [vmem:[%s1662 + $0x68] sm:$0xff]
        %v1692 = vld [vmem:[%s1662 + $0x70] sm:$0xff]
        %v1693 = vld [vmem:[%s1662 + $0x78] sm:$0xff]
        %v1694 = vld [vmem:[%s1662 + $0x80] sm:$0xff]
        %v1695 = vld [vmem:[%s1662 + $0x88] sm:$0xff]
        %v1696 = vld [vmem:[%s1662 + $0x90] sm:$0xff]
        %v1697 = vld [vmem:[%s1662 + $0x98] sm:$0xff]
        %v1698 = vld [vmem:[%s1662 + $0xa0] sm:$0xff]
        %v1699 = vld [vmem:[%s1662 + $0xa8] sm:$0xff]
        %v1700 = vld [vmem:[%s1662 + $0xb0] sm:$0xff]
        %v1701 = vld [vmem:[%s1662 + $0xb8] sm:$0xff]
        %v1702 = vld [vmem:[%s1662 + $0xc0] sm:$0xff]
        %v1703 = vld [vmem:[%s1662 + $0xc8] sm:$0xff]
        %v1704 = vld [vmem:[%s1662 + $0xd0] sm:$0xff]
        %v1705 = vld [vmem:[%s1662 + $0xd8] sm:$0xff]
        %v1706 = vld [vmem:[%s1662 + $0xe0] sm:$0xff]
        %v1707 = vld [vmem:[%s1662 + $0xe8] sm:$0xff]
        %v1708 = vld [vmem:[%s1662 + $0xf0] sm:$0xff]
        %v1709 = vld [vmem:[%s1662 + $0xf8] sm:$0xff]
        %v1710 = vld [vmem:[%s1668] sm:$0xff]
        %v1711 = vld [vmem:[%s1668 + $0x8] sm:$0xff]
        %v1712 = vld [vmem:[%s1668 + $0x10] sm:$0xff]
        %v1713 = vld [vmem:[%s1668 + $0x18] sm:$0xff]
        %v1714 = vld [vmem:[%s1668 + $0x20] sm:$0xff]
        %v1715 = vld [vmem:[%s1668 + $0x28] sm:$0xff]
        %v1716 = vld [vmem:[%s1668 + $0x30] sm:$0xff]
        %v1717 = vld [vmem:[%s1668 + $0x38] sm:$0xff]
        %v1718 = vld [vmem:[%s1668 + $0x40] sm:$0xff]
        %v1719 = vld [vmem:[%s1668 + $0x48] sm:$0xff]
        %v1720 = vld [vmem:[%s1668 + $0x50] sm:$0xff]
        %v1721 = vld [vmem:[%s1668 + $0x58] sm:$0xff]
        %v1722 = vld [vmem:[%s1668 + $0x60] sm:$0xff]
        %v1723 = vld [vmem:[%s1668 + $0x68] sm:$0xff]
        %v1724 = vld [vmem:[%s1668 + $0x70] sm:$0xff]
        %v1725 = vld [vmem:[%s1668 + $0x78] sm:$0xff]
        %v1726 = vld [vmem:[%s1668 + $0x80] sm:$0xff]
        %v1727 = vld [vmem:[%s1668 + $0x88] sm:$0xff]
        %v1728 = vld [vmem:[%s1668 + $0x90] sm:$0xff]
        %v1729 = vld [vmem:[%s1668 + $0x98] sm:$0xff]
        %v1730 = vld [vmem:[%s1668 + $0xa0] sm:$0xff]
        %v1731 = vld [vmem:[%s1668 + $0xa8] sm:$0xff]
        %v1732 = vld [vmem:[%s1668 + $0xb0] sm:$0xff]
        %v1733 = vld [vmem:[%s1668 + $0xb8] sm:$0xff]
        %v1734 = vld [vmem:[%s1668 + $0xc0] sm:$0xff]
        %v1735 = vld [vmem:[%s1668 + $0xc8] sm:$0xff]
        %v1736 = vld [vmem:[%s1668 + $0xd0] sm:$0xff]
        %v1737 = vld [vmem:[%s1668 + $0xd8] sm:$0xff]
        %v1738 = vld [vmem:[%s1668 + $0xe0] sm:$0xff]
        %v1739 = vld [vmem:[%s1668 + $0xe8] sm:$0xff]
        %v1740 = vld [vmem:[%s1668 + $0xf0] sm:$0xff]
        %v1741 = vld [vmem:[%s1668 + $0xf8] sm:$0xff]
        %v1742 = vld [vmem:[%s1674] sm:$0xff]
        %v1743 = vld [vmem:[%s1674 + $0x8] sm:$0xff]
        %v1744 = vld [vmem:[%s1674 + $0x10] sm:$0xff]
        %v1745 = vld [vmem:[%s1674 + $0x18] sm:$0xff]
        %v1746 = vld [vmem:[%s1674 + $0x20] sm:$0xff]
        %v1747 = vld [vmem:[%s1674 + $0x28] sm:$0xff]
        %v1748 = vld [vmem:[%s1674 + $0x30] sm:$0xff]
        %v1749 = vld [vmem:[%s1674 + $0x38] sm:$0xff]
        %v1750 = vld [vmem:[%s1674 + $0x40] sm:$0xff]
        %v1751 = vld [vmem:[%s1674 + $0x48] sm:$0xff]
        %v1752 = vld [vmem:[%s1674 + $0x50] sm:$0xff]
        %v1753 = vld [vmem:[%s1674 + $0x58] sm:$0xff]
        %v1754 = vld [vmem:[%s1674 + $0x60] sm:$0xff]
        %v1755 = vld [vmem:[%s1674 + $0x68] sm:$0xff]
        %v1756 = vld [vmem:[%s1674 + $0x70] sm:$0xff]
        %v1757 = vld [vmem:[%s1674 + $0x78] sm:$0xff]
        %v1758 = vld [vmem:[%s1674 + $0x80] sm:$0xff]
        %v1759 = vld [vmem:[%s1674 + $0x88] sm:$0xff]
        %v1760 = vld [vmem:[%s1674 + $0x90] sm:$0xff]
        %v1761 = vld [vmem:[%s1674 + $0x98] sm:$0xff]
        %v1762 = vld [vmem:[%s1674 + $0xa0] sm:$0xff]
        %v1763 = vld [vmem:[%s1674 + $0xa8] sm:$0xff]
        %v1764 = vld [vmem:[%s1674 + $0xb0] sm:$0xff]
        %v1765 = vld [vmem:[%s1674 + $0xb8] sm:$0xff]
        %v1766 = vld [vmem:[%s1674 + $0xc0] sm:$0xff]
        %v1767 = vld [vmem:[%s1674 + $0xc8] sm:$0xff]
        %v1768 = vld [vmem:[%s1674 + $0xd0] sm:$0xff]
        %v1769 = vld [vmem:[%s1674 + $0xd8] sm:$0xff]
        %v1770 = vld [vmem:[%s1674 + $0xe0] sm:$0xff]
        %v1771 = vld [vmem:[%s1674 + $0xe8] sm:$0xff]
        %v1772 = vld [vmem:[%s1674 + $0xf0] sm:$0xff]
        %v1773 = vld [vmem:[%s1674 + $0xf8] sm:$0xff]
        %v1774 = vpack.c.bf16 %v1711, %v1710
        %v1775 = vpack.c.bf16 %v1713, %v1712
        %v1776 = vpack.c.bf16 %v1715, %v1714
        %v1777 = vpack.c.bf16 %v1717, %v1716
        %v1778 = vpack.c.bf16 %v1719, %v1718
        %v1779 = vpack.c.bf16 %v1721, %v1720
        %v1780 = vpack.c.bf16 %v1723, %v1722
        %v1781 = vpack.c.bf16 %v1725, %v1724
        %v1782 = vpack.c.bf16 %v1727, %v1726
        %v1783 = vpack.c.bf16 %v1729, %v1728
        %v1784 = vpack.c.bf16 %v1731, %v1730
        %v1785 = vpack.c.bf16 %v1733, %v1732
        %v1786 = vpack.c.bf16 %v1735, %v1734
        %v1787 = vpack.c.bf16 %v1737, %v1736
        %v1788 = vpack.c.bf16 %v1739, %v1738
        %v1789 = vpack.c.bf16 %v1741, %v1740
        %v1790 = vld [vmem:[#allocation2] sm:$0xf]
        %v1791 = vld [vmem:[#allocation2 + $0x4] sm:$0xf]
        %v1792 = vpack.c.bf16 %v1679, %v1678
        %v1793 = vpack.c.bf16 %v1681, %v1680
        %v1794 = vpack.c.bf16 %v1683, %v1682
        %v1795 = vpack.c.bf16 %v1685, %v1684
        %v1796 = vpack.c.bf16 %v1687, %v1686
        %v1797 = vpack.c.bf16 %v1689, %v1688
        %v1798 = vpack.c.bf16 %v1691, %v1690
        %v1799 = vpack.c.bf16 %v1693, %v1692
        %v1800 = vpack.c.bf16 %v1695, %v1694
        %v1801 = vpack.c.bf16 %v1697, %v1696
        %v1802 = vpack.c.bf16 %v1699, %v1698
        %v1803 = vpack.c.bf16 %v1701, %v1700
        %v1804 = vpack.c.bf16 %v1703, %v1702
        %v1805 = vpack.c.bf16 %v1705, %v1704
        %v1806 = vpack.c.bf16 %v1707, %v1706
        %v1807 = vpack.c.bf16 %v1709, %v1708
        %v1808 = vld [vmem:[#allocation5] sm:$0xf]
        %v1809 = vld [vmem:[#allocation5 + $0x4] sm:$0xf]
        %v1812 = vunpack.c.l.b16 %v1808
        %v1813 = vunpack.c.l.b16 %v1809
        %v1814 = vpack.c.b16 %v1813, %v1812
        %vm1816 = vcmask 130048
        %v1818 = vsel %vm1816, %v1792, 0
        %v1821 = vsel %vm1816, %v1793, 0
        %v1824 = vsel %vm1816, %v1794, 0
        %v1827 = vsel %vm1816, %v1795, 0
        %v1830 = vsel %vm1816, %v1796, 0
        %v1833 = vsel %vm1816, %v1797, 0
        %v1836 = vsel %vm1816, %v1798, 0
        %v1839 = vsel %vm1816, %v1799, 0
        %v1842 = vsel %vm1816, %v1800, 0
        %v1845 = vsel %vm1816, %v1801, 0
        %v1848 = vsel %vm1816, %v1802, 0
        %v1851 = vsel %vm1816, %v1803, 0
        %v1854 = vsel %vm1816, %v1804, 0
        %v1857 = vsel %vm1816, %v1805, 0
        %v1860 = vsel %vm1816, %v1806, 0
        %v1863 = vsel %vm1816, %v1807, 0
        %1865 = vmatprep.subr.bf16.mxu0 0
        %1866 = vmatpush1.bf16.msra.mxu0 0
        %1867 = vmatprep.subr.bf16.mxu0 0
        %1868 = vmatpush1.bf16.msra.mxu0 0
        %1869 = vmatprep.subr.bf16.mxu0 0
        %1870 = vmatpush1.bf16.msra.mxu0 0
        %1871 = vmatprep.subr.bf16.mxu0 0
        %1872 = vmatpush1.bf16.msra.mxu0 0
        %1873 = vmatprep.subr.bf16.mxu0 0
        %1874 = vmatpush1.bf16.msra.mxu0 0
        %1875 = vmatprep.subr.bf16.mxu0 0
        %1876 = vmatpush1.bf16.msra.mxu0 0
        %1877 = vmatprep.subr.bf16.mxu0 0
        %1878 = vmatpush1.bf16.msra.mxu0 0
        %1879 = vmatprep.subr.bf16.mxu0 0
        %1880 = vmatpush1.bf16.msra.mxu0 %v1814
        %1881 = vmatprep.subr.bf16.mxu0 0
        %1882 = vmatpush2.bf16.msra.mxu0 0
        %1883 = vmatprep.subr.bf16.mxu0 0
        %1884 = vmatpush2.bf16.msra.mxu0 0
        %1885 = vmatprep.subr.bf16.mxu0 0
        %1886 = vmatpush2.bf16.msra.mxu0 0
        %1887 = vmatprep.subr.bf16.mxu0 0
        %1888 = vmatpush2.bf16.msra.mxu0 0
        %1889 = vmatprep.subr.bf16.mxu0 0
        %1890 = vmatpush2.bf16.msra.mxu0 0
        %1891 = vmatprep.subr.bf16.mxu0 0
        %1892 = vmatpush2.bf16.msra.mxu0 0
        %1893 = vmatprep.subr.bf16.mxu0 0
        %1894 = vmatpush2.bf16.msra.mxu0 0
        %1895 = vmatprep.subr.bf16.mxu0 0
        %1896 = vmatpush2.bf16.msra.mxu0 0
        %1897 = vmatprep.mubr.bf16.mxu0 0
        %1898 = vmatmul.mubr.bf16.gmra.mxu0 %v1818
        %v1899 = vpop.f32.mrf.mxu0
        %v1900 = vadd.f32 0.0, %v1899
        %v1901 = vpop.f32.mrf.mxu0
        %v1902 = vpop.f32.mrf.mxu0
        %v1903 = vadd.f32 0.0, %v1902
        %v1904 = vpop.f32.mrf.mxu0
        %1905 = vmatprep.mubr.bf16.mxu0 0
        %1906 = vmatmul.mubr.bf16.gmra.mxu0 %v1821
        %v1907 = vpop.f32.mrf.mxu0
        %v1908 = vadd.f32 0.0, %v1907
        %v1909 = vpop.f32.mrf.mxu0
        %v1910 = vpop.f32.mrf.mxu0
        %v1911 = vadd.f32 0.0, %v1910
        %v1912 = vpop.f32.mrf.mxu0
        %1913 = vmatprep.mubr.bf16.mxu0 0
        %1914 = vmatmul.mubr.bf16.gmra.mxu0 %v1824
        %v1915 = vpop.f32.mrf.mxu0
        %v1916 = vadd.f32 0.0, %v1915
        %v1917 = vpop.f32.mrf.mxu0
        %v1918 = vpop.f32.mrf.mxu0
        %v1919 = vadd.f32 0.0, %v1918
        %v1920 = vpop.f32.mrf.mxu0
        %1921 = vmatprep.mubr.bf16.mxu0 0
        %1922 = vmatmul.mubr.bf16.gmra.mxu0 %v1827
        %v1923 = vpop.f32.mrf.mxu0
        %v1924 = vadd.f32 0.0, %v1923
        %v1925 = vpop.f32.mrf.mxu0
        %v1926 = vpop.f32.mrf.mxu0
        %v1927 = vadd.f32 0.0, %v1926
        %v1928 = vpop.f32.mrf.mxu0
        %1929 = vmatprep.mubr.bf16.mxu0 0
        %1930 = vmatmul.mubr.bf16.gmra.mxu0 %v1830
        %v1931 = vpop.f32.mrf.mxu0
        %v1932 = vadd.f32 0.0, %v1931
        %v1933 = vpop.f32.mrf.mxu0
        %v1934 = vpop.f32.mrf.mxu0
        %v1935 = vadd.f32 0.0, %v1934
        %v1936 = vpop.f32.mrf.mxu0
        %1937 = vmatprep.mubr.bf16.mxu0 0
        %1938 = vmatmul.mubr.bf16.gmra.mxu0 %v1833
        %v1939 = vpop.f32.mrf.mxu0
        %v1940 = vadd.f32 0.0, %v1939
        %v1941 = vpop.f32.mrf.mxu0
        %v1942 = vpop.f32.mrf.mxu0
        %v1943 = vadd.f32 0.0, %v1942
        %v1944 = vpop.f32.mrf.mxu0
        %1945 = vmatprep.mubr.bf16.mxu0 0
        %1946 = vmatmul.mubr.bf16.gmra.mxu0 %v1836
        %v1947 = vpop.f32.mrf.mxu0
        %v1948 = vadd.f32 0.0, %v1947
        %v1949 = vpop.f32.mrf.mxu0
        %v1950 = vpop.f32.mrf.mxu0
        %v1951 = vadd.f32 0.0, %v1950
        %v1952 = vpop.f32.mrf.mxu0
        %1953 = vmatprep.mubr.bf16.mxu0 0
        %1954 = vmatmul.mubr.bf16.gmra.mxu0 %v1839
        %v1955 = vpop.f32.mrf.mxu0
        %v1956 = vadd.f32 0.0, %v1955
        %v1957 = vpop.f32.mrf.mxu0
        %v1958 = vpop.f32.mrf.mxu0
        %v1959 = vadd.f32 0.0, %v1958
        %v1960 = vpop.f32.mrf.mxu0
        %1961 = vmatprep.mubr.bf16.mxu0 0
        %1962 = vmatmul.mubr.bf16.gmra.mxu0 %v1842
        %v1963 = vpop.f32.mrf.mxu0
        %v1964 = vadd.f32 0.0, %v1963
        %v1965 = vpop.f32.mrf.mxu0
        %v1966 = vpop.f32.mrf.mxu0
        %v1967 = vadd.f32 0.0, %v1966
        %v1968 = vpop.f32.mrf.mxu0
        %1969 = vmatprep.mubr.bf16.mxu0 0
        %1970 = vmatmul.mubr.bf16.gmra.mxu0 %v1845
        %v1971 = vpop.f32.mrf.mxu0
        %v1972 = vadd.f32 0.0, %v1971
        %v1973 = vpop.f32.mrf.mxu0
        %v1974 = vpop.f32.mrf.mxu0
        %v1975 = vadd.f32 0.0, %v1974
        %v1976 = vpop.f32.mrf.mxu0
        %1977 = vmatprep.mubr.bf16.mxu0 0
        %1978 = vmatmul.mubr.bf16.gmra.mxu0 %v1848
        %v1979 = vpop.f32.mrf.mxu0
        %v1980 = vadd.f32 0.0, %v1979
        %v1981 = vpop.f32.mrf.mxu0
        %v1982 = vpop.f32.mrf.mxu0
        %v1983 = vadd.f32 0.0, %v1982
        %v1984 = vpop.f32.mrf.mxu0
        %1985 = vmatprep.mubr.bf16.mxu0 0
        %1986 = vmatmul.mubr.bf16.gmra.mxu0 %v1851
        %v1987 = vpop.f32.mrf.mxu0
        %v1988 = vadd.f32 0.0, %v1987
        %v1989 = vpop.f32.mrf.mxu0
        %v1990 = vpop.f32.mrf.mxu0
        %v1991 = vadd.f32 0.0, %v1990
        %v1992 = vpop.f32.mrf.mxu0
        %1993 = vmatprep.mubr.bf16.mxu0 0
        %1994 = vmatmul.mubr.bf16.gmra.mxu0 %v1854
        %v1995 = vpop.f32.mrf.mxu0
        %v1996 = vadd.f32 0.0, %v1995
        %v1997 = vpop.f32.mrf.mxu0
        %v1998 = vpop.f32.mrf.mxu0
        %v1999 = vadd.f32 0.0, %v1998
        %v2000 = vpop.f32.mrf.mxu0
        %2001 = vmatprep.mubr.bf16.mxu0 0
        %2002 = vmatmul.mubr.bf16.gmra.mxu0 %v1857
        %v2003 = vpop.f32.mrf.mxu0
        %v2004 = vadd.f32 0.0, %v2003
        %v2005 = vpop.f32.mrf.mxu0
        %v2006 = vpop.f32.mrf.mxu0
        %v2007 = vadd.f32 0.0, %v2006
        %v2008 = vpop.f32.mrf.mxu0
        %2009 = vmatprep.mubr.bf16.mxu0 0
        %2010 = vmatmul.mubr.bf16.gmra.mxu0 %v1860
        %v2011 = vpop.f32.mrf.mxu0
        %v2012 = vadd.f32 0.0, %v2011
        %v2013 = vpop.f32.mrf.mxu0
        %v2014 = vpop.f32.mrf.mxu0
        %v2015 = vadd.f32 0.0, %v2014
        %v2016 = vpop.f32.mrf.mxu0
        %2017 = vmatprep.mubr.bf16.mxu0 0
        %2018 = vmatmul.mubr.bf16.gmra.mxu0 %v1863
        %v2019 = vpop.f32.mrf.mxu0
        %v2020 = vadd.f32 0.0, %v2019
        %v2021 = vpop.f32.mrf.mxu0
        %v2022 = vpop.f32.mrf.mxu0
        %v2023 = vadd.f32 0.0, %v2022
        %v2024 = vpop.f32.mrf.mxu0
        %2025 = vdwg.mxu0
        %v2028 = vunpack.c.l.b16 %v1790
        %v2029 = vunpack.c.l.b16 %v1791
        %v2030 = vpack.c.b16 %v2029, %v2028
        %v2033 = vsel %vm1816, %v1774, 0
        %v2036 = vsel %vm1816, %v1775, 0
        %v2039 = vsel %vm1816, %v1776, 0
        %v2042 = vsel %vm1816, %v1777, 0
        %v2045 = vsel %vm1816, %v1778, 0
        %v2048 = vsel %vm1816, %v1779, 0
        %v2051 = vsel %vm1816, %v1780, 0
        %v2054 = vsel %vm1816, %v1781, 0
        %v2057 = vsel %vm1816, %v1782, 0
        %v2060 = vsel %vm1816, %v1783, 0
        %v2063 = vsel %vm1816, %v1784, 0
        %v2066 = vsel %vm1816, %v1785, 0
        %v2069 = vsel %vm1816, %v1786, 0
        %v2072 = vsel %vm1816, %v1787, 0
        %v2075 = vsel %vm1816, %v1788, 0
        %v2078 = vsel %vm1816, %v1789, 0
        %2080 = vmatprep.subr.bf16.mxu0 0
        %2081 = vmatpush1.bf16.msra.mxu0 0
        %2082 = vmatprep.subr.bf16.mxu0 0
        %2083 = vmatpush1.bf16.msra.mxu0 0
        %2084 = vmatprep.subr.bf16.mxu0 0
        %2085 = vmatpush1.bf16.msra.mxu0 0
        %2086 = vmatprep.subr.bf16.mxu0 0
        %2087 = vmatpush1.bf16.msra.mxu0 0
        %2088 = vmatprep.subr.bf16.mxu0 0
        %2089 = vmatpush1.bf16.msra.mxu0 0
        %2090 = vmatprep.subr.bf16.mxu0 0
        %2091 = vmatpush1.bf16.msra.mxu0 0
        %2092 = vmatprep.subr.bf16.mxu0 0
        %2093 = vmatpush1.bf16.msra.mxu0 0
        %2094 = vmatprep.subr.bf16.mxu0 0
        %2095 = vmatpush1.bf16.msra.mxu0 %v2030
        %2096 = vmatprep.subr.bf16.mxu0 0
        %2097 = vmatpush2.bf16.msra.mxu0 0
        %2098 = vmatprep.subr.bf16.mxu0 0
        %2099 = vmatpush2.bf16.msra.mxu0 0
        %2100 = vmatprep.subr.bf16.mxu0 0
        %2101 = vmatpush2.bf16.msra.mxu0 0
        %2102 = vmatprep.subr.bf16.mxu0 0
        %2103 = vmatpush2.bf16.msra.mxu0 0
        %2104 = vmatprep.subr.bf16.mxu0 0
        %2105 = vmatpush2.bf16.msra.mxu0 0
        %2106 = vmatprep.subr.bf16.mxu0 0
        %2107 = vmatpush2.bf16.msra.mxu0 0
        %2108 = vmatprep.subr.bf16.mxu0 0
        %2109 = vmatpush2.bf16.msra.mxu0 0
        %2110 = vmatprep.subr.bf16.mxu0 0
        %2111 = vmatpush2.bf16.msra.mxu0 0
        %2112 = vmatprep.mubr.bf16.mxu0 0
        %2113 = vmatmul.mubr.bf16.gmra.mxu0 %v2033
        %v2114 = vpop.f32.mrf.mxu0
        %v2115 = vadd.f32 %v1900, %v2114
        %v2116 = vpop.f32.mrf.mxu0
        %v2117 = vpop.f32.mrf.mxu0
        %v2118 = vadd.f32 %v1903, %v2117
        %v2119 = vpop.f32.mrf.mxu0
        %2120 = vmatprep.mubr.bf16.mxu0 0
        %2121 = vmatmul.mubr.bf16.gmra.mxu0 %v2036
        %v2122 = vpop.f32.mrf.mxu0
        %v2123 = vadd.f32 %v1908, %v2122
        %v2124 = vpop.f32.mrf.mxu0
        %v2125 = vpop.f32.mrf.mxu0
        %v2126 = vadd.f32 %v1911, %v2125
        %v2127 = vpop.f32.mrf.mxu0
        %2128 = vmatprep.mubr.bf16.mxu0 0
        %2129 = vmatmul.mubr.bf16.gmra.mxu0 %v2039
        %v2130 = vpop.f32.mrf.mxu0
        %v2131 = vadd.f32 %v1916, %v2130
        %v2132 = vpop.f32.mrf.mxu0
        %v2133 = vpop.f32.mrf.mxu0
        %v2134 = vadd.f32 %v1919, %v2133
        %v2135 = vpop.f32.mrf.mxu0
        %2136 = vmatprep.mubr.bf16.mxu0 0
        %2137 = vmatmul.mubr.bf16.gmra.mxu0 %v2042
        %v2138 = vpop.f32.mrf.mxu0
        %v2139 = vadd.f32 %v1924, %v2138
        %v2140 = vpop.f32.mrf.mxu0
        %v2141 = vpop.f32.mrf.mxu0
        %v2142 = vadd.f32 %v1927, %v2141
        %v2143 = vpop.f32.mrf.mxu0
        %2144 = vmatprep.mubr.bf16.mxu0 0
        %2145 = vmatmul.mubr.bf16.gmra.mxu0 %v2045
        %v2146 = vpop.f32.mrf.mxu0
        %v2147 = vadd.f32 %v1932, %v2146
        %v2148 = vpop.f32.mrf.mxu0
        %v2149 = vpop.f32.mrf.mxu0
        %v2150 = vadd.f32 %v1935, %v2149
        %v2151 = vpop.f32.mrf.mxu0
        %2152 = vmatprep.mubr.bf16.mxu0 0
        %2153 = vmatmul.mubr.bf16.gmra.mxu0 %v2048
        %v2154 = vpop.f32.mrf.mxu0
        %v2155 = vadd.f32 %v1940, %v2154
        %v2156 = vpop.f32.mrf.mxu0
        %v2157 = vpop.f32.mrf.mxu0
        %v2158 = vadd.f32 %v1943, %v2157
        %v2159 = vpop.f32.mrf.mxu0
        %2160 = vmatprep.mubr.bf16.mxu0 0
        %2161 = vmatmul.mubr.bf16.gmra.mxu0 %v2051
        %v2162 = vpop.f32.mrf.mxu0
        %v2163 = vadd.f32 %v1948, %v2162
        %v2164 = vpop.f32.mrf.mxu0
        %v2165 = vpop.f32.mrf.mxu0
        %v2166 = vadd.f32 %v1951, %v2165
        %v2167 = vpop.f32.mrf.mxu0
        %2168 = vmatprep.mubr.bf16.mxu0 0
        %2169 = vmatmul.mubr.bf16.gmra.mxu0 %v2054
        %v2170 = vpop.f32.mrf.mxu0
        %v2171 = vadd.f32 %v1956, %v2170
        %v2172 = vpop.f32.mrf.mxu0
        %v2173 = vpop.f32.mrf.mxu0
        %v2174 = vadd.f32 %v1959, %v2173
        %v2175 = vpop.f32.mrf.mxu0
        %2176 = vmatprep.mubr.bf16.mxu0 0
        %2177 = vmatmul.mubr.bf16.gmra.mxu0 %v2057
        %v2178 = vpop.f32.mrf.mxu0
        %v2179 = vadd.f32 %v1964, %v2178
        %v2180 = vpop.f32.mrf.mxu0
        %v2181 = vpop.f32.mrf.mxu0
        %v2182 = vadd.f32 %v1967, %v2181
        %v2183 = vpop.f32.mrf.mxu0
        %2184 = vmatprep.mubr.bf16.mxu0 0
        %2185 = vmatmul.mubr.bf16.gmra.mxu0 %v2060
        %v2186 = vpop.f32.mrf.mxu0
        %v2187 = vadd.f32 %v1972, %v2186
        %v2188 = vpop.f32.mrf.mxu0
        %v2189 = vpop.f32.mrf.mxu0
        %v2190 = vadd.f32 %v1975, %v2189
        %v2191 = vpop.f32.mrf.mxu0
        %2192 = vmatprep.mubr.bf16.mxu0 0
        %2193 = vmatmul.mubr.bf16.gmra.mxu0 %v2063
        %v2194 = vpop.f32.mrf.mxu0
        %v2195 = vadd.f32 %v1980, %v2194
        %v2196 = vpop.f32.mrf.mxu0
        %v2197 = vpop.f32.mrf.mxu0
        %v2198 = vadd.f32 %v1983, %v2197
        %v2199 = vpop.f32.mrf.mxu0
        %2200 = vmatprep.mubr.bf16.mxu0 0
        %2201 = vmatmul.mubr.bf16.gmra.mxu0 %v2066
        %v2202 = vpop.f32.mrf.mxu0
        %v2203 = vadd.f32 %v1988, %v2202
        %v2204 = vpop.f32.mrf.mxu0
        %v2205 = vpop.f32.mrf.mxu0
        %v2206 = vadd.f32 %v1991, %v2205
        %v2207 = vpop.f32.mrf.mxu0
        %2208 = vmatprep.mubr.bf16.mxu0 0
        %2209 = vmatmul.mubr.bf16.gmra.mxu0 %v2069
        %v2210 = vpop.f32.mrf.mxu0
        %v2211 = vadd.f32 %v1996, %v2210
        %v2212 = vpop.f32.mrf.mxu0
        %v2213 = vpop.f32.mrf.mxu0
        %v2214 = vadd.f32 %v1999, %v2213
        %v2215 = vpop.f32.mrf.mxu0
        %2216 = vmatprep.mubr.bf16.mxu0 0
        %2217 = vmatmul.mubr.bf16.gmra.mxu0 %v2072
        %v2218 = vpop.f32.mrf.mxu0
        %v2219 = vadd.f32 %v2004, %v2218
        %v2220 = vpop.f32.mrf.mxu0
        %v2221 = vpop.f32.mrf.mxu0
        %v2222 = vadd.f32 %v2007, %v2221
        %v2223 = vpop.f32.mrf.mxu0
        %2224 = vmatprep.mubr.bf16.mxu0 0
        %2225 = vmatmul.mubr.bf16.gmra.mxu0 %v2075
        %v2226 = vpop.f32.mrf.mxu0
        %v2227 = vadd.f32 %v2012, %v2226
        %v2228 = vpop.f32.mrf.mxu0
        %v2229 = vpop.f32.mrf.mxu0
        %v2230 = vadd.f32 %v2015, %v2229
        %v2231 = vpop.f32.mrf.mxu0
        %2232 = vmatprep.mubr.bf16.mxu0 0
        %2233 = vmatmul.mubr.bf16.gmra.mxu0 %v2078
        %v2234 = vpop.f32.mrf.mxu0
        %v2235 = vadd.f32 %v2020, %v2234
        %v2236 = vpop.f32.mrf.mxu0
        %v2237 = vpop.f32.mrf.mxu0
        %v2238 = vadd.f32 %v2023, %v2237
        %v2239 = vpop.f32.mrf.mxu0
        %2240 = vdwg.mxu0
        %v2241 = vpack.c.bf16 %v1743, %v1742
        %v2242 = vpack.c.bf16 %v1745, %v1744
        %v2243 = vpack.c.bf16 %v1747, %v1746
        %v2244 = vpack.c.bf16 %v1749, %v1748
        %v2245 = vpack.c.bf16 %v1751, %v1750
        %v2246 = vpack.c.bf16 %v1753, %v1752
        %v2247 = vpack.c.bf16 %v1755, %v1754
        %v2248 = vpack.c.bf16 %v1757, %v1756
        %v2249 = vpack.c.bf16 %v1759, %v1758
        %v2250 = vpack.c.bf16 %v1761, %v1760
        %v2251 = vpack.c.bf16 %v1763, %v1762
        %v2252 = vpack.c.bf16 %v1765, %v1764
        %v2253 = vpack.c.bf16 %v1767, %v1766
        %v2254 = vpack.c.bf16 %v1769, %v1768
        %v2255 = vpack.c.bf16 %v1771, %v1770
        %v2256 = vpack.c.bf16 %v1773, %v1772
        %v2257 = vld [vmem:[#allocation7] sm:$0xf]
        %v2258 = vld [vmem:[#allocation7 + $0x4] sm:$0xf]
        %v2261 = vunpack.c.l.b16 %v2257
        %v2262 = vunpack.c.l.b16 %v2258
        %v2263 = vpack.c.b16 %v2262, %v2261
        %v2266 = vsel %vm1816, %v2241, 0
        %v2269 = vsel %vm1816, %v2242, 0
        %v2272 = vsel %vm1816, %v2243, 0
        %v2275 = vsel %vm1816, %v2244, 0
        %v2278 = vsel %vm1816, %v2245, 0
        %v2281 = vsel %vm1816, %v2246, 0
        %v2284 = vsel %vm1816, %v2247, 0
        %v2287 = vsel %vm1816, %v2248, 0
        %v2290 = vsel %vm1816, %v2249, 0
        %v2293 = vsel %vm1816, %v2250, 0
        %v2296 = vsel %vm1816, %v2251, 0
        %v2299 = vsel %vm1816, %v2252, 0
        %v2302 = vsel %vm1816, %v2253, 0
        %v2305 = vsel %vm1816, %v2254, 0
        %v2308 = vsel %vm1816, %v2255, 0
        %v2311 = vsel %vm1816, %v2256, 0
        %2313 = vmatprep.subr.bf16.mxu0 0
        %2314 = vmatpush1.bf16.msra.mxu0 0
        %2315 = vmatprep.subr.bf16.mxu0 0
        %2316 = vmatpush1.bf16.msra.mxu0 0
        %2317 = vmatprep.subr.bf16.mxu0 0
        %2318 = vmatpush1.bf16.msra.mxu0 0
        %2319 = vmatprep.subr.bf16.mxu0 0
        %2320 = vmatpush1.bf16.msra.mxu0 0
        %2321 = vmatprep.subr.bf16.mxu0 0
        %2322 = vmatpush1.bf16.msra.mxu0 0
        %2323 = vmatprep.subr.bf16.mxu0 0
        %2324 = vmatpush1.bf16.msra.mxu0 0
        %2325 = vmatprep.subr.bf16.mxu0 0
        %2326 = vmatpush1.bf16.msra.mxu0 0
        %2327 = vmatprep.subr.bf16.mxu0 0
        %2328 = vmatpush1.bf16.msra.mxu0 %v2263
        %2329 = vmatprep.subr.bf16.mxu0 0
        %2330 = vmatpush2.bf16.msra.mxu0 0
        %2331 = vmatprep.subr.bf16.mxu0 0
        %2332 = vmatpush2.bf16.msra.mxu0 0
        %2333 = vmatprep.subr.bf16.mxu0 0
        %2334 = vmatpush2.bf16.msra.mxu0 0
        %2335 = vmatprep.subr.bf16.mxu0 0
        %2336 = vmatpush2.bf16.msra.mxu0 0
        %2337 = vmatprep.subr.bf16.mxu0 0
        %2338 = vmatpush2.bf16.msra.mxu0 0
        %2339 = vmatprep.subr.bf16.mxu0 0
        %2340 = vmatpush2.bf16.msra.mxu0 0
        %2341 = vmatprep.subr.bf16.mxu0 0
        %2342 = vmatpush2.bf16.msra.mxu0 0
        %2343 = vmatprep.subr.bf16.mxu0 0
        %2344 = vmatpush2.bf16.msra.mxu0 0
        %2345 = vmatprep.mubr.bf16.mxu0 0
        %2346 = vmatmul.mubr.bf16.gmra.mxu0 %v2266
        %v2347 = vpop.f32.mrf.mxu0
        %v2348 = vadd.f32 0.0, %v2347
        %v2349 = vpop.f32.mrf.mxu0
        %v2350 = vpop.f32.mrf.mxu0
        %v2351 = vadd.f32 0.0, %v2350
        %v2352 = vpop.f32.mrf.mxu0
        %2353 = vmatprep.mubr.bf16.mxu0 0
        %2354 = vmatmul.mubr.bf16.gmra.mxu0 %v2269
        %v2355 = vpop.f32.mrf.mxu0
        %v2356 = vadd.f32 0.0, %v2355
        %v2357 = vpop.f32.mrf.mxu0
        %v2358 = vpop.f32.mrf.mxu0
        %v2359 = vadd.f32 0.0, %v2358
        %v2360 = vpop.f32.mrf.mxu0
        %2361 = vmatprep.mubr.bf16.mxu0 0
        %2362 = vmatmul.mubr.bf16.gmra.mxu0 %v2272
        %v2363 = vpop.f32.mrf.mxu0
        %v2364 = vadd.f32 0.0, %v2363
        %v2365 = vpop.f32.mrf.mxu0
        %v2366 = vpop.f32.mrf.mxu0
        %v2367 = vadd.f32 0.0, %v2366
        %v2368 = vpop.f32.mrf.mxu0
        %2369 = vmatprep.mubr.bf16.mxu0 0
        %2370 = vmatmul.mubr.bf16.gmra.mxu0 %v2275
        %v2371 = vpop.f32.mrf.mxu0
        %v2372 = vadd.f32 0.0, %v2371
        %v2373 = vpop.f32.mrf.mxu0
        %v2374 = vpop.f32.mrf.mxu0
        %v2375 = vadd.f32 0.0, %v2374
        %v2376 = vpop.f32.mrf.mxu0
        %2377 = vmatprep.mubr.bf16.mxu0 0
        %2378 = vmatmul.mubr.bf16.gmra.mxu0 %v2278
        %v2379 = vpop.f32.mrf.mxu0
        %v2380 = vadd.f32 0.0, %v2379
        %v2381 = vpop.f32.mrf.mxu0
        %v2382 = vpop.f32.mrf.mxu0
        %v2383 = vadd.f32 0.0, %v2382
        %v2384 = vpop.f32.mrf.mxu0
        %2385 = vmatprep.mubr.bf16.mxu0 0
        %2386 = vmatmul.mubr.bf16.gmra.mxu0 %v2281
        %v2387 = vpop.f32.mrf.mxu0
        %v2388 = vadd.f32 0.0, %v2387
        %v2389 = vpop.f32.mrf.mxu0
        %v2390 = vpop.f32.mrf.mxu0
        %v2391 = vadd.f32 0.0, %v2390
        %v2392 = vpop.f32.mrf.mxu0
        %2393 = vmatprep.mubr.bf16.mxu0 0
        %2394 = vmatmul.mubr.bf16.gmra.mxu0 %v2284
        %v2395 = vpop.f32.mrf.mxu0
        %v2396 = vadd.f32 0.0, %v2395
        %v2397 = vpop.f32.mrf.mxu0
        %v2398 = vpop.f32.mrf.mxu0
        %v2399 = vadd.f32 0.0, %v2398
        %v2400 = vpop.f32.mrf.mxu0
        %2401 = vmatprep.mubr.bf16.mxu0 0
        %2402 = vmatmul.mubr.bf16.gmra.mxu0 %v2287
        %v2403 = vpop.f32.mrf.mxu0
        %v2404 = vadd.f32 0.0, %v2403
        %v2405 = vpop.f32.mrf.mxu0
        %v2406 = vpop.f32.mrf.mxu0
        %v2407 = vadd.f32 0.0, %v2406
        %v2408 = vpop.f32.mrf.mxu0
        %2409 = vmatprep.mubr.bf16.mxu0 0
        %2410 = vmatmul.mubr.bf16.gmra.mxu0 %v2290
        %v2411 = vpop.f32.mrf.mxu0
        %v2412 = vadd.f32 0.0, %v2411
        %v2413 = vpop.f32.mrf.mxu0
        %v2414 = vpop.f32.mrf.mxu0
        %v2415 = vadd.f32 0.0, %v2414
        %v2416 = vpop.f32.mrf.mxu0
        %2417 = vmatprep.mubr.bf16.mxu0 0
        %2418 = vmatmul.mubr.bf16.gmra.mxu0 %v2293
        %v2419 = vpop.f32.mrf.mxu0
        %v2420 = vadd.f32 0.0, %v2419
        %v2421 = vpop.f32.mrf.mxu0
        %v2422 = vpop.f32.mrf.mxu0
        %v2423 = vadd.f32 0.0, %v2422
        %v2424 = vpop.f32.mrf.mxu0
        %2425 = vmatprep.mubr.bf16.mxu0 0
        %2426 = vmatmul.mubr.bf16.gmra.mxu0 %v2296
        %v2427 = vpop.f32.mrf.mxu0
        %v2428 = vadd.f32 0.0, %v2427
        %v2429 = vpop.f32.mrf.mxu0
        %v2430 = vpop.f32.mrf.mxu0
        %v2431 = vadd.f32 0.0, %v2430
        %v2432 = vpop.f32.mrf.mxu0
        %2433 = vmatprep.mubr.bf16.mxu0 0
        %2434 = vmatmul.mubr.bf16.gmra.mxu0 %v2299
        %v2435 = vpop.f32.mrf.mxu0
        %v2436 = vadd.f32 0.0, %v2435
        %v2437 = vpop.f32.mrf.mxu0
        %v2438 = vpop.f32.mrf.mxu0
        %v2439 = vadd.f32 0.0, %v2438
        %v2440 = vpop.f32.mrf.mxu0
        %2441 = vmatprep.mubr.bf16.mxu0 0
        %2442 = vmatmul.mubr.bf16.gmra.mxu0 %v2302
        %v2443 = vpop.f32.mrf.mxu0
        %v2444 = vadd.f32 0.0, %v2443
        %v2445 = vpop.f32.mrf.mxu0
        %v2446 = vpop.f32.mrf.mxu0
        %v2447 = vadd.f32 0.0, %v2446
        %v2448 = vpop.f32.mrf.mxu0
        %2449 = vmatprep.mubr.bf16.mxu0 0
        %2450 = vmatmul.mubr.bf16.gmra.mxu0 %v2305
        %v2451 = vpop.f32.mrf.mxu0
        %v2452 = vadd.f32 0.0, %v2451
        %v2453 = vpop.f32.mrf.mxu0
        %v2454 = vpop.f32.mrf.mxu0
        %v2455 = vadd.f32 0.0, %v2454
        %v2456 = vpop.f32.mrf.mxu0
        %2457 = vmatprep.mubr.bf16.mxu0 0
        %2458 = vmatmul.mubr.bf16.gmra.mxu0 %v2308
        %v2459 = vpop.f32.mrf.mxu0
        %v2460 = vadd.f32 0.0, %v2459
        %v2461 = vpop.f32.mrf.mxu0
        %v2462 = vpop.f32.mrf.mxu0
        %v2463 = vadd.f32 0.0, %v2462
        %v2464 = vpop.f32.mrf.mxu0
        %2465 = vmatprep.mubr.bf16.mxu0 0
        %2466 = vmatmul.mubr.bf16.gmra.mxu0 %v2311
        %v2467 = vpop.f32.mrf.mxu0
        %v2468 = vadd.f32 0.0, %v2467
        %v2469 = vpop.f32.mrf.mxu0
        %v2470 = vpop.f32.mrf.mxu0
        %v2471 = vadd.f32 0.0, %v2470
        %v2472 = vpop.f32.mrf.mxu0
        %2473 = vdwg.mxu0
        %v2474 = vadd.f32 %v2115, %v2348
        %v2475 = vadd.f32 %v2118, %v2351
        %v2476 = vadd.f32 %v2123, %v2356
        %v2477 = vadd.f32 %v2126, %v2359
        %v2478 = vadd.f32 %v2131, %v2364
        %v2479 = vadd.f32 %v2134, %v2367
        %v2480 = vadd.f32 %v2139, %v2372
        %v2481 = vadd.f32 %v2142, %v2375
        %v2482 = vadd.f32 %v2147, %v2380
        %v2483 = vadd.f32 %v2150, %v2383
        %v2484 = vadd.f32 %v2155, %v2388
        %v2485 = vadd.f32 %v2158, %v2391
        %v2486 = vadd.f32 %v2163, %v2396
        %v2487 = vadd.f32 %v2166, %v2399
        %v2488 = vadd.f32 %v2171, %v2404
        %v2489 = vadd.f32 %v2174, %v2407
        %v2490 = vadd.f32 %v2179, %v2412
        %v2491 = vadd.f32 %v2182, %v2415
        %v2492 = vadd.f32 %v2187, %v2420
        %v2493 = vadd.f32 %v2190, %v2423
        %v2494 = vadd.f32 %v2195, %v2428
        %v2495 = vadd.f32 %v2198, %v2431
        %v2496 = vadd.f32 %v2203, %v2436
        %v2497 = vadd.f32 %v2206, %v2439
        %v2498 = vadd.f32 %v2211, %v2444
        %v2499 = vadd.f32 %v2214, %v2447
        %v2500 = vadd.f32 %v2219, %v2452
        %v2501 = vadd.f32 %v2222, %v2455
        %v2502 = vadd.f32 %v2227, %v2460
        %v2503 = vadd.f32 %v2230, %v2463
        %v2504 = vadd.f32 %v2235, %v2468
        %v2505 = vadd.f32 %v2238, %v2471
        %v2506 = vld [vmem:[#allocation8] sm:$0x1]
        %v2508 = vlaneseq
        %v2509 = vshrl.u32 %v2508, 7
        %v2510 = vsub.s32 0, %v2509
        %v2511 = vrot.slane %v2506, %v2510
        %v2513 = vadd.f32 %v2474, %v2511
        %v2514 = vadd.f32 %v2475, %v2511
        %v2515 = vadd.f32 %v2476, %v2511
        %v2516 = vadd.f32 %v2477, %v2511
        %v2517 = vadd.f32 %v2478, %v2511
        %v2518 = vadd.f32 %v2479, %v2511
        %v2519 = vadd.f32 %v2480, %v2511
        %v2520 = vadd.f32 %v2481, %v2511
        %v2521 = vadd.f32 %v2482, %v2511
        %v2522 = vadd.f32 %v2483, %v2511
        %v2523 = vadd.f32 %v2484, %v2511
        %v2524 = vadd.f32 %v2485, %v2511
        %v2525 = vadd.f32 %v2486, %v2511
        %v2526 = vadd.f32 %v2487, %v2511
        %v2527 = vadd.f32 %v2488, %v2511
        %v2528 = vadd.f32 %v2489, %v2511
        %v2529 = vadd.f32 %v2490, %v2511
        %v2530 = vadd.f32 %v2491, %v2511
        %v2531 = vadd.f32 %v2492, %v2511
        %v2532 = vadd.f32 %v2493, %v2511
        %v2533 = vadd.f32 %v2494, %v2511
        %v2534 = vadd.f32 %v2495, %v2511
        %v2535 = vadd.f32 %v2496, %v2511
        %v2536 = vadd.f32 %v2497, %v2511
        %v2537 = vadd.f32 %v2498, %v2511
        %v2538 = vadd.f32 %v2499, %v2511
        %v2539 = vadd.f32 %v2500, %v2511
        %v2540 = vadd.f32 %v2501, %v2511
        %v2541 = vadd.f32 %v2502, %v2511
        %v2542 = vadd.f32 %v2503, %v2511
        %v2543 = vadd.f32 %v2504, %v2511
        %v2544 = vadd.f32 %v2505, %v2511
        %v2545 = vmax.f32 %v2513, 0.0
        %v2546 = vmax.f32 %v2514, 0.0
        %v2547 = vmax.f32 %v2515, 0.0
        %v2548 = vmax.f32 %v2516, 0.0
        %v2549 = vmax.f32 %v2517, 0.0
        %v2550 = vmax.f32 %v2518, 0.0
        %v2551 = vmax.f32 %v2519, 0.0
        %v2552 = vmax.f32 %v2520, 0.0
        %v2553 = vmax.f32 %v2521, 0.0
        %v2554 = vmax.f32 %v2522, 0.0
        %v2555 = vmax.f32 %v2523, 0.0
        %v2556 = vmax.f32 %v2524, 0.0
        %v2557 = vmax.f32 %v2525, 0.0
        %v2558 = vmax.f32 %v2526, 0.0
        %v2559 = vmax.f32 %v2527, 0.0
        %v2560 = vmax.f32 %v2528, 0.0
        %v2561 = vmax.f32 %v2529, 0.0
        %v2562 = vmax.f32 %v2530, 0.0
        %v2563 = vmax.f32 %v2531, 0.0
        %v2564 = vmax.f32 %v2532, 0.0
        %v2565 = vmax.f32 %v2533, 0.0
        %v2566 = vmax.f32 %v2534, 0.0
        %v2567 = vmax.f32 %v2535, 0.0
        %v2568 = vmax.f32 %v2536, 0.0
        %v2569 = vmax.f32 %v2537, 0.0
        %v2570 = vmax.f32 %v2538, 0.0
        %v2571 = vmax.f32 %v2539, 0.0
        %v2572 = vmax.f32 %v2540, 0.0
        %v2573 = vmax.f32 %v2541, 0.0
        %v2574 = vmax.f32 %v2542, 0.0
        %v2575 = vmax.f32 %v2543, 0.0
        %v2576 = vmax.f32 %v2544, 0.0
        %v2577 = vmin.f32 %v2545, 6.0
        %v2578 = vmin.f32 %v2546, 6.0
        %v2579 = vmin.f32 %v2547, 6.0
        %v2580 = vmin.f32 %v2548, 6.0
        %v2581 = vmin.f32 %v2549, 6.0
        %v2582 = vmin.f32 %v2550, 6.0
        %v2583 = vmin.f32 %v2551, 6.0
        %v2584 = vmin.f32 %v2552, 6.0
        %v2585 = vmin.f32 %v2553, 6.0
        %v2586 = vmin.f32 %v2554, 6.0
        %v2587 = vmin.f32 %v2555, 6.0
        %v2588 = vmin.f32 %v2556, 6.0
        %v2589 = vmin.f32 %v2557, 6.0
        %v2590 = vmin.f32 %v2558, 6.0
        %v2591 = vmin.f32 %v2559, 6.0
        %v2592 = vmin.f32 %v2560, 6.0
        %v2593 = vmin.f32 %v2561, 6.0
        %v2594 = vmin.f32 %v2562, 6.0
        %v2595 = vmin.f32 %v2563, 6.0
        %v2596 = vmin.f32 %v2564, 6.0
        %v2597 = vmin.f32 %v2565, 6.0
        %v2598 = vmin.f32 %v2566, 6.0
        %v2599 = vmin.f32 %v2567, 6.0
        %v2600 = vmin.f32 %v2568, 6.0
        %v2601 = vmin.f32 %v2569, 6.0
        %v2602 = vmin.f32 %v2570, 6.0
        %v2603 = vmin.f32 %v2571, 6.0
        %v2604 = vmin.f32 %v2572, 6.0
        %v2605 = vmin.f32 %v2573, 6.0
        %v2606 = vmin.f32 %v2574, 6.0
        %v2607 = vmin.f32 %v2575, 6.0
        %v2608 = vmin.f32 %v2576, 6.0
        %v2609 = vld [vmem:[%s15] sm:$0xff]
        %v2610 = vld [vmem:[%s15 + $0x8] sm:$0xff]
        %v2611 = vld [vmem:[%s15 + $0x10] sm:$0xff]
        %v2612 = vld [vmem:[%s15 + $0x18] sm:$0xff]
        %v2613 = vld [vmem:[%s15 + $0x20] sm:$0xff]
        %v2614 = vld [vmem:[%s15 + $0x28] sm:$0xff]
        %v2615 = vld [vmem:[%s15 + $0x30] sm:$0xff]
        %v2616 = vld [vmem:[%s15 + $0x38] sm:$0xff]
        %v2617 = vld [vmem:[%s15 + $0x40] sm:$0xff]
        %v2618 = vld [vmem:[%s15 + $0x48] sm:$0xff]
        %v2619 = vld [vmem:[%s15 + $0x50] sm:$0xff]
        %v2620 = vld [vmem:[%s15 + $0x58] sm:$0xff]
        %v2621 = vld [vmem:[%s15 + $0x60] sm:$0xff]
        %v2622 = vld [vmem:[%s15 + $0x68] sm:$0xff]
        %v2623 = vld [vmem:[%s15 + $0x70] sm:$0xff]
        %v2624 = vld [vmem:[%s15 + $0x78] sm:$0xff]
        %2625 = vmatprep.subr.mxu0 0.0
        %2626 = vmatpush1.msra.mxu0 %v2624
        %2627 = vmatprep.subr.mxu0 0.0
        %2628 = vmatpush1.msra.mxu0 %v2623
        %2629 = vmatprep.subr.mxu0 0.0
        %2630 = vmatpush1.msra.mxu0 %v2622
        %2631 = vmatprep.subr.mxu0 0.0
        %2632 = vmatpush1.msra.mxu0 %v2621
        %2633 = vmatprep.subr.mxu0 0.0
        %2634 = vmatpush1.msra.mxu0 %v2620
        %2635 = vmatprep.subr.mxu0 0.0
        %2636 = vmatpush1.msra.mxu0 %v2619
        %2637 = vmatprep.subr.mxu0 0.0
        %2638 = vmatpush1.msra.mxu0 %v2618
        %2639 = vmatprep.subr.mxu0 0.0
        %2640 = vmatpush1.msra.mxu0 %v2617
        %2641 = vmatprep.subr.mxu0 0.0
        %2642 = vmatpush1.msra.mxu0 %v2616
        %2643 = vmatprep.subr.mxu0 0.0
        %2644 = vmatpush1.msra.mxu0 %v2615
        %2645 = vmatprep.subr.mxu0 0.0
        %2646 = vmatpush1.msra.mxu0 %v2614
        %2647 = vmatprep.subr.mxu0 0.0
        %2648 = vmatpush1.msra.mxu0 %v2613
        %2649 = vmatprep.subr.mxu0 0.0
        %2650 = vmatpush1.msra.mxu0 %v2612
        %2651 = vmatprep.subr.mxu0 0.0
        %2652 = vmatpush1.msra.mxu0 %v2611
        %2653 = vmatprep.subr.mxu0 0.0
        %2654 = vmatpush1.msra.mxu0 %v2610
        %2655 = vmatprep.subr.mxu0 0.0
        %2656 = vmatpush1.msra.mxu0 %v2609
        %2657 = vmatprep.subr.mxu0 0.0
        %2658 = vmatpush2.msra.mxu0 0.0
        %2659 = vmatprep.subr.mxu0 0.0
        %2660 = vmatpush2.msra.mxu0 0.0
        %2661 = vmatprep.subr.mxu0 0.0
        %2662 = vmatpush2.msra.mxu0 0.0
        %2663 = vmatprep.subr.mxu0 0.0
        %2664 = vmatpush2.msra.mxu0 0.0
        %2665 = vmatprep.subr.mxu0 0.0
        %2666 = vmatpush2.msra.mxu0 0.0
        %2667 = vmatprep.subr.mxu0 0.0
        %2668 = vmatpush2.msra.mxu0 0.0
        %2669 = vmatprep.subr.mxu0 0.0
        %2670 = vmatpush2.msra.mxu0 0.0
        %2671 = vmatprep.subr.mxu0 0.0
        %2672 = vmatpush2.msra.mxu0 0.0
        %2673 = vmatprep.subr.mxu0 0.0
        %2674 = vmatpush2.msra.mxu0 0.0
        %2675 = vmatprep.subr.mxu0 0.0
        %2676 = vmatpush2.msra.mxu0 0.0
        %2677 = vmatprep.subr.mxu0 0.0
        %2678 = vmatpush2.msra.mxu0 0.0
        %2679 = vmatprep.subr.mxu0 0.0
        %2680 = vmatpush2.msra.mxu0 0.0
        %2681 = vmatprep.subr.mxu0 0.0
        %2682 = vmatpush2.msra.mxu0 0.0
        %2683 = vmatprep.subr.mxu0 0.0
        %2684 = vmatpush2.msra.mxu0 0.0
        %2685 = vmatprep.subr.mxu0 0.0
        %2686 = vmatpush2.msra.mxu0 0.0
        %2687 = vmatprep.subr.mxu0 0.0
        %2688 = vmatpush2.msra.mxu0 0.0
        %2689 = vmatprep.mubr.f32.mxu0 0.0
        %2690 = vmatmul.mubr.f32.gmra.mxu0 %v2577
        %v2691 = vpop.f32.mrf.mxu0
        %v2692 = vadd.f32 0.0, %v2691
        %v2693 = vpop.f32.mrf.mxu0
        %2694 = vmatprep.mubr.f32.mxu0 0.0
        %2695 = vmatmul.mubr.f32.gmra.mxu0 %v2578
        %v2696 = vpop.f32.mrf.mxu0
        %v2697 = vadd.f32 0.0, %v2696
        %v2698 = vpop.f32.mrf.mxu0
        %2699 = vmatprep.mubr.f32.mxu0 0.0
        %2700 = vmatmul.mubr.f32.gmra.mxu0 %v2579
        %v2701 = vpop.f32.mrf.mxu0
        %v2702 = vadd.f32 0.0, %v2701
        %v2703 = vpop.f32.mrf.mxu0
        %2704 = vmatprep.mubr.f32.mxu0 0.0
        %2705 = vmatmul.mubr.f32.gmra.mxu0 %v2580
        %v2706 = vpop.f32.mrf.mxu0
        %v2707 = vadd.f32 0.0, %v2706
        %v2708 = vpop.f32.mrf.mxu0
        %2709 = vmatprep.mubr.f32.mxu0 0.0
        %2710 = vmatmul.mubr.f32.gmra.mxu0 %v2581
        %v2711 = vpop.f32.mrf.mxu0
        %v2712 = vadd.f32 0.0, %v2711
        %v2713 = vpop.f32.mrf.mxu0
        %2714 = vmatprep.mubr.f32.mxu0 0.0
        %2715 = vmatmul.mubr.f32.gmra.mxu0 %v2582
        %v2716 = vpop.f32.mrf.mxu0
        %v2717 = vadd.f32 0.0, %v2716
        %v2718 = vpop.f32.mrf.mxu0
        %2719 = vmatprep.mubr.f32.mxu0 0.0
        %2720 = vmatmul.mubr.f32.gmra.mxu0 %v2583
        %v2721 = vpop.f32.mrf.mxu0
        %v2722 = vadd.f32 0.0, %v2721
        %v2723 = vpop.f32.mrf.mxu0
        %2724 = vmatprep.mubr.f32.mxu0 0.0
        %2725 = vmatmul.mubr.f32.gmra.mxu0 %v2584
        %v2726 = vpop.f32.mrf.mxu0
        %v2727 = vadd.f32 0.0, %v2726
        %v2728 = vpop.f32.mrf.mxu0
        %2729 = vmatprep.mubr.f32.mxu0 0.0
        %2730 = vmatmul.mubr.f32.gmra.mxu0 %v2585
        %v2731 = vpop.f32.mrf.mxu0
        %v2732 = vadd.f32 0.0, %v2731
        %v2733 = vpop.f32.mrf.mxu0
        %2734 = vmatprep.mubr.f32.mxu0 0.0
        %2735 = vmatmul.mubr.f32.gmra.mxu0 %v2586
        %v2736 = vpop.f32.mrf.mxu0
        %v2737 = vadd.f32 0.0, %v2736
        %v2738 = vpop.f32.mrf.mxu0
        %2739 = vmatprep.mubr.f32.mxu0 0.0
        %2740 = vmatmul.mubr.f32.gmra.mxu0 %v2587
        %v2741 = vpop.f32.mrf.mxu0
        %v2742 = vadd.f32 0.0, %v2741
        %v2743 = vpop.f32.mrf.mxu0
        %2744 = vmatprep.mubr.f32.mxu0 0.0
        %2745 = vmatmul.mubr.f32.gmra.mxu0 %v2588
        %v2746 = vpop.f32.mrf.mxu0
        %v2747 = vadd.f32 0.0, %v2746
        %v2748 = vpop.f32.mrf.mxu0
        %2749 = vmatprep.mubr.f32.mxu0 0.0
        %2750 = vmatmul.mubr.f32.gmra.mxu0 %v2589
        %v2751 = vpop.f32.mrf.mxu0
        %v2752 = vadd.f32 0.0, %v2751
        %v2753 = vpop.f32.mrf.mxu0
        %2754 = vmatprep.mubr.f32.mxu0 0.0
        %2755 = vmatmul.mubr.f32.gmra.mxu0 %v2590
        %v2756 = vpop.f32.mrf.mxu0
        %v2757 = vadd.f32 0.0, %v2756
        %v2758 = vpop.f32.mrf.mxu0
        %2759 = vmatprep.mubr.f32.mxu0 0.0
        %2760 = vmatmul.mubr.f32.gmra.mxu0 %v2591
        %v2761 = vpop.f32.mrf.mxu0
        %v2762 = vadd.f32 0.0, %v2761
        %v2763 = vpop.f32.mrf.mxu0
        %2764 = vmatprep.mubr.f32.mxu0 0.0
        %2765 = vmatmul.mubr.f32.gmra.mxu0 %v2592
        %v2766 = vpop.f32.mrf.mxu0
        %v2767 = vadd.f32 0.0, %v2766
        %v2768 = vpop.f32.mrf.mxu0
        %2769 = vmatprep.mubr.f32.mxu0 0.0
        %2770 = vmatmul.mubr.f32.gmra.mxu0 %v2593
        %v2771 = vpop.f32.mrf.mxu0
        %v2772 = vadd.f32 0.0, %v2771
        %v2773 = vpop.f32.mrf.mxu0
        %2774 = vmatprep.mubr.f32.mxu0 0.0
        %2775 = vmatmul.mubr.f32.gmra.mxu0 %v2594
        %v2776 = vpop.f32.mrf.mxu0
        %v2777 = vadd.f32 0.0, %v2776
        %v2778 = vpop.f32.mrf.mxu0
        %2779 = vmatprep.mubr.f32.mxu0 0.0
        %2780 = vmatmul.mubr.f32.gmra.mxu0 %v2595
        %v2781 = vpop.f32.mrf.mxu0
        %v2782 = vadd.f32 0.0, %v2781
        %v2783 = vpop.f32.mrf.mxu0
        %2784 = vmatprep.mubr.f32.mxu0 0.0
        %2785 = vmatmul.mubr.f32.gmra.mxu0 %v2596
        %v2786 = vpop.f32.mrf.mxu0
        %v2787 = vadd.f32 0.0, %v2786
        %v2788 = vpop.f32.mrf.mxu0
        %2789 = vmatprep.mubr.f32.mxu0 0.0
        %2790 = vmatmul.mubr.f32.gmra.mxu0 %v2597
        %v2791 = vpop.f32.mrf.mxu0
        %v2792 = vadd.f32 0.0, %v2791
        %v2793 = vpop.f32.mrf.mxu0
        %2794 = vmatprep.mubr.f32.mxu0 0.0
        %2795 = vmatmul.mubr.f32.gmra.mxu0 %v2598
        %v2796 = vpop.f32.mrf.mxu0
        %v2797 = vadd.f32 0.0, %v2796
        %v2798 = vpop.f32.mrf.mxu0
        %2799 = vmatprep.mubr.f32.mxu0 0.0
        %2800 = vmatmul.mubr.f32.gmra.mxu0 %v2599
        %v2801 = vpop.f32.mrf.mxu0
        %v2802 = vadd.f32 0.0, %v2801
        %v2803 = vpop.f32.mrf.mxu0
        %2804 = vmatprep.mubr.f32.mxu0 0.0
        %2805 = vmatmul.mubr.f32.gmra.mxu0 %v2600
        %v2806 = vpop.f32.mrf.mxu0
        %v2807 = vadd.f32 0.0, %v2806
        %v2808 = vpop.f32.mrf.mxu0
        %2809 = vmatprep.mubr.f32.mxu0 0.0
        %2810 = vmatmul.mubr.f32.gmra.mxu0 %v2601
        %v2811 = vpop.f32.mrf.mxu0
        %v2812 = vadd.f32 0.0, %v2811
        %v2813 = vpop.f32.mrf.mxu0
        %2814 = vmatprep.mubr.f32.mxu0 0.0
        %2815 = vmatmul.mubr.f32.gmra.mxu0 %v2602
        %v2816 = vpop.f32.mrf.mxu0
        %v2817 = vadd.f32 0.0, %v2816
        %v2818 = vpop.f32.mrf.mxu0
        %2819 = vmatprep.mubr.f32.mxu0 0.0
        %2820 = vmatmul.mubr.f32.gmra.mxu0 %v2603
        %v2821 = vpop.f32.mrf.mxu0
        %v2822 = vadd.f32 0.0, %v2821
        %v2823 = vpop.f32.mrf.mxu0
        %2824 = vmatprep.mubr.f32.mxu0 0.0
        %2825 = vmatmul.mubr.f32.gmra.mxu0 %v2604
        %v2826 = vpop.f32.mrf.mxu0
        %v2827 = vadd.f32 0.0, %v2826
        %v2828 = vpop.f32.mrf.mxu0
        %2829 = vmatprep.mubr.f32.mxu0 0.0
        %2830 = vmatmul.mubr.f32.gmra.mxu0 %v2605
        %v2831 = vpop.f32.mrf.mxu0
        %v2832 = vadd.f32 0.0, %v2831
        %v2833 = vpop.f32.mrf.mxu0
        %2834 = vmatprep.mubr.f32.mxu0 0.0
        %2835 = vmatmul.mubr.f32.gmra.mxu0 %v2606
        %v2836 = vpop.f32.mrf.mxu0
        %v2837 = vadd.f32 0.0, %v2836
        %v2838 = vpop.f32.mrf.mxu0
        %2839 = vmatprep.mubr.f32.mxu0 0.0
        %2840 = vmatmul.mubr.f32.gmra.mxu0 %v2607
        %v2841 = vpop.f32.mrf.mxu0
        %v2842 = vadd.f32 0.0, %v2841
        %v2843 = vpop.f32.mrf.mxu0
        %2844 = vmatprep.mubr.f32.mxu0 0.0
        %2845 = vmatmul.mubr.f32.gmra.mxu0 %v2608
        %v2846 = vpop.f32.mrf.mxu0
        %v2847 = vadd.f32 0.0, %v2846
        %v2848 = vpop.f32.mrf.mxu0
        %2849 = vdwg.mxu0
        %v2850 = vld [vmem:[%s17] sm:$0xff]
        %v2851 = vld [vmem:[%s17 + $0x8] sm:$0xff]
        %v2852 = vld [vmem:[%s17 + $0x10] sm:$0xff]
        %v2853 = vld [vmem:[%s17 + $0x18] sm:$0xff]
        %v2854 = vld [vmem:[%s17 + $0x20] sm:$0xff]
        %v2855 = vld [vmem:[%s17 + $0x28] sm:$0xff]
        %v2856 = vld [vmem:[%s17 + $0x30] sm:$0xff]
        %v2857 = vld [vmem:[%s17 + $0x38] sm:$0xff]
        %v2858 = vld [vmem:[%s17 + $0x40] sm:$0xff]
        %v2859 = vld [vmem:[%s17 + $0x48] sm:$0xff]
        %v2860 = vld [vmem:[%s17 + $0x50] sm:$0xff]
        %v2861 = vld [vmem:[%s17 + $0x58] sm:$0xff]
        %v2862 = vld [vmem:[%s17 + $0x60] sm:$0xff]
        %v2863 = vld [vmem:[%s17 + $0x68] sm:$0xff]
        %v2864 = vld [vmem:[%s17 + $0x70] sm:$0xff]
        %v2865 = vld [vmem:[%s17 + $0x78] sm:$0xff]
        %2866 = vmatprep.subr.mxu0 0.0
        %2867 = vmatpush1.msra.mxu0 %v2865
        %2868 = vmatprep.subr.mxu0 0.0
        %2869 = vmatpush1.msra.mxu0 %v2864
        %2870 = vmatprep.subr.mxu0 0.0
        %2871 = vmatpush1.msra.mxu0 %v2863
        %2872 = vmatprep.subr.mxu0 0.0
        %2873 = vmatpush1.msra.mxu0 %v2862
        %2874 = vmatprep.subr.mxu0 0.0
        %2875 = vmatpush1.msra.mxu0 %v2861
        %2876 = vmatprep.subr.mxu0 0.0
        %2877 = vmatpush1.msra.mxu0 %v2860
        %2878 = vmatprep.subr.mxu0 0.0
        %2879 = vmatpush1.msra.mxu0 %v2859
        %2880 = vmatprep.subr.mxu0 0.0
        %2881 = vmatpush1.msra.mxu0 %v2858
        %2882 = vmatprep.subr.mxu0 0.0
        %2883 = vmatpush1.msra.mxu0 %v2857
        %2884 = vmatprep.subr.mxu0 0.0
        %2885 = vmatpush1.msra.mxu0 %v2856
        %2886 = vmatprep.subr.mxu0 0.0
        %2887 = vmatpush1.msra.mxu0 %v2855
        %2888 = vmatprep.subr.mxu0 0.0
        %2889 = vmatpush1.msra.mxu0 %v2854
        %2890 = vmatprep.subr.mxu0 0.0
        %2891 = vmatpush1.msra.mxu0 %v2853
        %2892 = vmatprep.subr.mxu0 0.0
        %2893 = vmatpush1.msra.mxu0 %v2852
        %2894 = vmatprep.subr.mxu0 0.0
        %2895 = vmatpush1.msra.mxu0 %v2851
        %2896 = vmatprep.subr.mxu0 0.0
        %2897 = vmatpush1.msra.mxu0 %v2850
        %2898 = vmatprep.subr.mxu0 0.0
        %2899 = vmatpush2.msra.mxu0 0.0
        %2900 = vmatprep.subr.mxu0 0.0
        %2901 = vmatpush2.msra.mxu0 0.0
        %2902 = vmatprep.subr.mxu0 0.0
        %2903 = vmatpush2.msra.mxu0 0.0
        %2904 = vmatprep.subr.mxu0 0.0
        %2905 = vmatpush2.msra.mxu0 0.0
        %2906 = vmatprep.subr.mxu0 0.0
        %2907 = vmatpush2.msra.mxu0 0.0
        %2908 = vmatprep.subr.mxu0 0.0
        %2909 = vmatpush2.msra.mxu0 0.0
        %2910 = vmatprep.subr.mxu0 0.0
        %2911 = vmatpush2.msra.mxu0 0.0
        %2912 = vmatprep.subr.mxu0 0.0
        %2913 = vmatpush2.msra.mxu0 0.0
        %2914 = vmatprep.subr.mxu0 0.0
        %2915 = vmatpush2.msra.mxu0 0.0
        %2916 = vmatprep.subr.mxu0 0.0
        %2917 = vmatpush2.msra.mxu0 0.0
        %2918 = vmatprep.subr.mxu0 0.0
        %2919 = vmatpush2.msra.mxu0 0.0
        %2920 = vmatprep.subr.mxu0 0.0
        %2921 = vmatpush2.msra.mxu0 0.0
        %2922 = vmatprep.subr.mxu0 0.0
        %2923 = vmatpush2.msra.mxu0 0.0
        %2924 = vmatprep.subr.mxu0 0.0
        %2925 = vmatpush2.msra.mxu0 0.0
        %2926 = vmatprep.subr.mxu0 0.0
        %2927 = vmatpush2.msra.mxu0 0.0
        %2928 = vmatprep.subr.mxu0 0.0
        %2929 = vmatpush2.msra.mxu0 0.0
        %2930 = vmatprep.mubr.f32.mxu0 0.0
        %2931 = vmatmul.mubr.f32.gmra.mxu0 %v2577
        %v2932 = vpop.f32.mrf.mxu0
        %v2933 = vadd.f32 0.0, %v2932
        %v2934 = vpop.f32.mrf.mxu0
        %2935 = vmatprep.mubr.f32.mxu0 0.0
        %2936 = vmatmul.mubr.f32.gmra.mxu0 %v2578
        %v2937 = vpop.f32.mrf.mxu0
        %v2938 = vadd.f32 0.0, %v2937
        %v2939 = vpop.f32.mrf.mxu0
        %2940 = vmatprep.mubr.f32.mxu0 0.0
        %2941 = vmatmul.mubr.f32.gmra.mxu0 %v2579
        %v2942 = vpop.f32.mrf.mxu0
        %v2943 = vadd.f32 0.0, %v2942
        %v2944 = vpop.f32.mrf.mxu0
        %2945 = vmatprep.mubr.f32.mxu0 0.0
        %2946 = vmatmul.mubr.f32.gmra.mxu0 %v2580
        %v2947 = vpop.f32.mrf.mxu0
        %v2948 = vadd.f32 0.0, %v2947
        %v2949 = vpop.f32.mrf.mxu0
        %2950 = vmatprep.mubr.f32.mxu0 0.0
        %2951 = vmatmul.mubr.f32.gmra.mxu0 %v2581
        %v2952 = vpop.f32.mrf.mxu0
        %v2953 = vadd.f32 0.0, %v2952
        %v2954 = vpop.f32.mrf.mxu0
        %2955 = vmatprep.mubr.f32.mxu0 0.0
        %2956 = vmatmul.mubr.f32.gmra.mxu0 %v2582
        %v2957 = vpop.f32.mrf.mxu0
        %v2958 = vadd.f32 0.0, %v2957
        %v2959 = vpop.f32.mrf.mxu0
        %2960 = vmatprep.mubr.f32.mxu0 0.0
        %2961 = vmatmul.mubr.f32.gmra.mxu0 %v2583
        %v2962 = vpop.f32.mrf.mxu0
        %v2963 = vadd.f32 0.0, %v2962
        %v2964 = vpop.f32.mrf.mxu0
        %2965 = vmatprep.mubr.f32.mxu0 0.0
        %2966 = vmatmul.mubr.f32.gmra.mxu0 %v2584
        %v2967 = vpop.f32.mrf.mxu0
        %v2968 = vadd.f32 0.0, %v2967
        %v2969 = vpop.f32.mrf.mxu0
        %2970 = vmatprep.mubr.f32.mxu0 0.0
        %2971 = vmatmul.mubr.f32.gmra.mxu0 %v2585
        %v2972 = vpop.f32.mrf.mxu0
        %v2973 = vadd.f32 0.0, %v2972
        %v2974 = vpop.f32.mrf.mxu0
        %2975 = vmatprep.mubr.f32.mxu0 0.0
        %2976 = vmatmul.mubr.f32.gmra.mxu0 %v2586
        %v2977 = vpop.f32.mrf.mxu0
        %v2978 = vadd.f32 0.0, %v2977
        %v2979 = vpop.f32.mrf.mxu0
        %2980 = vmatprep.mubr.f32.mxu0 0.0
        %2981 = vmatmul.mubr.f32.gmra.mxu0 %v2587
        %v2982 = vpop.f32.mrf.mxu0
        %v2983 = vadd.f32 0.0, %v2982
        %v2984 = vpop.f32.mrf.mxu0
        %2985 = vmatprep.mubr.f32.mxu0 0.0
        %2986 = vmatmul.mubr.f32.gmra.mxu0 %v2588
        %v2987 = vpop.f32.mrf.mxu0
        %v2988 = vadd.f32 0.0, %v2987
        %v2989 = vpop.f32.mrf.mxu0
        %2990 = vmatprep.mubr.f32.mxu0 0.0
        %2991 = vmatmul.mubr.f32.gmra.mxu0 %v2589
        %v2992 = vpop.f32.mrf.mxu0
        %v2993 = vadd.f32 0.0, %v2992
        %v2994 = vpop.f32.mrf.mxu0
        %2995 = vmatprep.mubr.f32.mxu0 0.0
        %2996 = vmatmul.mubr.f32.gmra.mxu0 %v2590
        %v2997 = vpop.f32.mrf.mxu0
        %v2998 = vadd.f32 0.0, %v2997
        %v2999 = vpop.f32.mrf.mxu0
        %3000 = vmatprep.mubr.f32.mxu0 0.0
        %3001 = vmatmul.mubr.f32.gmra.mxu0 %v2591
        %v3002 = vpop.f32.mrf.mxu0
        %v3003 = vadd.f32 0.0, %v3002
        %v3004 = vpop.f32.mrf.mxu0
        %3005 = vmatprep.mubr.f32.mxu0 0.0
        %3006 = vmatmul.mubr.f32.gmra.mxu0 %v2592
        %v3007 = vpop.f32.mrf.mxu0
        %v3008 = vadd.f32 0.0, %v3007
        %v3009 = vpop.f32.mrf.mxu0
        %3010 = vmatprep.mubr.f32.mxu0 0.0
        %3011 = vmatmul.mubr.f32.gmra.mxu0 %v2593
        %v3012 = vpop.f32.mrf.mxu0
        %v3013 = vadd.f32 0.0, %v3012
        %v3014 = vpop.f32.mrf.mxu0
        %3015 = vmatprep.mubr.f32.mxu0 0.0
        %3016 = vmatmul.mubr.f32.gmra.mxu0 %v2594
        %v3017 = vpop.f32.mrf.mxu0
        %v3018 = vadd.f32 0.0, %v3017
        %v3019 = vpop.f32.mrf.mxu0
        %3020 = vmatprep.mubr.f32.mxu0 0.0
        %3021 = vmatmul.mubr.f32.gmra.mxu0 %v2595
        %v3022 = vpop.f32.mrf.mxu0
        %v3023 = vadd.f32 0.0, %v3022
        %v3024 = vpop.f32.mrf.mxu0
        %3025 = vmatprep.mubr.f32.mxu0 0.0
        %3026 = vmatmul.mubr.f32.gmra.mxu0 %v2596
        %v3027 = vpop.f32.mrf.mxu0
        %v3028 = vadd.f32 0.0, %v3027
        %v3029 = vpop.f32.mrf.mxu0
        %3030 = vmatprep.mubr.f32.mxu0 0.0
        %3031 = vmatmul.mubr.f32.gmra.mxu0 %v2597
        %v3032 = vpop.f32.mrf.mxu0
        %v3033 = vadd.f32 0.0, %v3032
        %v3034 = vpop.f32.mrf.mxu0
        %3035 = vmatprep.mubr.f32.mxu0 0.0
        %3036 = vmatmul.mubr.f32.gmra.mxu0 %v2598
        %v3037 = vpop.f32.mrf.mxu0
        %v3038 = vadd.f32 0.0, %v3037
        %v3039 = vpop.f32.mrf.mxu0
        %3040 = vmatprep.mubr.f32.mxu0 0.0
        %3041 = vmatmul.mubr.f32.gmra.mxu0 %v2599
        %v3042 = vpop.f32.mrf.mxu0
        %v3043 = vadd.f32 0.0, %v3042
        %v3044 = vpop.f32.mrf.mxu0
        %3045 = vmatprep.mubr.f32.mxu0 0.0
        %3046 = vmatmul.mubr.f32.gmra.mxu0 %v2600
        %v3047 = vpop.f32.mrf.mxu0
        %v3048 = vadd.f32 0.0, %v3047
        %v3049 = vpop.f32.mrf.mxu0
        %3050 = vmatprep.mubr.f32.mxu0 0.0
        %3051 = vmatmul.mubr.f32.gmra.mxu0 %v2601
        %v3052 = vpop.f32.mrf.mxu0
        %v3053 = vadd.f32 0.0, %v3052
        %v3054 = vpop.f32.mrf.mxu0
        %3055 = vmatprep.mubr.f32.mxu0 0.0
        %3056 = vmatmul.mubr.f32.gmra.mxu0 %v2602
        %v3057 = vpop.f32.mrf.mxu0
        %v3058 = vadd.f32 0.0, %v3057
        %v3059 = vpop.f32.mrf.mxu0
        %3060 = vmatprep.mubr.f32.mxu0 0.0
        %3061 = vmatmul.mubr.f32.gmra.mxu0 %v2603
        %v3062 = vpop.f32.mrf.mxu0
        %v3063 = vadd.f32 0.0, %v3062
        %v3064 = vpop.f32.mrf.mxu0
        %3065 = vmatprep.mubr.f32.mxu0 0.0
        %3066 = vmatmul.mubr.f32.gmra.mxu0 %v2604
        %v3067 = vpop.f32.mrf.mxu0
        %v3068 = vadd.f32 0.0, %v3067
        %v3069 = vpop.f32.mrf.mxu0
        %3070 = vmatprep.mubr.f32.mxu0 0.0
        %3071 = vmatmul.mubr.f32.gmra.mxu0 %v2605
        %v3072 = vpop.f32.mrf.mxu0
        %v3073 = vadd.f32 0.0, %v3072
        %v3074 = vpop.f32.mrf.mxu0
        %3075 = vmatprep.mubr.f32.mxu0 0.0
        %3076 = vmatmul.mubr.f32.gmra.mxu0 %v2606
        %v3077 = vpop.f32.mrf.mxu0
        %v3078 = vadd.f32 0.0, %v3077
        %v3079 = vpop.f32.mrf.mxu0
        %3080 = vmatprep.mubr.f32.mxu0 0.0
        %3081 = vmatmul.mubr.f32.gmra.mxu0 %v2607
        %v3082 = vpop.f32.mrf.mxu0
        %v3083 = vadd.f32 0.0, %v3082
        %v3084 = vpop.f32.mrf.mxu0
        %3085 = vmatprep.mubr.f32.mxu0 0.0
        %3086 = vmatmul.mubr.f32.gmra.mxu0 %v2608
        %v3087 = vpop.f32.mrf.mxu0
        %v3088 = vadd.f32 0.0, %v3087
        %v3089 = vpop.f32.mrf.mxu0
        %3090 = vdwg.mxu0
        %v3091 = vmax.f32 %v2692, %v2933
        %v3092 = vmax.f32 %v2697, %v2938
        %v3093 = vmax.f32 %v2702, %v2943
        %v3094 = vmax.f32 %v2707, %v2948
        %v3095 = vmax.f32 %v2712, %v2953
        %v3096 = vmax.f32 %v2717, %v2958
        %v3097 = vmax.f32 %v2722, %v2963
        %v3098 = vmax.f32 %v2727, %v2968
        %v3099 = vmax.f32 %v2732, %v2973
        %v3100 = vmax.f32 %v2737, %v2978
        %v3101 = vmax.f32 %v2742, %v2983
        %v3102 = vmax.f32 %v2747, %v2988
        %v3103 = vmax.f32 %v2752, %v2993
        %v3104 = vmax.f32 %v2757, %v2998
        %v3105 = vmax.f32 %v2762, %v3003
        %v3106 = vmax.f32 %v2767, %v3008
        %v3107 = vmax.f32 %v2772, %v3013
        %v3108 = vmax.f32 %v2777, %v3018
        %v3109 = vmax.f32 %v2782, %v3023
        %v3110 = vmax.f32 %v2787, %v3028
        %v3111 = vmax.f32 %v2792, %v3033
        %v3112 = vmax.f32 %v2797, %v3038
        %v3113 = vmax.f32 %v2802, %v3043
        %v3114 = vmax.f32 %v2807, %v3048
        %v3115 = vmax.f32 %v2812, %v3053
        %v3116 = vmax.f32 %v2817, %v3058
        %v3117 = vmax.f32 %v2822, %v3063
        %v3118 = vmax.f32 %v2827, %v3068
        %v3119 = vmax.f32 %v2832, %v3073
        %v3120 = vmax.f32 %v2837, %v3078
        %v3121 = vmax.f32 %v2842, %v3083
        %v3122 = vmax.f32 %v2847, %v3088
        %v3123 = vld [vmem:[%s19] sm:$0xff]
        %v3124 = vld [vmem:[%s19 + $0x8] sm:$0xff]
        %v3125 = vld [vmem:[%s19 + $0x10] sm:$0xff]
        %v3126 = vld [vmem:[%s19 + $0x18] sm:$0xff]
        %v3127 = vld [vmem:[%s19 + $0x20] sm:$0xff]
        %v3128 = vld [vmem:[%s19 + $0x28] sm:$0xff]
        %v3129 = vld [vmem:[%s19 + $0x30] sm:$0xff]
        %v3130 = vld [vmem:[%s19 + $0x38] sm:$0xff]
        %v3131 = vld [vmem:[%s19 + $0x40] sm:$0xff]
        %v3132 = vld [vmem:[%s19 + $0x48] sm:$0xff]
        %v3133 = vld [vmem:[%s19 + $0x50] sm:$0xff]
        %v3134 = vld [vmem:[%s19 + $0x58] sm:$0xff]
        %v3135 = vld [vmem:[%s19 + $0x60] sm:$0xff]
        %v3136 = vld [vmem:[%s19 + $0x68] sm:$0xff]
        %v3137 = vld [vmem:[%s19 + $0x70] sm:$0xff]
        %v3138 = vld [vmem:[%s19 + $0x78] sm:$0xff]
        %v3139 = vld [vmem:[%s19 + $0x80] sm:$0xff]
        %v3140 = vld [vmem:[%s19 + $0x88] sm:$0xff]
        %v3141 = vld [vmem:[%s19 + $0x90] sm:$0xff]
        %v3142 = vld [vmem:[%s19 + $0x98] sm:$0xff]
        %v3143 = vld [vmem:[%s19 + $0xa0] sm:$0xff]
        %v3144 = vld [vmem:[%s19 + $0xa8] sm:$0xff]
        %v3145 = vld [vmem:[%s19 + $0xb0] sm:$0xff]
        %v3146 = vld [vmem:[%s19 + $0xb8] sm:$0xff]
        %v3147 = vld [vmem:[%s19 + $0xc0] sm:$0xff]
        %v3148 = vld [vmem:[%s19 + $0xc8] sm:$0xff]
        %v3149 = vld [vmem:[%s19 + $0xd0] sm:$0xff]
        %v3150 = vld [vmem:[%s19 + $0xd8] sm:$0xff]
        %v3151 = vld [vmem:[%s19 + $0xe0] sm:$0xff]
        %v3152 = vld [vmem:[%s19 + $0xe8] sm:$0xff]
        %v3153 = vld [vmem:[%s19 + $0xf0] sm:$0xff]
        %v3154 = vld [vmem:[%s19 + $0xf8] sm:$0xff]
        %3155 = vmatprep.subr.mxu0 0.0
        %3156 = vmatpush1.msra.mxu0 %v3106
        %3157 = vmatprep.subr.mxu0 0.0
        %3158 = vmatpush1.msra.mxu0 %v3105
        %3159 = vmatprep.subr.mxu0 0.0
        %3160 = vmatpush1.msra.mxu0 %v3104
        %3161 = vmatprep.subr.mxu0 0.0
        %3162 = vmatpush1.msra.mxu0 %v3103
        %3163 = vmatprep.subr.mxu0 0.0
        %3164 = vmatpush1.msra.mxu0 %v3102
        %3165 = vmatprep.subr.mxu0 0.0
        %3166 = vmatpush1.msra.mxu0 %v3101
        %3167 = vmatprep.subr.mxu0 0.0
        %3168 = vmatpush1.msra.mxu0 %v3100
        %3169 = vmatprep.subr.mxu0 0.0
        %3170 = vmatpush1.msra.mxu0 %v3099
        %3171 = vmatprep.subr.mxu0 0.0
        %3172 = vmatpush1.msra.mxu0 %v3098
        %3173 = vmatprep.subr.mxu0 0.0
        %3174 = vmatpush1.msra.mxu0 %v3097
        %3175 = vmatprep.subr.mxu0 0.0
        %3176 = vmatpush1.msra.mxu0 %v3096
        %3177 = vmatprep.subr.mxu0 0.0
        %3178 = vmatpush1.msra.mxu0 %v3095
        %3179 = vmatprep.subr.mxu0 0.0
        %3180 = vmatpush1.msra.mxu0 %v3094
        %3181 = vmatprep.subr.mxu0 0.0
        %3182 = vmatpush1.msra.mxu0 %v3093
        %3183 = vmatprep.subr.mxu0 0.0
        %3184 = vmatpush1.msra.mxu0 %v3092
        %3185 = vmatprep.subr.mxu0 0.0
        %3186 = vmatpush1.msra.mxu0 %v3091
        %3187 = vmatprep.subr.mxu0 0.0
        %3188 = vmatpush2.msra.mxu0 %v3122
        %3189 = vmatprep.subr.mxu0 0.0
        %3190 = vmatpush2.msra.mxu0 %v3121
        %3191 = vmatprep.subr.mxu0 0.0
        %3192 = vmatpush2.msra.mxu0 %v3120
        %3193 = vmatprep.subr.mxu0 0.0
        %3194 = vmatpush2.msra.mxu0 %v3119
        %3195 = vmatprep.subr.mxu0 0.0
        %3196 = vmatpush2.msra.mxu0 %v3118
        %3197 = vmatprep.subr.mxu0 0.0
        %3198 = vmatpush2.msra.mxu0 %v3117
        %3199 = vmatprep.subr.mxu0 0.0
        %3200 = vmatpush2.msra.mxu0 %v3116
        %3201 = vmatprep.subr.mxu0 0.0
        %3202 = vmatpush2.msra.mxu0 %v3115
        %3203 = vmatprep.subr.mxu0 0.0
        %3204 = vmatpush2.msra.mxu0 %v3114
        %3205 = vmatprep.subr.mxu0 0.0
        %3206 = vmatpush2.msra.mxu0 %v3113
        %3207 = vmatprep.subr.mxu0 0.0
        %3208 = vmatpush2.msra.mxu0 %v3112
        %3209 = vmatprep.subr.mxu0 0.0
        %3210 = vmatpush2.msra.mxu0 %v3111
        %3211 = vmatprep.subr.mxu0 0.0
        %3212 = vmatpush2.msra.mxu0 %v3110
        %3213 = vmatprep.subr.mxu0 0.0
        %3214 = vmatpush2.msra.mxu0 %v3109
        %3215 = vmatprep.subr.mxu0 0.0
        %3216 = vmatpush2.msra.mxu0 %v3108
        %3217 = vmatprep.subr.mxu0 0.0
        %3218 = vmatpush2.msra.mxu0 %v3107
        %3219 = vmatprep.mubr.f32.mxu0 %v3124
        %3220 = vmatmul.mubr.f32.gmra.mxu0 %v3123
        %v3221 = vpop.f32.mrf.mxu0
        %v3222 = vadd.f32 0.0, %v3221
        %v3223 = vpop.f32.mrf.mxu0
        %3224 = vmatprep.mubr.f32.mxu0 %v3126
        %3225 = vmatmul.mubr.f32.gmra.mxu0 %v3125
        %v3226 = vpop.f32.mrf.mxu0
        %v3227 = vadd.f32 0.0, %v3226
        %v3228 = vpop.f32.mrf.mxu0
        %3229 = vmatprep.mubr.f32.mxu0 %v3128
        %3230 = vmatmul.mubr.f32.gmra.mxu0 %v3127
        %v3231 = vpop.f32.mrf.mxu0
        %v3232 = vadd.f32 0.0, %v3231
        %v3233 = vpop.f32.mrf.mxu0
        %3234 = vmatprep.mubr.f32.mxu0 %v3130
        %3235 = vmatmul.mubr.f32.gmra.mxu0 %v3129
        %v3236 = vpop.f32.mrf.mxu0
        %v3237 = vadd.f32 0.0, %v3236
        %v3238 = vpop.f32.mrf.mxu0
        %3239 = vmatprep.mubr.f32.mxu0 %v3132
        %3240 = vmatmul.mubr.f32.gmra.mxu0 %v3131
        %v3241 = vpop.f32.mrf.mxu0
        %v3242 = vadd.f32 0.0, %v3241
        %v3243 = vpop.f32.mrf.mxu0
        %3244 = vmatprep.mubr.f32.mxu0 %v3134
        %3245 = vmatmul.mubr.f32.gmra.mxu0 %v3133
        %v3246 = vpop.f32.mrf.mxu0
        %v3247 = vadd.f32 0.0, %v3246
        %v3248 = vpop.f32.mrf.mxu0
        %3249 = vmatprep.mubr.f32.mxu0 %v3136
        %3250 = vmatmul.mubr.f32.gmra.mxu0 %v3135
        %v3251 = vpop.f32.mrf.mxu0
        %v3252 = vadd.f32 0.0, %v3251
        %v3253 = vpop.f32.mrf.mxu0
        %3254 = vmatprep.mubr.f32.mxu0 %v3138
        %3255 = vmatmul.mubr.f32.gmra.mxu0 %v3137
        %v3256 = vpop.f32.mrf.mxu0
        %v3257 = vadd.f32 0.0, %v3256
        %v3258 = vpop.f32.mrf.mxu0
        %3259 = vmatprep.mubr.f32.mxu0 %v3140
        %3260 = vmatmul.mubr.f32.gmra.mxu0 %v3139
        %v3261 = vpop.f32.mrf.mxu0
        %v3262 = vadd.f32 0.0, %v3261
        %v3263 = vpop.f32.mrf.mxu0
        %3264 = vmatprep.mubr.f32.mxu0 %v3142
        %3265 = vmatmul.mubr.f32.gmra.mxu0 %v3141
        %v3266 = vpop.f32.mrf.mxu0
        %v3267 = vadd.f32 0.0, %v3266
        %v3268 = vpop.f32.mrf.mxu0
        %3269 = vmatprep.mubr.f32.mxu0 %v3144
        %3270 = vmatmul.mubr.f32.gmra.mxu0 %v3143
        %v3271 = vpop.f32.mrf.mxu0
        %v3272 = vadd.f32 0.0, %v3271
        %v3273 = vpop.f32.mrf.mxu0
        %3274 = vmatprep.mubr.f32.mxu0 %v3146
        %3275 = vmatmul.mubr.f32.gmra.mxu0 %v3145
        %v3276 = vpop.f32.mrf.mxu0
        %v3277 = vadd.f32 0.0, %v3276
        %v3278 = vpop.f32.mrf.mxu0
        %3279 = vmatprep.mubr.f32.mxu0 %v3148
        %3280 = vmatmul.mubr.f32.gmra.mxu0 %v3147
        %v3281 = vpop.f32.mrf.mxu0
        %v3282 = vadd.f32 0.0, %v3281
        %v3283 = vpop.f32.mrf.mxu0
        %3284 = vmatprep.mubr.f32.mxu0 %v3150
        %3285 = vmatmul.mubr.f32.gmra.mxu0 %v3149
        %v3286 = vpop.f32.mrf.mxu0
        %v3287 = vadd.f32 0.0, %v3286
        %v3288 = vpop.f32.mrf.mxu0
        %3289 = vmatprep.mubr.f32.mxu0 %v3152
        %3290 = vmatmul.mubr.f32.gmra.mxu0 %v3151
        %v3291 = vpop.f32.mrf.mxu0
        %v3292 = vadd.f32 0.0, %v3291
        %v3293 = vpop.f32.mrf.mxu0
        %3294 = vmatprep.mubr.f32.mxu0 %v3154
        %3295 = vmatmul.mubr.f32.gmra.mxu0 %v3153
        %v3296 = vpop.f32.mrf.mxu0
        %v3297 = vadd.f32 0.0, %v3296
        %v3298 = vpop.f32.mrf.mxu0
        %3299 = vdwg.mxu0
        %v3300 = vld [vmem:[%s21] sm:$0xff]
        %v3301 = vld [vmem:[%s21 + $0x8] sm:$0xff]
        %v3302 = vld [vmem:[%s21 + $0x10] sm:$0xff]
        %v3303 = vld [vmem:[%s21 + $0x18] sm:$0xff]
        %v3304 = vld [vmem:[%s21 + $0x20] sm:$0xff]
        %v3305 = vld [vmem:[%s21 + $0x28] sm:$0xff]
        %v3306 = vld [vmem:[%s21 + $0x30] sm:$0xff]
        %v3307 = vld [vmem:[%s21 + $0x38] sm:$0xff]
        %v3308 = vld [vmem:[%s21 + $0x40] sm:$0xff]
        %v3309 = vld [vmem:[%s21 + $0x48] sm:$0xff]
        %v3310 = vld [vmem:[%s21 + $0x50] sm:$0xff]
        %v3311 = vld [vmem:[%s21 + $0x58] sm:$0xff]
        %v3312 = vld [vmem:[%s21 + $0x60] sm:$0xff]
        %v3313 = vld [vmem:[%s21 + $0x68] sm:$0xff]
        %v3314 = vld [vmem:[%s21 + $0x70] sm:$0xff]
        %v3315 = vld [vmem:[%s21 + $0x78] sm:$0xff]
        %v3316 = vld [vmem:[%s21 + $0x80] sm:$0xff]
        %v3317 = vld [vmem:[%s21 + $0x88] sm:$0xff]
        %v3318 = vld [vmem:[%s21 + $0x90] sm:$0xff]
        %v3319 = vld [vmem:[%s21 + $0x98] sm:$0xff]
        %v3320 = vld [vmem:[%s21 + $0xa0] sm:$0xff]
        %v3321 = vld [vmem:[%s21 + $0xa8] sm:$0xff]
        %v3322 = vld [vmem:[%s21 + $0xb0] sm:$0xff]
        %v3323 = vld [vmem:[%s21 + $0xb8] sm:$0xff]
        %v3324 = vld [vmem:[%s21 + $0xc0] sm:$0xff]
        %v3325 = vld [vmem:[%s21 + $0xc8] sm:$0xff]
        %v3326 = vld [vmem:[%s21 + $0xd0] sm:$0xff]
        %v3327 = vld [vmem:[%s21 + $0xd8] sm:$0xff]
        %v3328 = vld [vmem:[%s21 + $0xe0] sm:$0xff]
        %v3329 = vld [vmem:[%s21 + $0xe8] sm:$0xff]
        %v3330 = vld [vmem:[%s21 + $0xf0] sm:$0xff]
        %v3331 = vld [vmem:[%s21 + $0xf8] sm:$0xff]
        %3332 = vmatprep.subr.mxu0 0.0
        %3333 = vmatpush1.msra.mxu0 %v3106
        %3334 = vmatprep.subr.mxu0 0.0
        %3335 = vmatpush1.msra.mxu0 %v3105
        %3336 = vmatprep.subr.mxu0 0.0
        %3337 = vmatpush1.msra.mxu0 %v3104
        %3338 = vmatprep.subr.mxu0 0.0
        %3339 = vmatpush1.msra.mxu0 %v3103
        %3340 = vmatprep.subr.mxu0 0.0
        %3341 = vmatpush1.msra.mxu0 %v3102
        %3342 = vmatprep.subr.mxu0 0.0
        %3343 = vmatpush1.msra.mxu0 %v3101
        %3344 = vmatprep.subr.mxu0 0.0
        %3345 = vmatpush1.msra.mxu0 %v3100
        %3346 = vmatprep.subr.mxu0 0.0
        %3347 = vmatpush1.msra.mxu0 %v3099
        %3348 = vmatprep.subr.mxu0 0.0
        %3349 = vmatpush1.msra.mxu0 %v3098
        %3350 = vmatprep.subr.mxu0 0.0
        %3351 = vmatpush1.msra.mxu0 %v3097
        %3352 = vmatprep.subr.mxu0 0.0
        %3353 = vmatpush1.msra.mxu0 %v3096
        %3354 = vmatprep.subr.mxu0 0.0
        %3355 = vmatpush1.msra.mxu0 %v3095
        %3356 = vmatprep.subr.mxu0 0.0
        %3357 = vmatpush1.msra.mxu0 %v3094
        %3358 = vmatprep.subr.mxu0 0.0
        %3359 = vmatpush1.msra.mxu0 %v3093
        %3360 = vmatprep.subr.mxu0 0.0
        %3361 = vmatpush1.msra.mxu0 %v3092
        %3362 = vmatprep.subr.mxu0 0.0
        %3363 = vmatpush1.msra.mxu0 %v3091
        %3364 = vmatprep.subr.mxu0 0.0
        %3365 = vmatpush2.msra.mxu0 %v3122
        %3366 = vmatprep.subr.mxu0 0.0
        %3367 = vmatpush2.msra.mxu0 %v3121
        %3368 = vmatprep.subr.mxu0 0.0
        %3369 = vmatpush2.msra.mxu0 %v3120
        %3370 = vmatprep.subr.mxu0 0.0
        %3371 = vmatpush2.msra.mxu0 %v3119
        %3372 = vmatprep.subr.mxu0 0.0
        %3373 = vmatpush2.msra.mxu0 %v3118
        %3374 = vmatprep.subr.mxu0 0.0
        %3375 = vmatpush2.msra.mxu0 %v3117
        %3376 = vmatprep.subr.mxu0 0.0
        %3377 = vmatpush2.msra.mxu0 %v3116
        %3378 = vmatprep.subr.mxu0 0.0
        %3379 = vmatpush2.msra.mxu0 %v3115
        %3380 = vmatprep.subr.mxu0 0.0
        %3381 = vmatpush2.msra.mxu0 %v3114
        %3382 = vmatprep.subr.mxu0 0.0
        %3383 = vmatpush2.msra.mxu0 %v3113
        %3384 = vmatprep.subr.mxu0 0.0
        %3385 = vmatpush2.msra.mxu0 %v3112
        %3386 = vmatprep.subr.mxu0 0.0
        %3387 = vmatpush2.msra.mxu0 %v3111
        %3388 = vmatprep.subr.mxu0 0.0
        %3389 = vmatpush2.msra.mxu0 %v3110
        %3390 = vmatprep.subr.mxu0 0.0
        %3391 = vmatpush2.msra.mxu0 %v3109
        %3392 = vmatprep.subr.mxu0 0.0
        %3393 = vmatpush2.msra.mxu0 %v3108
        %3394 = vmatprep.subr.mxu0 0.0
        %3395 = vmatpush2.msra.mxu0 %v3107
        %3396 = vmatprep.mubr.f32.mxu0 %v3301
        %3397 = vmatmul.mubr.f32.gmra.mxu0 %v3300
        %v3398 = vpop.f32.mrf.mxu0
        %v3399 = vadd.f32 0.0, %v3398
        %v3400 = vpop.f32.mrf.mxu0
        %3401 = vmatprep.mubr.f32.mxu0 %v3303
        %3402 = vmatmul.mubr.f32.gmra.mxu0 %v3302
        %v3403 = vpop.f32.mrf.mxu0
        %v3404 = vadd.f32 0.0, %v3403
        %v3405 = vpop.f32.mrf.mxu0
        %3406 = vmatprep.mubr.f32.mxu0 %v3305
        %3407 = vmatmul.mubr.f32.gmra.mxu0 %v3304
        %v3408 = vpop.f32.mrf.mxu0
        %v3409 = vadd.f32 0.0, %v3408
        %v3410 = vpop.f32.mrf.mxu0
        %3411 = vmatprep.mubr.f32.mxu0 %v3307
        %3412 = vmatmul.mubr.f32.gmra.mxu0 %v3306
        %v3413 = vpop.f32.mrf.mxu0
        %v3414 = vadd.f32 0.0, %v3413
        %v3415 = vpop.f32.mrf.mxu0
        %3416 = vmatprep.mubr.f32.mxu0 %v3309
        %3417 = vmatmul.mubr.f32.gmra.mxu0 %v3308
        %v3418 = vpop.f32.mrf.mxu0
        %v3419 = vadd.f32 0.0, %v3418
        %v3420 = vpop.f32.mrf.mxu0
        %3421 = vmatprep.mubr.f32.mxu0 %v3311
        %3422 = vmatmul.mubr.f32.gmra.mxu0 %v3310
        %v3423 = vpop.f32.mrf.mxu0
        %v3424 = vadd.f32 0.0, %v3423
        %v3425 = vpop.f32.mrf.mxu0
        %3426 = vmatprep.mubr.f32.mxu0 %v3313
        %3427 = vmatmul.mubr.f32.gmra.mxu0 %v3312
        %v3428 = vpop.f32.mrf.mxu0
        %v3429 = vadd.f32 0.0, %v3428
        %v3430 = vpop.f32.mrf.mxu0
        %3431 = vmatprep.mubr.f32.mxu0 %v3315
        %3432 = vmatmul.mubr.f32.gmra.mxu0 %v3314
        %v3433 = vpop.f32.mrf.mxu0
        %v3434 = vadd.f32 0.0, %v3433
        %v3435 = vpop.f32.mrf.mxu0
        %3436 = vmatprep.mubr.f32.mxu0 %v3317
        %3437 = vmatmul.mubr.f32.gmra.mxu0 %v3316
        %v3438 = vpop.f32.mrf.mxu0
        %v3439 = vadd.f32 0.0, %v3438
        %v3440 = vpop.f32.mrf.mxu0
        %3441 = vmatprep.mubr.f32.mxu0 %v3319
        %3442 = vmatmul.mubr.f32.gmra.mxu0 %v3318
        %v3443 = vpop.f32.mrf.mxu0
        %v3444 = vadd.f32 0.0, %v3443
        %v3445 = vpop.f32.mrf.mxu0
        %3446 = vmatprep.mubr.f32.mxu0 %v3321
        %3447 = vmatmul.mubr.f32.gmra.mxu0 %v3320
        %v3448 = vpop.f32.mrf.mxu0
        %v3449 = vadd.f32 0.0, %v3448
        %v3450 = vpop.f32.mrf.mxu0
        %3451 = vmatprep.mubr.f32.mxu0 %v3323
        %3452 = vmatmul.mubr.f32.gmra.mxu0 %v3322
        %v3453 = vpop.f32.mrf.mxu0
        %v3454 = vadd.f32 0.0, %v3453
        %v3455 = vpop.f32.mrf.mxu0
        %3456 = vmatprep.mubr.f32.mxu0 %v3325
        %3457 = vmatmul.mubr.f32.gmra.mxu0 %v3324
        %v3458 = vpop.f32.mrf.mxu0
        %v3459 = vadd.f32 0.0, %v3458
        %v3460 = vpop.f32.mrf.mxu0
        %3461 = vmatprep.mubr.f32.mxu0 %v3327
        %3462 = vmatmul.mubr.f32.gmra.mxu0 %v3326
        %v3463 = vpop.f32.mrf.mxu0
        %v3464 = vadd.f32 0.0, %v3463
        %v3465 = vpop.f32.mrf.mxu0
        %3466 = vmatprep.mubr.f32.mxu0 %v3329
        %3467 = vmatmul.mubr.f32.gmra.mxu0 %v3328
        %v3468 = vpop.f32.mrf.mxu0
        %v3469 = vadd.f32 0.0, %v3468
        %v3470 = vpop.f32.mrf.mxu0
        %3471 = vmatprep.mubr.f32.mxu0 %v3331
        %3472 = vmatmul.mubr.f32.gmra.mxu0 %v3330
        %v3473 = vpop.f32.mrf.mxu0
        %v3474 = vadd.f32 0.0, %v3473
        %v3475 = vpop.f32.mrf.mxu0
        %3476 = vdwg.mxu0
        %v3477 = vmax.f32 %v3222, %v3399
        %v3478 = vmax.f32 %v3227, %v3404
        %v3479 = vmax.f32 %v3232, %v3409
        %v3480 = vmax.f32 %v3237, %v3414
        %v3481 = vmax.f32 %v3242, %v3419
        %v3482 = vmax.f32 %v3247, %v3424
        %v3483 = vmax.f32 %v3252, %v3429
        %v3484 = vmax.f32 %v3257, %v3434
        %v3485 = vmax.f32 %v3262, %v3439
        %v3486 = vmax.f32 %v3267, %v3444
        %v3487 = vmax.f32 %v3272, %v3449
        %v3488 = vmax.f32 %v3277, %v3454
        %v3489 = vmax.f32 %v3282, %v3459
        %v3490 = vmax.f32 %v3287, %v3464
        %v3491 = vmax.f32 %v3292, %v3469
        %v3492 = vmax.f32 %v3297, %v3474
        %v3493 = vld [vmem:[%s23] sm:$0xff]
        %v3494 = vld [vmem:[%s23 + $0x8] sm:$0xff]
        %v3495 = vld [vmem:[%s23 + $0x10] sm:$0xff]
        %v3496 = vld [vmem:[%s23 + $0x18] sm:$0xff]
        %v3497 = vld [vmem:[%s23 + $0x20] sm:$0xff]
        %v3498 = vld [vmem:[%s23 + $0x28] sm:$0xff]
        %v3499 = vld [vmem:[%s23 + $0x30] sm:$0xff]
        %v3500 = vld [vmem:[%s23 + $0x38] sm:$0xff]
        %v3501 = vld [vmem:[%s23 + $0x40] sm:$0xff]
        %v3502 = vld [vmem:[%s23 + $0x48] sm:$0xff]
        %v3503 = vld [vmem:[%s23 + $0x50] sm:$0xff]
        %v3504 = vld [vmem:[%s23 + $0x58] sm:$0xff]
        %v3505 = vld [vmem:[%s23 + $0x60] sm:$0xff]
        %v3506 = vld [vmem:[%s23 + $0x68] sm:$0xff]
        %v3507 = vld [vmem:[%s23 + $0x70] sm:$0xff]
        %v3508 = vld [vmem:[%s23 + $0x78] sm:$0xff]
        %v3509 = vld [vmem:[%s23 + $0x80] sm:$0xff]
        %v3510 = vld [vmem:[%s23 + $0x88] sm:$0xff]
        %v3511 = vld [vmem:[%s23 + $0x90] sm:$0xff]
        %v3512 = vld [vmem:[%s23 + $0x98] sm:$0xff]
        %v3513 = vld [vmem:[%s23 + $0xa0] sm:$0xff]
        %v3514 = vld [vmem:[%s23 + $0xa8] sm:$0xff]
        %v3515 = vld [vmem:[%s23 + $0xb0] sm:$0xff]
        %v3516 = vld [vmem:[%s23 + $0xb8] sm:$0xff]
        %v3517 = vld [vmem:[%s23 + $0xc0] sm:$0xff]
        %v3518 = vld [vmem:[%s23 + $0xc8] sm:$0xff]
        %v3519 = vld [vmem:[%s23 + $0xd0] sm:$0xff]
        %v3520 = vld [vmem:[%s23 + $0xd8] sm:$0xff]
        %v3521 = vld [vmem:[%s23 + $0xe0] sm:$0xff]
        %v3522 = vld [vmem:[%s23 + $0xe8] sm:$0xff]
        %v3523 = vld [vmem:[%s23 + $0xf0] sm:$0xff]
        %v3524 = vld [vmem:[%s23 + $0xf8] sm:$0xff]
        %3525 = vmatprep.subr.mxu0 0.0
        %3526 = vmatpush1.msra.mxu0 %v3106
        %3527 = vmatprep.subr.mxu0 0.0
        %3528 = vmatpush1.msra.mxu0 %v3105
        %3529 = vmatprep.subr.mxu0 0.0
        %3530 = vmatpush1.msra.mxu0 %v3104
        %3531 = vmatprep.subr.mxu0 0.0
        %3532 = vmatpush1.msra.mxu0 %v3103
        %3533 = vmatprep.subr.mxu0 0.0
        %3534 = vmatpush1.msra.mxu0 %v3102
        %3535 = vmatprep.subr.mxu0 0.0
        %3536 = vmatpush1.msra.mxu0 %v3101
        %3537 = vmatprep.subr.mxu0 0.0
        %3538 = vmatpush1.msra.mxu0 %v3100
        %3539 = vmatprep.subr.mxu0 0.0
        %3540 = vmatpush1.msra.mxu0 %v3099
        %3541 = vmatprep.subr.mxu0 0.0
        %3542 = vmatpush1.msra.mxu0 %v3098
        %3543 = vmatprep.subr.mxu0 0.0
        %3544 = vmatpush1.msra.mxu0 %v3097
        %3545 = vmatprep.subr.mxu0 0.0
        %3546 = vmatpush1.msra.mxu0 %v3096
        %3547 = vmatprep.subr.mxu0 0.0
        %3548 = vmatpush1.msra.mxu0 %v3095
        %3549 = vmatprep.subr.mxu0 0.0
        %3550 = vmatpush1.msra.mxu0 %v3094
        %3551 = vmatprep.subr.mxu0 0.0
        %3552 = vmatpush1.msra.mxu0 %v3093
        %3553 = vmatprep.subr.mxu0 0.0
        %3554 = vmatpush1.msra.mxu0 %v3092
        %3555 = vmatprep.subr.mxu0 0.0
        %3556 = vmatpush1.msra.mxu0 %v3091
        %3557 = vmatprep.subr.mxu0 0.0
        %3558 = vmatpush2.msra.mxu0 %v3122
        %3559 = vmatprep.subr.mxu0 0.0
        %3560 = vmatpush2.msra.mxu0 %v3121
        %3561 = vmatprep.subr.mxu0 0.0
        %3562 = vmatpush2.msra.mxu0 %v3120
        %3563 = vmatprep.subr.mxu0 0.0
        %3564 = vmatpush2.msra.mxu0 %v3119
        %3565 = vmatprep.subr.mxu0 0.0
        %3566 = vmatpush2.msra.mxu0 %v3118
        %3567 = vmatprep.subr.mxu0 0.0
        %3568 = vmatpush2.msra.mxu0 %v3117
        %3569 = vmatprep.subr.mxu0 0.0
        %3570 = vmatpush2.msra.mxu0 %v3116
        %3571 = vmatprep.subr.mxu0 0.0
        %3572 = vmatpush2.msra.mxu0 %v3115
        %3573 = vmatprep.subr.mxu0 0.0
        %3574 = vmatpush2.msra.mxu0 %v3114
        %3575 = vmatprep.subr.mxu0 0.0
        %3576 = vmatpush2.msra.mxu0 %v3113
        %3577 = vmatprep.subr.mxu0 0.0
        %3578 = vmatpush2.msra.mxu0 %v3112
        %3579 = vmatprep.subr.mxu0 0.0
        %3580 = vmatpush2.msra.mxu0 %v3111
        %3581 = vmatprep.subr.mxu0 0.0
        %3582 = vmatpush2.msra.mxu0 %v3110
        %3583 = vmatprep.subr.mxu0 0.0
        %3584 = vmatpush2.msra.mxu0 %v3109
        %3585 = vmatprep.subr.mxu0 0.0
        %3586 = vmatpush2.msra.mxu0 %v3108
        %3587 = vmatprep.subr.mxu0 0.0
        %3588 = vmatpush2.msra.mxu0 %v3107
        %3589 = vmatprep.mubr.f32.mxu0 %v3494
        %3590 = vmatmul.mubr.f32.gmra.mxu0 %v3493
        %v3591 = vpop.f32.mrf.mxu0
        %v3592 = vadd.f32 0.0, %v3591
        %v3593 = vpop.f32.mrf.mxu0
        %3594 = vmatprep.mubr.f32.mxu0 %v3496
        %3595 = vmatmul.mubr.f32.gmra.mxu0 %v3495
        %v3596 = vpop.f32.mrf.mxu0
        %v3597 = vadd.f32 0.0, %v3596
        %v3598 = vpop.f32.mrf.mxu0
        %3599 = vmatprep.mubr.f32.mxu0 %v3498
        %3600 = vmatmul.mubr.f32.gmra.mxu0 %v3497
        %v3601 = vpop.f32.mrf.mxu0
        %v3602 = vadd.f32 0.0, %v3601
        %v3603 = vpop.f32.mrf.mxu0
        %3604 = vmatprep.mubr.f32.mxu0 %v3500
        %3605 = vmatmul.mubr.f32.gmra.mxu0 %v3499
        %v3606 = vpop.f32.mrf.mxu0
        %v3607 = vadd.f32 0.0, %v3606
        %v3608 = vpop.f32.mrf.mxu0
        %3609 = vmatprep.mubr.f32.mxu0 %v3502
        %3610 = vmatmul.mubr.f32.gmra.mxu0 %v3501
        %v3611 = vpop.f32.mrf.mxu0
        %v3612 = vadd.f32 0.0, %v3611
        %v3613 = vpop.f32.mrf.mxu0
        %3614 = vmatprep.mubr.f32.mxu0 %v3504
        %3615 = vmatmul.mubr.f32.gmra.mxu0 %v3503
        %v3616 = vpop.f32.mrf.mxu0
        %v3617 = vadd.f32 0.0, %v3616
        %v3618 = vpop.f32.mrf.mxu0
        %3619 = vmatprep.mubr.f32.mxu0 %v3506
        %3620 = vmatmul.mubr.f32.gmra.mxu0 %v3505
        %v3621 = vpop.f32.mrf.mxu0
        %v3622 = vadd.f32 0.0, %v3621
        %v3623 = vpop.f32.mrf.mxu0
        %3624 = vmatprep.mubr.f32.mxu0 %v3508
        %3625 = vmatmul.mubr.f32.gmra.mxu0 %v3507
        %v3626 = vpop.f32.mrf.mxu0
        %v3627 = vadd.f32 0.0, %v3626
        %v3628 = vpop.f32.mrf.mxu0
        %3629 = vmatprep.mubr.f32.mxu0 %v3510
        %3630 = vmatmul.mubr.f32.gmra.mxu0 %v3509
        %v3631 = vpop.f32.mrf.mxu0
        %v3632 = vadd.f32 0.0, %v3631
        %v3633 = vpop.f32.mrf.mxu0
        %3634 = vmatprep.mubr.f32.mxu0 %v3512
        %3635 = vmatmul.mubr.f32.gmra.mxu0 %v3511
        %v3636 = vpop.f32.mrf.mxu0
        %v3637 = vadd.f32 0.0, %v3636
        %v3638 = vpop.f32.mrf.mxu0
        %3639 = vmatprep.mubr.f32.mxu0 %v3514
        %3640 = vmatmul.mubr.f32.gmra.mxu0 %v3513
        %v3641 = vpop.f32.mrf.mxu0
        %v3642 = vadd.f32 0.0, %v3641
        %v3643 = vpop.f32.mrf.mxu0
        %3644 = vmatprep.mubr.f32.mxu0 %v3516
        %3645 = vmatmul.mubr.f32.gmra.mxu0 %v3515
        %v3646 = vpop.f32.mrf.mxu0
        %v3647 = vadd.f32 0.0, %v3646
        %v3648 = vpop.f32.mrf.mxu0
        %3649 = vmatprep.mubr.f32.mxu0 %v3518
        %3650 = vmatmul.mubr.f32.gmra.mxu0 %v3517
        %v3651 = vpop.f32.mrf.mxu0
        %v3652 = vadd.f32 0.0, %v3651
        %v3653 = vpop.f32.mrf.mxu0
        %3654 = vmatprep.mubr.f32.mxu0 %v3520
        %3655 = vmatmul.mubr.f32.gmra.mxu0 %v3519
        %v3656 = vpop.f32.mrf.mxu0
        %v3657 = vadd.f32 0.0, %v3656
        %v3658 = vpop.f32.mrf.mxu0
        %3659 = vmatprep.mubr.f32.mxu0 %v3522
        %3660 = vmatmul.mubr.f32.gmra.mxu0 %v3521
        %v3661 = vpop.f32.mrf.mxu0
        %v3662 = vadd.f32 0.0, %v3661
        %v3663 = vpop.f32.mrf.mxu0
        %3664 = vmatprep.mubr.f32.mxu0 %v3524
        %3665 = vmatmul.mubr.f32.gmra.mxu0 %v3523
        %v3666 = vpop.f32.mrf.mxu0
        %v3667 = vadd.f32 0.0, %v3666
        %v3668 = vpop.f32.mrf.mxu0
        %3669 = vdwg.mxu0
        %v3670 = vld [vmem:[%s25] sm:$0xff]
        %v3671 = vld [vmem:[%s25 + $0x8] sm:$0xff]
        %v3672 = vld [vmem:[%s25 + $0x10] sm:$0xff]
        %v3673 = vld [vmem:[%s25 + $0x18] sm:$0xff]
        %v3674 = vld [vmem:[%s25 + $0x20] sm:$0xff]
        %v3675 = vld [vmem:[%s25 + $0x28] sm:$0xff]
        %v3676 = vld [vmem:[%s25 + $0x30] sm:$0xff]
        %v3677 = vld [vmem:[%s25 + $0x38] sm:$0xff]
        %v3678 = vld [vmem:[%s25 + $0x40] sm:$0xff]
        %v3679 = vld [vmem:[%s25 + $0x48] sm:$0xff]
        %v3680 = vld [vmem:[%s25 + $0x50] sm:$0xff]
        %v3681 = vld [vmem:[%s25 + $0x58] sm:$0xff]
        %v3682 = vld [vmem:[%s25 + $0x60] sm:$0xff]
        %v3683 = vld [vmem:[%s25 + $0x68] sm:$0xff]
        %v3684 = vld [vmem:[%s25 + $0x70] sm:$0xff]
        %v3685 = vld [vmem:[%s25 + $0x78] sm:$0xff]
        %v3686 = vld [vmem:[%s25 + $0x80] sm:$0xff]
        %v3687 = vld [vmem:[%s25 + $0x88] sm:$0xff]
        %v3688 = vld [vmem:[%s25 + $0x90] sm:$0xff]
        %v3689 = vld [vmem:[%s25 + $0x98] sm:$0xff]
        %v3690 = vld [vmem:[%s25 + $0xa0] sm:$0xff]
        %v3691 = vld [vmem:[%s25 + $0xa8] sm:$0xff]
        %v3692 = vld [vmem:[%s25 + $0xb0] sm:$0xff]
        %v3693 = vld [vmem:[%s25 + $0xb8] sm:$0xff]
        %v3694 = vld [vmem:[%s25 + $0xc0] sm:$0xff]
        %v3695 = vld [vmem:[%s25 + $0xc8] sm:$0xff]
        %v3696 = vld [vmem:[%s25 + $0xd0] sm:$0xff]
        %v3697 = vld [vmem:[%s25 + $0xd8] sm:$0xff]
        %v3698 = vld [vmem:[%s25 + $0xe0] sm:$0xff]
        %v3699 = vld [vmem:[%s25 + $0xe8] sm:$0xff]
        %v3700 = vld [vmem:[%s25 + $0xf0] sm:$0xff]
        %v3701 = vld [vmem:[%s25 + $0xf8] sm:$0xff]
        %3702 = vmatprep.subr.mxu0 0.0
        %3703 = vmatpush1.msra.mxu0 %v3106
        %3704 = vmatprep.subr.mxu0 0.0
        %3705 = vmatpush1.msra.mxu0 %v3105
        %3706 = vmatprep.subr.mxu0 0.0
        %3707 = vmatpush1.msra.mxu0 %v3104
        %3708 = vmatprep.subr.mxu0 0.0
        %3709 = vmatpush1.msra.mxu0 %v3103
        %3710 = vmatprep.subr.mxu0 0.0
        %3711 = vmatpush1.msra.mxu0 %v3102
        %3712 = vmatprep.subr.mxu0 0.0
        %3713 = vmatpush1.msra.mxu0 %v3101
        %3714 = vmatprep.subr.mxu0 0.0
        %3715 = vmatpush1.msra.mxu0 %v3100
        %3716 = vmatprep.subr.mxu0 0.0
        %3717 = vmatpush1.msra.mxu0 %v3099
        %3718 = vmatprep.subr.mxu0 0.0
        %3719 = vmatpush1.msra.mxu0 %v3098
        %3720 = vmatprep.subr.mxu0 0.0
        %3721 = vmatpush1.msra.mxu0 %v3097
        %3722 = vmatprep.subr.mxu0 0.0
        %3723 = vmatpush1.msra.mxu0 %v3096
        %3724 = vmatprep.subr.mxu0 0.0
        %3725 = vmatpush1.msra.mxu0 %v3095
        %3726 = vmatprep.subr.mxu0 0.0
        %3727 = vmatpush1.msra.mxu0 %v3094
        %3728 = vmatprep.subr.mxu0 0.0
        %3729 = vmatpush1.msra.mxu0 %v3093
        %3730 = vmatprep.subr.mxu0 0.0
        %3731 = vmatpush1.msra.mxu0 %v3092
        %3732 = vmatprep.subr.mxu0 0.0
        %3733 = vmatpush1.msra.mxu0 %v3091
        %3734 = vmatprep.subr.mxu0 0.0
        %3735 = vmatpush2.msra.mxu0 %v3122
        %3736 = vmatprep.subr.mxu0 0.0
        %3737 = vmatpush2.msra.mxu0 %v3121
        %3738 = vmatprep.subr.mxu0 0.0
        %3739 = vmatpush2.msra.mxu0 %v3120
        %3740 = vmatprep.subr.mxu0 0.0
        %3741 = vmatpush2.msra.mxu0 %v3119
        %3742 = vmatprep.subr.mxu0 0.0
        %3743 = vmatpush2.msra.mxu0 %v3118
        %3744 = vmatprep.subr.mxu0 0.0
        %3745 = vmatpush2.msra.mxu0 %v3117
        %3746 = vmatprep.subr.mxu0 0.0
        %3747 = vmatpush2.msra.mxu0 %v3116
        %3748 = vmatprep.subr.mxu0 0.0
        %3749 = vmatpush2.msra.mxu0 %v3115
        %3750 = vmatprep.subr.mxu0 0.0
        %3751 = vmatpush2.msra.mxu0 %v3114
        %3752 = vmatprep.subr.mxu0 0.0
        %3753 = vmatpush2.msra.mxu0 %v3113
        %3754 = vmatprep.subr.mxu0 0.0
        %3755 = vmatpush2.msra.mxu0 %v3112
        %3756 = vmatprep.subr.mxu0 0.0
        %3757 = vmatpush2.msra.mxu0 %v3111
        %3758 = vmatprep.subr.mxu0 0.0
        %3759 = vmatpush2.msra.mxu0 %v3110
        %3760 = vmatprep.subr.mxu0 0.0
        %3761 = vmatpush2.msra.mxu0 %v3109
        %3762 = vmatprep.subr.mxu0 0.0
        %3763 = vmatpush2.msra.mxu0 %v3108
        %3764 = vmatprep.subr.mxu0 0.0
        %3765 = vmatpush2.msra.mxu0 %v3107
        %3766 = vmatprep.mubr.f32.mxu0 %v3671
        %3767 = vmatmul.mubr.f32.gmra.mxu0 %v3670
        %v3768 = vpop.f32.mrf.mxu0
        %v3769 = vadd.f32 0.0, %v3768
        %v3770 = vpop.f32.mrf.mxu0
        %3771 = vmatprep.mubr.f32.mxu0 %v3673
        %3772 = vmatmul.mubr.f32.gmra.mxu0 %v3672
        %v3773 = vpop.f32.mrf.mxu0
        %v3774 = vadd.f32 0.0, %v3773
        %v3775 = vpop.f32.mrf.mxu0
        %3776 = vmatprep.mubr.f32.mxu0 %v3675
        %3777 = vmatmul.mubr.f32.gmra.mxu0 %v3674
        %v3778 = vpop.f32.mrf.mxu0
        %v3779 = vadd.f32 0.0, %v3778
        %v3780 = vpop.f32.mrf.mxu0
        %3781 = vmatprep.mubr.f32.mxu0 %v3677
        %3782 = vmatmul.mubr.f32.gmra.mxu0 %v3676
        %v3783 = vpop.f32.mrf.mxu0
        %v3784 = vadd.f32 0.0, %v3783
        %v3785 = vpop.f32.mrf.mxu0
        %3786 = vmatprep.mubr.f32.mxu0 %v3679
        %3787 = vmatmul.mubr.f32.gmra.mxu0 %v3678
        %v3788 = vpop.f32.mrf.mxu0
        %v3789 = vadd.f32 0.0, %v3788
        %v3790 = vpop.f32.mrf.mxu0
        %3791 = vmatprep.mubr.f32.mxu0 %v3681
        %3792 = vmatmul.mubr.f32.gmra.mxu0 %v3680
        %v3793 = vpop.f32.mrf.mxu0
        %v3794 = vadd.f32 0.0, %v3793
        %v3795 = vpop.f32.mrf.mxu0
        %3796 = vmatprep.mubr.f32.mxu0 %v3683
        %3797 = vmatmul.mubr.f32.gmra.mxu0 %v3682
        %v3798 = vpop.f32.mrf.mxu0
        %v3799 = vadd.f32 0.0, %v3798
        %v3800 = vpop.f32.mrf.mxu0
        %3801 = vmatprep.mubr.f32.mxu0 %v3685
        %3802 = vmatmul.mubr.f32.gmra.mxu0 %v3684
        %v3803 = vpop.f32.mrf.mxu0
        %v3804 = vadd.f32 0.0, %v3803
        %v3805 = vpop.f32.mrf.mxu0
        %3806 = vmatprep.mubr.f32.mxu0 %v3687
        %3807 = vmatmul.mubr.f32.gmra.mxu0 %v3686
        %v3808 = vpop.f32.mrf.mxu0
        %v3809 = vadd.f32 0.0, %v3808
        %v3810 = vpop.f32.mrf.mxu0
        %3811 = vmatprep.mubr.f32.mxu0 %v3689
        %3812 = vmatmul.mubr.f32.gmra.mxu0 %v3688
        %v3813 = vpop.f32.mrf.mxu0
        %v3814 = vadd.f32 0.0, %v3813
        %v3815 = vpop.f32.mrf.mxu0
        %3816 = vmatprep.mubr.f32.mxu0 %v3691
        %3817 = vmatmul.mubr.f32.gmra.mxu0 %v3690
        %v3818 = vpop.f32.mrf.mxu0
        %v3819 = vadd.f32 0.0, %v3818
        %v3820 = vpop.f32.mrf.mxu0
        %3821 = vmatprep.mubr.f32.mxu0 %v3693
        %3822 = vmatmul.mubr.f32.gmra.mxu0 %v3692
        %v3823 = vpop.f32.mrf.mxu0
        %v3824 = vadd.f32 0.0, %v3823
        %v3825 = vpop.f32.mrf.mxu0
        %3826 = vmatprep.mubr.f32.mxu0 %v3695
        %3827 = vmatmul.mubr.f32.gmra.mxu0 %v3694
        %v3828 = vpop.f32.mrf.mxu0
        %v3829 = vadd.f32 0.0, %v3828
        %v3830 = vpop.f32.mrf.mxu0
        %3831 = vmatprep.mubr.f32.mxu0 %v3697
        %3832 = vmatmul.mubr.f32.gmra.mxu0 %v3696
        %v3833 = vpop.f32.mrf.mxu0
        %v3834 = vadd.f32 0.0, %v3833
        %v3835 = vpop.f32.mrf.mxu0
        %3836 = vmatprep.mubr.f32.mxu0 %v3699
        %3837 = vmatmul.mubr.f32.gmra.mxu0 %v3698
        %v3838 = vpop.f32.mrf.mxu0
        %v3839 = vadd.f32 0.0, %v3838
        %v3840 = vpop.f32.mrf.mxu0
        %3841 = vmatprep.mubr.f32.mxu0 %v3701
        %3842 = vmatmul.mubr.f32.gmra.mxu0 %v3700
        %v3843 = vpop.f32.mrf.mxu0
        %v3844 = vadd.f32 0.0, %v3843
        %v3845 = vpop.f32.mrf.mxu0
        %3846 = vdwg.mxu0
        %v3847 = vmax.f32 %v3592, %v3769
        %v3848 = vmax.f32 %v3597, %v3774
        %v3849 = vmax.f32 %v3602, %v3779
        %v3850 = vmax.f32 %v3607, %v3784
        %v3851 = vmax.f32 %v3612, %v3789
        %v3852 = vmax.f32 %v3617, %v3794
        %v3853 = vmax.f32 %v3622, %v3799
        %v3854 = vmax.f32 %v3627, %v3804
        %v3855 = vmax.f32 %v3632, %v3809
        %v3856 = vmax.f32 %v3637, %v3814
        %v3857 = vmax.f32 %v3642, %v3819
        %v3858 = vmax.f32 %v3647, %v3824
        %v3859 = vmax.f32 %v3652, %v3829
        %v3860 = vmax.f32 %v3657, %v3834
        %v3861 = vmax.f32 %v3662, %v3839
        %v3862 = vmax.f32 %v3667, %v3844
        %v3863 = vld [vmem:[%s27] sm:$0xff]
        %v3864 = vld [vmem:[%s27 + $0x8] sm:$0xff]
        %v3865 = vld [vmem:[%s27 + $0x10] sm:$0xff]
        %v3866 = vld [vmem:[%s27 + $0x18] sm:$0xff]
        %v3867 = vld [vmem:[%s27 + $0x20] sm:$0xff]
        %v3868 = vld [vmem:[%s27 + $0x28] sm:$0xff]
        %v3869 = vld [vmem:[%s27 + $0x30] sm:$0xff]
        %v3870 = vld [vmem:[%s27 + $0x38] sm:$0xff]
        %v3871 = vld [vmem:[%s27 + $0x40] sm:$0xff]
        %v3872 = vld [vmem:[%s27 + $0x48] sm:$0xff]
        %v3873 = vld [vmem:[%s27 + $0x50] sm:$0xff]
        %v3874 = vld [vmem:[%s27 + $0x58] sm:$0xff]
        %v3875 = vld [vmem:[%s27 + $0x60] sm:$0xff]
        %v3876 = vld [vmem:[%s27 + $0x68] sm:$0xff]
        %v3877 = vld [vmem:[%s27 + $0x70] sm:$0xff]
        %v3878 = vld [vmem:[%s27 + $0x78] sm:$0xff]
        %v3879 = vld [vmem:[%s27 + $0x80] sm:$0xff]
        %v3880 = vld [vmem:[%s27 + $0x88] sm:$0xff]
        %v3881 = vld [vmem:[%s27 + $0x90] sm:$0xff]
        %v3882 = vld [vmem:[%s27 + $0x98] sm:$0xff]
        %v3883 = vld [vmem:[%s27 + $0xa0] sm:$0xff]
        %v3884 = vld [vmem:[%s27 + $0xa8] sm:$0xff]
        %v3885 = vld [vmem:[%s27 + $0xb0] sm:$0xff]
        %v3886 = vld [vmem:[%s27 + $0xb8] sm:$0xff]
        %v3887 = vld [vmem:[%s27 + $0xc0] sm:$0xff]
        %v3888 = vld [vmem:[%s27 + $0xc8] sm:$0xff]
        %v3889 = vld [vmem:[%s27 + $0xd0] sm:$0xff]
        %v3890 = vld [vmem:[%s27 + $0xd8] sm:$0xff]
        %v3891 = vld [vmem:[%s27 + $0xe0] sm:$0xff]
        %v3892 = vld [vmem:[%s27 + $0xe8] sm:$0xff]
        %v3893 = vld [vmem:[%s27 + $0xf0] sm:$0xff]
        %v3894 = vld [vmem:[%s27 + $0xf8] sm:$0xff]
        %3895 = vmatprep.subr.mxu0 0.0
        %3896 = vmatpush1.msra.mxu0 %v3106
        %3897 = vmatprep.subr.mxu0 0.0
        %3898 = vmatpush1.msra.mxu0 %v3105
        %3899 = vmatprep.subr.mxu0 0.0
        %3900 = vmatpush1.msra.mxu0 %v3104
        %3901 = vmatprep.subr.mxu0 0.0
        %3902 = vmatpush1.msra.mxu0 %v3103
        %3903 = vmatprep.subr.mxu0 0.0
        %3904 = vmatpush1.msra.mxu0 %v3102
        %3905 = vmatprep.subr.mxu0 0.0
        %3906 = vmatpush1.msra.mxu0 %v3101
        %3907 = vmatprep.subr.mxu0 0.0
        %3908 = vmatpush1.msra.mxu0 %v3100
        %3909 = vmatprep.subr.mxu0 0.0
        %3910 = vmatpush1.msra.mxu0 %v3099
        %3911 = vmatprep.subr.mxu0 0.0
        %3912 = vmatpush1.msra.mxu0 %v3098
        %3913 = vmatprep.subr.mxu0 0.0
        %3914 = vmatpush1.msra.mxu0 %v3097
        %3915 = vmatprep.subr.mxu0 0.0
        %3916 = vmatpush1.msra.mxu0 %v3096
        %3917 = vmatprep.subr.mxu0 0.0
        %3918 = vmatpush1.msra.mxu0 %v3095
        %3919 = vmatprep.subr.mxu0 0.0
        %3920 = vmatpush1.msra.mxu0 %v3094
        %3921 = vmatprep.subr.mxu0 0.0
        %3922 = vmatpush1.msra.mxu0 %v3093
        %3923 = vmatprep.subr.mxu0 0.0
        %3924 = vmatpush1.msra.mxu0 %v3092
        %3925 = vmatprep.subr.mxu0 0.0
        %3926 = vmatpush1.msra.mxu0 %v3091
        %3927 = vmatprep.subr.mxu0 0.0
        %3928 = vmatpush2.msra.mxu0 %v3122
        %3929 = vmatprep.subr.mxu0 0.0
        %3930 = vmatpush2.msra.mxu0 %v3121
        %3931 = vmatprep.subr.mxu0 0.0
        %3932 = vmatpush2.msra.mxu0 %v3120
        %3933 = vmatprep.subr.mxu0 0.0
        %3934 = vmatpush2.msra.mxu0 %v3119
        %3935 = vmatprep.subr.mxu0 0.0
        %3936 = vmatpush2.msra.mxu0 %v3118
        %3937 = vmatprep.subr.mxu0 0.0
        %3938 = vmatpush2.msra.mxu0 %v3117
        %3939 = vmatprep.subr.mxu0 0.0
        %3940 = vmatpush2.msra.mxu0 %v3116
        %3941 = vmatprep.subr.mxu0 0.0
        %3942 = vmatpush2.msra.mxu0 %v3115
        %3943 = vmatprep.subr.mxu0 0.0
        %3944 = vmatpush2.msra.mxu0 %v3114
        %3945 = vmatprep.subr.mxu0 0.0
        %3946 = vmatpush2.msra.mxu0 %v3113
        %3947 = vmatprep.subr.mxu0 0.0
        %3948 = vmatpush2.msra.mxu0 %v3112
        %3949 = vmatprep.subr.mxu0 0.0
        %3950 = vmatpush2.msra.mxu0 %v3111
        %3951 = vmatprep.subr.mxu0 0.0
        %3952 = vmatpush2.msra.mxu0 %v3110
        %3953 = vmatprep.subr.mxu0 0.0
        %3954 = vmatpush2.msra.mxu0 %v3109
        %3955 = vmatprep.subr.mxu0 0.0
        %3956 = vmatpush2.msra.mxu0 %v3108
        %3957 = vmatprep.subr.mxu0 0.0
        %3958 = vmatpush2.msra.mxu0 %v3107
        %3959 = vmatprep.mubr.f32.mxu0 %v3864
        %3960 = vmatmul.mubr.f32.gmra.mxu0 %v3863
        %v3961 = vpop.f32.mrf.mxu0
        %v3962 = vadd.f32 0.0, %v3961
        %v3963 = vpop.f32.mrf.mxu0
        %3964 = vmatprep.mubr.f32.mxu0 %v3866
        %3965 = vmatmul.mubr.f32.gmra.mxu0 %v3865
        %v3966 = vpop.f32.mrf.mxu0
        %v3967 = vadd.f32 0.0, %v3966
        %v3968 = vpop.f32.mrf.mxu0
        %3969 = vmatprep.mubr.f32.mxu0 %v3868
        %3970 = vmatmul.mubr.f32.gmra.mxu0 %v3867
        %v3971 = vpop.f32.mrf.mxu0
        %v3972 = vadd.f32 0.0, %v3971
        %v3973 = vpop.f32.mrf.mxu0
        %3974 = vmatprep.mubr.f32.mxu0 %v3870
        %3975 = vmatmul.mubr.f32.gmra.mxu0 %v3869
        %v3976 = vpop.f32.mrf.mxu0
        %v3977 = vadd.f32 0.0, %v3976
        %v3978 = vpop.f32.mrf.mxu0
        %3979 = vmatprep.mubr.f32.mxu0 %v3872
        %3980 = vmatmul.mubr.f32.gmra.mxu0 %v3871
        %v3981 = vpop.f32.mrf.mxu0
        %v3982 = vadd.f32 0.0, %v3981
        %v3983 = vpop.f32.mrf.mxu0
        %3984 = vmatprep.mubr.f32.mxu0 %v3874
        %3985 = vmatmul.mubr.f32.gmra.mxu0 %v3873
        %v3986 = vpop.f32.mrf.mxu0
        %v3987 = vadd.f32 0.0, %v3986
        %v3988 = vpop.f32.mrf.mxu0
        %3989 = vmatprep.mubr.f32.mxu0 %v3876
        %3990 = vmatmul.mubr.f32.gmra.mxu0 %v3875
        %v3991 = vpop.f32.mrf.mxu0
        %v3992 = vadd.f32 0.0, %v3991
        %v3993 = vpop.f32.mrf.mxu0
        %3994 = vmatprep.mubr.f32.mxu0 %v3878
        %3995 = vmatmul.mubr.f32.gmra.mxu0 %v3877
        %v3996 = vpop.f32.mrf.mxu0
        %v3997 = vadd.f32 0.0, %v3996
        %v3998 = vpop.f32.mrf.mxu0
        %3999 = vmatprep.mubr.f32.mxu0 %v3880
        %4000 = vmatmul.mubr.f32.gmra.mxu0 %v3879
        %v4001 = vpop.f32.mrf.mxu0
        %v4002 = vadd.f32 0.0, %v4001
        %v4003 = vpop.f32.mrf.mxu0
        %4004 = vmatprep.mubr.f32.mxu0 %v3882
        %4005 = vmatmul.mubr.f32.gmra.mxu0 %v3881
        %v4006 = vpop.f32.mrf.mxu0
        %v4007 = vadd.f32 0.0, %v4006
        %v4008 = vpop.f32.mrf.mxu0
        %4009 = vmatprep.mubr.f32.mxu0 %v3884
        %4010 = vmatmul.mubr.f32.gmra.mxu0 %v3883
        %v4011 = vpop.f32.mrf.mxu0
        %v4012 = vadd.f32 0.0, %v4011
        %v4013 = vpop.f32.mrf.mxu0
        %4014 = vmatprep.mubr.f32.mxu0 %v3886
        %4015 = vmatmul.mubr.f32.gmra.mxu0 %v3885
        %v4016 = vpop.f32.mrf.mxu0
        %v4017 = vadd.f32 0.0, %v4016
        %v4018 = vpop.f32.mrf.mxu0
        %4019 = vmatprep.mubr.f32.mxu0 %v3888
        %4020 = vmatmul.mubr.f32.gmra.mxu0 %v3887
        %v4021 = vpop.f32.mrf.mxu0
        %v4022 = vadd.f32 0.0, %v4021
        %v4023 = vpop.f32.mrf.mxu0
        %4024 = vmatprep.mubr.f32.mxu0 %v3890
        %4025 = vmatmul.mubr.f32.gmra.mxu0 %v3889
        %v4026 = vpop.f32.mrf.mxu0
        %v4027 = vadd.f32 0.0, %v4026
        %v4028 = vpop.f32.mrf.mxu0
        %4029 = vmatprep.mubr.f32.mxu0 %v3892
        %4030 = vmatmul.mubr.f32.gmra.mxu0 %v3891
        %v4031 = vpop.f32.mrf.mxu0
        %v4032 = vadd.f32 0.0, %v4031
        %v4033 = vpop.f32.mrf.mxu0
        %4034 = vmatprep.mubr.f32.mxu0 %v3894
        %4035 = vmatmul.mubr.f32.gmra.mxu0 %v3893
        %v4036 = vpop.f32.mrf.mxu0
        %v4037 = vadd.f32 0.0, %v4036
        %v4038 = vpop.f32.mrf.mxu0
        %4039 = vdwg.mxu0
        %v4040 = vld [vmem:[%s29] sm:$0xff]
        %v4041 = vld [vmem:[%s29 + $0x8] sm:$0xff]
        %v4042 = vld [vmem:[%s29 + $0x10] sm:$0xff]
        %v4043 = vld [vmem:[%s29 + $0x18] sm:$0xff]
        %v4044 = vld [vmem:[%s29 + $0x20] sm:$0xff]
        %v4045 = vld [vmem:[%s29 + $0x28] sm:$0xff]
        %v4046 = vld [vmem:[%s29 + $0x30] sm:$0xff]
        %v4047 = vld [vmem:[%s29 + $0x38] sm:$0xff]
        %v4048 = vld [vmem:[%s29 + $0x40] sm:$0xff]
        %v4049 = vld [vmem:[%s29 + $0x48] sm:$0xff]
        %v4050 = vld [vmem:[%s29 + $0x50] sm:$0xff]
        %v4051 = vld [vmem:[%s29 + $0x58] sm:$0xff]
        %v4052 = vld [vmem:[%s29 + $0x60] sm:$0xff]
        %v4053 = vld [vmem:[%s29 + $0x68] sm:$0xff]
        %v4054 = vld [vmem:[%s29 + $0x70] sm:$0xff]
        %v4055 = vld [vmem:[%s29 + $0x78] sm:$0xff]
        %v4056 = vld [vmem:[%s29 + $0x80] sm:$0xff]
        %v4057 = vld [vmem:[%s29 + $0x88] sm:$0xff]
        %v4058 = vld [vmem:[%s29 + $0x90] sm:$0xff]
        %v4059 = vld [vmem:[%s29 + $0x98] sm:$0xff]
        %v4060 = vld [vmem:[%s29 + $0xa0] sm:$0xff]
        %v4061 = vld [vmem:[%s29 + $0xa8] sm:$0xff]
        %v4062 = vld [vmem:[%s29 + $0xb0] sm:$0xff]
        %v4063 = vld [vmem:[%s29 + $0xb8] sm:$0xff]
        %v4064 = vld [vmem:[%s29 + $0xc0] sm:$0xff]
        %v4065 = vld [vmem:[%s29 + $0xc8] sm:$0xff]
        %v4066 = vld [vmem:[%s29 + $0xd0] sm:$0xff]
        %v4067 = vld [vmem:[%s29 + $0xd8] sm:$0xff]
        %v4068 = vld [vmem:[%s29 + $0xe0] sm:$0xff]
        %v4069 = vld [vmem:[%s29 + $0xe8] sm:$0xff]
        %v4070 = vld [vmem:[%s29 + $0xf0] sm:$0xff]
        %v4071 = vld [vmem:[%s29 + $0xf8] sm:$0xff]
        %4072 = vmatprep.subr.mxu0 0.0
        %4073 = vmatpush1.msra.mxu0 %v3106
        %4074 = vmatprep.subr.mxu0 0.0
        %4075 = vmatpush1.msra.mxu0 %v3105
        %4076 = vmatprep.subr.mxu0 0.0
        %4077 = vmatpush1.msra.mxu0 %v3104
        %4078 = vmatprep.subr.mxu0 0.0
        %4079 = vmatpush1.msra.mxu0 %v3103
        %4080 = vmatprep.subr.mxu0 0.0
        %4081 = vmatpush1.msra.mxu0 %v3102
        %4082 = vmatprep.subr.mxu0 0.0
        %4083 = vmatpush1.msra.mxu0 %v3101
        %4084 = vmatprep.subr.mxu0 0.0
        %4085 = vmatpush1.msra.mxu0 %v3100
        %4086 = vmatprep.subr.mxu0 0.0
        %4087 = vmatpush1.msra.mxu0 %v3099
        %4088 = vmatprep.subr.mxu0 0.0
        %4089 = vmatpush1.msra.mxu0 %v3098
        %4090 = vmatprep.subr.mxu0 0.0
        %4091 = vmatpush1.msra.mxu0 %v3097
        %4092 = vmatprep.subr.mxu0 0.0
        %4093 = vmatpush1.msra.mxu0 %v3096
        %4094 = vmatprep.subr.mxu0 0.0
        %4095 = vmatpush1.msra.mxu0 %v3095
        %4096 = vmatprep.subr.mxu0 0.0
        %4097 = vmatpush1.msra.mxu0 %v3094
        %4098 = vmatprep.subr.mxu0 0.0
        %4099 = vmatpush1.msra.mxu0 %v3093
        %4100 = vmatprep.subr.mxu0 0.0
        %4101 = vmatpush1.msra.mxu0 %v3092
        %4102 = vmatprep.subr.mxu0 0.0
        %4103 = vmatpush1.msra.mxu0 %v3091
        %4104 = vmatprep.subr.mxu0 0.0
        %4105 = vmatpush2.msra.mxu0 %v3122
        %4106 = vmatprep.subr.mxu0 0.0
        %4107 = vmatpush2.msra.mxu0 %v3121
        %4108 = vmatprep.subr.mxu0 0.0
        %4109 = vmatpush2.msra.mxu0 %v3120
        %4110 = vmatprep.subr.mxu0 0.0
        %4111 = vmatpush2.msra.mxu0 %v3119
        %4112 = vmatprep.subr.mxu0 0.0
        %4113 = vmatpush2.msra.mxu0 %v3118
        %4114 = vmatprep.subr.mxu0 0.0
        %4115 = vmatpush2.msra.mxu0 %v3117
        %4116 = vmatprep.subr.mxu0 0.0
        %4117 = vmatpush2.msra.mxu0 %v3116
        %4118 = vmatprep.subr.mxu0 0.0
        %4119 = vmatpush2.msra.mxu0 %v3115
        %4120 = vmatprep.subr.mxu0 0.0
        %4121 = vmatpush2.msra.mxu0 %v3114
        %4122 = vmatprep.subr.mxu0 0.0
        %4123 = vmatpush2.msra.mxu0 %v3113
        %4124 = vmatprep.subr.mxu0 0.0
        %4125 = vmatpush2.msra.mxu0 %v3112
        %4126 = vmatprep.subr.mxu0 0.0
        %4127 = vmatpush2.msra.mxu0 %v3111
        %4128 = vmatprep.subr.mxu0 0.0
        %4129 = vmatpush2.msra.mxu0 %v3110
        %4130 = vmatprep.subr.mxu0 0.0
        %4131 = vmatpush2.msra.mxu0 %v3109
        %4132 = vmatprep.subr.mxu0 0.0
        %4133 = vmatpush2.msra.mxu0 %v3108
        %4134 = vmatprep.subr.mxu0 0.0
        %4135 = vmatpush2.msra.mxu0 %v3107
        %4136 = vmatprep.mubr.f32.mxu0 %v4041
        %4137 = vmatmul.mubr.f32.gmra.mxu0 %v4040
        %v4138 = vpop.f32.mrf.mxu0
        %v4139 = vadd.f32 0.0, %v4138
        %v4140 = vpop.f32.mrf.mxu0
        %4141 = vmatprep.mubr.f32.mxu0 %v4043
        %4142 = vmatmul.mubr.f32.gmra.mxu0 %v4042
        %v4143 = vpop.f32.mrf.mxu0
        %v4144 = vadd.f32 0.0, %v4143
        %v4145 = vpop.f32.mrf.mxu0
        %4146 = vmatprep.mubr.f32.mxu0 %v4045
        %4147 = vmatmul.mubr.f32.gmra.mxu0 %v4044
        %v4148 = vpop.f32.mrf.mxu0
        %v4149 = vadd.f32 0.0, %v4148
        %v4150 = vpop.f32.mrf.mxu0
        %4151 = vmatprep.mubr.f32.mxu0 %v4047
        %4152 = vmatmul.mubr.f32.gmra.mxu0 %v4046
        %v4153 = vpop.f32.mrf.mxu0
        %v4154 = vadd.f32 0.0, %v4153
        %v4155 = vpop.f32.mrf.mxu0
        %4156 = vmatprep.mubr.f32.mxu0 %v4049
        %4157 = vmatmul.mubr.f32.gmra.mxu0 %v4048
        %v4158 = vpop.f32.mrf.mxu0
        %v4159 = vadd.f32 0.0, %v4158
        %v4160 = vpop.f32.mrf.mxu0
        %4161 = vmatprep.mubr.f32.mxu0 %v4051
        %4162 = vmatmul.mubr.f32.gmra.mxu0 %v4050
        %v4163 = vpop.f32.mrf.mxu0
        %v4164 = vadd.f32 0.0, %v4163
        %v4165 = vpop.f32.mrf.mxu0
        %4166 = vmatprep.mubr.f32.mxu0 %v4053
        %4167 = vmatmul.mubr.f32.gmra.mxu0 %v4052
        %v4168 = vpop.f32.mrf.mxu0
        %v4169 = vadd.f32 0.0, %v4168
        %v4170 = vpop.f32.mrf.mxu0
        %4171 = vmatprep.mubr.f32.mxu0 %v4055
        %4172 = vmatmul.mubr.f32.gmra.mxu0 %v4054
        %v4173 = vpop.f32.mrf.mxu0
        %v4174 = vadd.f32 0.0, %v4173
        %v4175 = vpop.f32.mrf.mxu0
        %4176 = vmatprep.mubr.f32.mxu0 %v4057
        %4177 = vmatmul.mubr.f32.gmra.mxu0 %v4056
        %v4178 = vpop.f32.mrf.mxu0
        %v4179 = vadd.f32 0.0, %v4178
        %v4180 = vpop.f32.mrf.mxu0
        %4181 = vmatprep.mubr.f32.mxu0 %v4059
        %4182 = vmatmul.mubr.f32.gmra.mxu0 %v4058
        %v4183 = vpop.f32.mrf.mxu0
        %v4184 = vadd.f32 0.0, %v4183
        %v4185 = vpop.f32.mrf.mxu0
        %4186 = vmatprep.mubr.f32.mxu0 %v4061
        %4187 = vmatmul.mubr.f32.gmra.mxu0 %v4060
        %v4188 = vpop.f32.mrf.mxu0
        %v4189 = vadd.f32 0.0, %v4188
        %v4190 = vpop.f32.mrf.mxu0
        %4191 = vmatprep.mubr.f32.mxu0 %v4063
        %4192 = vmatmul.mubr.f32.gmra.mxu0 %v4062
        %v4193 = vpop.f32.mrf.mxu0
        %v4194 = vadd.f32 0.0, %v4193
        %v4195 = vpop.f32.mrf.mxu0
        %4196 = vmatprep.mubr.f32.mxu0 %v4065
        %4197 = vmatmul.mubr.f32.gmra.mxu0 %v4064
        %v4198 = vpop.f32.mrf.mxu0
        %v4199 = vadd.f32 0.0, %v4198
        %v4200 = vpop.f32.mrf.mxu0
        %4201 = vmatprep.mubr.f32.mxu0 %v4067
        %4202 = vmatmul.mubr.f32.gmra.mxu0 %v4066
        %v4203 = vpop.f32.mrf.mxu0
        %v4204 = vadd.f32 0.0, %v4203
        %v4205 = vpop.f32.mrf.mxu0
        %4206 = vmatprep.mubr.f32.mxu0 %v4069
        %4207 = vmatmul.mubr.f32.gmra.mxu0 %v4068
        %v4208 = vpop.f32.mrf.mxu0
        %v4209 = vadd.f32 0.0, %v4208
        %v4210 = vpop.f32.mrf.mxu0
        %4211 = vmatprep.mubr.f32.mxu0 %v4071
        %4212 = vmatmul.mubr.f32.gmra.mxu0 %v4070
        %v4213 = vpop.f32.mrf.mxu0
        %v4214 = vadd.f32 0.0, %v4213
        %v4215 = vpop.f32.mrf.mxu0
        %4216 = vdwg.mxu0
        %v4217 = vmax.f32 %v3962, %v4139
        %v4218 = vmax.f32 %v3967, %v4144
        %v4219 = vmax.f32 %v3972, %v4149
        %v4220 = vmax.f32 %v3977, %v4154
        %v4221 = vmax.f32 %v3982, %v4159
        %v4222 = vmax.f32 %v3987, %v4164
        %v4223 = vmax.f32 %v3992, %v4169
        %v4224 = vmax.f32 %v3997, %v4174
        %v4225 = vmax.f32 %v4002, %v4179
        %v4226 = vmax.f32 %v4007, %v4184
        %v4227 = vmax.f32 %v4012, %v4189
        %v4228 = vmax.f32 %v4017, %v4194
        %v4229 = vmax.f32 %v4022, %v4199
        %v4230 = vmax.f32 %v4027, %v4204
        %v4231 = vmax.f32 %v4032, %v4209
        %v4232 = vmax.f32 %v4037, %v4214
        %v4233 = vpack.c.bf16 %v3848, %v3847
        %v4234 = vpack.c.bf16 %v3850, %v3849
        %v4235 = vpack.c.bf16 %v3852, %v3851
        %v4236 = vpack.c.bf16 %v3854, %v3853
        %v4237 = vpack.c.bf16 %v3856, %v3855
        %v4238 = vpack.c.bf16 %v3858, %v3857
        %v4239 = vpack.c.bf16 %v3860, %v3859
        %v4240 = vpack.c.bf16 %v3862, %v3861
        %v4241 = vld [vmem:[%s31] sm:$0xf]
        %v4242 = vld [vmem:[%s31 + $0x4] sm:$0xf]
        %v4243 = vld [vmem:[%s31 + $0x8] sm:$0xf]
        %v4244 = vld [vmem:[%s31 + $0xc] sm:$0xf]
        %v4245 = vld [vmem:[%s31 + $0x10] sm:$0xf]
        %v4246 = vld [vmem:[%s31 + $0x14] sm:$0xf]
        %v4247 = vld [vmem:[%s31 + $0x18] sm:$0xf]
        %v4248 = vld [vmem:[%s31 + $0x1c] sm:$0xf]
        %v4249 = vpack.c.bf16 %v3478, %v3477
        %v4250 = vpack.c.bf16 %v3480, %v3479
        %v4251 = vpack.c.bf16 %v3482, %v3481
        %v4252 = vpack.c.bf16 %v3484, %v3483
        %v4253 = vpack.c.bf16 %v3486, %v3485
        %v4254 = vpack.c.bf16 %v3488, %v3487
        %v4255 = vpack.c.bf16 %v3490, %v3489
        %v4256 = vpack.c.bf16 %v3492, %v3491
        %v4257 = vld [vmem:[%s33] sm:$0xf]
        %v4258 = vld [vmem:[%s33 + $0x4] sm:$0xf]
        %v4259 = vld [vmem:[%s33 + $0x8] sm:$0xf]
        %v4260 = vld [vmem:[%s33 + $0xc] sm:$0xf]
        %v4261 = vld [vmem:[%s33 + $0x10] sm:$0xf]
        %v4262 = vld [vmem:[%s33 + $0x14] sm:$0xf]
        %v4263 = vld [vmem:[%s33 + $0x18] sm:$0xf]
        %v4264 = vld [vmem:[%s33 + $0x1c] sm:$0xf]
        %v4273 = vunpack.c.l.b16 %v4257
        %v4274 = vunpack.c.l.b16 %v4258
        %v4275 = vunpack.c.l.b16 %v4259
        %v4276 = vunpack.c.l.b16 %v4260
        %v4277 = vunpack.c.l.b16 %v4261
        %v4278 = vunpack.c.l.b16 %v4262
        %v4279 = vunpack.c.l.b16 %v4263
        %v4280 = vunpack.c.l.b16 %v4264
        %v4281 = vpack.c.b16 %v4274, %v4273
        %v4282 = vpack.c.b16 %v4276, %v4275
        %v4283 = vpack.c.b16 %v4278, %v4277
        %v4284 = vpack.c.b16 %v4280, %v4279
        %vm4289 = vcmask 523264
        %v4291 = vsel %vm4289, %v4249, 0
        %v4294 = vsel %vm4289, %v4250, 0
        %v4297 = vsel %vm4289, %v4251, 0
        %v4300 = vsel %vm4289, %v4252, 0
        %v4303 = vsel %vm4289, %v4253, 0
        %v4306 = vsel %vm4289, %v4254, 0
        %v4309 = vsel %vm4289, %v4255, 0
        %v4312 = vsel %vm4289, %v4256, 0
        %4314 = vmatprep.subr.bf16.mxu0 0
        %4315 = vmatpush1.bf16.msra.mxu0 0
        %4316 = vmatprep.subr.bf16.mxu0 0
        %4317 = vmatpush1.bf16.msra.mxu0 0
        %4318 = vmatprep.subr.bf16.mxu0 0
        %4319 = vmatpush1.bf16.msra.mxu0 0
        %4320 = vmatprep.subr.bf16.mxu0 0
        %4321 = vmatpush1.bf16.msra.mxu0 0
        %4322 = vmatprep.subr.bf16.mxu0 0
        %4323 = vmatpush1.bf16.msra.mxu0 %v4284
        %4324 = vmatprep.subr.bf16.mxu0 0
        %4325 = vmatpush1.bf16.msra.mxu0 %v4283
        %4326 = vmatprep.subr.bf16.mxu0 0
        %4327 = vmatpush1.bf16.msra.mxu0 %v4282
        %4328 = vmatprep.subr.bf16.mxu0 0
        %4329 = vmatpush1.bf16.msra.mxu0 %v4281
        %4330 = vmatprep.subr.bf16.mxu0 0
        %4331 = vmatpush2.bf16.msra.mxu0 0
        %4332 = vmatprep.subr.bf16.mxu0 0
        %4333 = vmatpush2.bf16.msra.mxu0 0
        %4334 = vmatprep.subr.bf16.mxu0 0
        %4335 = vmatpush2.bf16.msra.mxu0 0
        %4336 = vmatprep.subr.bf16.mxu0 0
        %4337 = vmatpush2.bf16.msra.mxu0 0
        %4338 = vmatprep.subr.bf16.mxu0 0
        %4339 = vmatpush2.bf16.msra.mxu0 0
        %4340 = vmatprep.subr.bf16.mxu0 0
        %4341 = vmatpush2.bf16.msra.mxu0 0
        %4342 = vmatprep.subr.bf16.mxu0 0
        %4343 = vmatpush2.bf16.msra.mxu0 0
        %4344 = vmatprep.subr.bf16.mxu0 0
        %4345 = vmatpush2.bf16.msra.mxu0 0
        %4346 = vmatprep.mubr.bf16.mxu0 0
        %4347 = vmatmul.mubr.bf16.gmra.mxu0 %v4291
        %v4348 = vpop.f32.mrf.mxu0
        %v4349 = vadd.f32 0.0, %v4348
        %v4350 = vpop.f32.mrf.mxu0
        %v4351 = vpop.f32.mrf.mxu0
        %v4352 = vadd.f32 0.0, %v4351
        %v4353 = vpop.f32.mrf.mxu0
        %4354 = vmatprep.mubr.bf16.mxu0 0
        %4355 = vmatmul.mubr.bf16.gmra.mxu0 %v4294
        %v4356 = vpop.f32.mrf.mxu0
        %v4357 = vadd.f32 0.0, %v4356
        %v4358 = vpop.f32.mrf.mxu0
        %v4359 = vpop.f32.mrf.mxu0
        %v4360 = vadd.f32 0.0, %v4359
        %v4361 = vpop.f32.mrf.mxu0
        %4362 = vmatprep.mubr.bf16.mxu0 0
        %4363 = vmatmul.mubr.bf16.gmra.mxu0 %v4297
        %v4364 = vpop.f32.mrf.mxu0
        %v4365 = vadd.f32 0.0, %v4364
        %v4366 = vpop.f32.mrf.mxu0
        %v4367 = vpop.f32.mrf.mxu0
        %v4368 = vadd.f32 0.0, %v4367
        %v4369 = vpop.f32.mrf.mxu0
        %4370 = vmatprep.mubr.bf16.mxu0 0
        %4371 = vmatmul.mubr.bf16.gmra.mxu0 %v4300
        %v4372 = vpop.f32.mrf.mxu0
        %v4373 = vadd.f32 0.0, %v4372
        %v4374 = vpop.f32.mrf.mxu0
        %v4375 = vpop.f32.mrf.mxu0
        %v4376 = vadd.f32 0.0, %v4375
        %v4377 = vpop.f32.mrf.mxu0
        %4378 = vmatprep.mubr.bf16.mxu0 0
        %4379 = vmatmul.mubr.bf16.gmra.mxu0 %v4303
        %v4380 = vpop.f32.mrf.mxu0
        %v4381 = vadd.f32 0.0, %v4380
        %v4382 = vpop.f32.mrf.mxu0
        %v4383 = vpop.f32.mrf.mxu0
        %v4384 = vadd.f32 0.0, %v4383
        %v4385 = vpop.f32.mrf.mxu0
        %4386 = vmatprep.mubr.bf16.mxu0 0
        %4387 = vmatmul.mubr.bf16.gmra.mxu0 %v4306
        %v4388 = vpop.f32.mrf.mxu0
        %v4389 = vadd.f32 0.0, %v4388
        %v4390 = vpop.f32.mrf.mxu0
        %v4391 = vpop.f32.mrf.mxu0
        %v4392 = vadd.f32 0.0, %v4391
        %v4393 = vpop.f32.mrf.mxu0
        %4394 = vmatprep.mubr.bf16.mxu0 0
        %4395 = vmatmul.mubr.bf16.gmra.mxu0 %v4309
        %v4396 = vpop.f32.mrf.mxu0
        %v4397 = vadd.f32 0.0, %v4396
        %v4398 = vpop.f32.mrf.mxu0
        %v4399 = vpop.f32.mrf.mxu0
        %v4400 = vadd.f32 0.0, %v4399
        %v4401 = vpop.f32.mrf.mxu0
        %4402 = vmatprep.mubr.bf16.mxu0 0
        %4403 = vmatmul.mubr.bf16.gmra.mxu0 %v4312
        %v4404 = vpop.f32.mrf.mxu0
        %v4405 = vadd.f32 0.0, %v4404
        %v4406 = vpop.f32.mrf.mxu0
        %v4407 = vpop.f32.mrf.mxu0
        %v4408 = vadd.f32 0.0, %v4407
        %v4409 = vpop.f32.mrf.mxu0
        %4410 = vdwg.mxu0
        %v4419 = vunpack.c.l.b16 %v4241
        %v4420 = vunpack.c.l.b16 %v4242
        %v4421 = vunpack.c.l.b16 %v4243
        %v4422 = vunpack.c.l.b16 %v4244
        %v4423 = vunpack.c.l.b16 %v4245
        %v4424 = vunpack.c.l.b16 %v4246
        %v4425 = vunpack.c.l.b16 %v4247
        %v4426 = vunpack.c.l.b16 %v4248
        %v4427 = vpack.c.b16 %v4420, %v4419
        %v4428 = vpack.c.b16 %v4422, %v4421
        %v4429 = vpack.c.b16 %v4424, %v4423
        %v4430 = vpack.c.b16 %v4426, %v4425
        %v4436 = vsel %vm4289, %v4233, 0
        %v4439 = vsel %vm4289, %v4234, 0
        %v4442 = vsel %vm4289, %v4235, 0
        %v4445 = vsel %vm4289, %v4236, 0
        %v4448 = vsel %vm4289, %v4237, 0
        %v4451 = vsel %vm4289, %v4238, 0
        %v4454 = vsel %vm4289, %v4239, 0
        %v4457 = vsel %vm4289, %v4240, 0
        %4459 = vmatprep.subr.bf16.mxu0 0
        %4460 = vmatpush1.bf16.msra.mxu0 0
        %4461 = vmatprep.subr.bf16.mxu0 0
        %4462 = vmatpush1.bf16.msra.mxu0 0
        %4463 = vmatprep.subr.bf16.mxu0 0
        %4464 = vmatpush1.bf16.msra.mxu0 0
        %4465 = vmatprep.subr.bf16.mxu0 0
        %4466 = vmatpush1.bf16.msra.mxu0 0
        %4467 = vmatprep.subr.bf16.mxu0 0
        %4468 = vmatpush1.bf16.msra.mxu0 %v4430
        %4469 = vmatprep.subr.bf16.mxu0 0
        %4470 = vmatpush1.bf16.msra.mxu0 %v4429
        %4471 = vmatprep.subr.bf16.mxu0 0
        %4472 = vmatpush1.bf16.msra.mxu0 %v4428
        %4473 = vmatprep.subr.bf16.mxu0 0
        %4474 = vmatpush1.bf16.msra.mxu0 %v4427
        %4475 = vmatprep.subr.bf16.mxu0 0
        %4476 = vmatpush2.bf16.msra.mxu0 0
        %4477 = vmatprep.subr.bf16.mxu0 0
        %4478 = vmatpush2.bf16.msra.mxu0 0
        %4479 = vmatprep.subr.bf16.mxu0 0
        %4480 = vmatpush2.bf16.msra.mxu0 0
        %4481 = vmatprep.subr.bf16.mxu0 0
        %4482 = vmatpush2.bf16.msra.mxu0 0
        %4483 = vmatprep.subr.bf16.mxu0 0
        %4484 = vmatpush2.bf16.msra.mxu0 0
        %4485 = vmatprep.subr.bf16.mxu0 0
        %4486 = vmatpush2.bf16.msra.mxu0 0
        %4487 = vmatprep.subr.bf16.mxu0 0
        %4488 = vmatpush2.bf16.msra.mxu0 0
        %4489 = vmatprep.subr.bf16.mxu0 0
        %4490 = vmatpush2.bf16.msra.mxu0 0
        %4491 = vmatprep.mubr.bf16.mxu0 0
        %4492 = vmatmul.mubr.bf16.gmra.mxu0 %v4436
        %v4493 = vpop.f32.mrf.mxu0
        %v4494 = vadd.f32 %v4349, %v4493
        %v4495 = vpop.f32.mrf.mxu0
        %v4496 = vpop.f32.mrf.mxu0
        %v4497 = vadd.f32 %v4352, %v4496
        %v4498 = vpop.f32.mrf.mxu0
        %4499 = vmatprep.mubr.bf16.mxu0 0
        %4500 = vmatmul.mubr.bf16.gmra.mxu0 %v4439
        %v4501 = vpop.f32.mrf.mxu0
        %v4502 = vadd.f32 %v4357, %v4501
        %v4503 = vpop.f32.mrf.mxu0
        %v4504 = vpop.f32.mrf.mxu0
        %v4505 = vadd.f32 %v4360, %v4504
        %v4506 = vpop.f32.mrf.mxu0
        %4507 = vmatprep.mubr.bf16.mxu0 0
        %4508 = vmatmul.mubr.bf16.gmra.mxu0 %v4442
        %v4509 = vpop.f32.mrf.mxu0
        %v4510 = vadd.f32 %v4365, %v4509
        %v4511 = vpop.f32.mrf.mxu0
        %v4512 = vpop.f32.mrf.mxu0
        %v4513 = vadd.f32 %v4368, %v4512
        %v4514 = vpop.f32.mrf.mxu0
        %4515 = vmatprep.mubr.bf16.mxu0 0
        %4516 = vmatmul.mubr.bf16.gmra.mxu0 %v4445
        %v4517 = vpop.f32.mrf.mxu0
        %v4518 = vadd.f32 %v4373, %v4517
        %v4519 = vpop.f32.mrf.mxu0
        %v4520 = vpop.f32.mrf.mxu0
        %v4521 = vadd.f32 %v4376, %v4520
        %v4522 = vpop.f32.mrf.mxu0
        %4523 = vmatprep.mubr.bf16.mxu0 0
        %4524 = vmatmul.mubr.bf16.gmra.mxu0 %v4448
        %v4525 = vpop.f32.mrf.mxu0
        %v4526 = vadd.f32 %v4381, %v4525
        %v4527 = vpop.f32.mrf.mxu0
        %v4528 = vpop.f32.mrf.mxu0
        %v4529 = vadd.f32 %v4384, %v4528
        %v4530 = vpop.f32.mrf.mxu0
        %4531 = vmatprep.mubr.bf16.mxu0 0
        %4532 = vmatmul.mubr.bf16.gmra.mxu0 %v4451
        %v4533 = vpop.f32.mrf.mxu0
        %v4534 = vadd.f32 %v4389, %v4533
        %v4535 = vpop.f32.mrf.mxu0
        %v4536 = vpop.f32.mrf.mxu0
        %v4537 = vadd.f32 %v4392, %v4536
        %v4538 = vpop.f32.mrf.mxu0
        %4539 = vmatprep.mubr.bf16.mxu0 0
        %4540 = vmatmul.mubr.bf16.gmra.mxu0 %v4454
        %v4541 = vpop.f32.mrf.mxu0
        %v4542 = vadd.f32 %v4397, %v4541
        %v4543 = vpop.f32.mrf.mxu0
        %v4544 = vpop.f32.mrf.mxu0
        %v4545 = vadd.f32 %v4400, %v4544
        %v4546 = vpop.f32.mrf.mxu0
        %4547 = vmatprep.mubr.bf16.mxu0 0
        %4548 = vmatmul.mubr.bf16.gmra.mxu0 %v4457
        %v4549 = vpop.f32.mrf.mxu0
        %v4550 = vadd.f32 %v4405, %v4549
        %v4551 = vpop.f32.mrf.mxu0
        %v4552 = vpop.f32.mrf.mxu0
        %v4553 = vadd.f32 %v4408, %v4552
        %v4554 = vpop.f32.mrf.mxu0
        %4555 = vdwg.mxu0
        %v4556 = vpack.c.bf16 %v4218, %v4217
        %v4557 = vpack.c.bf16 %v4220, %v4219
        %v4558 = vpack.c.bf16 %v4222, %v4221
        %v4559 = vpack.c.bf16 %v4224, %v4223
        %v4560 = vpack.c.bf16 %v4226, %v4225
        %v4561 = vpack.c.bf16 %v4228, %v4227
        %v4562 = vpack.c.bf16 %v4230, %v4229
        %v4563 = vpack.c.bf16 %v4232, %v4231
        %v4564 = vld [vmem:[%s35] sm:$0xf]
        %v4565 = vld [vmem:[%s35 + $0x4] sm:$0xf]
        %v4566 = vld [vmem:[%s35 + $0x8] sm:$0xf]
        %v4567 = vld [vmem:[%s35 + $0xc] sm:$0xf]
        %v4568 = vld [vmem:[%s35 + $0x10] sm:$0xf]
        %v4569 = vld [vmem:[%s35 + $0x14] sm:$0xf]
        %v4570 = vld [vmem:[%s35 + $0x18] sm:$0xf]
        %v4571 = vld [vmem:[%s35 + $0x1c] sm:$0xf]
        %v4580 = vunpack.c.l.b16 %v4564
        %v4581 = vunpack.c.l.b16 %v4565
        %v4582 = vunpack.c.l.b16 %v4566
        %v4583 = vunpack.c.l.b16 %v4567
        %v4584 = vunpack.c.l.b16 %v4568
        %v4585 = vunpack.c.l.b16 %v4569
        %v4586 = vunpack.c.l.b16 %v4570
        %v4587 = vunpack.c.l.b16 %v4571
        %v4588 = vpack.c.b16 %v4581, %v4580
        %v4589 = vpack.c.b16 %v4583, %v4582
        %v4590 = vpack.c.b16 %v4585, %v4584
        %v4591 = vpack.c.b16 %v4587, %v4586
        %v4597 = vsel %vm4289, %v4556, 0
        %v4600 = vsel %vm4289, %v4557, 0
        %v4603 = vsel %vm4289, %v4558, 0
        %v4606 = vsel %vm4289, %v4559, 0
        %v4609 = vsel %vm4289, %v4560, 0
        %v4612 = vsel %vm4289, %v4561, 0
        %v4615 = vsel %vm4289, %v4562, 0
        %v4618 = vsel %vm4289, %v4563, 0
        %4620 = vmatprep.subr.bf16.mxu0 0
        %4621 = vmatpush1.bf16.msra.mxu0 0
        %4622 = vmatprep.subr.bf16.mxu0 0
        %4623 = vmatpush1.bf16.msra.mxu0 0
        %4624 = vmatprep.subr.bf16.mxu0 0
        %4625 = vmatpush1.bf16.msra.mxu0 0
        %4626 = vmatprep.subr.bf16.mxu0 0
        %4627 = vmatpush1.bf16.msra.mxu0 0
        %4628 = vmatprep.subr.bf16.mxu0 0
        %4629 = vmatpush1.bf16.msra.mxu0 %v4591
        %4630 = vmatprep.subr.bf16.mxu0 0
        %4631 = vmatpush1.bf16.msra.mxu0 %v4590
        %4632 = vmatprep.subr.bf16.mxu0 0
        %4633 = vmatpush1.bf16.msra.mxu0 %v4589
        %4634 = vmatprep.subr.bf16.mxu0 0
        %4635 = vmatpush1.bf16.msra.mxu0 %v4588
        %4636 = vmatprep.subr.bf16.mxu0 0
        %4637 = vmatpush2.bf16.msra.mxu0 0
        %4638 = vmatprep.subr.bf16.mxu0 0
        %4639 = vmatpush2.bf16.msra.mxu0 0
        %4640 = vmatprep.subr.bf16.mxu0 0
        %4641 = vmatpush2.bf16.msra.mxu0 0
        %4642 = vmatprep.subr.bf16.mxu0 0
        %4643 = vmatpush2.bf16.msra.mxu0 0
        %4644 = vmatprep.subr.bf16.mxu0 0
        %4645 = vmatpush2.bf16.msra.mxu0 0
        %4646 = vmatprep.subr.bf16.mxu0 0
        %4647 = vmatpush2.bf16.msra.mxu0 0
        %4648 = vmatprep.subr.bf16.mxu0 0
        %4649 = vmatpush2.bf16.msra.mxu0 0
        %4650 = vmatprep.subr.bf16.mxu0 0
        %4651 = vmatpush2.bf16.msra.mxu0 0
        %4652 = vmatprep.mubr.bf16.mxu0 0
        %4653 = vmatmul.mubr.bf16.gmra.mxu0 %v4597
        %v4654 = vpop.f32.mrf.mxu0
        %v4655 = vadd.f32 0.0, %v4654
        %v4656 = vpop.f32.mrf.mxu0
        %v4657 = vpop.f32.mrf.mxu0
        %v4658 = vadd.f32 0.0, %v4657
        %v4659 = vpop.f32.mrf.mxu0
        %4660 = vmatprep.mubr.bf16.mxu0 0
        %4661 = vmatmul.mubr.bf16.gmra.mxu0 %v4600
        %v4662 = vpop.f32.mrf.mxu0
        %v4663 = vadd.f32 0.0, %v4662
        %v4664 = vpop.f32.mrf.mxu0
        %v4665 = vpop.f32.mrf.mxu0
        %v4666 = vadd.f32 0.0, %v4665
        %v4667 = vpop.f32.mrf.mxu0
        %4668 = vmatprep.mubr.bf16.mxu0 0
        %4669 = vmatmul.mubr.bf16.gmra.mxu0 %v4603
        %v4670 = vpop.f32.mrf.mxu0
        %v4671 = vadd.f32 0.0, %v4670
        %v4672 = vpop.f32.mrf.mxu0
        %v4673 = vpop.f32.mrf.mxu0
        %v4674 = vadd.f32 0.0, %v4673
        %v4675 = vpop.f32.mrf.mxu0
        %4676 = vmatprep.mubr.bf16.mxu0 0
        %4677 = vmatmul.mubr.bf16.gmra.mxu0 %v4606
        %v4678 = vpop.f32.mrf.mxu0
        %v4679 = vadd.f32 0.0, %v4678
        %v4680 = vpop.f32.mrf.mxu0
        %v4681 = vpop.f32.mrf.mxu0
        %v4682 = vadd.f32 0.0, %v4681
        %v4683 = vpop.f32.mrf.mxu0
        %4684 = vmatprep.mubr.bf16.mxu0 0
        %4685 = vmatmul.mubr.bf16.gmra.mxu0 %v4609
        %v4686 = vpop.f32.mrf.mxu0
        %v4687 = vadd.f32 0.0, %v4686
        %v4688 = vpop.f32.mrf.mxu0
        %v4689 = vpop.f32.mrf.mxu0
        %v4690 = vadd.f32 0.0, %v4689
        %v4691 = vpop.f32.mrf.mxu0
        %4692 = vmatprep.mubr.bf16.mxu0 0
        %4693 = vmatmul.mubr.bf16.gmra.mxu0 %v4612
        %v4694 = vpop.f32.mrf.mxu0
        %v4695 = vadd.f32 0.0, %v4694
        %v4696 = vpop.f32.mrf.mxu0
        %v4697 = vpop.f32.mrf.mxu0
        %v4698 = vadd.f32 0.0, %v4697
        %v4699 = vpop.f32.mrf.mxu0
        %4700 = vmatprep.mubr.bf16.mxu0 0
        %4701 = vmatmul.mubr.bf16.gmra.mxu0 %v4615
        %v4702 = vpop.f32.mrf.mxu0
        %v4703 = vadd.f32 0.0, %v4702
        %v4704 = vpop.f32.mrf.mxu0
        %v4705 = vpop.f32.mrf.mxu0
        %v4706 = vadd.f32 0.0, %v4705
        %v4707 = vpop.f32.mrf.mxu0
        %4708 = vmatprep.mubr.bf16.mxu0 0
        %4709 = vmatmul.mubr.bf16.gmra.mxu0 %v4618
        %v4710 = vpop.f32.mrf.mxu0
        %v4711 = vadd.f32 0.0, %v4710
        %v4712 = vpop.f32.mrf.mxu0
        %v4713 = vpop.f32.mrf.mxu0
        %v4714 = vadd.f32 0.0, %v4713
        %v4715 = vpop.f32.mrf.mxu0
        %4716 = vdwg.mxu0
        %v4717 = vadd.f32 %v4494, %v4655
        %v4718 = vadd.f32 %v4497, %v4658
        %v4719 = vadd.f32 %v4502, %v4663
        %v4720 = vadd.f32 %v4505, %v4666
        %v4721 = vadd.f32 %v4510, %v4671
        %v4722 = vadd.f32 %v4513, %v4674
        %v4723 = vadd.f32 %v4518, %v4679
        %v4724 = vadd.f32 %v4521, %v4682
        %v4725 = vadd.f32 %v4526, %v4687
        %v4726 = vadd.f32 %v4529, %v4690
        %v4727 = vadd.f32 %v4534, %v4695
        %v4728 = vadd.f32 %v4537, %v4698
        %v4729 = vadd.f32 %v4542, %v4703
        %v4730 = vadd.f32 %v4545, %v4706
        %v4731 = vadd.f32 %v4550, %v4711
        %v4732 = vadd.f32 %v4553, %v4714
        %v4733 = vld [vmem:[%s37] sm:$0x1]
        %v4735 = vlaneseq
        %v4736 = vshrl.u32 %v4735, 7
        %v4737 = vsub.s32 0, %v4736
        %v4738 = vrot.slane %v4733, %v4737
        %v4740 = vadd.f32 %v4717, %v4738
        %v4741 = vadd.f32 %v4718, %v4738
        %v4742 = vadd.f32 %v4719, %v4738
        %v4743 = vadd.f32 %v4720, %v4738
        %v4744 = vadd.f32 %v4721, %v4738
        %v4745 = vadd.f32 %v4722, %v4738
        %v4746 = vadd.f32 %v4723, %v4738
        %v4747 = vadd.f32 %v4724, %v4738
        %v4748 = vadd.f32 %v4725, %v4738
        %v4749 = vadd.f32 %v4726, %v4738
        %v4750 = vadd.f32 %v4727, %v4738
        %v4751 = vadd.f32 %v4728, %v4738
        %v4752 = vadd.f32 %v4729, %v4738
        %v4753 = vadd.f32 %v4730, %v4738
        %v4754 = vadd.f32 %v4731, %v4738
        %v4755 = vadd.f32 %v4732, %v4738
        %v4756 = vmax.f32 %v4740, 0.0
        %v4757 = vmax.f32 %v4741, 0.0
        %v4758 = vmax.f32 %v4742, 0.0
        %v4759 = vmax.f32 %v4743, 0.0
        %v4760 = vmax.f32 %v4744, 0.0
        %v4761 = vmax.f32 %v4745, 0.0
        %v4762 = vmax.f32 %v4746, 0.0
        %v4763 = vmax.f32 %v4747, 0.0
        %v4764 = vmax.f32 %v4748, 0.0
        %v4765 = vmax.f32 %v4749, 0.0
        %v4766 = vmax.f32 %v4750, 0.0
        %v4767 = vmax.f32 %v4751, 0.0
        %v4768 = vmax.f32 %v4752, 0.0
        %v4769 = vmax.f32 %v4753, 0.0
        %v4770 = vmax.f32 %v4754, 0.0
        %v4771 = vmax.f32 %v4755, 0.0
        %v4772 = vmin.f32 %v4756, 6.0
        %v4773 = vmin.f32 %v4757, 6.0
        %v4774 = vmin.f32 %v4758, 6.0
        %v4775 = vmin.f32 %v4759, 6.0
        %v4776 = vmin.f32 %v4760, 6.0
        %v4777 = vmin.f32 %v4761, 6.0
        %v4778 = vmin.f32 %v4762, 6.0
        %v4779 = vmin.f32 %v4763, 6.0
        %v4780 = vmin.f32 %v4764, 6.0
        %v4781 = vmin.f32 %v4765, 6.0
        %v4782 = vmin.f32 %v4766, 6.0
        %v4783 = vmin.f32 %v4767, 6.0
        %v4784 = vmin.f32 %v4768, 6.0
        %v4785 = vmin.f32 %v4769, 6.0
        %v4786 = vmin.f32 %v4770, 6.0
        %v4787 = vmin.f32 %v4771, 6.0
        %v4788 = vld [vmem:[%s39] sm:$0xff]
        %v4789 = vld [vmem:[%s39 + $0x8] sm:$0xff]
        %v4790 = vld [vmem:[%s39 + $0x10] sm:$0xff]
        %v4791 = vld [vmem:[%s39 + $0x18] sm:$0xff]
        %v4792 = vld [vmem:[%s39 + $0x20] sm:$0xff]
        %v4793 = vld [vmem:[%s39 + $0x28] sm:$0xff]
        %v4794 = vld [vmem:[%s39 + $0x30] sm:$0xff]
        %v4795 = vld [vmem:[%s39 + $0x38] sm:$0xff]
        %v4796 = vld [vmem:[%s39 + $0x40] sm:$0xff]
        %v4797 = vld [vmem:[%s39 + $0x48] sm:$0xff]
        %v4798 = vld [vmem:[%s39 + $0x50] sm:$0xff]
        %v4799 = vld [vmem:[%s39 + $0x58] sm:$0xff]
        %v4800 = vld [vmem:[%s39 + $0x60] sm:$0xff]
        %v4801 = vld [vmem:[%s39 + $0x68] sm:$0xff]
        %v4802 = vld [vmem:[%s39 + $0x70] sm:$0xff]
        %v4803 = vld [vmem:[%s39 + $0x78] sm:$0xff]
        %4804 = vmatprep.subr.mxu0 0.0
        %4805 = vmatpush1.msra.mxu0 %v4803
        %4806 = vmatprep.subr.mxu0 0.0
        %4807 = vmatpush1.msra.mxu0 %v4802
        %4808 = vmatprep.subr.mxu0 0.0
        %4809 = vmatpush1.msra.mxu0 %v4801
        %4810 = vmatprep.subr.mxu0 0.0
        %4811 = vmatpush1.msra.mxu0 %v4800
        %4812 = vmatprep.subr.mxu0 0.0
        %4813 = vmatpush1.msra.mxu0 %v4799
        %4814 = vmatprep.subr.mxu0 0.0
        %4815 = vmatpush1.msra.mxu0 %v4798
        %4816 = vmatprep.subr.mxu0 0.0
        %4817 = vmatpush1.msra.mxu0 %v4797
        %4818 = vmatprep.subr.mxu0 0.0
        %4819 = vmatpush1.msra.mxu0 %v4796
        %4820 = vmatprep.subr.mxu0 0.0
        %4821 = vmatpush1.msra.mxu0 %v4795
        %4822 = vmatprep.subr.mxu0 0.0
        %4823 = vmatpush1.msra.mxu0 %v4794
        %4824 = vmatprep.subr.mxu0 0.0
        %4825 = vmatpush1.msra.mxu0 %v4793
        %4826 = vmatprep.subr.mxu0 0.0
        %4827 = vmatpush1.msra.mxu0 %v4792
        %4828 = vmatprep.subr.mxu0 0.0
        %4829 = vmatpush1.msra.mxu0 %v4791
        %4830 = vmatprep.subr.mxu0 0.0
        %4831 = vmatpush1.msra.mxu0 %v4790
        %4832 = vmatprep.subr.mxu0 0.0
        %4833 = vmatpush1.msra.mxu0 %v4789
        %4834 = vmatprep.subr.mxu0 0.0
        %4835 = vmatpush1.msra.mxu0 %v4788
        %4836 = vmatprep.subr.mxu0 0.0
        %4837 = vmatpush2.msra.mxu0 0.0
        %4838 = vmatprep.subr.mxu0 0.0
        %4839 = vmatpush2.msra.mxu0 0.0
        %4840 = vmatprep.subr.mxu0 0.0
        %4841 = vmatpush2.msra.mxu0 0.0
        %4842 = vmatprep.subr.mxu0 0.0
        %4843 = vmatpush2.msra.mxu0 0.0
        %4844 = vmatprep.subr.mxu0 0.0
        %4845 = vmatpush2.msra.mxu0 0.0
        %4846 = vmatprep.subr.mxu0 0.0
        %4847 = vmatpush2.msra.mxu0 0.0
        %4848 = vmatprep.subr.mxu0 0.0
        %4849 = vmatpush2.msra.mxu0 0.0
        %4850 = vmatprep.subr.mxu0 0.0
        %4851 = vmatpush2.msra.mxu0 0.0
        %4852 = vmatprep.subr.mxu0 0.0
        %4853 = vmatpush2.msra.mxu0 0.0
        %4854 = vmatprep.subr.mxu0 0.0
        %4855 = vmatpush2.msra.mxu0 0.0
        %4856 = vmatprep.subr.mxu0 0.0
        %4857 = vmatpush2.msra.mxu0 0.0
        %4858 = vmatprep.subr.mxu0 0.0
        %4859 = vmatpush2.msra.mxu0 0.0
        %4860 = vmatprep.subr.mxu0 0.0
        %4861 = vmatpush2.msra.mxu0 0.0
        %4862 = vmatprep.subr.mxu0 0.0
        %4863 = vmatpush2.msra.mxu0 0.0
        %4864 = vmatprep.subr.mxu0 0.0
        %4865 = vmatpush2.msra.mxu0 0.0
        %4866 = vmatprep.subr.mxu0 0.0
        %4867 = vmatpush2.msra.mxu0 0.0
        %4868 = vmatprep.mubr.f32.mxu0 0.0
        %4869 = vmatmul.mubr.f32.gmra.mxu0 %v4772
        %v4870 = vpop.f32.mrf.mxu0
        %v4871 = vadd.f32 0.0, %v4870
        %v4872 = vpop.f32.mrf.mxu0
        %4873 = vmatprep.mubr.f32.mxu0 0.0
        %4874 = vmatmul.mubr.f32.gmra.mxu0 %v4773
        %v4875 = vpop.f32.mrf.mxu0
        %v4876 = vadd.f32 0.0, %v4875
        %v4877 = vpop.f32.mrf.mxu0
        %4878 = vmatprep.mubr.f32.mxu0 0.0
        %4879 = vmatmul.mubr.f32.gmra.mxu0 %v4774
        %v4880 = vpop.f32.mrf.mxu0
        %v4881 = vadd.f32 0.0, %v4880
        %v4882 = vpop.f32.mrf.mxu0
        %4883 = vmatprep.mubr.f32.mxu0 0.0
        %4884 = vmatmul.mubr.f32.gmra.mxu0 %v4775
        %v4885 = vpop.f32.mrf.mxu0
        %v4886 = vadd.f32 0.0, %v4885
        %v4887 = vpop.f32.mrf.mxu0
        %4888 = vmatprep.mubr.f32.mxu0 0.0
        %4889 = vmatmul.mubr.f32.gmra.mxu0 %v4776
        %v4890 = vpop.f32.mrf.mxu0
        %v4891 = vadd.f32 0.0, %v4890
        %v4892 = vpop.f32.mrf.mxu0
        %4893 = vmatprep.mubr.f32.mxu0 0.0
        %4894 = vmatmul.mubr.f32.gmra.mxu0 %v4777
        %v4895 = vpop.f32.mrf.mxu0
        %v4896 = vadd.f32 0.0, %v4895
        %v4897 = vpop.f32.mrf.mxu0
        %4898 = vmatprep.mubr.f32.mxu0 0.0
        %4899 = vmatmul.mubr.f32.gmra.mxu0 %v4778
        %v4900 = vpop.f32.mrf.mxu0
        %v4901 = vadd.f32 0.0, %v4900
        %v4902 = vpop.f32.mrf.mxu0
        %4903 = vmatprep.mubr.f32.mxu0 0.0
        %4904 = vmatmul.mubr.f32.gmra.mxu0 %v4779
        %v4905 = vpop.f32.mrf.mxu0
        %v4906 = vadd.f32 0.0, %v4905
        %v4907 = vpop.f32.mrf.mxu0
        %4908 = vmatprep.mubr.f32.mxu0 0.0
        %4909 = vmatmul.mubr.f32.gmra.mxu0 %v4780
        %v4910 = vpop.f32.mrf.mxu0
        %v4911 = vadd.f32 0.0, %v4910
        %v4912 = vpop.f32.mrf.mxu0
        %4913 = vmatprep.mubr.f32.mxu0 0.0
        %4914 = vmatmul.mubr.f32.gmra.mxu0 %v4781
        %v4915 = vpop.f32.mrf.mxu0
        %v4916 = vadd.f32 0.0, %v4915
        %v4917 = vpop.f32.mrf.mxu0
        %4918 = vmatprep.mubr.f32.mxu0 0.0
        %4919 = vmatmul.mubr.f32.gmra.mxu0 %v4782
        %v4920 = vpop.f32.mrf.mxu0
        %v4921 = vadd.f32 0.0, %v4920
        %v4922 = vpop.f32.mrf.mxu0
        %4923 = vmatprep.mubr.f32.mxu0 0.0
        %4924 = vmatmul.mubr.f32.gmra.mxu0 %v4783
        %v4925 = vpop.f32.mrf.mxu0
        %v4926 = vadd.f32 0.0, %v4925
        %v4927 = vpop.f32.mrf.mxu0
        %4928 = vmatprep.mubr.f32.mxu0 0.0
        %4929 = vmatmul.mubr.f32.gmra.mxu0 %v4784
        %v4930 = vpop.f32.mrf.mxu0
        %v4931 = vadd.f32 0.0, %v4930
        %v4932 = vpop.f32.mrf.mxu0
        %4933 = vmatprep.mubr.f32.mxu0 0.0
        %4934 = vmatmul.mubr.f32.gmra.mxu0 %v4785
        %v4935 = vpop.f32.mrf.mxu0
        %v4936 = vadd.f32 0.0, %v4935
        %v4937 = vpop.f32.mrf.mxu0
        %4938 = vmatprep.mubr.f32.mxu0 0.0
        %4939 = vmatmul.mubr.f32.gmra.mxu0 %v4786
        %v4940 = vpop.f32.mrf.mxu0
        %v4941 = vadd.f32 0.0, %v4940
        %v4942 = vpop.f32.mrf.mxu0
        %4943 = vmatprep.mubr.f32.mxu0 0.0
        %4944 = vmatmul.mubr.f32.gmra.mxu0 %v4787
        %v4945 = vpop.f32.mrf.mxu0
        %v4946 = vadd.f32 0.0, %v4945
        %v4947 = vpop.f32.mrf.mxu0
        %4948 = vdwg.mxu0
        %v4949 = vld [vmem:[%s41] sm:$0xff]
        %v4950 = vld [vmem:[%s41 + $0x8] sm:$0xff]
        %v4951 = vld [vmem:[%s41 + $0x10] sm:$0xff]
        %v4952 = vld [vmem:[%s41 + $0x18] sm:$0xff]
        %v4953 = vld [vmem:[%s41 + $0x20] sm:$0xff]
        %v4954 = vld [vmem:[%s41 + $0x28] sm:$0xff]
        %v4955 = vld [vmem:[%s41 + $0x30] sm:$0xff]
        %v4956 = vld [vmem:[%s41 + $0x38] sm:$0xff]
        %v4957 = vld [vmem:[%s41 + $0x40] sm:$0xff]
        %v4958 = vld [vmem:[%s41 + $0x48] sm:$0xff]
        %v4959 = vld [vmem:[%s41 + $0x50] sm:$0xff]
        %v4960 = vld [vmem:[%s41 + $0x58] sm:$0xff]
        %v4961 = vld [vmem:[%s41 + $0x60] sm:$0xff]
        %v4962 = vld [vmem:[%s41 + $0x68] sm:$0xff]
        %v4963 = vld [vmem:[%s41 + $0x70] sm:$0xff]
        %v4964 = vld [vmem:[%s41 + $0x78] sm:$0xff]
        %4965 = vmatprep.subr.mxu0 0.0
        %4966 = vmatpush1.msra.mxu0 %v4964
        %4967 = vmatprep.subr.mxu0 0.0
        %4968 = vmatpush1.msra.mxu0 %v4963
        %4969 = vmatprep.subr.mxu0 0.0
        %4970 = vmatpush1.msra.mxu0 %v4962
        %4971 = vmatprep.subr.mxu0 0.0
        %4972 = vmatpush1.msra.mxu0 %v4961
        %4973 = vmatprep.subr.mxu0 0.0
        %4974 = vmatpush1.msra.mxu0 %v4960
        %4975 = vmatprep.subr.mxu0 0.0
        %4976 = vmatpush1.msra.mxu0 %v4959
        %4977 = vmatprep.subr.mxu0 0.0
        %4978 = vmatpush1.msra.mxu0 %v4958
        %4979 = vmatprep.subr.mxu0 0.0
        %4980 = vmatpush1.msra.mxu0 %v4957
        %4981 = vmatprep.subr.mxu0 0.0
        %4982 = vmatpush1.msra.mxu0 %v4956
        %4983 = vmatprep.subr.mxu0 0.0
        %4984 = vmatpush1.msra.mxu0 %v4955
        %4985 = vmatprep.subr.mxu0 0.0
        %4986 = vmatpush1.msra.mxu0 %v4954
        %4987 = vmatprep.subr.mxu0 0.0
        %4988 = vmatpush1.msra.mxu0 %v4953
        %4989 = vmatprep.subr.mxu0 0.0
        %4990 = vmatpush1.msra.mxu0 %v4952
        %4991 = vmatprep.subr.mxu0 0.0
        %4992 = vmatpush1.msra.mxu0 %v4951
        %4993 = vmatprep.subr.mxu0 0.0
        %4994 = vmatpush1.msra.mxu0 %v4950
        %4995 = vmatprep.subr.mxu0 0.0
        %4996 = vmatpush1.msra.mxu0 %v4949
        %4997 = vmatprep.subr.mxu0 0.0
        %4998 = vmatpush2.msra.mxu0 0.0
        %4999 = vmatprep.subr.mxu0 0.0
        %5000 = vmatpush2.msra.mxu0 0.0
        %5001 = vmatprep.subr.mxu0 0.0
        %5002 = vmatpush2.msra.mxu0 0.0
        %5003 = vmatprep.subr.mxu0 0.0
        %5004 = vmatpush2.msra.mxu0 0.0
        %5005 = vmatprep.subr.mxu0 0.0
        %5006 = vmatpush2.msra.mxu0 0.0
        %5007 = vmatprep.subr.mxu0 0.0
        %5008 = vmatpush2.msra.mxu0 0.0
        %5009 = vmatprep.subr.mxu0 0.0
        %5010 = vmatpush2.msra.mxu0 0.0
        %5011 = vmatprep.subr.mxu0 0.0
        %5012 = vmatpush2.msra.mxu0 0.0
        %5013 = vmatprep.subr.mxu0 0.0
        %5014 = vmatpush2.msra.mxu0 0.0
        %5015 = vmatprep.subr.mxu0 0.0
        %5016 = vmatpush2.msra.mxu0 0.0
        %5017 = vmatprep.subr.mxu0 0.0
        %5018 = vmatpush2.msra.mxu0 0.0
        %5019 = vmatprep.subr.mxu0 0.0
        %5020 = vmatpush2.msra.mxu0 0.0
        %5021 = vmatprep.subr.mxu0 0.0
        %5022 = vmatpush2.msra.mxu0 0.0
        %5023 = vmatprep.subr.mxu0 0.0
        %5024 = vmatpush2.msra.mxu0 0.0
        %5025 = vmatprep.subr.mxu0 0.0
        %5026 = vmatpush2.msra.mxu0 0.0
        %5027 = vmatprep.subr.mxu0 0.0
        %5028 = vmatpush2.msra.mxu0 0.0
        %5029 = vmatprep.mubr.f32.mxu0 0.0
        %5030 = vmatmul.mubr.f32.gmra.mxu0 %v4772
        %v5031 = vpop.f32.mrf.mxu0
        %v5032 = vadd.f32 0.0, %v5031
        %v5033 = vpop.f32.mrf.mxu0
        %5034 = vmatprep.mubr.f32.mxu0 0.0
        %5035 = vmatmul.mubr.f32.gmra.mxu0 %v4773
        %v5036 = vpop.f32.mrf.mxu0
        %v5037 = vadd.f32 0.0, %v5036
        %v5038 = vpop.f32.mrf.mxu0
        %5039 = vmatprep.mubr.f32.mxu0 0.0
        %5040 = vmatmul.mubr.f32.gmra.mxu0 %v4774
        %v5041 = vpop.f32.mrf.mxu0
        %v5042 = vadd.f32 0.0, %v5041
        %v5043 = vpop.f32.mrf.mxu0
        %5044 = vmatprep.mubr.f32.mxu0 0.0
        %5045 = vmatmul.mubr.f32.gmra.mxu0 %v4775
        %v5046 = vpop.f32.mrf.mxu0
        %v5047 = vadd.f32 0.0, %v5046
        %v5048 = vpop.f32.mrf.mxu0
        %5049 = vmatprep.mubr.f32.mxu0 0.0
        %5050 = vmatmul.mubr.f32.gmra.mxu0 %v4776
        %v5051 = vpop.f32.mrf.mxu0
        %v5052 = vadd.f32 0.0, %v5051
        %v5053 = vpop.f32.mrf.mxu0
        %5054 = vmatprep.mubr.f32.mxu0 0.0
        %5055 = vmatmul.mubr.f32.gmra.mxu0 %v4777
        %v5056 = vpop.f32.mrf.mxu0
        %v5057 = vadd.f32 0.0, %v5056
        %v5058 = vpop.f32.mrf.mxu0
        %5059 = vmatprep.mubr.f32.mxu0 0.0
        %5060 = vmatmul.mubr.f32.gmra.mxu0 %v4778
        %v5061 = vpop.f32.mrf.mxu0
        %v5062 = vadd.f32 0.0, %v5061
        %v5063 = vpop.f32.mrf.mxu0
        %5064 = vmatprep.mubr.f32.mxu0 0.0
        %5065 = vmatmul.mubr.f32.gmra.mxu0 %v4779
        %v5066 = vpop.f32.mrf.mxu0
        %v5067 = vadd.f32 0.0, %v5066
        %v5068 = vpop.f32.mrf.mxu0
        %5069 = vmatprep.mubr.f32.mxu0 0.0
        %5070 = vmatmul.mubr.f32.gmra.mxu0 %v4780
        %v5071 = vpop.f32.mrf.mxu0
        %v5072 = vadd.f32 0.0, %v5071
        %v5073 = vpop.f32.mrf.mxu0
        %5074 = vmatprep.mubr.f32.mxu0 0.0
        %5075 = vmatmul.mubr.f32.gmra.mxu0 %v4781
        %v5076 = vpop.f32.mrf.mxu0
        %v5077 = vadd.f32 0.0, %v5076
        %v5078 = vpop.f32.mrf.mxu0
        %5079 = vmatprep.mubr.f32.mxu0 0.0
        %5080 = vmatmul.mubr.f32.gmra.mxu0 %v4782
        %v5081 = vpop.f32.mrf.mxu0
        %v5082 = vadd.f32 0.0, %v5081
        %v5083 = vpop.f32.mrf.mxu0
        %5084 = vmatprep.mubr.f32.mxu0 0.0
        %5085 = vmatmul.mubr.f32.gmra.mxu0 %v4783
        %v5086 = vpop.f32.mrf.mxu0
        %v5087 = vadd.f32 0.0, %v5086
        %v5088 = vpop.f32.mrf.mxu0
        %5089 = vmatprep.mubr.f32.mxu0 0.0
        %5090 = vmatmul.mubr.f32.gmra.mxu0 %v4784
        %v5091 = vpop.f32.mrf.mxu0
        %v5092 = vadd.f32 0.0, %v5091
        %v5093 = vpop.f32.mrf.mxu0
        %5094 = vmatprep.mubr.f32.mxu0 0.0
        %5095 = vmatmul.mubr.f32.gmra.mxu0 %v4785
        %v5096 = vpop.f32.mrf.mxu0
        %v5097 = vadd.f32 0.0, %v5096
        %v5098 = vpop.f32.mrf.mxu0
        %5099 = vmatprep.mubr.f32.mxu0 0.0
        %5100 = vmatmul.mubr.f32.gmra.mxu0 %v4786
        %v5101 = vpop.f32.mrf.mxu0
        %v5102 = vadd.f32 0.0, %v5101
        %v5103 = vpop.f32.mrf.mxu0
        %5104 = vmatprep.mubr.f32.mxu0 0.0
        %5105 = vmatmul.mubr.f32.gmra.mxu0 %v4787
        %v5106 = vpop.f32.mrf.mxu0
        %v5107 = vadd.f32 0.0, %v5106
        %v5108 = vpop.f32.mrf.mxu0
        %5109 = vdwg.mxu0
        %v5110 = vmax.f32 %v4871, %v5032
        %v5111 = vmax.f32 %v4876, %v5037
        %v5112 = vmax.f32 %v4881, %v5042
        %v5113 = vmax.f32 %v4886, %v5047
        %v5114 = vmax.f32 %v4891, %v5052
        %v5115 = vmax.f32 %v4896, %v5057
        %v5116 = vmax.f32 %v4901, %v5062
        %v5117 = vmax.f32 %v4906, %v5067
        %v5118 = vmax.f32 %v4911, %v5072
        %v5119 = vmax.f32 %v4916, %v5077
        %v5120 = vmax.f32 %v4921, %v5082
        %v5121 = vmax.f32 %v4926, %v5087
        %v5122 = vmax.f32 %v4931, %v5092
        %v5123 = vmax.f32 %v4936, %v5097
        %v5124 = vmax.f32 %v4941, %v5102
        %v5125 = vmax.f32 %v4946, %v5107
        %v5126 = vld [vmem:[%s43] sm:$0xff]
        %v5127 = vld [vmem:[%s43 + $0x8] sm:$0xff]
        %v5128 = vld [vmem:[%s43 + $0x10] sm:$0xff]
        %v5129 = vld [vmem:[%s43 + $0x18] sm:$0xff]
        %v5130 = vld [vmem:[%s43 + $0x20] sm:$0xff]
        %v5131 = vld [vmem:[%s43 + $0x28] sm:$0xff]
        %v5132 = vld [vmem:[%s43 + $0x30] sm:$0xff]
        %v5133 = vld [vmem:[%s43 + $0x38] sm:$0xff]
        %5134 = vmatprep.subr.mxu0 0.0
        %5135 = vmatpush1.msra.mxu0 %v5125
        %5136 = vmatprep.subr.mxu0 0.0
        %5137 = vmatpush1.msra.mxu0 %v5124
        %5138 = vmatprep.subr.mxu0 0.0
        %5139 = vmatpush1.msra.mxu0 %v5123
        %5140 = vmatprep.subr.mxu0 0.0
        %5141 = vmatpush1.msra.mxu0 %v5122
        %5142 = vmatprep.subr.mxu0 0.0
        %5143 = vmatpush1.msra.mxu0 %v5121
        %5144 = vmatprep.subr.mxu0 0.0
        %5145 = vmatpush1.msra.mxu0 %v5120
        %5146 = vmatprep.subr.mxu0 0.0
        %5147 = vmatpush1.msra.mxu0 %v5119
        %5148 = vmatprep.subr.mxu0 0.0
        %5149 = vmatpush1.msra.mxu0 %v5118
        %5150 = vmatprep.subr.mxu0 0.0
        %5151 = vmatpush1.msra.mxu0 %v5117
        %5152 = vmatprep.subr.mxu0 0.0
        %5153 = vmatpush1.msra.mxu0 %v5116
        %5154 = vmatprep.subr.mxu0 0.0
        %5155 = vmatpush1.msra.mxu0 %v5115
        %5156 = vmatprep.subr.mxu0 0.0
        %5157 = vmatpush1.msra.mxu0 %v5114
        %5158 = vmatprep.subr.mxu0 0.0
        %5159 = vmatpush1.msra.mxu0 %v5113
        %5160 = vmatprep.subr.mxu0 0.0
        %5161 = vmatpush1.msra.mxu0 %v5112
        %5162 = vmatprep.subr.mxu0 0.0
        %5163 = vmatpush1.msra.mxu0 %v5111
        %5164 = vmatprep.subr.mxu0 0.0
        %5165 = vmatpush1.msra.mxu0 %v5110
        %5166 = vmatprep.subr.mxu0 0.0
        %5167 = vmatpush2.msra.mxu0 0.0
        %5168 = vmatprep.subr.mxu0 0.0
        %5169 = vmatpush2.msra.mxu0 0.0
        %5170 = vmatprep.subr.mxu0 0.0
        %5171 = vmatpush2.msra.mxu0 0.0
        %5172 = vmatprep.subr.mxu0 0.0
        %5173 = vmatpush2.msra.mxu0 0.0
        %5174 = vmatprep.subr.mxu0 0.0
        %5175 = vmatpush2.msra.mxu0 0.0
        %5176 = vmatprep.subr.mxu0 0.0
        %5177 = vmatpush2.msra.mxu0 0.0
        %5178 = vmatprep.subr.mxu0 0.0
        %5179 = vmatpush2.msra.mxu0 0.0
        %5180 = vmatprep.subr.mxu0 0.0
        %5181 = vmatpush2.msra.mxu0 0.0
        %5182 = vmatprep.subr.mxu0 0.0
        %5183 = vmatpush2.msra.mxu0 0.0
        %5184 = vmatprep.subr.mxu0 0.0
        %5185 = vmatpush2.msra.mxu0 0.0
        %5186 = vmatprep.subr.mxu0 0.0
        %5187 = vmatpush2.msra.mxu0 0.0
        %5188 = vmatprep.subr.mxu0 0.0
        %5189 = vmatpush2.msra.mxu0 0.0
        %5190 = vmatprep.subr.mxu0 0.0
        %5191 = vmatpush2.msra.mxu0 0.0
        %5192 = vmatprep.subr.mxu0 0.0
        %5193 = vmatpush2.msra.mxu0 0.0
        %5194 = vmatprep.subr.mxu0 0.0
        %5195 = vmatpush2.msra.mxu0 0.0
        %5196 = vmatprep.subr.mxu0 0.0
        %5197 = vmatpush2.msra.mxu0 0.0
        %5198 = vmatprep.mubr.f32.mxu0 0.0
        %5199 = vmatmul.mubr.f32.gmra.mxu0 %v5126
        %v5200 = vpop.f32.mrf.mxu0
        %v5201 = vadd.f32 0.0, %v5200
        %v5202 = vpop.f32.mrf.mxu0
        %5203 = vmatprep.mubr.f32.mxu0 0.0
        %5204 = vmatmul.mubr.f32.gmra.mxu0 %v5127
        %v5205 = vpop.f32.mrf.mxu0
        %v5206 = vadd.f32 0.0, %v5205
        %v5207 = vpop.f32.mrf.mxu0
        %5208 = vmatprep.mubr.f32.mxu0 0.0
        %5209 = vmatmul.mubr.f32.gmra.mxu0 %v5128
        %v5210 = vpop.f32.mrf.mxu0
        %v5211 = vadd.f32 0.0, %v5210
        %v5212 = vpop.f32.mrf.mxu0
        %5213 = vmatprep.mubr.f32.mxu0 0.0
        %5214 = vmatmul.mubr.f32.gmra.mxu0 %v5129
        %v5215 = vpop.f32.mrf.mxu0
        %v5216 = vadd.f32 0.0, %v5215
        %v5217 = vpop.f32.mrf.mxu0
        %5218 = vmatprep.mubr.f32.mxu0 0.0
        %5219 = vmatmul.mubr.f32.gmra.mxu0 %v5130
        %v5220 = vpop.f32.mrf.mxu0
        %v5221 = vadd.f32 0.0, %v5220
        %v5222 = vpop.f32.mrf.mxu0
        %5223 = vmatprep.mubr.f32.mxu0 0.0
        %5224 = vmatmul.mubr.f32.gmra.mxu0 %v5131
        %v5225 = vpop.f32.mrf.mxu0
        %v5226 = vadd.f32 0.0, %v5225
        %v5227 = vpop.f32.mrf.mxu0
        %5228 = vmatprep.mubr.f32.mxu0 0.0
        %5229 = vmatmul.mubr.f32.gmra.mxu0 %v5132
        %v5230 = vpop.f32.mrf.mxu0
        %v5231 = vadd.f32 0.0, %v5230
        %v5232 = vpop.f32.mrf.mxu0
        %5233 = vmatprep.mubr.f32.mxu0 0.0
        %5234 = vmatmul.mubr.f32.gmra.mxu0 %v5133
        %v5235 = vpop.f32.mrf.mxu0
        %v5236 = vadd.f32 0.0, %v5235
        %v5237 = vpop.f32.mrf.mxu0
        %5238 = vdwg.mxu0
        %v5239 = vld [vmem:[%s45] sm:$0xff]
        %v5240 = vld [vmem:[%s45 + $0x8] sm:$0xff]
        %v5241 = vld [vmem:[%s45 + $0x10] sm:$0xff]
        %v5242 = vld [vmem:[%s45 + $0x18] sm:$0xff]
        %v5243 = vld [vmem:[%s45 + $0x20] sm:$0xff]
        %v5244 = vld [vmem:[%s45 + $0x28] sm:$0xff]
        %v5245 = vld [vmem:[%s45 + $0x30] sm:$0xff]
        %v5246 = vld [vmem:[%s45 + $0x38] sm:$0xff]
        %5247 = vmatprep.subr.mxu0 0.0
        %5248 = vmatpush1.msra.mxu0 %v5125
        %5249 = vmatprep.subr.mxu0 0.0
        %5250 = vmatpush1.msra.mxu0 %v5124
        %5251 = vmatprep.subr.mxu0 0.0
        %5252 = vmatpush1.msra.mxu0 %v5123
        %5253 = vmatprep.subr.mxu0 0.0
        %5254 = vmatpush1.msra.mxu0 %v5122
        %5255 = vmatprep.subr.mxu0 0.0
        %5256 = vmatpush1.msra.mxu0 %v5121
        %5257 = vmatprep.subr.mxu0 0.0
        %5258 = vmatpush1.msra.mxu0 %v5120
        %5259 = vmatprep.subr.mxu0 0.0
        %5260 = vmatpush1.msra.mxu0 %v5119
        %5261 = vmatprep.subr.mxu0 0.0
        %5262 = vmatpush1.msra.mxu0 %v5118
        %5263 = vmatprep.subr.mxu0 0.0
        %5264 = vmatpush1.msra.mxu0 %v5117
        %5265 = vmatprep.subr.mxu0 0.0
        %5266 = vmatpush1.msra.mxu0 %v5116
        %5267 = vmatprep.subr.mxu0 0.0
        %5268 = vmatpush1.msra.mxu0 %v5115
        %5269 = vmatprep.subr.mxu0 0.0
        %5270 = vmatpush1.msra.mxu0 %v5114
        %5271 = vmatprep.subr.mxu0 0.0
        %5272 = vmatpush1.msra.mxu0 %v5113
        %5273 = vmatprep.subr.mxu0 0.0
        %5274 = vmatpush1.msra.mxu0 %v5112
        %5275 = vmatprep.subr.mxu0 0.0
        %5276 = vmatpush1.msra.mxu0 %v5111
        %5277 = vmatprep.subr.mxu0 0.0
        %5278 = vmatpush1.msra.mxu0 %v5110
        %5279 = vmatprep.subr.mxu0 0.0
        %5280 = vmatpush2.msra.mxu0 0.0
        %5281 = vmatprep.subr.mxu0 0.0
        %5282 = vmatpush2.msra.mxu0 0.0
        %5283 = vmatprep.subr.mxu0 0.0
        %5284 = vmatpush2.msra.mxu0 0.0
        %5285 = vmatprep.subr.mxu0 0.0
        %5286 = vmatpush2.msra.mxu0 0.0
        %5287 = vmatprep.subr.mxu0 0.0
        %5288 = vmatpush2.msra.mxu0 0.0
        %5289 = vmatprep.subr.mxu0 0.0
        %5290 = vmatpush2.msra.mxu0 0.0
        %5291 = vmatprep.subr.mxu0 0.0
        %5292 = vmatpush2.msra.mxu0 0.0
        %5293 = vmatprep.subr.mxu0 0.0
        %5294 = vmatpush2.msra.mxu0 0.0
        %5295 = vmatprep.subr.mxu0 0.0
        %5296 = vmatpush2.msra.mxu0 0.0
        %5297 = vmatprep.subr.mxu0 0.0
        %5298 = vmatpush2.msra.mxu0 0.0
        %5299 = vmatprep.subr.mxu0 0.0
        %5300 = vmatpush2.msra.mxu0 0.0
        %5301 = vmatprep.subr.mxu0 0.0
        %5302 = vmatpush2.msra.mxu0 0.0
        %5303 = vmatprep.subr.mxu0 0.0
        %5304 = vmatpush2.msra.mxu0 0.0
        %5305 = vmatprep.subr.mxu0 0.0
        %5306 = vmatpush2.msra.mxu0 0.0
        %5307 = vmatprep.subr.mxu0 0.0
        %5308 = vmatpush2.msra.mxu0 0.0
        %5309 = vmatprep.subr.mxu0 0.0
        %5310 = vmatpush2.msra.mxu0 0.0
        %5311 = vmatprep.mubr.f32.mxu0 0.0
        %5312 = vmatmul.mubr.f32.gmra.mxu0 %v5239
        %v5313 = vpop.f32.mrf.mxu0
        %v5314 = vadd.f32 0.0, %v5313
        %v5315 = vpop.f32.mrf.mxu0
        %5316 = vmatprep.mubr.f32.mxu0 0.0
        %5317 = vmatmul.mubr.f32.gmra.mxu0 %v5240
        %v5318 = vpop.f32.mrf.mxu0
        %v5319 = vadd.f32 0.0, %v5318
        %v5320 = vpop.f32.mrf.mxu0
        %5321 = vmatprep.mubr.f32.mxu0 0.0
        %5322 = vmatmul.mubr.f32.gmra.mxu0 %v5241
        %v5323 = vpop.f32.mrf.mxu0
        %v5324 = vadd.f32 0.0, %v5323
        %v5325 = vpop.f32.mrf.mxu0
        %5326 = vmatprep.mubr.f32.mxu0 0.0
        %5327 = vmatmul.mubr.f32.gmra.mxu0 %v5242
        %v5328 = vpop.f32.mrf.mxu0
        %v5329 = vadd.f32 0.0, %v5328
        %v5330 = vpop.f32.mrf.mxu0
        %5331 = vmatprep.mubr.f32.mxu0 0.0
        %5332 = vmatmul.mubr.f32.gmra.mxu0 %v5243
        %v5333 = vpop.f32.mrf.mxu0
        %v5334 = vadd.f32 0.0, %v5333
        %v5335 = vpop.f32.mrf.mxu0
        %5336 = vmatprep.mubr.f32.mxu0 0.0
        %5337 = vmatmul.mubr.f32.gmra.mxu0 %v5244
        %v5338 = vpop.f32.mrf.mxu0
        %v5339 = vadd.f32 0.0, %v5338
        %v5340 = vpop.f32.mrf.mxu0
        %5341 = vmatprep.mubr.f32.mxu0 0.0
        %5342 = vmatmul.mubr.f32.gmra.mxu0 %v5245
        %v5343 = vpop.f32.mrf.mxu0
        %v5344 = vadd.f32 0.0, %v5343
        %v5345 = vpop.f32.mrf.mxu0
        %5346 = vmatprep.mubr.f32.mxu0 0.0
        %5347 = vmatmul.mubr.f32.gmra.mxu0 %v5246
        %v5348 = vpop.f32.mrf.mxu0
        %v5349 = vadd.f32 0.0, %v5348
        %v5350 = vpop.f32.mrf.mxu0
        %5351 = vdwg.mxu0
        %v5352 = vmax.f32 %v5201, %v5314
        %v5353 = vmax.f32 %v5206, %v5319
        %v5354 = vmax.f32 %v5211, %v5324
        %v5355 = vmax.f32 %v5216, %v5329
        %v5356 = vmax.f32 %v5221, %v5334
        %v5357 = vmax.f32 %v5226, %v5339
        %v5358 = vmax.f32 %v5231, %v5344
        %v5359 = vmax.f32 %v5236, %v5349
        %v5360 = vld [vmem:[%s47] sm:$0xff]
        %v5361 = vld [vmem:[%s47 + $0x8] sm:$0xff]
        %v5362 = vld [vmem:[%s47 + $0x10] sm:$0xff]
        %v5363 = vld [vmem:[%s47 + $0x18] sm:$0xff]
        %v5364 = vld [vmem:[%s47 + $0x20] sm:$0xff]
        %v5365 = vld [vmem:[%s47 + $0x28] sm:$0xff]
        %v5366 = vld [vmem:[%s47 + $0x30] sm:$0xff]
        %v5367 = vld [vmem:[%s47 + $0x38] sm:$0xff]
        %5368 = vmatprep.subr.mxu0 0.0
        %5369 = vmatpush1.msra.mxu0 %v5125
        %5370 = vmatprep.subr.mxu0 0.0
        %5371 = vmatpush1.msra.mxu0 %v5124
        %5372 = vmatprep.subr.mxu0 0.0
        %5373 = vmatpush1.msra.mxu0 %v5123
        %5374 = vmatprep.subr.mxu0 0.0
        %5375 = vmatpush1.msra.mxu0 %v5122
        %5376 = vmatprep.subr.mxu0 0.0
        %5377 = vmatpush1.msra.mxu0 %v5121
        %5378 = vmatprep.subr.mxu0 0.0
        %5379 = vmatpush1.msra.mxu0 %v5120
        %5380 = vmatprep.subr.mxu0 0.0
        %5381 = vmatpush1.msra.mxu0 %v5119
        %5382 = vmatprep.subr.mxu0 0.0
        %5383 = vmatpush1.msra.mxu0 %v5118
        %5384 = vmatprep.subr.mxu0 0.0
        %5385 = vmatpush1.msra.mxu0 %v5117
        %5386 = vmatprep.subr.mxu0 0.0
        %5387 = vmatpush1.msra.mxu0 %v5116
        %5388 = vmatprep.subr.mxu0 0.0
        %5389 = vmatpush1.msra.mxu0 %v5115
        %5390 = vmatprep.subr.mxu0 0.0
        %5391 = vmatpush1.msra.mxu0 %v5114
        %5392 = vmatprep.subr.mxu0 0.0
        %5393 = vmatpush1.msra.mxu0 %v5113
        %5394 = vmatprep.subr.mxu0 0.0
        %5395 = vmatpush1.msra.mxu0 %v5112
        %5396 = vmatprep.subr.mxu0 0.0
        %5397 = vmatpush1.msra.mxu0 %v5111
        %5398 = vmatprep.subr.mxu0 0.0
        %5399 = vmatpush1.msra.mxu0 %v5110
        %5400 = vmatprep.subr.mxu0 0.0
        %5401 = vmatpush2.msra.mxu0 0.0
        %5402 = vmatprep.subr.mxu0 0.0
        %5403 = vmatpush2.msra.mxu0 0.0
        %5404 = vmatprep.subr.mxu0 0.0
        %5405 = vmatpush2.msra.mxu0 0.0
        %5406 = vmatprep.subr.mxu0 0.0
        %5407 = vmatpush2.msra.mxu0 0.0
        %5408 = vmatprep.subr.mxu0 0.0
        %5409 = vmatpush2.msra.mxu0 0.0
        %5410 = vmatprep.subr.mxu0 0.0
        %5411 = vmatpush2.msra.mxu0 0.0
        %5412 = vmatprep.subr.mxu0 0.0
        %5413 = vmatpush2.msra.mxu0 0.0
        %5414 = vmatprep.subr.mxu0 0.0
        %5415 = vmatpush2.msra.mxu0 0.0
        %5416 = vmatprep.subr.mxu0 0.0
        %5417 = vmatpush2.msra.mxu0 0.0
        %5418 = vmatprep.subr.mxu0 0.0
        %5419 = vmatpush2.msra.mxu0 0.0
        %5420 = vmatprep.subr.mxu0 0.0
        %5421 = vmatpush2.msra.mxu0 0.0
        %5422 = vmatprep.subr.mxu0 0.0
        %5423 = vmatpush2.msra.mxu0 0.0
        %5424 = vmatprep.subr.mxu0 0.0
        %5425 = vmatpush2.msra.mxu0 0.0
        %5426 = vmatprep.subr.mxu0 0.0
        %5427 = vmatpush2.msra.mxu0 0.0
        %5428 = vmatprep.subr.mxu0 0.0
        %5429 = vmatpush2.msra.mxu0 0.0
        %5430 = vmatprep.subr.mxu0 0.0
        %5431 = vmatpush2.msra.mxu0 0.0
        %5432 = vmatprep.mubr.f32.mxu0 0.0
        %5433 = vmatmul.mubr.f32.gmra.mxu0 %v5360
        %v5434 = vpop.f32.mrf.mxu0
        %v5435 = vadd.f32 0.0, %v5434
        %v5436 = vpop.f32.mrf.mxu0
        %5437 = vmatprep.mubr.f32.mxu0 0.0
        %5438 = vmatmul.mubr.f32.gmra.mxu0 %v5361
        %v5439 = vpop.f32.mrf.mxu0
        %v5440 = vadd.f32 0.0, %v5439
        %v5441 = vpop.f32.mrf.mxu0
        %5442 = vmatprep.mubr.f32.mxu0 0.0
        %5443 = vmatmul.mubr.f32.gmra.mxu0 %v5362
        %v5444 = vpop.f32.mrf.mxu0
        %v5445 = vadd.f32 0.0, %v5444
        %v5446 = vpop.f32.mrf.mxu0
        %5447 = vmatprep.mubr.f32.mxu0 0.0
        %5448 = vmatmul.mubr.f32.gmra.mxu0 %v5363
        %v5449 = vpop.f32.mrf.mxu0
        %v5450 = vadd.f32 0.0, %v5449
        %v5451 = vpop.f32.mrf.mxu0
        %5452 = vmatprep.mubr.f32.mxu0 0.0
        %5453 = vmatmul.mubr.f32.gmra.mxu0 %v5364
        %v5454 = vpop.f32.mrf.mxu0
        %v5455 = vadd.f32 0.0, %v5454
        %v5456 = vpop.f32.mrf.mxu0
        %5457 = vmatprep.mubr.f32.mxu0 0.0
        %5458 = vmatmul.mubr.f32.gmra.mxu0 %v5365
        %v5459 = vpop.f32.mrf.mxu0
        %v5460 = vadd.f32 0.0, %v5459
        %v5461 = vpop.f32.mrf.mxu0
        %5462 = vmatprep.mubr.f32.mxu0 0.0
        %5463 = vmatmul.mubr.f32.gmra.mxu0 %v5366
        %v5464 = vpop.f32.mrf.mxu0
        %v5465 = vadd.f32 0.0, %v5464
        %v5466 = vpop.f32.mrf.mxu0
        %5467 = vmatprep.mubr.f32.mxu0 0.0
        %5468 = vmatmul.mubr.f32.gmra.mxu0 %v5367
        %v5469 = vpop.f32.mrf.mxu0
        %v5470 = vadd.f32 0.0, %v5469
        %v5471 = vpop.f32.mrf.mxu0
        %5472 = vdwg.mxu0
        %v5473 = vld [vmem:[%s49] sm:$0xff]
        %v5474 = vld [vmem:[%s49 + $0x8] sm:$0xff]
        %v5475 = vld [vmem:[%s49 + $0x10] sm:$0xff]
        %v5476 = vld [vmem:[%s49 + $0x18] sm:$0xff]
        %v5477 = vld [vmem:[%s49 + $0x20] sm:$0xff]
        %v5478 = vld [vmem:[%s49 + $0x28] sm:$0xff]
        %v5479 = vld [vmem:[%s49 + $0x30] sm:$0xff]
        %v5480 = vld [vmem:[%s49 + $0x38] sm:$0xff]
        %5481 = vmatprep.subr.mxu0 0.0
        %5482 = vmatpush1.msra.mxu0 %v5125
        %5483 = vmatprep.subr.mxu0 0.0
        %5484 = vmatpush1.msra.mxu0 %v5124
        %5485 = vmatprep.subr.mxu0 0.0
        %5486 = vmatpush1.msra.mxu0 %v5123
        %5487 = vmatprep.subr.mxu0 0.0
        %5488 = vmatpush1.msra.mxu0 %v5122
        %5489 = vmatprep.subr.mxu0 0.0
        %5490 = vmatpush1.msra.mxu0 %v5121
        %5491 = vmatprep.subr.mxu0 0.0
        %5492 = vmatpush1.msra.mxu0 %v5120
        %5493 = vmatprep.subr.mxu0 0.0
        %5494 = vmatpush1.msra.mxu0 %v5119
        %5495 = vmatprep.subr.mxu0 0.0
        %5496 = vmatpush1.msra.mxu0 %v5118
        %5497 = vmatprep.subr.mxu0 0.0
        %5498 = vmatpush1.msra.mxu0 %v5117
        %5499 = vmatprep.subr.mxu0 0.0
        %5500 = vmatpush1.msra.mxu0 %v5116
        %5501 = vmatprep.subr.mxu0 0.0
        %5502 = vmatpush1.msra.mxu0 %v5115
        %5503 = vmatprep.subr.mxu0 0.0
        %5504 = vmatpush1.msra.mxu0 %v5114
        %5505 = vmatprep.subr.mxu0 0.0
        %5506 = vmatpush1.msra.mxu0 %v5113
        %5507 = vmatprep.subr.mxu0 0.0
        %5508 = vmatpush1.msra.mxu0 %v5112
        %5509 = vmatprep.subr.mxu0 0.0
        %5510 = vmatpush1.msra.mxu0 %v5111
        %5511 = vmatprep.subr.mxu0 0.0
        %5512 = vmatpush1.msra.mxu0 %v5110
        %5513 = vmatprep.subr.mxu0 0.0
        %5514 = vmatpush2.msra.mxu0 0.0
        %5515 = vmatprep.subr.mxu0 0.0
        %5516 = vmatpush2.msra.mxu0 0.0
        %5517 = vmatprep.subr.mxu0 0.0
        %5518 = vmatpush2.msra.mxu0 0.0
        %5519 = vmatprep.subr.mxu0 0.0
        %5520 = vmatpush2.msra.mxu0 0.0
        %5521 = vmatprep.subr.mxu0 0.0
        %5522 = vmatpush2.msra.mxu0 0.0
        %5523 = vmatprep.subr.mxu0 0.0
        %5524 = vmatpush2.msra.mxu0 0.0
        %5525 = vmatprep.subr.mxu0 0.0
        %5526 = vmatpush2.msra.mxu0 0.0
        %5527 = vmatprep.subr.mxu0 0.0
        %5528 = vmatpush2.msra.mxu0 0.0
        %5529 = vmatprep.subr.mxu0 0.0
        %5530 = vmatpush2.msra.mxu0 0.0
        %5531 = vmatprep.subr.mxu0 0.0
        %5532 = vmatpush2.msra.mxu0 0.0
        %5533 = vmatprep.subr.mxu0 0.0
        %5534 = vmatpush2.msra.mxu0 0.0
        %5535 = vmatprep.subr.mxu0 0.0
        %5536 = vmatpush2.msra.mxu0 0.0
        %5537 = vmatprep.subr.mxu0 0.0
        %5538 = vmatpush2.msra.mxu0 0.0
        %5539 = vmatprep.subr.mxu0 0.0
        %5540 = vmatpush2.msra.mxu0 0.0
        %5541 = vmatprep.subr.mxu0 0.0
        %5542 = vmatpush2.msra.mxu0 0.0
        %5543 = vmatprep.subr.mxu0 0.0
        %5544 = vmatpush2.msra.mxu0 0.0
        %5545 = vmatprep.mubr.f32.mxu0 0.0
        %5546 = vmatmul.mubr.f32.gmra.mxu0 %v5473
        %v5547 = vpop.f32.mrf.mxu0
        %v5548 = vadd.f32 0.0, %v5547
        %v5549 = vpop.f32.mrf.mxu0
        %5550 = vmatprep.mubr.f32.mxu0 0.0
        %5551 = vmatmul.mubr.f32.gmra.mxu0 %v5474
        %v5552 = vpop.f32.mrf.mxu0
        %v5553 = vadd.f32 0.0, %v5552
        %v5554 = vpop.f32.mrf.mxu0
        %5555 = vmatprep.mubr.f32.mxu0 0.0
        %5556 = vmatmul.mubr.f32.gmra.mxu0 %v5475
        %v5557 = vpop.f32.mrf.mxu0
        %v5558 = vadd.f32 0.0, %v5557
        %v5559 = vpop.f32.mrf.mxu0
        %5560 = vmatprep.mubr.f32.mxu0 0.0
        %5561 = vmatmul.mubr.f32.gmra.mxu0 %v5476
        %v5562 = vpop.f32.mrf.mxu0
        %v5563 = vadd.f32 0.0, %v5562
        %v5564 = vpop.f32.mrf.mxu0
        %5565 = vmatprep.mubr.f32.mxu0 0.0
        %5566 = vmatmul.mubr.f32.gmra.mxu0 %v5477
        %v5567 = vpop.f32.mrf.mxu0
        %v5568 = vadd.f32 0.0, %v5567
        %v5569 = vpop.f32.mrf.mxu0
        %5570 = vmatprep.mubr.f32.mxu0 0.0
        %5571 = vmatmul.mubr.f32.gmra.mxu0 %v5478
        %v5572 = vpop.f32.mrf.mxu0
        %v5573 = vadd.f32 0.0, %v5572
        %v5574 = vpop.f32.mrf.mxu0
        %5575 = vmatprep.mubr.f32.mxu0 0.0
        %5576 = vmatmul.mubr.f32.gmra.mxu0 %v5479
        %v5577 = vpop.f32.mrf.mxu0
        %v5578 = vadd.f32 0.0, %v5577
        %v5579 = vpop.f32.mrf.mxu0
        %5580 = vmatprep.mubr.f32.mxu0 0.0
        %5581 = vmatmul.mubr.f32.gmra.mxu0 %v5480
        %v5582 = vpop.f32.mrf.mxu0
        %v5583 = vadd.f32 0.0, %v5582
        %v5584 = vpop.f32.mrf.mxu0
        %5585 = vdwg.mxu0
        %v5586 = vmax.f32 %v5435, %v5548
        %v5587 = vmax.f32 %v5440, %v5553
        %v5588 = vmax.f32 %v5445, %v5558
        %v5589 = vmax.f32 %v5450, %v5563
        %v5590 = vmax.f32 %v5455, %v5568
        %v5591 = vmax.f32 %v5460, %v5573
        %v5592 = vmax.f32 %v5465, %v5578
        %v5593 = vmax.f32 %v5470, %v5583
        %v5594 = vld [vmem:[%s51] sm:$0xff]
        %v5595 = vld [vmem:[%s51 + $0x8] sm:$0xff]
        %v5596 = vld [vmem:[%s51 + $0x10] sm:$0xff]
        %v5597 = vld [vmem:[%s51 + $0x18] sm:$0xff]
        %v5598 = vld [vmem:[%s51 + $0x20] sm:$0xff]
        %v5599 = vld [vmem:[%s51 + $0x28] sm:$0xff]
        %v5600 = vld [vmem:[%s51 + $0x30] sm:$0xff]
        %v5601 = vld [vmem:[%s51 + $0x38] sm:$0xff]
        %5602 = vmatprep.subr.mxu0 0.0
        %5603 = vmatpush1.msra.mxu0 %v5125
        %5604 = vmatprep.subr.mxu0 0.0
        %5605 = vmatpush1.msra.mxu0 %v5124
        %5606 = vmatprep.subr.mxu0 0.0
        %5607 = vmatpush1.msra.mxu0 %v5123
        %5608 = vmatprep.subr.mxu0 0.0
        %5609 = vmatpush1.msra.mxu0 %v5122
        %5610 = vmatprep.subr.mxu0 0.0
        %5611 = vmatpush1.msra.mxu0 %v5121
        %5612 = vmatprep.subr.mxu0 0.0
        %5613 = vmatpush1.msra.mxu0 %v5120
        %5614 = vmatprep.subr.mxu0 0.0
        %5615 = vmatpush1.msra.mxu0 %v5119
        %5616 = vmatprep.subr.mxu0 0.0
        %5617 = vmatpush1.msra.mxu0 %v5118
        %5618 = vmatprep.subr.mxu0 0.0
        %5619 = vmatpush1.msra.mxu0 %v5117
        %5620 = vmatprep.subr.mxu0 0.0
        %5621 = vmatpush1.msra.mxu0 %v5116
        %5622 = vmatprep.subr.mxu0 0.0
        %5623 = vmatpush1.msra.mxu0 %v5115
        %5624 = vmatprep.subr.mxu0 0.0
        %5625 = vmatpush1.msra.mxu0 %v5114
        %5626 = vmatprep.subr.mxu0 0.0
        %5627 = vmatpush1.msra.mxu0 %v5113
        %5628 = vmatprep.subr.mxu0 0.0
        %5629 = vmatpush1.msra.mxu0 %v5112
        %5630 = vmatprep.subr.mxu0 0.0
        %5631 = vmatpush1.msra.mxu0 %v5111
        %5632 = vmatprep.subr.mxu0 0.0
        %5633 = vmatpush1.msra.mxu0 %v5110
        %5634 = vmatprep.subr.mxu0 0.0
        %5635 = vmatpush2.msra.mxu0 0.0
        %5636 = vmatprep.subr.mxu0 0.0
        %5637 = vmatpush2.msra.mxu0 0.0
        %5638 = vmatprep.subr.mxu0 0.0
        %5639 = vmatpush2.msra.mxu0 0.0
        %5640 = vmatprep.subr.mxu0 0.0
        %5641 = vmatpush2.msra.mxu0 0.0
        %5642 = vmatprep.subr.mxu0 0.0
        %5643 = vmatpush2.msra.mxu0 0.0
        %5644 = vmatprep.subr.mxu0 0.0
        %5645 = vmatpush2.msra.mxu0 0.0
        %5646 = vmatprep.subr.mxu0 0.0
        %5647 = vmatpush2.msra.mxu0 0.0
        %5648 = vmatprep.subr.mxu0 0.0
        %5649 = vmatpush2.msra.mxu0 0.0
        %5650 = vmatprep.subr.mxu0 0.0
        %5651 = vmatpush2.msra.mxu0 0.0
        %5652 = vmatprep.subr.mxu0 0.0
        %5653 = vmatpush2.msra.mxu0 0.0
        %5654 = vmatprep.subr.mxu0 0.0
        %5655 = vmatpush2.msra.mxu0 0.0
        %5656 = vmatprep.subr.mxu0 0.0
        %5657 = vmatpush2.msra.mxu0 0.0
        %5658 = vmatprep.subr.mxu0 0.0
        %5659 = vmatpush2.msra.mxu0 0.0
        %5660 = vmatprep.subr.mxu0 0.0
        %5661 = vmatpush2.msra.mxu0 0.0
        %5662 = vmatprep.subr.mxu0 0.0
        %5663 = vmatpush2.msra.mxu0 0.0
        %5664 = vmatprep.subr.mxu0 0.0
        %5665 = vmatpush2.msra.mxu0 0.0
        %5666 = vmatprep.mubr.f32.mxu0 0.0
        %5667 = vmatmul.mubr.f32.gmra.mxu0 %v5594
        %v5668 = vpop.f32.mrf.mxu0
        %v5669 = vadd.f32 0.0, %v5668
        %v5670 = vpop.f32.mrf.mxu0
        %5671 = vmatprep.mubr.f32.mxu0 0.0
        %5672 = vmatmul.mubr.f32.gmra.mxu0 %v5595
        %v5673 = vpop.f32.mrf.mxu0
        %v5674 = vadd.f32 0.0, %v5673
        %v5675 = vpop.f32.mrf.mxu0
        %5676 = vmatprep.mubr.f32.mxu0 0.0
        %5677 = vmatmul.mubr.f32.gmra.mxu0 %v5596
        %v5678 = vpop.f32.mrf.mxu0
        %v5679 = vadd.f32 0.0, %v5678
        %v5680 = vpop.f32.mrf.mxu0
        %5681 = vmatprep.mubr.f32.mxu0 0.0
        %5682 = vmatmul.mubr.f32.gmra.mxu0 %v5597
        %v5683 = vpop.f32.mrf.mxu0
        %v5684 = vadd.f32 0.0, %v5683
        %v5685 = vpop.f32.mrf.mxu0
        %5686 = vmatprep.mubr.f32.mxu0 0.0
        %5687 = vmatmul.mubr.f32.gmra.mxu0 %v5598
        %v5688 = vpop.f32.mrf.mxu0
        %v5689 = vadd.f32 0.0, %v5688
        %v5690 = vpop.f32.mrf.mxu0
        %5691 = vmatprep.mubr.f32.mxu0 0.0
        %5692 = vmatmul.mubr.f32.gmra.mxu0 %v5599
        %v5693 = vpop.f32.mrf.mxu0
        %v5694 = vadd.f32 0.0, %v5693
        %v5695 = vpop.f32.mrf.mxu0
        %5696 = vmatprep.mubr.f32.mxu0 0.0
        %5697 = vmatmul.mubr.f32.gmra.mxu0 %v5600
        %v5698 = vpop.f32.mrf.mxu0
        %v5699 = vadd.f32 0.0, %v5698
        %v5700 = vpop.f32.mrf.mxu0
        %5701 = vmatprep.mubr.f32.mxu0 0.0
        %5702 = vmatmul.mubr.f32.gmra.mxu0 %v5601
        %v5703 = vpop.f32.mrf.mxu0
        %v5704 = vadd.f32 0.0, %v5703
        %v5705 = vpop.f32.mrf.mxu0
        %5706 = vdwg.mxu0
        %v5707 = vld [vmem:[%s53] sm:$0xff]
        %v5708 = vld [vmem:[%s53 + $0x8] sm:$0xff]
        %v5709 = vld [vmem:[%s53 + $0x10] sm:$0xff]
        %v5710 = vld [vmem:[%s53 + $0x18] sm:$0xff]
        %v5711 = vld [vmem:[%s53 + $0x20] sm:$0xff]
        %v5712 = vld [vmem:[%s53 + $0x28] sm:$0xff]
        %v5713 = vld [vmem:[%s53 + $0x30] sm:$0xff]
        %v5714 = vld [vmem:[%s53 + $0x38] sm:$0xff]
        %5715 = vmatprep.subr.mxu0 0.0
        %5716 = vmatpush1.msra.mxu0 %v5125
        %5717 = vmatprep.subr.mxu0 0.0
        %5718 = vmatpush1.msra.mxu0 %v5124
        %5719 = vmatprep.subr.mxu0 0.0
        %5720 = vmatpush1.msra.mxu0 %v5123
        %5721 = vmatprep.subr.mxu0 0.0
        %5722 = vmatpush1.msra.mxu0 %v5122
        %5723 = vmatprep.subr.mxu0 0.0
        %5724 = vmatpush1.msra.mxu0 %v5121
        %5725 = vmatprep.subr.mxu0 0.0
        %5726 = vmatpush1.msra.mxu0 %v5120
        %5727 = vmatprep.subr.mxu0 0.0
        %5728 = vmatpush1.msra.mxu0 %v5119
        %5729 = vmatprep.subr.mxu0 0.0
        %5730 = vmatpush1.msra.mxu0 %v5118
        %5731 = vmatprep.subr.mxu0 0.0
        %5732 = vmatpush1.msra.mxu0 %v5117
        %5733 = vmatprep.subr.mxu0 0.0
        %5734 = vmatpush1.msra.mxu0 %v5116
        %5735 = vmatprep.subr.mxu0 0.0
        %5736 = vmatpush1.msra.mxu0 %v5115
        %5737 = vmatprep.subr.mxu0 0.0
        %5738 = vmatpush1.msra.mxu0 %v5114
        %5739 = vmatprep.subr.mxu0 0.0
        %5740 = vmatpush1.msra.mxu0 %v5113
        %5741 = vmatprep.subr.mxu0 0.0
        %5742 = vmatpush1.msra.mxu0 %v5112
        %5743 = vmatprep.subr.mxu0 0.0
        %5744 = vmatpush1.msra.mxu0 %v5111
        %5745 = vmatprep.subr.mxu0 0.0
        %5746 = vmatpush1.msra.mxu0 %v5110
        %5747 = vmatprep.subr.mxu0 0.0
        %5748 = vmatpush2.msra.mxu0 0.0
        %5749 = vmatprep.subr.mxu0 0.0
        %5750 = vmatpush2.msra.mxu0 0.0
        %5751 = vmatprep.subr.mxu0 0.0
        %5752 = vmatpush2.msra.mxu0 0.0
        %5753 = vmatprep.subr.mxu0 0.0
        %5754 = vmatpush2.msra.mxu0 0.0
        %5755 = vmatprep.subr.mxu0 0.0
        %5756 = vmatpush2.msra.mxu0 0.0
        %5757 = vmatprep.subr.mxu0 0.0
        %5758 = vmatpush2.msra.mxu0 0.0
        %5759 = vmatprep.subr.mxu0 0.0
        %5760 = vmatpush2.msra.mxu0 0.0
        %5761 = vmatprep.subr.mxu0 0.0
        %5762 = vmatpush2.msra.mxu0 0.0
        %5763 = vmatprep.subr.mxu0 0.0
        %5764 = vmatpush2.msra.mxu0 0.0
        %5765 = vmatprep.subr.mxu0 0.0
        %5766 = vmatpush2.msra.mxu0 0.0
        %5767 = vmatprep.subr.mxu0 0.0
        %5768 = vmatpush2.msra.mxu0 0.0
        %5769 = vmatprep.subr.mxu0 0.0
        %5770 = vmatpush2.msra.mxu0 0.0
        %5771 = vmatprep.subr.mxu0 0.0
        %5772 = vmatpush2.msra.mxu0 0.0
        %5773 = vmatprep.subr.mxu0 0.0
        %5774 = vmatpush2.msra.mxu0 0.0
        %5775 = vmatprep.subr.mxu0 0.0
        %5776 = vmatpush2.msra.mxu0 0.0
        %5777 = vmatprep.subr.mxu0 0.0
        %5778 = vmatpush2.msra.mxu0 0.0
        %5779 = vmatprep.mubr.f32.mxu0 0.0
        %5780 = vmatmul.mubr.f32.gmra.mxu0 %v5707
        %v5781 = vpop.f32.mrf.mxu0
        %v5782 = vadd.f32 0.0, %v5781
        %v5783 = vpop.f32.mrf.mxu0
        %5784 = vmatprep.mubr.f32.mxu0 0.0
        %5785 = vmatmul.mubr.f32.gmra.mxu0 %v5708
        %v5786 = vpop.f32.mrf.mxu0
        %v5787 = vadd.f32 0.0, %v5786
        %v5788 = vpop.f32.mrf.mxu0
        %5789 = vmatprep.mubr.f32.mxu0 0.0
        %5790 = vmatmul.mubr.f32.gmra.mxu0 %v5709
        %v5791 = vpop.f32.mrf.mxu0
        %v5792 = vadd.f32 0.0, %v5791
        %v5793 = vpop.f32.mrf.mxu0
        %5794 = vmatprep.mubr.f32.mxu0 0.0
        %5795 = vmatmul.mubr.f32.gmra.mxu0 %v5710
        %v5796 = vpop.f32.mrf.mxu0
        %v5797 = vadd.f32 0.0, %v5796
        %v5798 = vpop.f32.mrf.mxu0
        %5799 = vmatprep.mubr.f32.mxu0 0.0
        %5800 = vmatmul.mubr.f32.gmra.mxu0 %v5711
        %v5801 = vpop.f32.mrf.mxu0
        %v5802 = vadd.f32 0.0, %v5801
        %v5803 = vpop.f32.mrf.mxu0
        %5804 = vmatprep.mubr.f32.mxu0 0.0
        %5805 = vmatmul.mubr.f32.gmra.mxu0 %v5712
        %v5806 = vpop.f32.mrf.mxu0
        %v5807 = vadd.f32 0.0, %v5806
        %v5808 = vpop.f32.mrf.mxu0
        %5809 = vmatprep.mubr.f32.mxu0 0.0
        %5810 = vmatmul.mubr.f32.gmra.mxu0 %v5713
        %v5811 = vpop.f32.mrf.mxu0
        %v5812 = vadd.f32 0.0, %v5811
        %v5813 = vpop.f32.mrf.mxu0
        %5814 = vmatprep.mubr.f32.mxu0 0.0
        %5815 = vmatmul.mubr.f32.gmra.mxu0 %v5714
        %v5816 = vpop.f32.mrf.mxu0
        %v5817 = vadd.f32 0.0, %v5816
        %v5818 = vpop.f32.mrf.mxu0
        %5819 = vdwg.mxu0
        %v5820 = vmax.f32 %v5669, %v5782
        %v5821 = vmax.f32 %v5674, %v5787
        %v5822 = vmax.f32 %v5679, %v5792
        %v5823 = vmax.f32 %v5684, %v5797
        %v5824 = vmax.f32 %v5689, %v5802
        %v5825 = vmax.f32 %v5694, %v5807
        %v5826 = vmax.f32 %v5699, %v5812
        %v5827 = vmax.f32 %v5704, %v5817
        %v5828 = vpack.c.bf16 %v5587, %v5586
        %v5829 = vpack.c.bf16 %v5589, %v5588
        %v5830 = vpack.c.bf16 %v5591, %v5590
        %v5831 = vpack.c.bf16 %v5593, %v5592
        %v5832 = vld [vmem:[%s55] sm:$0xf]
        %v5833 = vld [vmem:[%s55 + $0x4] sm:$0xf]
        %v5834 = vld [vmem:[%s55 + $0x8] sm:$0xf]
        %v5835 = vld [vmem:[%s55 + $0xc] sm:$0xf]
        %v5836 = vld [vmem:[%s55 + $0x10] sm:$0xf]
        %v5837 = vld [vmem:[%s55 + $0x14] sm:$0xf]
        %v5838 = vld [vmem:[%s55 + $0x18] sm:$0xf]
        %v5839 = vld [vmem:[%s55 + $0x1c] sm:$0xf]
        %v5840 = vpack.c.bf16 %v5353, %v5352
        %v5841 = vpack.c.bf16 %v5355, %v5354
        %v5842 = vpack.c.bf16 %v5357, %v5356
        %v5843 = vpack.c.bf16 %v5359, %v5358
        %v5844 = vld [vmem:[%s57] sm:$0xf]
        %v5845 = vld [vmem:[%s57 + $0x4] sm:$0xf]
        %v5846 = vld [vmem:[%s57 + $0x8] sm:$0xf]
        %v5847 = vld [vmem:[%s57 + $0xc] sm:$0xf]
        %v5848 = vld [vmem:[%s57 + $0x10] sm:$0xf]
        %v5849 = vld [vmem:[%s57 + $0x14] sm:$0xf]
        %v5850 = vld [vmem:[%s57 + $0x18] sm:$0xf]
        %v5851 = vld [vmem:[%s57 + $0x1c] sm:$0xf]
        %v5860 = vunpack.c.l.b16 %v5844
        %v5861 = vunpack.c.l.b16 %v5845
        %v5862 = vunpack.c.l.b16 %v5846
        %v5863 = vunpack.c.l.b16 %v5847
        %v5864 = vunpack.c.l.b16 %v5848
        %v5865 = vunpack.c.l.b16 %v5849
        %v5866 = vunpack.c.l.b16 %v5850
        %v5867 = vunpack.c.l.b16 %v5851
        %v5868 = vpack.c.b16 %v5861, %v5860
        %v5869 = vpack.c.b16 %v5863, %v5862
        %v5870 = vpack.c.b16 %v5865, %v5864
        %v5871 = vpack.c.b16 %v5867, %v5866
        %v5877 = vsel %vm4289, %v5840, 0
        %v5880 = vsel %vm4289, %v5841, 0
        %v5883 = vsel %vm4289, %v5842, 0
        %v5886 = vsel %vm4289, %v5843, 0
        %5888 = vmatprep.subr.bf16.mxu0 0
        %5889 = vmatpush1.bf16.msra.mxu0 0
        %5890 = vmatprep.subr.bf16.mxu0 0
        %5891 = vmatpush1.bf16.msra.mxu0 0
        %5892 = vmatprep.subr.bf16.mxu0 0
        %5893 = vmatpush1.bf16.msra.mxu0 0
        %5894 = vmatprep.subr.bf16.mxu0 0
        %5895 = vmatpush1.bf16.msra.mxu0 0
        %5896 = vmatprep.subr.bf16.mxu0 0
        %5897 = vmatpush1.bf16.msra.mxu0 %v5871
        %5898 = vmatprep.subr.bf16.mxu0 0
        %5899 = vmatpush1.bf16.msra.mxu0 %v5870
        %5900 = vmatprep.subr.bf16.mxu0 0
        %5901 = vmatpush1.bf16.msra.mxu0 %v5869
        %5902 = vmatprep.subr.bf16.mxu0 0
        %5903 = vmatpush1.bf16.msra.mxu0 %v5868
        %5904 = vmatprep.subr.bf16.mxu0 0
        %5905 = vmatpush2.bf16.msra.mxu0 0
        %5906 = vmatprep.subr.bf16.mxu0 0
        %5907 = vmatpush2.bf16.msra.mxu0 0
        %5908 = vmatprep.subr.bf16.mxu0 0
        %5909 = vmatpush2.bf16.msra.mxu0 0
        %5910 = vmatprep.subr.bf16.mxu0 0
        %5911 = vmatpush2.bf16.msra.mxu0 0
        %5912 = vmatprep.subr.bf16.mxu0 0
        %5913 = vmatpush2.bf16.msra.mxu0 0
        %5914 = vmatprep.subr.bf16.mxu0 0
        %5915 = vmatpush2.bf16.msra.mxu0 0
        %5916 = vmatprep.subr.bf16.mxu0 0
        %5917 = vmatpush2.bf16.msra.mxu0 0
        %5918 = vmatprep.subr.bf16.mxu0 0
        %5919 = vmatpush2.bf16.msra.mxu0 0
        %5920 = vmatprep.mubr.bf16.mxu0 0
        %5921 = vmatmul.mubr.bf16.gmra.mxu0 %v5877
        %v5922 = vpop.f32.mrf.mxu0
        %v5923 = vadd.f32 0.0, %v5922
        %v5924 = vpop.f32.mrf.mxu0
        %v5925 = vpop.f32.mrf.mxu0
        %v5926 = vadd.f32 0.0, %v5925
        %v5927 = vpop.f32.mrf.mxu0
        %5928 = vmatprep.mubr.bf16.mxu0 0
        %5929 = vmatmul.mubr.bf16.gmra.mxu0 %v5880
        %v5930 = vpop.f32.mrf.mxu0
        %v5931 = vadd.f32 0.0, %v5930
        %v5932 = vpop.f32.mrf.mxu0
        %v5933 = vpop.f32.mrf.mxu0
        %v5934 = vadd.f32 0.0, %v5933
        %v5935 = vpop.f32.mrf.mxu0
        %5936 = vmatprep.mubr.bf16.mxu0 0
        %5937 = vmatmul.mubr.bf16.gmra.mxu0 %v5883
        %v5938 = vpop.f32.mrf.mxu0
        %v5939 = vadd.f32 0.0, %v5938
        %v5940 = vpop.f32.mrf.mxu0
        %v5941 = vpop.f32.mrf.mxu0
        %v5942 = vadd.f32 0.0, %v5941
        %v5943 = vpop.f32.mrf.mxu0
        %5944 = vmatprep.mubr.bf16.mxu0 0
        %5945 = vmatmul.mubr.bf16.gmra.mxu0 %v5886
        %v5946 = vpop.f32.mrf.mxu0
        %v5947 = vadd.f32 0.0, %v5946
        %v5948 = vpop.f32.mrf.mxu0
        %v5949 = vpop.f32.mrf.mxu0
        %v5950 = vadd.f32 0.0, %v5949
        %v5951 = vpop.f32.mrf.mxu0
        %5952 = vdwg.mxu0
        %v5961 = vunpack.c.l.b16 %v5832
        %v5962 = vunpack.c.l.b16 %v5833
        %v5963 = vunpack.c.l.b16 %v5834
        %v5964 = vunpack.c.l.b16 %v5835
        %v5965 = vunpack.c.l.b16 %v5836
        %v5966 = vunpack.c.l.b16 %v5837
        %v5967 = vunpack.c.l.b16 %v5838
        %v5968 = vunpack.c.l.b16 %v5839
        %v5969 = vpack.c.b16 %v5962, %v5961
        %v5970 = vpack.c.b16 %v5964, %v5963
        %v5971 = vpack.c.b16 %v5966, %v5965
        %v5972 = vpack.c.b16 %v5968, %v5967
        %v5978 = vsel %vm4289, %v5828, 0
        %v5981 = vsel %vm4289, %v5829, 0
        %v5984 = vsel %vm4289, %v5830, 0
        %v5987 = vsel %vm4289, %v5831, 0
        %5989 = vmatprep.subr.bf16.mxu0 0
        %5990 = vmatpush1.bf16.msra.mxu0 0
        %5991 = vmatprep.subr.bf16.mxu0 0
        %5992 = vmatpush1.bf16.msra.mxu0 0
        %5993 = vmatprep.subr.bf16.mxu0 0
        %5994 = vmatpush1.bf16.msra.mxu0 0
        %5995 = vmatprep.subr.bf16.mxu0 0
        %5996 = vmatpush1.bf16.msra.mxu0 0
        %5997 = vmatprep.subr.bf16.mxu0 0
        %5998 = vmatpush1.bf16.msra.mxu0 %v5972
        %5999 = vmatprep.subr.bf16.mxu0 0
        %6000 = vmatpush1.bf16.msra.mxu0 %v5971
        %6001 = vmatprep.subr.bf16.mxu0 0
        %6002 = vmatpush1.bf16.msra.mxu0 %v5970
        %6003 = vmatprep.subr.bf16.mxu0 0
        %6004 = vmatpush1.bf16.msra.mxu0 %v5969
        %6005 = vmatprep.subr.bf16.mxu0 0
        %6006 = vmatpush2.bf16.msra.mxu0 0
        %6007 = vmatprep.subr.bf16.mxu0 0
        %6008 = vmatpush2.bf16.msra.mxu0 0
        %6009 = vmatprep.subr.bf16.mxu0 0
        %6010 = vmatpush2.bf16.msra.mxu0 0
        %6011 = vmatprep.subr.bf16.mxu0 0
        %6012 = vmatpush2.bf16.msra.mxu0 0
        %6013 = vmatprep.subr.bf16.mxu0 0
        %6014 = vmatpush2.bf16.msra.mxu0 0
        %6015 = vmatprep.subr.bf16.mxu0 0
        %6016 = vmatpush2.bf16.msra.mxu0 0
        %6017 = vmatprep.subr.bf16.mxu0 0
        %6018 = vmatpush2.bf16.msra.mxu0 0
        %6019 = vmatprep.subr.bf16.mxu0 0
        %6020 = vmatpush2.bf16.msra.mxu0 0
        %6021 = vmatprep.mubr.bf16.mxu0 0
        %6022 = vmatmul.mubr.bf16.gmra.mxu0 %v5978
        %v6023 = vpop.f32.mrf.mxu0
        %v6024 = vadd.f32 %v5923, %v6023
        %v6025 = vpop.f32.mrf.mxu0
        %v6026 = vpop.f32.mrf.mxu0
        %v6027 = vadd.f32 %v5926, %v6026
        %v6028 = vpop.f32.mrf.mxu0
        %6029 = vmatprep.mubr.bf16.mxu0 0
        %6030 = vmatmul.mubr.bf16.gmra.mxu0 %v5981
        %v6031 = vpop.f32.mrf.mxu0
        %v6032 = vadd.f32 %v5931, %v6031
        %v6033 = vpop.f32.mrf.mxu0
        %v6034 = vpop.f32.mrf.mxu0
        %v6035 = vadd.f32 %v5934, %v6034
        %v6036 = vpop.f32.mrf.mxu0
        %6037 = vmatprep.mubr.bf16.mxu0 0
        %6038 = vmatmul.mubr.bf16.gmra.mxu0 %v5984
        %v6039 = vpop.f32.mrf.mxu0
        %v6040 = vadd.f32 %v5939, %v6039
        %v6041 = vpop.f32.mrf.mxu0
        %v6042 = vpop.f32.mrf.mxu0
        %v6043 = vadd.f32 %v5942, %v6042
        %v6044 = vpop.f32.mrf.mxu0
        %6045 = vmatprep.mubr.bf16.mxu0 0
        %6046 = vmatmul.mubr.bf16.gmra.mxu0 %v5987
        %v6047 = vpop.f32.mrf.mxu0
        %v6048 = vadd.f32 %v5947, %v6047
        %v6049 = vpop.f32.mrf.mxu0
        %v6050 = vpop.f32.mrf.mxu0
        %v6051 = vadd.f32 %v5950, %v6050
        %v6052 = vpop.f32.mrf.mxu0
        %6053 = vdwg.mxu0
        %v6054 = vpack.c.bf16 %v5821, %v5820
        %v6055 = vpack.c.bf16 %v5823, %v5822
        %v6056 = vpack.c.bf16 %v5825, %v5824
        %v6057 = vpack.c.bf16 %v5827, %v5826
        %v6058 = vld [vmem:[%s59] sm:$0xf]
        %v6059 = vld [vmem:[%s59 + $0x4] sm:$0xf]
        %v6060 = vld [vmem:[%s59 + $0x8] sm:$0xf]
        %v6061 = vld [vmem:[%s59 + $0xc] sm:$0xf]
        %v6062 = vld [vmem:[%s59 + $0x10] sm:$0xf]
        %v6063 = vld [vmem:[%s59 + $0x14] sm:$0xf]
        %v6064 = vld [vmem:[%s59 + $0x18] sm:$0xf]
        %v6065 = vld [vmem:[%s59 + $0x1c] sm:$0xf]
        %v6074 = vunpack.c.l.b16 %v6058
        %v6075 = vunpack.c.l.b16 %v6059
        %v6076 = vunpack.c.l.b16 %v6060
        %v6077 = vunpack.c.l.b16 %v6061
        %v6078 = vunpack.c.l.b16 %v6062
        %v6079 = vunpack.c.l.b16 %v6063
        %v6080 = vunpack.c.l.b16 %v6064
        %v6081 = vunpack.c.l.b16 %v6065
        %v6082 = vpack.c.b16 %v6075, %v6074
        %v6083 = vpack.c.b16 %v6077, %v6076
        %v6084 = vpack.c.b16 %v6079, %v6078
        %v6085 = vpack.c.b16 %v6081, %v6080
        %v6091 = vsel %vm4289, %v6054, 0
        %v6094 = vsel %vm4289, %v6055, 0
        %v6097 = vsel %vm4289, %v6056, 0
        %v6100 = vsel %vm4289, %v6057, 0
        %6102 = vmatprep.subr.bf16.mxu0 0
        %6103 = vmatpush1.bf16.msra.mxu0 0
        %6104 = vmatprep.subr.bf16.mxu0 0
        %6105 = vmatpush1.bf16.msra.mxu0 0
        %6106 = vmatprep.subr.bf16.mxu0 0
        %6107 = vmatpush1.bf16.msra.mxu0 0
        %6108 = vmatprep.subr.bf16.mxu0 0
        %6109 = vmatpush1.bf16.msra.mxu0 0
        %6110 = vmatprep.subr.bf16.mxu0 0
        %6111 = vmatpush1.bf16.msra.mxu0 %v6085
        %6112 = vmatprep.subr.bf16.mxu0 0
        %6113 = vmatpush1.bf16.msra.mxu0 %v6084
        %6114 = vmatprep.subr.bf16.mxu0 0
        %6115 = vmatpush1.bf16.msra.mxu0 %v6083
        %6116 = vmatprep.subr.bf16.mxu0 0
        %6117 = vmatpush1.bf16.msra.mxu0 %v6082
        %6118 = vmatprep.subr.bf16.mxu0 0
        %6119 = vmatpush2.bf16.msra.mxu0 0
        %6120 = vmatprep.subr.bf16.mxu0 0
        %6121 = vmatpush2.bf16.msra.mxu0 0
        %6122 = vmatprep.subr.bf16.mxu0 0
        %6123 = vmatpush2.bf16.msra.mxu0 0
        %6124 = vmatprep.subr.bf16.mxu0 0
        %6125 = vmatpush2.bf16.msra.mxu0 0
        %6126 = vmatprep.subr.bf16.mxu0 0
        %6127 = vmatpush2.bf16.msra.mxu0 0
        %6128 = vmatprep.subr.bf16.mxu0 0
        %6129 = vmatpush2.bf16.msra.mxu0 0
        %6130 = vmatprep.subr.bf16.mxu0 0
        %6131 = vmatpush2.bf16.msra.mxu0 0
        %6132 = vmatprep.subr.bf16.mxu0 0
        %6133 = vmatpush2.bf16.msra.mxu0 0
        %6134 = vmatprep.mubr.bf16.mxu0 0
        %6135 = vmatmul.mubr.bf16.gmra.mxu0 %v6091
        %v6136 = vpop.f32.mrf.mxu0
        %v6137 = vadd.f32 0.0, %v6136
        %v6138 = vpop.f32.mrf.mxu0
        %v6139 = vpop.f32.mrf.mxu0
        %v6140 = vadd.f32 0.0, %v6139
        %v6141 = vpop.f32.mrf.mxu0
        %6142 = vmatprep.mubr.bf16.mxu0 0
        %6143 = vmatmul.mubr.bf16.gmra.mxu0 %v6094
        %v6144 = vpop.f32.mrf.mxu0
        %v6145 = vadd.f32 0.0, %v6144
        %v6146 = vpop.f32.mrf.mxu0
        %v6147 = vpop.f32.mrf.mxu0
        %v6148 = vadd.f32 0.0, %v6147
        %v6149 = vpop.f32.mrf.mxu0
        %6150 = vmatprep.mubr.bf16.mxu0 0
        %6151 = vmatmul.mubr.bf16.gmra.mxu0 %v6097
        %v6152 = vpop.f32.mrf.mxu0
        %v6153 = vadd.f32 0.0, %v6152
        %v6154 = vpop.f32.mrf.mxu0
        %v6155 = vpop.f32.mrf.mxu0
        %v6156 = vadd.f32 0.0, %v6155
        %v6157 = vpop.f32.mrf.mxu0
        %6158 = vmatprep.mubr.bf16.mxu0 0
        %6159 = vmatmul.mubr.bf16.gmra.mxu0 %v6100
        %v6160 = vpop.f32.mrf.mxu0
        %v6161 = vadd.f32 0.0, %v6160
        %v6162 = vpop.f32.mrf.mxu0
        %v6163 = vpop.f32.mrf.mxu0
        %v6164 = vadd.f32 0.0, %v6163
        %v6165 = vpop.f32.mrf.mxu0
        %6166 = vdwg.mxu0
        %v6167 = vadd.f32 %v6024, %v6137
        %v6168 = vadd.f32 %v6027, %v6140
        %v6169 = vadd.f32 %v6032, %v6145
        %v6170 = vadd.f32 %v6035, %v6148
        %v6171 = vadd.f32 %v6040, %v6153
        %v6172 = vadd.f32 %v6043, %v6156
        %v6173 = vadd.f32 %v6048, %v6161
        %v6174 = vadd.f32 %v6051, %v6164
        %v6175 = vld [vmem:[#allocation10] sm:$0x1]
        %v6177 = vlaneseq
        %v6178 = vshrl.u32 %v6177, 7
        %v6179 = vsub.s32 0, %v6178
        %v6180 = vrot.slane %v6175, %v6179
        %v6182 = vadd.f32 %v6167, %v6180
        %v6183 = vadd.f32 %v6168, %v6180
        %v6184 = vadd.f32 %v6169, %v6180
        %v6185 = vadd.f32 %v6170, %v6180
        %v6186 = vadd.f32 %v6171, %v6180
        %v6187 = vadd.f32 %v6172, %v6180
        %v6188 = vadd.f32 %v6173, %v6180
        %v6189 = vadd.f32 %v6174, %v6180
        %v6190 = vmax.f32 %v6182, 0.0
        %v6191 = vmax.f32 %v6183, 0.0
        %v6192 = vmax.f32 %v6184, 0.0
        %v6193 = vmax.f32 %v6185, 0.0
        %v6194 = vmax.f32 %v6186, 0.0
        %v6195 = vmax.f32 %v6187, 0.0
        %v6196 = vmax.f32 %v6188, 0.0
        %v6197 = vmax.f32 %v6189, 0.0
        %v6198 = vmin.f32 %v6190, 6.0
        %v6199 = vmin.f32 %v6191, 6.0
        %v6200 = vmin.f32 %v6192, 6.0
        %v6201 = vmin.f32 %v6193, 6.0
        %v6202 = vmin.f32 %v6194, 6.0
        %v6203 = vmin.f32 %v6195, 6.0
        %v6204 = vmin.f32 %v6196, 6.0
        %v6205 = vmin.f32 %v6197, 6.0
        %v6206 = vld [vmem:[%s63] sm:$0xff]
        %v6207 = vld [vmem:[%s63 + $0x8] sm:$0xff]
        %v6208 = vld [vmem:[%s63 + $0x10] sm:$0xff]
        %v6209 = vld [vmem:[%s63 + $0x18] sm:$0xff]
        %v6210 = vld [vmem:[%s63 + $0x20] sm:$0xff]
        %v6211 = vld [vmem:[%s63 + $0x28] sm:$0xff]
        %v6212 = vld [vmem:[%s63 + $0x30] sm:$0xff]
        %v6213 = vld [vmem:[%s63 + $0x38] sm:$0xff]
        %v6215 = vsel %vm4289, %v6198, 0
        %v6218 = vsel %vm4289, %v6199, 0
        %v6221 = vsel %vm4289, %v6200, 0
        %v6224 = vsel %vm4289, %v6201, 0
        %v6227 = vsel %vm4289, %v6202, 0
        %v6230 = vsel %vm4289, %v6203, 0
        %v6233 = vsel %vm4289, %v6204, 0
        %v6236 = vsel %vm4289, %v6205, 0
        %6238 = vmatprep.subr.mxu0 0.0
        %6239 = vmatpush1.msra.mxu0 0.0
        %6240 = vmatprep.subr.mxu0 0.0
        %6241 = vmatpush1.msra.mxu0 0.0
        %6242 = vmatprep.subr.mxu0 0.0
        %6243 = vmatpush1.msra.mxu0 0.0
        %6244 = vmatprep.subr.mxu0 0.0
        %6245 = vmatpush1.msra.mxu0 0.0
        %6246 = vmatprep.subr.mxu0 0.0
        %6247 = vmatpush1.msra.mxu0 0.0
        %6248 = vmatprep.subr.mxu0 0.0
        %6249 = vmatpush1.msra.mxu0 0.0
        %6250 = vmatprep.subr.mxu0 0.0
        %6251 = vmatpush1.msra.mxu0 0.0
        %6252 = vmatprep.subr.mxu0 0.0
        %6253 = vmatpush1.msra.mxu0 0.0
        %6254 = vmatprep.subr.mxu0 0.0
        %6255 = vmatpush1.msra.mxu0 %v6213
        %6256 = vmatprep.subr.mxu0 0.0
        %6257 = vmatpush1.msra.mxu0 %v6212
        %6258 = vmatprep.subr.mxu0 0.0
        %6259 = vmatpush1.msra.mxu0 %v6211
        %6260 = vmatprep.subr.mxu0 0.0
        %6261 = vmatpush1.msra.mxu0 %v6210
        %6262 = vmatprep.subr.mxu0 0.0
        %6263 = vmatpush1.msra.mxu0 %v6209
        %6264 = vmatprep.subr.mxu0 0.0
        %6265 = vmatpush1.msra.mxu0 %v6208
        %6266 = vmatprep.subr.mxu0 0.0
        %6267 = vmatpush1.msra.mxu0 %v6207
        %6268 = vmatprep.subr.mxu0 0.0
        %6269 = vmatpush1.msra.mxu0 %v6206
        %6270 = vmatprep.subr.mxu0 0.0
        %6271 = vmatpush2.msra.mxu0 0.0
        %6272 = vmatprep.subr.mxu0 0.0
        %6273 = vmatpush2.msra.mxu0 0.0
        %6274 = vmatprep.subr.mxu0 0.0
        %6275 = vmatpush2.msra.mxu0 0.0
        %6276 = vmatprep.subr.mxu0 0.0
        %6277 = vmatpush2.msra.mxu0 0.0
        %6278 = vmatprep.subr.mxu0 0.0
        %6279 = vmatpush2.msra.mxu0 0.0
        %6280 = vmatprep.subr.mxu0 0.0
        %6281 = vmatpush2.msra.mxu0 0.0
        %6282 = vmatprep.subr.mxu0 0.0
        %6283 = vmatpush2.msra.mxu0 0.0
        %6284 = vmatprep.subr.mxu0 0.0
        %6285 = vmatpush2.msra.mxu0 0.0
        %6286 = vmatprep.subr.mxu0 0.0
        %6287 = vmatpush2.msra.mxu0 0.0
        %6288 = vmatprep.subr.mxu0 0.0
        %6289 = vmatpush2.msra.mxu0 0.0
        %6290 = vmatprep.subr.mxu0 0.0
        %6291 = vmatpush2.msra.mxu0 0.0
        %6292 = vmatprep.subr.mxu0 0.0
        %6293 = vmatpush2.msra.mxu0 0.0
        %6294 = vmatprep.subr.mxu0 0.0
        %6295 = vmatpush2.msra.mxu0 0.0
        %6296 = vmatprep.subr.mxu0 0.0
        %6297 = vmatpush2.msra.mxu0 0.0
        %6298 = vmatprep.subr.mxu0 0.0
        %6299 = vmatpush2.msra.mxu0 0.0
        %6300 = vmatprep.subr.mxu0 0.0
        %6301 = vmatpush2.msra.mxu0 0.0
        %6302 = vmatprep.mubr.f32.mxu0 0.0
        %6303 = vmatmul.mubr.f32.gmra.mxu0 %v6215
        %v6304 = vpop.f32.mrf.mxu0
        %v6305 = vadd.f32 0.0, %v6304
        %v6306 = vpop.f32.mrf.mxu0
        %6307 = vmatprep.mubr.f32.mxu0 0.0
        %6308 = vmatmul.mubr.f32.gmra.mxu0 %v6218
        %v6309 = vpop.f32.mrf.mxu0
        %v6310 = vadd.f32 0.0, %v6309
        %v6311 = vpop.f32.mrf.mxu0
        %6312 = vmatprep.mubr.f32.mxu0 0.0
        %6313 = vmatmul.mubr.f32.gmra.mxu0 %v6221
        %v6314 = vpop.f32.mrf.mxu0
        %v6315 = vadd.f32 0.0, %v6314
        %v6316 = vpop.f32.mrf.mxu0
        %6317 = vmatprep.mubr.f32.mxu0 0.0
        %6318 = vmatmul.mubr.f32.gmra.mxu0 %v6224
        %v6319 = vpop.f32.mrf.mxu0
        %v6320 = vadd.f32 0.0, %v6319
        %v6321 = vpop.f32.mrf.mxu0
        %6322 = vmatprep.mubr.f32.mxu0 0.0
        %6323 = vmatmul.mubr.f32.gmra.mxu0 %v6227
        %v6324 = vpop.f32.mrf.mxu0
        %v6325 = vadd.f32 0.0, %v6324
        %v6326 = vpop.f32.mrf.mxu0
        %6327 = vmatprep.mubr.f32.mxu0 0.0
        %6328 = vmatmul.mubr.f32.gmra.mxu0 %v6230
        %v6329 = vpop.f32.mrf.mxu0
        %v6330 = vadd.f32 0.0, %v6329
        %v6331 = vpop.f32.mrf.mxu0
        %6332 = vmatprep.mubr.f32.mxu0 0.0
        %6333 = vmatmul.mubr.f32.gmra.mxu0 %v6233
        %v6334 = vpop.f32.mrf.mxu0
        %v6335 = vadd.f32 0.0, %v6334
        %v6336 = vpop.f32.mrf.mxu0
        %6337 = vmatprep.mubr.f32.mxu0 0.0
        %6338 = vmatmul.mubr.f32.gmra.mxu0 %v6236
        %v6339 = vpop.f32.mrf.mxu0
        %v6340 = vadd.f32 0.0, %v6339
        %v6341 = vpop.f32.mrf.mxu0
        %6342 = vdwg.mxu0
        %v6343 = vld [vmem:[%s65] sm:$0xff]
        %v6344 = vld [vmem:[%s65 + $0x8] sm:$0xff]
        %v6345 = vld [vmem:[%s65 + $0x10] sm:$0xff]
        %v6346 = vld [vmem:[%s65 + $0x18] sm:$0xff]
        %v6347 = vld [vmem:[%s65 + $0x20] sm:$0xff]
        %v6348 = vld [vmem:[%s65 + $0x28] sm:$0xff]
        %v6349 = vld [vmem:[%s65 + $0x30] sm:$0xff]
        %v6350 = vld [vmem:[%s65 + $0x38] sm:$0xff]
        %6351 = vmatprep.subr.mxu0 0.0
        %6352 = vmatpush1.msra.mxu0 0.0
        %6353 = vmatprep.subr.mxu0 0.0
        %6354 = vmatpush1.msra.mxu0 0.0
        %6355 = vmatprep.subr.mxu0 0.0
        %6356 = vmatpush1.msra.mxu0 0.0
        %6357 = vmatprep.subr.mxu0 0.0
        %6358 = vmatpush1.msra.mxu0 0.0
        %6359 = vmatprep.subr.mxu0 0.0
        %6360 = vmatpush1.msra.mxu0 0.0
        %6361 = vmatprep.subr.mxu0 0.0
        %6362 = vmatpush1.msra.mxu0 0.0
        %6363 = vmatprep.subr.mxu0 0.0
        %6364 = vmatpush1.msra.mxu0 0.0
        %6365 = vmatprep.subr.mxu0 0.0
        %6366 = vmatpush1.msra.mxu0 0.0
        %6367 = vmatprep.subr.mxu0 0.0
        %6368 = vmatpush1.msra.mxu0 %v6350
        %6369 = vmatprep.subr.mxu0 0.0
        %6370 = vmatpush1.msra.mxu0 %v6349
        %6371 = vmatprep.subr.mxu0 0.0
        %6372 = vmatpush1.msra.mxu0 %v6348
        %6373 = vmatprep.subr.mxu0 0.0
        %6374 = vmatpush1.msra.mxu0 %v6347
        %6375 = vmatprep.subr.mxu0 0.0
        %6376 = vmatpush1.msra.mxu0 %v6346
        %6377 = vmatprep.subr.mxu0 0.0
        %6378 = vmatpush1.msra.mxu0 %v6345
        %6379 = vmatprep.subr.mxu0 0.0
        %6380 = vmatpush1.msra.mxu0 %v6344
        %6381 = vmatprep.subr.mxu0 0.0
        %6382 = vmatpush1.msra.mxu0 %v6343
        %6383 = vmatprep.subr.mxu0 0.0
        %6384 = vmatpush2.msra.mxu0 0.0
        %6385 = vmatprep.subr.mxu0 0.0
        %6386 = vmatpush2.msra.mxu0 0.0
        %6387 = vmatprep.subr.mxu0 0.0
        %6388 = vmatpush2.msra.mxu0 0.0
        %6389 = vmatprep.subr.mxu0 0.0
        %6390 = vmatpush2.msra.mxu0 0.0
        %6391 = vmatprep.subr.mxu0 0.0
        %6392 = vmatpush2.msra.mxu0 0.0
        %6393 = vmatprep.subr.mxu0 0.0
        %6394 = vmatpush2.msra.mxu0 0.0
        %6395 = vmatprep.subr.mxu0 0.0
        %6396 = vmatpush2.msra.mxu0 0.0
        %6397 = vmatprep.subr.mxu0 0.0
        %6398 = vmatpush2.msra.mxu0 0.0
        %6399 = vmatprep.subr.mxu0 0.0
        %6400 = vmatpush2.msra.mxu0 0.0
        %6401 = vmatprep.subr.mxu0 0.0
        %6402 = vmatpush2.msra.mxu0 0.0
        %6403 = vmatprep.subr.mxu0 0.0
        %6404 = vmatpush2.msra.mxu0 0.0
        %6405 = vmatprep.subr.mxu0 0.0
        %6406 = vmatpush2.msra.mxu0 0.0
        %6407 = vmatprep.subr.mxu0 0.0
        %6408 = vmatpush2.msra.mxu0 0.0
        %6409 = vmatprep.subr.mxu0 0.0
        %6410 = vmatpush2.msra.mxu0 0.0
        %6411 = vmatprep.subr.mxu0 0.0
        %6412 = vmatpush2.msra.mxu0 0.0
        %6413 = vmatprep.subr.mxu0 0.0
        %6414 = vmatpush2.msra.mxu0 0.0
        %6415 = vmatprep.mubr.f32.mxu0 0.0
        %6416 = vmatmul.mubr.f32.gmra.mxu0 %v6215
        %v6417 = vpop.f32.mrf.mxu0
        %v6418 = vadd.f32 0.0, %v6417
        %v6419 = vpop.f32.mrf.mxu0
        %6420 = vmatprep.mubr.f32.mxu0 0.0
        %6421 = vmatmul.mubr.f32.gmra.mxu0 %v6218
        %v6422 = vpop.f32.mrf.mxu0
        %v6423 = vadd.f32 0.0, %v6422
        %v6424 = vpop.f32.mrf.mxu0
        %6425 = vmatprep.mubr.f32.mxu0 0.0
        %6426 = vmatmul.mubr.f32.gmra.mxu0 %v6221
        %v6427 = vpop.f32.mrf.mxu0
        %v6428 = vadd.f32 0.0, %v6427
        %v6429 = vpop.f32.mrf.mxu0
        %6430 = vmatprep.mubr.f32.mxu0 0.0
        %6431 = vmatmul.mubr.f32.gmra.mxu0 %v6224
        %v6432 = vpop.f32.mrf.mxu0
        %v6433 = vadd.f32 0.0, %v6432
        %v6434 = vpop.f32.mrf.mxu0
        %6435 = vmatprep.mubr.f32.mxu0 0.0
        %6436 = vmatmul.mubr.f32.gmra.mxu0 %v6227
        %v6437 = vpop.f32.mrf.mxu0
        %v6438 = vadd.f32 0.0, %v6437
        %v6439 = vpop.f32.mrf.mxu0
        %6440 = vmatprep.mubr.f32.mxu0 0.0
        %6441 = vmatmul.mubr.f32.gmra.mxu0 %v6230
        %v6442 = vpop.f32.mrf.mxu0
        %v6443 = vadd.f32 0.0, %v6442
        %v6444 = vpop.f32.mrf.mxu0
        %6445 = vmatprep.mubr.f32.mxu0 0.0
        %6446 = vmatmul.mubr.f32.gmra.mxu0 %v6233
        %v6447 = vpop.f32.mrf.mxu0
        %v6448 = vadd.f32 0.0, %v6447
        %v6449 = vpop.f32.mrf.mxu0
        %6450 = vmatprep.mubr.f32.mxu0 0.0
        %6451 = vmatmul.mubr.f32.gmra.mxu0 %v6236
        %v6452 = vpop.f32.mrf.mxu0
        %v6453 = vadd.f32 0.0, %v6452
        %v6454 = vpop.f32.mrf.mxu0
        %6455 = vdwg.mxu0
        %v6456 = vmax.f32 %v6305, %v6418
        %v6457 = vmax.f32 %v6310, %v6423
        %v6458 = vmax.f32 %v6315, %v6428
        %v6459 = vmax.f32 %v6320, %v6433
        %v6460 = vmax.f32 %v6325, %v6438
        %v6461 = vmax.f32 %v6330, %v6443
        %v6462 = vmax.f32 %v6335, %v6448
        %v6463 = vmax.f32 %v6340, %v6453
        %v6464 = vld [vmem:[%s67] sm:$0xff]
        %v6465 = vld [vmem:[%s67 + $0x8] sm:$0xff]
        %v6466 = vld [vmem:[%s67 + $0x10] sm:$0xff]
        %v6467 = vld [vmem:[%s67 + $0x18] sm:$0xff]
        %v6469 = vsel %vm4289, %v6464, 0
        %v6472 = vsel %vm4289, %v6465, 0
        %v6475 = vsel %vm4289, %v6466, 0
        %v6478 = vsel %vm4289, %v6467, 0
        %6480 = vmatprep.subr.mxu0 0.0
        %6481 = vmatpush1.msra.mxu0 0.0
        %6482 = vmatprep.subr.mxu0 0.0
        %6483 = vmatpush1.msra.mxu0 0.0
        %6484 = vmatprep.subr.mxu0 0.0
        %6485 = vmatpush1.msra.mxu0 0.0
        %6486 = vmatprep.subr.mxu0 0.0
        %6487 = vmatpush1.msra.mxu0 0.0
        %6488 = vmatprep.subr.mxu0 0.0
        %6489 = vmatpush1.msra.mxu0 0.0
        %6490 = vmatprep.subr.mxu0 0.0
        %6491 = vmatpush1.msra.mxu0 0.0
        %6492 = vmatprep.subr.mxu0 0.0
        %6493 = vmatpush1.msra.mxu0 0.0
        %6494 = vmatprep.subr.mxu0 0.0
        %6495 = vmatpush1.msra.mxu0 0.0
        %6496 = vmatprep.subr.mxu0 0.0
        %6497 = vmatpush1.msra.mxu0 %v6463
        %6498 = vmatprep.subr.mxu0 0.0
        %6499 = vmatpush1.msra.mxu0 %v6462
        %6500 = vmatprep.subr.mxu0 0.0
        %6501 = vmatpush1.msra.mxu0 %v6461
        %6502 = vmatprep.subr.mxu0 0.0
        %6503 = vmatpush1.msra.mxu0 %v6460
        %6504 = vmatprep.subr.mxu0 0.0
        %6505 = vmatpush1.msra.mxu0 %v6459
        %6506 = vmatprep.subr.mxu0 0.0
        %6507 = vmatpush1.msra.mxu0 %v6458
        %6508 = vmatprep.subr.mxu0 0.0
        %6509 = vmatpush1.msra.mxu0 %v6457
        %6510 = vmatprep.subr.mxu0 0.0
        %6511 = vmatpush1.msra.mxu0 %v6456
        %6512 = vmatprep.subr.mxu0 0.0
        %6513 = vmatpush2.msra.mxu0 0.0
        %6514 = vmatprep.subr.mxu0 0.0
        %6515 = vmatpush2.msra.mxu0 0.0
        %6516 = vmatprep.subr.mxu0 0.0
        %6517 = vmatpush2.msra.mxu0 0.0
        %6518 = vmatprep.subr.mxu0 0.0
        %6519 = vmatpush2.msra.mxu0 0.0
        %6520 = vmatprep.subr.mxu0 0.0
        %6521 = vmatpush2.msra.mxu0 0.0
        %6522 = vmatprep.subr.mxu0 0.0
        %6523 = vmatpush2.msra.mxu0 0.0
        %6524 = vmatprep.subr.mxu0 0.0
        %6525 = vmatpush2.msra.mxu0 0.0
        %6526 = vmatprep.subr.mxu0 0.0
        %6527 = vmatpush2.msra.mxu0 0.0
        %6528 = vmatprep.subr.mxu0 0.0
        %6529 = vmatpush2.msra.mxu0 0.0
        %6530 = vmatprep.subr.mxu0 0.0
        %6531 = vmatpush2.msra.mxu0 0.0
        %6532 = vmatprep.subr.mxu0 0.0
        %6533 = vmatpush2.msra.mxu0 0.0
        %6534 = vmatprep.subr.mxu0 0.0
        %6535 = vmatpush2.msra.mxu0 0.0
        %6536 = vmatprep.subr.mxu0 0.0
        %6537 = vmatpush2.msra.mxu0 0.0
        %6538 = vmatprep.subr.mxu0 0.0
        %6539 = vmatpush2.msra.mxu0 0.0
        %6540 = vmatprep.subr.mxu0 0.0
        %6541 = vmatpush2.msra.mxu0 0.0
        %6542 = vmatprep.subr.mxu0 0.0
        %6543 = vmatpush2.msra.mxu0 0.0
        %6544 = vmatprep.mubr.f32.mxu0 0.0
        %6545 = vmatmul.mubr.f32.gmra.mxu0 %v6469
        %v6546 = vpop.f32.mrf.mxu0
        %v6547 = vadd.f32 0.0, %v6546
        %v6548 = vpop.f32.mrf.mxu0
        %6549 = vmatprep.mubr.f32.mxu0 0.0
        %6550 = vmatmul.mubr.f32.gmra.mxu0 %v6472
        %v6551 = vpop.f32.mrf.mxu0
        %v6552 = vadd.f32 0.0, %v6551
        %v6553 = vpop.f32.mrf.mxu0
        %6554 = vmatprep.mubr.f32.mxu0 0.0
        %6555 = vmatmul.mubr.f32.gmra.mxu0 %v6475
        %v6556 = vpop.f32.mrf.mxu0
        %v6557 = vadd.f32 0.0, %v6556
        %v6558 = vpop.f32.mrf.mxu0
        %6559 = vmatprep.mubr.f32.mxu0 0.0
        %6560 = vmatmul.mubr.f32.gmra.mxu0 %v6478
        %v6561 = vpop.f32.mrf.mxu0
        %v6562 = vadd.f32 0.0, %v6561
        %v6563 = vpop.f32.mrf.mxu0
        %6564 = vdwg.mxu0
        %v6565 = vld [vmem:[%s69] sm:$0xff]
        %v6566 = vld [vmem:[%s69 + $0x8] sm:$0xff]
        %v6567 = vld [vmem:[%s69 + $0x10] sm:$0xff]
        %v6568 = vld [vmem:[%s69 + $0x18] sm:$0xff]
        %v6570 = vsel %vm4289, %v6565, 0
        %v6573 = vsel %vm4289, %v6566, 0
        %v6576 = vsel %vm4289, %v6567, 0
        %v6579 = vsel %vm4289, %v6568, 0
        %6581 = vmatprep.subr.mxu0 0.0
        %6582 = vmatpush1.msra.mxu0 0.0
        %6583 = vmatprep.subr.mxu0 0.0
        %6584 = vmatpush1.msra.mxu0 0.0
        %6585 = vmatprep.subr.mxu0 0.0
        %6586 = vmatpush1.msra.mxu0 0.0
        %6587 = vmatprep.subr.mxu0 0.0
        %6588 = vmatpush1.msra.mxu0 0.0
        %6589 = vmatprep.subr.mxu0 0.0
        %6590 = vmatpush1.msra.mxu0 0.0
        %6591 = vmatprep.subr.mxu0 0.0
        %6592 = vmatpush1.msra.mxu0 0.0
        %6593 = vmatprep.subr.mxu0 0.0
        %6594 = vmatpush1.msra.mxu0 0.0
        %6595 = vmatprep.subr.mxu0 0.0
        %6596 = vmatpush1.msra.mxu0 0.0
        %6597 = vmatprep.subr.mxu0 0.0
        %6598 = vmatpush1.msra.mxu0 %v6463
        %6599 = vmatprep.subr.mxu0 0.0
        %6600 = vmatpush1.msra.mxu0 %v6462
        %6601 = vmatprep.subr.mxu0 0.0
        %6602 = vmatpush1.msra.mxu0 %v6461
        %6603 = vmatprep.subr.mxu0 0.0
        %6604 = vmatpush1.msra.mxu0 %v6460
        %6605 = vmatprep.subr.mxu0 0.0
        %6606 = vmatpush1.msra.mxu0 %v6459
        %6607 = vmatprep.subr.mxu0 0.0
        %6608 = vmatpush1.msra.mxu0 %v6458
        %6609 = vmatprep.subr.mxu0 0.0
        %6610 = vmatpush1.msra.mxu0 %v6457
        %6611 = vmatprep.subr.mxu0 0.0
        %6612 = vmatpush1.msra.mxu0 %v6456
        %6613 = vmatprep.subr.mxu0 0.0
        %6614 = vmatpush2.msra.mxu0 0.0
        %6615 = vmatprep.subr.mxu0 0.0
        %6616 = vmatpush2.msra.mxu0 0.0
        %6617 = vmatprep.subr.mxu0 0.0
        %6618 = vmatpush2.msra.mxu0 0.0
        %6619 = vmatprep.subr.mxu0 0.0
        %6620 = vmatpush2.msra.mxu0 0.0
        %6621 = vmatprep.subr.mxu0 0.0
        %6622 = vmatpush2.msra.mxu0 0.0
        %6623 = vmatprep.subr.mxu0 0.0
        %6624 = vmatpush2.msra.mxu0 0.0
        %6625 = vmatprep.subr.mxu0 0.0
        %6626 = vmatpush2.msra.mxu0 0.0
        %6627 = vmatprep.subr.mxu0 0.0
        %6628 = vmatpush2.msra.mxu0 0.0
        %6629 = vmatprep.subr.mxu0 0.0
        %6630 = vmatpush2.msra.mxu0 0.0
        %6631 = vmatprep.subr.mxu0 0.0
        %6632 = vmatpush2.msra.mxu0 0.0
        %6633 = vmatprep.subr.mxu0 0.0
        %6634 = vmatpush2.msra.mxu0 0.0
        %6635 = vmatprep.subr.mxu0 0.0
        %6636 = vmatpush2.msra.mxu0 0.0
        %6637 = vmatprep.subr.mxu0 0.0
        %6638 = vmatpush2.msra.mxu0 0.0
        %6639 = vmatprep.subr.mxu0 0.0
        %6640 = vmatpush2.msra.mxu0 0.0
        %6641 = vmatprep.subr.mxu0 0.0
        %6642 = vmatpush2.msra.mxu0 0.0
        %6643 = vmatprep.subr.mxu0 0.0
        %6644 = vmatpush2.msra.mxu0 0.0
        %6645 = vmatprep.mubr.f32.mxu0 0.0
        %6646 = vmatmul.mubr.f32.gmra.mxu0 %v6570
        %v6647 = vpop.f32.mrf.mxu0
        %v6648 = vadd.f32 0.0, %v6647
        %v6649 = vpop.f32.mrf.mxu0
        %6650 = vmatprep.mubr.f32.mxu0 0.0
        %6651 = vmatmul.mubr.f32.gmra.mxu0 %v6573
        %v6652 = vpop.f32.mrf.mxu0
        %v6653 = vadd.f32 0.0, %v6652
        %v6654 = vpop.f32.mrf.mxu0
        %6655 = vmatprep.mubr.f32.mxu0 0.0
        %6656 = vmatmul.mubr.f32.gmra.mxu0 %v6576
        %v6657 = vpop.f32.mrf.mxu0
        %v6658 = vadd.f32 0.0, %v6657
        %v6659 = vpop.f32.mrf.mxu0
        %6660 = vmatprep.mubr.f32.mxu0 0.0
        %6661 = vmatmul.mubr.f32.gmra.mxu0 %v6579
        %v6662 = vpop.f32.mrf.mxu0
        %v6663 = vadd.f32 0.0, %v6662
        %v6664 = vpop.f32.mrf.mxu0
        %6665 = vdwg.mxu0
        %v6666 = vmax.f32 %v6547, %v6648
        %v6667 = vmax.f32 %v6552, %v6653
        %v6668 = vmax.f32 %v6557, %v6658
        %v6669 = vmax.f32 %v6562, %v6663
        %v6670 = vld [vmem:[%s71] sm:$0xff]
        %v6671 = vld [vmem:[%s71 + $0x8] sm:$0xff]
        %v6672 = vld [vmem:[%s71 + $0x10] sm:$0xff]
        %v6673 = vld [vmem:[%s71 + $0x18] sm:$0xff]
        %v6675 = vsel %vm4289, %v6670, 0
        %v6678 = vsel %vm4289, %v6671, 0
        %v6681 = vsel %vm4289, %v6672, 0
        %v6684 = vsel %vm4289, %v6673, 0
        %6686 = vmatprep.subr.mxu0 0.0
        %6687 = vmatpush1.msra.mxu0 0.0
        %6688 = vmatprep.subr.mxu0 0.0
        %6689 = vmatpush1.msra.mxu0 0.0
        %6690 = vmatprep.subr.mxu0 0.0
        %6691 = vmatpush1.msra.mxu0 0.0
        %6692 = vmatprep.subr.mxu0 0.0
        %6693 = vmatpush1.msra.mxu0 0.0
        %6694 = vmatprep.subr.mxu0 0.0
        %6695 = vmatpush1.msra.mxu0 0.0
        %6696 = vmatprep.subr.mxu0 0.0
        %6697 = vmatpush1.msra.mxu0 0.0
        %6698 = vmatprep.subr.mxu0 0.0
        %6699 = vmatpush1.msra.mxu0 0.0
        %6700 = vmatprep.subr.mxu0 0.0
        %6701 = vmatpush1.msra.mxu0 0.0
        %6702 = vmatprep.subr.mxu0 0.0
        %6703 = vmatpush1.msra.mxu0 %v6463
        %6704 = vmatprep.subr.mxu0 0.0
        %6705 = vmatpush1.msra.mxu0 %v6462
        %6706 = vmatprep.subr.mxu0 0.0
        %6707 = vmatpush1.msra.mxu0 %v6461
        %6708 = vmatprep.subr.mxu0 0.0
        %6709 = vmatpush1.msra.mxu0 %v6460
        %6710 = vmatprep.subr.mxu0 0.0
        %6711 = vmatpush1.msra.mxu0 %v6459
        %6712 = vmatprep.subr.mxu0 0.0
        %6713 = vmatpush1.msra.mxu0 %v6458
        %6714 = vmatprep.subr.mxu0 0.0
        %6715 = vmatpush1.msra.mxu0 %v6457
        %6716 = vmatprep.subr.mxu0 0.0
        %6717 = vmatpush1.msra.mxu0 %v6456
        %6718 = vmatprep.subr.mxu0 0.0
        %6719 = vmatpush2.msra.mxu0 0.0
        %6720 = vmatprep.subr.mxu0 0.0
        %6721 = vmatpush2.msra.mxu0 0.0
        %6722 = vmatprep.subr.mxu0 0.0
        %6723 = vmatpush2.msra.mxu0 0.0
        %6724 = vmatprep.subr.mxu0 0.0
        %6725 = vmatpush2.msra.mxu0 0.0
        %6726 = vmatprep.subr.mxu0 0.0
        %6727 = vmatpush2.msra.mxu0 0.0
        %6728 = vmatprep.subr.mxu0 0.0
        %6729 = vmatpush2.msra.mxu0 0.0
        %6730 = vmatprep.subr.mxu0 0.0
        %6731 = vmatpush2.msra.mxu0 0.0
        %6732 = vmatprep.subr.mxu0 0.0
        %6733 = vmatpush2.msra.mxu0 0.0
        %6734 = vmatprep.subr.mxu0 0.0
        %6735 = vmatpush2.msra.mxu0 0.0
        %6736 = vmatprep.subr.mxu0 0.0
        %6737 = vmatpush2.msra.mxu0 0.0
        %6738 = vmatprep.subr.mxu0 0.0
        %6739 = vmatpush2.msra.mxu0 0.0
        %6740 = vmatprep.subr.mxu0 0.0
        %6741 = vmatpush2.msra.mxu0 0.0
        %6742 = vmatprep.subr.mxu0 0.0
        %6743 = vmatpush2.msra.mxu0 0.0
        %6744 = vmatprep.subr.mxu0 0.0
        %6745 = vmatpush2.msra.mxu0 0.0
        %6746 = vmatprep.subr.mxu0 0.0
        %6747 = vmatpush2.msra.mxu0 0.0
        %6748 = vmatprep.subr.mxu0 0.0
        %6749 = vmatpush2.msra.mxu0 0.0
        %6750 = vmatprep.mubr.f32.mxu0 0.0
        %6751 = vmatmul.mubr.f32.gmra.mxu0 %v6675
        %v6752 = vpop.f32.mrf.mxu0
        %v6753 = vadd.f32 0.0, %v6752
        %v6754 = vpop.f32.mrf.mxu0
        %6755 = vmatprep.mubr.f32.mxu0 0.0
        %6756 = vmatmul.mubr.f32.gmra.mxu0 %v6678
        %v6757 = vpop.f32.mrf.mxu0
        %v6758 = vadd.f32 0.0, %v6757
        %v6759 = vpop.f32.mrf.mxu0
        %6760 = vmatprep.mubr.f32.mxu0 0.0
        %6761 = vmatmul.mubr.f32.gmra.mxu0 %v6681
        %v6762 = vpop.f32.mrf.mxu0
        %v6763 = vadd.f32 0.0, %v6762
        %v6764 = vpop.f32.mrf.mxu0
        %6765 = vmatprep.mubr.f32.mxu0 0.0
        %6766 = vmatmul.mubr.f32.gmra.mxu0 %v6684
        %v6767 = vpop.f32.mrf.mxu0
        %v6768 = vadd.f32 0.0, %v6767
        %v6769 = vpop.f32.mrf.mxu0
        %6770 = vdwg.mxu0
        %v6771 = vld [vmem:[%s73] sm:$0xff]
        %v6772 = vld [vmem:[%s73 + $0x8] sm:$0xff]
        %v6773 = vld [vmem:[%s73 + $0x10] sm:$0xff]
        %v6774 = vld [vmem:[%s73 + $0x18] sm:$0xff]
        %v6776 = vsel %vm4289, %v6771, 0
        %v6779 = vsel %vm4289, %v6772, 0
        %v6782 = vsel %vm4289, %v6773, 0
        %v6785 = vsel %vm4289, %v6774, 0
        %6787 = vmatprep.subr.mxu0 0.0
        %6788 = vmatpush1.msra.mxu0 0.0
        %6789 = vmatprep.subr.mxu0 0.0
        %6790 = vmatpush1.msra.mxu0 0.0
        %6791 = vmatprep.subr.mxu0 0.0
        %6792 = vmatpush1.msra.mxu0 0.0
        %6793 = vmatprep.subr.mxu0 0.0
        %6794 = vmatpush1.msra.mxu0 0.0
        %6795 = vmatprep.subr.mxu0 0.0
        %6796 = vmatpush1.msra.mxu0 0.0
        %6797 = vmatprep.subr.mxu0 0.0
        %6798 = vmatpush1.msra.mxu0 0.0
        %6799 = vmatprep.subr.mxu0 0.0
        %6800 = vmatpush1.msra.mxu0 0.0
        %6801 = vmatprep.subr.mxu0 0.0
        %6802 = vmatpush1.msra.mxu0 0.0
        %6803 = vmatprep.subr.mxu0 0.0
        %6804 = vmatpush1.msra.mxu0 %v6463
        %6805 = vmatprep.subr.mxu0 0.0
        %6806 = vmatpush1.msra.mxu0 %v6462
        %6807 = vmatprep.subr.mxu0 0.0
        %6808 = vmatpush1.msra.mxu0 %v6461
        %6809 = vmatprep.subr.mxu0 0.0
        %6810 = vmatpush1.msra.mxu0 %v6460
        %6811 = vmatprep.subr.mxu0 0.0
        %6812 = vmatpush1.msra.mxu0 %v6459
        %6813 = vmatprep.subr.mxu0 0.0
        %6814 = vmatpush1.msra.mxu0 %v6458
        %6815 = vmatprep.subr.mxu0 0.0
        %6816 = vmatpush1.msra.mxu0 %v6457
        %6817 = vmatprep.subr.mxu0 0.0
        %6818 = vmatpush1.msra.mxu0 %v6456
        %6819 = vmatprep.subr.mxu0 0.0
        %6820 = vmatpush2.msra.mxu0 0.0
        %6821 = vmatprep.subr.mxu0 0.0
        %6822 = vmatpush2.msra.mxu0 0.0
        %6823 = vmatprep.subr.mxu0 0.0
        %6824 = vmatpush2.msra.mxu0 0.0
        %6825 = vmatprep.subr.mxu0 0.0
        %6826 = vmatpush2.msra.mxu0 0.0
        %6827 = vmatprep.subr.mxu0 0.0
        %6828 = vmatpush2.msra.mxu0 0.0
        %6829 = vmatprep.subr.mxu0 0.0
        %6830 = vmatpush2.msra.mxu0 0.0
        %6831 = vmatprep.subr.mxu0 0.0
        %6832 = vmatpush2.msra.mxu0 0.0
        %6833 = vmatprep.subr.mxu0 0.0
        %6834 = vmatpush2.msra.mxu0 0.0
        %6835 = vmatprep.subr.mxu0 0.0
        %6836 = vmatpush2.msra.mxu0 0.0
        %6837 = vmatprep.subr.mxu0 0.0
        %6838 = vmatpush2.msra.mxu0 0.0
        %6839 = vmatprep.subr.mxu0 0.0
        %6840 = vmatpush2.msra.mxu0 0.0
        %6841 = vmatprep.subr.mxu0 0.0
        %6842 = vmatpush2.msra.mxu0 0.0
        %6843 = vmatprep.subr.mxu0 0.0
        %6844 = vmatpush2.msra.mxu0 0.0
        %6845 = vmatprep.subr.mxu0 0.0
        %6846 = vmatpush2.msra.mxu0 0.0
        %6847 = vmatprep.subr.mxu0 0.0
        %6848 = vmatpush2.msra.mxu0 0.0
        %6849 = vmatprep.subr.mxu0 0.0
        %6850 = vmatpush2.msra.mxu0 0.0
        %6851 = vmatprep.mubr.f32.mxu0 0.0
        %6852 = vmatmul.mubr.f32.gmra.mxu0 %v6776
        %v6853 = vpop.f32.mrf.mxu0
        %v6854 = vadd.f32 0.0, %v6853
        %v6855 = vpop.f32.mrf.mxu0
        %6856 = vmatprep.mubr.f32.mxu0 0.0
        %6857 = vmatmul.mubr.f32.gmra.mxu0 %v6779
        %v6858 = vpop.f32.mrf.mxu0
        %v6859 = vadd.f32 0.0, %v6858
        %v6860 = vpop.f32.mrf.mxu0
        %6861 = vmatprep.mubr.f32.mxu0 0.0
        %6862 = vmatmul.mubr.f32.gmra.mxu0 %v6782
        %v6863 = vpop.f32.mrf.mxu0
        %v6864 = vadd.f32 0.0, %v6863
        %v6865 = vpop.f32.mrf.mxu0
        %6866 = vmatprep.mubr.f32.mxu0 0.0
        %6867 = vmatmul.mubr.f32.gmra.mxu0 %v6785
        %v6868 = vpop.f32.mrf.mxu0
        %v6869 = vadd.f32 0.0, %v6868
        %v6870 = vpop.f32.mrf.mxu0
        %6871 = vdwg.mxu0
        %v6872 = vmax.f32 %v6753, %v6854
        %v6873 = vmax.f32 %v6758, %v6859
        %v6874 = vmax.f32 %v6763, %v6864
        %v6875 = vmax.f32 %v6768, %v6869
        %v6876 = vld [vmem:[%s75] sm:$0xff]
        %v6877 = vld [vmem:[%s75 + $0x8] sm:$0xff]
        %v6878 = vld [vmem:[%s75 + $0x10] sm:$0xff]
        %v6879 = vld [vmem:[%s75 + $0x18] sm:$0xff]
        %v6881 = vsel %vm4289, %v6876, 0
        %v6884 = vsel %vm4289, %v6877, 0
        %v6887 = vsel %vm4289, %v6878, 0
        %v6890 = vsel %vm4289, %v6879, 0
        %6892 = vmatprep.subr.mxu0 0.0
        %6893 = vmatpush1.msra.mxu0 0.0
        %6894 = vmatprep.subr.mxu0 0.0
        %6895 = vmatpush1.msra.mxu0 0.0
        %6896 = vmatprep.subr.mxu0 0.0
        %6897 = vmatpush1.msra.mxu0 0.0
        %6898 = vmatprep.subr.mxu0 0.0
        %6899 = vmatpush1.msra.mxu0 0.0
        %6900 = vmatprep.subr.mxu0 0.0
        %6901 = vmatpush1.msra.mxu0 0.0
        %6902 = vmatprep.subr.mxu0 0.0
        %6903 = vmatpush1.msra.mxu0 0.0
        %6904 = vmatprep.subr.mxu0 0.0
        %6905 = vmatpush1.msra.mxu0 0.0
        %6906 = vmatprep.subr.mxu0 0.0
        %6907 = vmatpush1.msra.mxu0 0.0
        %6908 = vmatprep.subr.mxu0 0.0
        %6909 = vmatpush1.msra.mxu0 %v6463
        %6910 = vmatprep.subr.mxu0 0.0
        %6911 = vmatpush1.msra.mxu0 %v6462
        %6912 = vmatprep.subr.mxu0 0.0
        %6913 = vmatpush1.msra.mxu0 %v6461
        %6914 = vmatprep.subr.mxu0 0.0
        %6915 = vmatpush1.msra.mxu0 %v6460
        %6916 = vmatprep.subr.mxu0 0.0
        %6917 = vmatpush1.msra.mxu0 %v6459
        %6918 = vmatprep.subr.mxu0 0.0
        %6919 = vmatpush1.msra.mxu0 %v6458
        %6920 = vmatprep.subr.mxu0 0.0
        %6921 = vmatpush1.msra.mxu0 %v6457
        %6922 = vmatprep.subr.mxu0 0.0
        %6923 = vmatpush1.msra.mxu0 %v6456
        %6924 = vmatprep.subr.mxu0 0.0
        %6925 = vmatpush2.msra.mxu0 0.0
        %6926 = vmatprep.subr.mxu0 0.0
        %6927 = vmatpush2.msra.mxu0 0.0
        %6928 = vmatprep.subr.mxu0 0.0
        %6929 = vmatpush2.msra.mxu0 0.0
        %6930 = vmatprep.subr.mxu0 0.0
        %6931 = vmatpush2.msra.mxu0 0.0
        %6932 = vmatprep.subr.mxu0 0.0
        %6933 = vmatpush2.msra.mxu0 0.0
        %6934 = vmatprep.subr.mxu0 0.0
        %6935 = vmatpush2.msra.mxu0 0.0
        %6936 = vmatprep.subr.mxu0 0.0
        %6937 = vmatpush2.msra.mxu0 0.0
        %6938 = vmatprep.subr.mxu0 0.0
        %6939 = vmatpush2.msra.mxu0 0.0
        %6940 = vmatprep.subr.mxu0 0.0
        %6941 = vmatpush2.msra.mxu0 0.0
        %6942 = vmatprep.subr.mxu0 0.0
        %6943 = vmatpush2.msra.mxu0 0.0
        %6944 = vmatprep.subr.mxu0 0.0
        %6945 = vmatpush2.msra.mxu0 0.0
        %6946 = vmatprep.subr.mxu0 0.0
        %6947 = vmatpush2.msra.mxu0 0.0
        %6948 = vmatprep.subr.mxu0 0.0
        %6949 = vmatpush2.msra.mxu0 0.0
        %6950 = vmatprep.subr.mxu0 0.0
        %6951 = vmatpush2.msra.mxu0 0.0
        %6952 = vmatprep.subr.mxu0 0.0
        %6953 = vmatpush2.msra.mxu0 0.0
        %6954 = vmatprep.subr.mxu0 0.0
        %6955 = vmatpush2.msra.mxu0 0.0
        %6956 = vmatprep.mubr.f32.mxu0 0.0
        %6957 = vmatmul.mubr.f32.gmra.mxu0 %v6881
        %v6958 = vpop.f32.mrf.mxu0
        %v6959 = vadd.f32 0.0, %v6958
        %v6960 = vpop.f32.mrf.mxu0
        %6961 = vmatprep.mubr.f32.mxu0 0.0
        %6962 = vmatmul.mubr.f32.gmra.mxu0 %v6884
        %v6963 = vpop.f32.mrf.mxu0
        %v6964 = vadd.f32 0.0, %v6963
        %v6965 = vpop.f32.mrf.mxu0
        %6966 = vmatprep.mubr.f32.mxu0 0.0
        %6967 = vmatmul.mubr.f32.gmra.mxu0 %v6887
        %v6968 = vpop.f32.mrf.mxu0
        %v6969 = vadd.f32 0.0, %v6968
        %v6970 = vpop.f32.mrf.mxu0
        %6971 = vmatprep.mubr.f32.mxu0 0.0
        %6972 = vmatmul.mubr.f32.gmra.mxu0 %v6890
        %v6973 = vpop.f32.mrf.mxu0
        %v6974 = vadd.f32 0.0, %v6973
        %v6975 = vpop.f32.mrf.mxu0
        %6976 = vdwg.mxu0
        %v6977 = vld [vmem:[%s77] sm:$0xff]
        %v6978 = vld [vmem:[%s77 + $0x8] sm:$0xff]
        %v6979 = vld [vmem:[%s77 + $0x10] sm:$0xff]
        %v6980 = vld [vmem:[%s77 + $0x18] sm:$0xff]
        %v6982 = vsel %vm4289, %v6977, 0
        %v6985 = vsel %vm4289, %v6978, 0
        %v6988 = vsel %vm4289, %v6979, 0
        %v6991 = vsel %vm4289, %v6980, 0
        %6993 = vmatprep.subr.mxu0 0.0
        %6994 = vmatpush1.msra.mxu0 0.0
        %6995 = vmatprep.subr.mxu0 0.0
        %6996 = vmatpush1.msra.mxu0 0.0
        %6997 = vmatprep.subr.mxu0 0.0
        %6998 = vmatpush1.msra.mxu0 0.0
        %6999 = vmatprep.subr.mxu0 0.0
        %7000 = vmatpush1.msra.mxu0 0.0
        %7001 = vmatprep.subr.mxu0 0.0
        %7002 = vmatpush1.msra.mxu0 0.0
        %7003 = vmatprep.subr.mxu0 0.0
        %7004 = vmatpush1.msra.mxu0 0.0
        %7005 = vmatprep.subr.mxu0 0.0
        %7006 = vmatpush1.msra.mxu0 0.0
        %7007 = vmatprep.subr.mxu0 0.0
        %7008 = vmatpush1.msra.mxu0 0.0
        %7009 = vmatprep.subr.mxu0 0.0
        %7010 = vmatpush1.msra.mxu0 %v6463
        %7011 = vmatprep.subr.mxu0 0.0
        %7012 = vmatpush1.msra.mxu0 %v6462
        %7013 = vmatprep.subr.mxu0 0.0
        %7014 = vmatpush1.msra.mxu0 %v6461
        %7015 = vmatprep.subr.mxu0 0.0
        %7016 = vmatpush1.msra.mxu0 %v6460
        %7017 = vmatprep.subr.mxu0 0.0
        %7018 = vmatpush1.msra.mxu0 %v6459
        %7019 = vmatprep.subr.mxu0 0.0
        %7020 = vmatpush1.msra.mxu0 %v6458
        %7021 = vmatprep.subr.mxu0 0.0
        %7022 = vmatpush1.msra.mxu0 %v6457
        %7023 = vmatprep.subr.mxu0 0.0
        %7024 = vmatpush1.msra.mxu0 %v6456
        %7025 = vmatprep.subr.mxu0 0.0
        %7026 = vmatpush2.msra.mxu0 0.0
        %7027 = vmatprep.subr.mxu0 0.0
        %7028 = vmatpush2.msra.mxu0 0.0
        %7029 = vmatprep.subr.mxu0 0.0
        %7030 = vmatpush2.msra.mxu0 0.0
        %7031 = vmatprep.subr.mxu0 0.0
        %7032 = vmatpush2.msra.mxu0 0.0
        %7033 = vmatprep.subr.mxu0 0.0
        %7034 = vmatpush2.msra.mxu0 0.0
        %7035 = vmatprep.subr.mxu0 0.0
        %7036 = vmatpush2.msra.mxu0 0.0
        %7037 = vmatprep.subr.mxu0 0.0
        %7038 = vmatpush2.msra.mxu0 0.0
        %7039 = vmatprep.subr.mxu0 0.0
        %7040 = vmatpush2.msra.mxu0 0.0
        %7041 = vmatprep.subr.mxu0 0.0
        %7042 = vmatpush2.msra.mxu0 0.0
        %7043 = vmatprep.subr.mxu0 0.0
        %7044 = vmatpush2.msra.mxu0 0.0
        %7045 = vmatprep.subr.mxu0 0.0
        %7046 = vmatpush2.msra.mxu0 0.0
        %7047 = vmatprep.subr.mxu0 0.0
        %7048 = vmatpush2.msra.mxu0 0.0
        %7049 = vmatprep.subr.mxu0 0.0
        %7050 = vmatpush2.msra.mxu0 0.0
        %7051 = vmatprep.subr.mxu0 0.0
        %7052 = vmatpush2.msra.mxu0 0.0
        %7053 = vmatprep.subr.mxu0 0.0
        %7054 = vmatpush2.msra.mxu0 0.0
        %7055 = vmatprep.subr.mxu0 0.0
        %7056 = vmatpush2.msra.mxu0 0.0
        %7057 = vmatprep.mubr.f32.mxu0 0.0
        %7058 = vmatmul.mubr.f32.gmra.mxu0 %v6982
        %v7059 = vpop.f32.mrf.mxu0
        %v7060 = vadd.f32 0.0, %v7059
        %v7061 = vpop.f32.mrf.mxu0
        %7062 = vmatprep.mubr.f32.mxu0 0.0
        %7063 = vmatmul.mubr.f32.gmra.mxu0 %v6985
        %v7064 = vpop.f32.mrf.mxu0
        %v7065 = vadd.f32 0.0, %v7064
        %v7066 = vpop.f32.mrf.mxu0
        %7067 = vmatprep.mubr.f32.mxu0 0.0
        %7068 = vmatmul.mubr.f32.gmra.mxu0 %v6988
        %v7069 = vpop.f32.mrf.mxu0
        %v7070 = vadd.f32 0.0, %v7069
        %v7071 = vpop.f32.mrf.mxu0
        %7072 = vmatprep.mubr.f32.mxu0 0.0
        %7073 = vmatmul.mubr.f32.gmra.mxu0 %v6991
        %v7074 = vpop.f32.mrf.mxu0
        %v7075 = vadd.f32 0.0, %v7074
        %v7076 = vpop.f32.mrf.mxu0
        %7077 = vdwg.mxu0
        %v7078 = vmax.f32 %v6959, %v7060
        %v7079 = vmax.f32 %v6964, %v7065
        %v7080 = vmax.f32 %v6969, %v7070
        %v7081 = vmax.f32 %v6974, %v7075
        %v7082 = vpack.c.bf16 %v6873, %v6872
        %v7083 = vpack.c.bf16 %v6875, %v6874
        %v7084 = vld [vmem:[#allocation11] sm:$0xf]
        %v7085 = vld [vmem:[#allocation11 + $0x4] sm:$0xf]
        %v7086 = vld [vmem:[#allocation11 + $0x8] sm:$0xf]
        %v7087 = vld [vmem:[#allocation11 + $0xc] sm:$0xf]
        %v7088 = vpack.c.bf16 %v6667, %v6666
        %v7089 = vpack.c.bf16 %v6669, %v6668
        %v7090 = vld [vmem:[#allocation13] sm:$0xf]
        %v7091 = vld [vmem:[#allocation13 + $0x4] sm:$0xf]
        %v7092 = vld [vmem:[#allocation13 + $0x8] sm:$0xf]
        %v7093 = vld [vmem:[#allocation13 + $0xc] sm:$0xf]
        %v7098 = vunpack.c.l.b16 %v7090
        %v7099 = vunpack.c.l.b16 %v7091
        %v7100 = vunpack.c.l.b16 %v7092
        %v7101 = vunpack.c.l.b16 %v7093
        %v7102 = vpack.c.b16 %v7099, %v7098
        %v7103 = vpack.c.b16 %v7101, %v7100
        %vm7106 = vcmask 261120
        %v7108 = vsel %vm7106, %v7088, 0
        %v7111 = vsel %vm7106, %v7089, 0
        %7113 = vmatprep.subr.bf16.mxu0 0
        %7114 = vmatpush1.bf16.msra.mxu0 0
        %7115 = vmatprep.subr.bf16.mxu0 0
        %7116 = vmatpush1.bf16.msra.mxu0 0
        %7117 = vmatprep.subr.bf16.mxu0 0
        %7118 = vmatpush1.bf16.msra.mxu0 0
        %7119 = vmatprep.subr.bf16.mxu0 0
        %7120 = vmatpush1.bf16.msra.mxu0 0
        %7121 = vmatprep.subr.bf16.mxu0 0
        %7122 = vmatpush1.bf16.msra.mxu0 0
        %7123 = vmatprep.subr.bf16.mxu0 0
        %7124 = vmatpush1.bf16.msra.mxu0 0
        %7125 = vmatprep.subr.bf16.mxu0 0
        %7126 = vmatpush1.bf16.msra.mxu0 %v7103
        %7127 = vmatprep.subr.bf16.mxu0 0
        %7128 = vmatpush1.bf16.msra.mxu0 %v7102
        %7129 = vmatprep.subr.bf16.mxu0 0
        %7130 = vmatpush2.bf16.msra.mxu0 0
        %7131 = vmatprep.subr.bf16.mxu0 0
        %7132 = vmatpush2.bf16.msra.mxu0 0
        %7133 = vmatprep.subr.bf16.mxu0 0
        %7134 = vmatpush2.bf16.msra.mxu0 0
        %7135 = vmatprep.subr.bf16.mxu0 0
        %7136 = vmatpush2.bf16.msra.mxu0 0
        %7137 = vmatprep.subr.bf16.mxu0 0
        %7138 = vmatpush2.bf16.msra.mxu0 0
        %7139 = vmatprep.subr.bf16.mxu0 0
        %7140 = vmatpush2.bf16.msra.mxu0 0
        %7141 = vmatprep.subr.bf16.mxu0 0
        %7142 = vmatpush2.bf16.msra.mxu0 0
        %7143 = vmatprep.subr.bf16.mxu0 0
        %7144 = vmatpush2.bf16.msra.mxu0 0
        %7145 = vmatprep.mubr.bf16.mxu0 0
        %7146 = vmatmul.mubr.bf16.gmra.mxu0 %v7108
        %v7147 = vpop.f32.mrf.mxu0
        %v7148 = vadd.f32 0.0, %v7147
        %v7149 = vpop.f32.mrf.mxu0
        %v7150 = vpop.f32.mrf.mxu0
        %v7151 = vadd.f32 0.0, %v7150
        %v7152 = vpop.f32.mrf.mxu0
        %7153 = vmatprep.mubr.bf16.mxu0 0
        %7154 = vmatmul.mubr.bf16.gmra.mxu0 %v7111
        %v7155 = vpop.f32.mrf.mxu0
        %v7156 = vadd.f32 0.0, %v7155
        %v7157 = vpop.f32.mrf.mxu0
        %v7158 = vpop.f32.mrf.mxu0
        %v7159 = vadd.f32 0.0, %v7158
        %v7160 = vpop.f32.mrf.mxu0
        %7161 = vdwg.mxu0
        %v7166 = vunpack.c.l.b16 %v7084
        %v7167 = vunpack.c.l.b16 %v7085
        %v7168 = vunpack.c.l.b16 %v7086
        %v7169 = vunpack.c.l.b16 %v7087
        %v7170 = vpack.c.b16 %v7167, %v7166
        %v7171 = vpack.c.b16 %v7169, %v7168
        %v7175 = vsel %vm7106, %v7082, 0
        %v7178 = vsel %vm7106, %v7083, 0
        %7180 = vmatprep.subr.bf16.mxu0 0
        %7181 = vmatpush1.bf16.msra.mxu0 0
        %7182 = vmatprep.subr.bf16.mxu0 0
        %7183 = vmatpush1.bf16.msra.mxu0 0
        %7184 = vmatprep.subr.bf16.mxu0 0
        %7185 = vmatpush1.bf16.msra.mxu0 0
        %7186 = vmatprep.subr.bf16.mxu0 0
        %7187 = vmatpush1.bf16.msra.mxu0 0
        %7188 = vmatprep.subr.bf16.mxu0 0
        %7189 = vmatpush1.bf16.msra.mxu0 0
        %7190 = vmatprep.subr.bf16.mxu0 0
        %7191 = vmatpush1.bf16.msra.mxu0 0
        %7192 = vmatprep.subr.bf16.mxu0 0
        %7193 = vmatpush1.bf16.msra.mxu0 %v7171
        %7194 = vmatprep.subr.bf16.mxu0 0
        %7195 = vmatpush1.bf16.msra.mxu0 %v7170
        %7196 = vmatprep.subr.bf16.mxu0 0
        %7197 = vmatpush2.bf16.msra.mxu0 0
        %7198 = vmatprep.subr.bf16.mxu0 0
        %7199 = vmatpush2.bf16.msra.mxu0 0
        %7200 = vmatprep.subr.bf16.mxu0 0
        %7201 = vmatpush2.bf16.msra.mxu0 0
        %7202 = vmatprep.subr.bf16.mxu0 0
        %7203 = vmatpush2.bf16.msra.mxu0 0
        %7204 = vmatprep.subr.bf16.mxu0 0
        %7205 = vmatpush2.bf16.msra.mxu0 0
        %7206 = vmatprep.subr.bf16.mxu0 0
        %7207 = vmatpush2.bf16.msra.mxu0 0
        %7208 = vmatprep.subr.bf16.mxu0 0
        %7209 = vmatpush2.bf16.msra.mxu0 0
        %7210 = vmatprep.subr.bf16.mxu0 0
        %7211 = vmatpush2.bf16.msra.mxu0 0
        %7212 = vmatprep.mubr.bf16.mxu0 0
        %7213 = vmatmul.mubr.bf16.gmra.mxu0 %v7175
        %v7214 = vpop.f32.mrf.mxu0
        %v7215 = vadd.f32 %v7148, %v7214
        %v7216 = vpop.f32.mrf.mxu0
        %v7217 = vpop.f32.mrf.mxu0
        %v7218 = vadd.f32 %v7151, %v7217
        %v7219 = vpop.f32.mrf.mxu0
        %7220 = vmatprep.mubr.bf16.mxu0 0
        %7221 = vmatmul.mubr.bf16.gmra.mxu0 %v7178
        %v7222 = vpop.f32.mrf.mxu0
        %v7223 = vadd.f32 %v7156, %v7222
        %v7224 = vpop.f32.mrf.mxu0
        %v7225 = vpop.f32.mrf.mxu0
        %v7226 = vadd.f32 %v7159, %v7225
        %v7227 = vpop.f32.mrf.mxu0
        %7228 = vdwg.mxu0
        %v7229 = vpack.c.bf16 %v7079, %v7078
        %v7230 = vpack.c.bf16 %v7081, %v7080
        %v7231 = vld [vmem:[#allocation14] sm:$0xf]
        %v7232 = vld [vmem:[#allocation14 + $0x4] sm:$0xf]
        %v7233 = vld [vmem:[#allocation14 + $0x8] sm:$0xf]
        %v7234 = vld [vmem:[#allocation14 + $0xc] sm:$0xf]
        %v7239 = vunpack.c.l.b16 %v7231
        %v7240 = vunpack.c.l.b16 %v7232
        %v7241 = vunpack.c.l.b16 %v7233
        %v7242 = vunpack.c.l.b16 %v7234
        %v7243 = vpack.c.b16 %v7240, %v7239
        %v7244 = vpack.c.b16 %v7242, %v7241
        %v7248 = vsel %vm7106, %v7229, 0
        %v7251 = vsel %vm7106, %v7230, 0
        %7253 = vmatprep.subr.bf16.mxu0 0
        %7254 = vmatpush1.bf16.msra.mxu0 0
        %7255 = vmatprep.subr.bf16.mxu0 0
        %7256 = vmatpush1.bf16.msra.mxu0 0
        %7257 = vmatprep.subr.bf16.mxu0 0
        %7258 = vmatpush1.bf16.msra.mxu0 0
        %7259 = vmatprep.subr.bf16.mxu0 0
        %7260 = vmatpush1.bf16.msra.mxu0 0
        %7261 = vmatprep.subr.bf16.mxu0 0
        %7262 = vmatpush1.bf16.msra.mxu0 0
        %7263 = vmatprep.subr.bf16.mxu0 0
        %7264 = vmatpush1.bf16.msra.mxu0 0
        %7265 = vmatprep.subr.bf16.mxu0 0
        %7266 = vmatpush1.bf16.msra.mxu0 %v7244
        %7267 = vmatprep.subr.bf16.mxu0 0
        %7268 = vmatpush1.bf16.msra.mxu0 %v7243
        %7269 = vmatprep.subr.bf16.mxu0 0
        %7270 = vmatpush2.bf16.msra.mxu0 0
        %7271 = vmatprep.subr.bf16.mxu0 0
        %7272 = vmatpush2.bf16.msra.mxu0 0
        %7273 = vmatprep.subr.bf16.mxu0 0
        %7274 = vmatpush2.bf16.msra.mxu0 0
        %7275 = vmatprep.subr.bf16.mxu0 0
        %7276 = vmatpush2.bf16.msra.mxu0 0
        %7277 = vmatprep.subr.bf16.mxu0 0
        %7278 = vmatpush2.bf16.msra.mxu0 0
        %7279 = vmatprep.subr.bf16.mxu0 0
        %7280 = vmatpush2.bf16.msra.mxu0 0
        %7281 = vmatprep.subr.bf16.mxu0 0
        %7282 = vmatpush2.bf16.msra.mxu0 0
        %7283 = vmatprep.subr.bf16.mxu0 0
        %7284 = vmatpush2.bf16.msra.mxu0 0
        %7285 = vmatprep.mubr.bf16.mxu0 0
        %7286 = vmatmul.mubr.bf16.gmra.mxu0 %v7248
        %v7287 = vpop.f32.mrf.mxu0
        %v7288 = vadd.f32 0.0, %v7287
        %v7289 = vpop.f32.mrf.mxu0
        %v7290 = vpop.f32.mrf.mxu0
        %v7291 = vadd.f32 0.0, %v7290
        %v7292 = vpop.f32.mrf.mxu0
        %7293 = vmatprep.mubr.bf16.mxu0 0
        %7294 = vmatmul.mubr.bf16.gmra.mxu0 %v7251
        %v7295 = vpop.f32.mrf.mxu0
        %v7296 = vadd.f32 0.0, %v7295
        %v7297 = vpop.f32.mrf.mxu0
        %v7298 = vpop.f32.mrf.mxu0
        %v7299 = vadd.f32 0.0, %v7298
        %v7300 = vpop.f32.mrf.mxu0
        %7301 = vdwg.mxu0
        %v7302 = vadd.f32 %v7215, %v7288
        %v7303 = vadd.f32 %v7218, %v7291
        %v7304 = vadd.f32 %v7223, %v7296
        %v7305 = vadd.f32 %v7226, %v7299
        %v7306 = vld [vmem:[#allocation16] sm:$0x1]
        %v7308 = vlaneseq
        %v7309 = vshrl.u32 %v7308, 7
        %v7310 = vsub.s32 0, %v7309
        %v7311 = vrot.slane %v7306, %v7310
        %v7313 = vadd.f32 %v7302, %v7311
        %v7314 = vadd.f32 %v7303, %v7311
        %v7315 = vadd.f32 %v7304, %v7311
        %v7316 = vadd.f32 %v7305, %v7311
        %v7317 = vmax.f32 %v7313, 0.0
        %v7318 = vmax.f32 %v7314, 0.0
        %v7319 = vmax.f32 %v7315, 0.0
        %v7320 = vmax.f32 %v7316, 0.0
        %v7321 = vmin.f32 %v7317, 6.0
        %v7322 = vmin.f32 %v7318, 6.0
        %v7323 = vmin.f32 %v7319, 6.0
        %v7324 = vmin.f32 %v7320, 6.0
        %v7325 = vld [vmem:[%s87] sm:$0xff]
        %v7326 = vld [vmem:[%s87 + $0x8] sm:$0xff]
        %v7327 = vld [vmem:[%s87 + $0x10] sm:$0xff]
        %v7328 = vld [vmem:[%s87 + $0x18] sm:$0xff]
        %v7330 = vsel %vm7106, %v7321, 0
        %v7333 = vsel %vm7106, %v7322, 0
        %v7336 = vsel %vm7106, %v7323, 0
        %v7339 = vsel %vm7106, %v7324, 0
        %7341 = vmatprep.subr.mxu0 0.0
        %7342 = vmatpush1.msra.mxu0 0.0
        %7343 = vmatprep.subr.mxu0 0.0
        %7344 = vmatpush1.msra.mxu0 0.0
        %7345 = vmatprep.subr.mxu0 0.0
        %7346 = vmatpush1.msra.mxu0 0.0
        %7347 = vmatprep.subr.mxu0 0.0
        %7348 = vmatpush1.msra.mxu0 0.0
        %7349 = vmatprep.subr.mxu0 0.0
        %7350 = vmatpush1.msra.mxu0 0.0
        %7351 = vmatprep.subr.mxu0 0.0
        %7352 = vmatpush1.msra.mxu0 0.0
        %7353 = vmatprep.subr.mxu0 0.0
        %7354 = vmatpush1.msra.mxu0 0.0
        %7355 = vmatprep.subr.mxu0 0.0
        %7356 = vmatpush1.msra.mxu0 0.0
        %7357 = vmatprep.subr.mxu0 0.0
        %7358 = vmatpush1.msra.mxu0 0.0
        %7359 = vmatprep.subr.mxu0 0.0
        %7360 = vmatpush1.msra.mxu0 0.0
        %7361 = vmatprep.subr.mxu0 0.0
        %7362 = vmatpush1.msra.mxu0 0.0
        %7363 = vmatprep.subr.mxu0 0.0
        %7364 = vmatpush1.msra.mxu0 0.0
        %7365 = vmatprep.subr.mxu0 0.0
        %7366 = vmatpush1.msra.mxu0 %v7328
        %7367 = vmatprep.subr.mxu0 0.0
        %7368 = vmatpush1.msra.mxu0 %v7327
        %7369 = vmatprep.subr.mxu0 0.0
        %7370 = vmatpush1.msra.mxu0 %v7326
        %7371 = vmatprep.subr.mxu0 0.0
        %7372 = vmatpush1.msra.mxu0 %v7325
        %7373 = vmatprep.subr.mxu0 0.0
        %7374 = vmatpush2.msra.mxu0 0.0
        %7375 = vmatprep.subr.mxu0 0.0
        %7376 = vmatpush2.msra.mxu0 0.0
        %7377 = vmatprep.subr.mxu0 0.0
        %7378 = vmatpush2.msra.mxu0 0.0
        %7379 = vmatprep.subr.mxu0 0.0
        %7380 = vmatpush2.msra.mxu0 0.0
        %7381 = vmatprep.subr.mxu0 0.0
        %7382 = vmatpush2.msra.mxu0 0.0
        %7383 = vmatprep.subr.mxu0 0.0
        %7384 = vmatpush2.msra.mxu0 0.0
        %7385 = vmatprep.subr.mxu0 0.0
        %7386 = vmatpush2.msra.mxu0 0.0
        %7387 = vmatprep.subr.mxu0 0.0
        %7388 = vmatpush2.msra.mxu0 0.0
        %7389 = vmatprep.subr.mxu0 0.0
        %7390 = vmatpush2.msra.mxu0 0.0
        %7391 = vmatprep.subr.mxu0 0.0
        %7392 = vmatpush2.msra.mxu0 0.0
        %7393 = vmatprep.subr.mxu0 0.0
        %7394 = vmatpush2.msra.mxu0 0.0
        %7395 = vmatprep.subr.mxu0 0.0
        %7396 = vmatpush2.msra.mxu0 0.0
        %7397 = vmatprep.subr.mxu0 0.0
        %7398 = vmatpush2.msra.mxu0 0.0
        %7399 = vmatprep.subr.mxu0 0.0
        %7400 = vmatpush2.msra.mxu0 0.0
        %7401 = vmatprep.subr.mxu0 0.0
        %7402 = vmatpush2.msra.mxu0 0.0
        %7403 = vmatprep.subr.mxu0 0.0
        %7404 = vmatpush2.msra.mxu0 0.0
        %7405 = vmatprep.mubr.f32.mxu0 0.0
        %7406 = vmatmul.mubr.f32.gmra.mxu0 %v7330
        %v7407 = vpop.f32.mrf.mxu0
        %v7408 = vadd.f32 0.0, %v7407
        %v7409 = vpop.f32.mrf.mxu0
        %7410 = vmatprep.mubr.f32.mxu0 0.0
        %7411 = vmatmul.mubr.f32.gmra.mxu0 %v7333
        %v7412 = vpop.f32.mrf.mxu0
        %v7413 = vadd.f32 0.0, %v7412
        %v7414 = vpop.f32.mrf.mxu0
        %7415 = vmatprep.mubr.f32.mxu0 0.0
        %7416 = vmatmul.mubr.f32.gmra.mxu0 %v7336
        %v7417 = vpop.f32.mrf.mxu0
        %v7418 = vadd.f32 0.0, %v7417
        %v7419 = vpop.f32.mrf.mxu0
        %7420 = vmatprep.mubr.f32.mxu0 0.0
        %7421 = vmatmul.mubr.f32.gmra.mxu0 %v7339
        %v7422 = vpop.f32.mrf.mxu0
        %v7423 = vadd.f32 0.0, %v7422
        %v7424 = vpop.f32.mrf.mxu0
        %7425 = vdwg.mxu0
        %v7426 = vld [vmem:[%s89] sm:$0xff]
        %v7427 = vld [vmem:[%s89 + $0x8] sm:$0xff]
        %v7428 = vld [vmem:[%s89 + $0x10] sm:$0xff]
        %v7429 = vld [vmem:[%s89 + $0x18] sm:$0xff]
        %7430 = vmatprep.subr.mxu0 0.0
        %7431 = vmatpush1.msra.mxu0 0.0
        %7432 = vmatprep.subr.mxu0 0.0
        %7433 = vmatpush1.msra.mxu0 0.0
        %7434 = vmatprep.subr.mxu0 0.0
        %7435 = vmatpush1.msra.mxu0 0.0
        %7436 = vmatprep.subr.mxu0 0.0
        %7437 = vmatpush1.msra.mxu0 0.0
        %7438 = vmatprep.subr.mxu0 0.0
        %7439 = vmatpush1.msra.mxu0 0.0
        %7440 = vmatprep.subr.mxu0 0.0
        %7441 = vmatpush1.msra.mxu0 0.0
        %7442 = vmatprep.subr.mxu0 0.0
        %7443 = vmatpush1.msra.mxu0 0.0
        %7444 = vmatprep.subr.mxu0 0.0
        %7445 = vmatpush1.msra.mxu0 0.0
        %7446 = vmatprep.subr.mxu0 0.0
        %7447 = vmatpush1.msra.mxu0 0.0
        %7448 = vmatprep.subr.mxu0 0.0
        %7449 = vmatpush1.msra.mxu0 0.0
        %7450 = vmatprep.subr.mxu0 0.0
        %7451 = vmatpush1.msra.mxu0 0.0
        %7452 = vmatprep.subr.mxu0 0.0
        %7453 = vmatpush1.msra.mxu0 0.0
        %7454 = vmatprep.subr.mxu0 0.0
        %7455 = vmatpush1.msra.mxu0 %v7429
        %7456 = vmatprep.subr.mxu0 0.0
        %7457 = vmatpush1.msra.mxu0 %v7428
        %7458 = vmatprep.subr.mxu0 0.0
        %7459 = vmatpush1.msra.mxu0 %v7427
        %7460 = vmatprep.subr.mxu0 0.0
        %7461 = vmatpush1.msra.mxu0 %v7426
        %7462 = vmatprep.subr.mxu0 0.0
        %7463 = vmatpush2.msra.mxu0 0.0
        %7464 = vmatprep.subr.mxu0 0.0
        %7465 = vmatpush2.msra.mxu0 0.0
        %7466 = vmatprep.subr.mxu0 0.0
        %7467 = vmatpush2.msra.mxu0 0.0
        %7468 = vmatprep.subr.mxu0 0.0
        %7469 = vmatpush2.msra.mxu0 0.0
        %7470 = vmatprep.subr.mxu0 0.0
        %7471 = vmatpush2.msra.mxu0 0.0
        %7472 = vmatprep.subr.mxu0 0.0
        %7473 = vmatpush2.msra.mxu0 0.0
        %7474 = vmatprep.subr.mxu0 0.0
        %7475 = vmatpush2.msra.mxu0 0.0
        %7476 = vmatprep.subr.mxu0 0.0
        %7477 = vmatpush2.msra.mxu0 0.0
        %7478 = vmatprep.subr.mxu0 0.0
        %7479 = vmatpush2.msra.mxu0 0.0
        %7480 = vmatprep.subr.mxu0 0.0
        %7481 = vmatpush2.msra.mxu0 0.0
        %7482 = vmatprep.subr.mxu0 0.0
        %7483 = vmatpush2.msra.mxu0 0.0
        %7484 = vmatprep.subr.mxu0 0.0
        %7485 = vmatpush2.msra.mxu0 0.0
        %7486 = vmatprep.subr.mxu0 0.0
        %7487 = vmatpush2.msra.mxu0 0.0
        %7488 = vmatprep.subr.mxu0 0.0
        %7489 = vmatpush2.msra.mxu0 0.0
        %7490 = vmatprep.subr.mxu0 0.0
        %7491 = vmatpush2.msra.mxu0 0.0
        %7492 = vmatprep.subr.mxu0 0.0
        %7493 = vmatpush2.msra.mxu0 0.0
        %7494 = vmatprep.mubr.f32.mxu0 0.0
        %7495 = vmatmul.mubr.f32.gmra.mxu0 %v7330
        %v7496 = vpop.f32.mrf.mxu0
        %v7497 = vadd.f32 0.0, %v7496
        %v7498 = vpop.f32.mrf.mxu0
        %7499 = vmatprep.mubr.f32.mxu0 0.0
        %7500 = vmatmul.mubr.f32.gmra.mxu0 %v7333
        %v7501 = vpop.f32.mrf.mxu0
        %v7502 = vadd.f32 0.0, %v7501
        %v7503 = vpop.f32.mrf.mxu0
        %7504 = vmatprep.mubr.f32.mxu0 0.0
        %7505 = vmatmul.mubr.f32.gmra.mxu0 %v7336
        %v7506 = vpop.f32.mrf.mxu0
        %v7507 = vadd.f32 0.0, %v7506
        %v7508 = vpop.f32.mrf.mxu0
        %7509 = vmatprep.mubr.f32.mxu0 0.0
        %7510 = vmatmul.mubr.f32.gmra.mxu0 %v7339
        %v7511 = vpop.f32.mrf.mxu0
        %v7512 = vadd.f32 0.0, %v7511
        %v7513 = vpop.f32.mrf.mxu0
        %7514 = vdwg.mxu0
        %v7515 = vmax.f32 %v7408, %v7497
        %v7516 = vmax.f32 %v7413, %v7502
        %v7517 = vmax.f32 %v7418, %v7507
        %v7518 = vmax.f32 %v7423, %v7512
        %v7519 = vld [vmem:[#allocation17] sm:$0xff]
        %v7520 = vld [vmem:[#allocation17 + $0x8] sm:$0xff]
        %v7522 = vsel %vm7106, %v7519, 0
        %v7525 = vsel %vm7106, %v7520, 0
        %7527 = vmatprep.subr.mxu0 0.0
        %7528 = vmatpush1.msra.mxu0 0.0
        %7529 = vmatprep.subr.mxu0 0.0
        %7530 = vmatpush1.msra.mxu0 0.0
        %7531 = vmatprep.subr.mxu0 0.0
        %7532 = vmatpush1.msra.mxu0 0.0
        %7533 = vmatprep.subr.mxu0 0.0
        %7534 = vmatpush1.msra.mxu0 0.0
        %7535 = vmatprep.subr.mxu0 0.0
        %7536 = vmatpush1.msra.mxu0 0.0
        %7537 = vmatprep.subr.mxu0 0.0
        %7538 = vmatpush1.msra.mxu0 0.0
        %7539 = vmatprep.subr.mxu0 0.0
        %7540 = vmatpush1.msra.mxu0 0.0
        %7541 = vmatprep.subr.mxu0 0.0
        %7542 = vmatpush1.msra.mxu0 0.0
        %7543 = vmatprep.subr.mxu0 0.0
        %7544 = vmatpush1.msra.mxu0 0.0
        %7545 = vmatprep.subr.mxu0 0.0
        %7546 = vmatpush1.msra.mxu0 0.0
        %7547 = vmatprep.subr.mxu0 0.0
        %7548 = vmatpush1.msra.mxu0 0.0
        %7549 = vmatprep.subr.mxu0 0.0
        %7550 = vmatpush1.msra.mxu0 0.0
        %7551 = vmatprep.subr.mxu0 0.0
        %7552 = vmatpush1.msra.mxu0 %v7518
        %7553 = vmatprep.subr.mxu0 0.0
        %7554 = vmatpush1.msra.mxu0 %v7517
        %7555 = vmatprep.subr.mxu0 0.0
        %7556 = vmatpush1.msra.mxu0 %v7516
        %7557 = vmatprep.subr.mxu0 0.0
        %7558 = vmatpush1.msra.mxu0 %v7515
        %7559 = vmatprep.subr.mxu0 0.0
        %7560 = vmatpush2.msra.mxu0 0.0
        %7561 = vmatprep.subr.mxu0 0.0
        %7562 = vmatpush2.msra.mxu0 0.0
        %7563 = vmatprep.subr.mxu0 0.0
        %7564 = vmatpush2.msra.mxu0 0.0
        %7565 = vmatprep.subr.mxu0 0.0
        %7566 = vmatpush2.msra.mxu0 0.0
        %7567 = vmatprep.subr.mxu0 0.0
        %7568 = vmatpush2.msra.mxu0 0.0
        %7569 = vmatprep.subr.mxu0 0.0
        %7570 = vmatpush2.msra.mxu0 0.0
        %7571 = vmatprep.subr.mxu0 0.0
        %7572 = vmatpush2.msra.mxu0 0.0
        %7573 = vmatprep.subr.mxu0 0.0
        %7574 = vmatpush2.msra.mxu0 0.0
        %7575 = vmatprep.subr.mxu0 0.0
        %7576 = vmatpush2.msra.mxu0 0.0
        %7577 = vmatprep.subr.mxu0 0.0
        %7578 = vmatpush2.msra.mxu0 0.0
        %7579 = vmatprep.subr.mxu0 0.0
        %7580 = vmatpush2.msra.mxu0 0.0
        %7581 = vmatprep.subr.mxu0 0.0
        %7582 = vmatpush2.msra.mxu0 0.0
        %7583 = vmatprep.subr.mxu0 0.0
        %7584 = vmatpush2.msra.mxu0 0.0
        %7585 = vmatprep.subr.mxu0 0.0
        %7586 = vmatpush2.msra.mxu0 0.0
        %7587 = vmatprep.subr.mxu0 0.0
        %7588 = vmatpush2.msra.mxu0 0.0
        %7589 = vmatprep.subr.mxu0 0.0
        %7590 = vmatpush2.msra.mxu0 0.0
        %7591 = vmatprep.mubr.f32.mxu0 0.0
        %7592 = vmatmul.mubr.f32.gmra.mxu0 %v7522
        %v7593 = vpop.f32.mrf.mxu0
        %v7594 = vadd.f32 0.0, %v7593
        %v7595 = vpop.f32.mrf.mxu0
        %7596 = vmatprep.mubr.f32.mxu0 0.0
        %7597 = vmatmul.mubr.f32.gmra.mxu0 %v7525
        %v7598 = vpop.f32.mrf.mxu0
        %v7599 = vadd.f32 0.0, %v7598
        %v7600 = vpop.f32.mrf.mxu0
        %7601 = vdwg.mxu0
        %v7602 = vld [vmem:[#allocation19] sm:$0xff]
        %v7603 = vld [vmem:[#allocation19 + $0x8] sm:$0xff]
        %v7605 = vsel %vm7106, %v7602, 0
        %v7608 = vsel %vm7106, %v7603, 0
        %7610 = vmatprep.subr.mxu0 0.0
        %7611 = vmatpush1.msra.mxu0 0.0
        %7612 = vmatprep.subr.mxu0 0.0
        %7613 = vmatpush1.msra.mxu0 0.0
        %7614 = vmatprep.subr.mxu0 0.0
        %7615 = vmatpush1.msra.mxu0 0.0
        %7616 = vmatprep.subr.mxu0 0.0
        %7617 = vmatpush1.msra.mxu0 0.0
        %7618 = vmatprep.subr.mxu0 0.0
        %7619 = vmatpush1.msra.mxu0 0.0
        %7620 = vmatprep.subr.mxu0 0.0
        %7621 = vmatpush1.msra.mxu0 0.0
        %7622 = vmatprep.subr.mxu0 0.0
        %7623 = vmatpush1.msra.mxu0 0.0
        %7624 = vmatprep.subr.mxu0 0.0
        %7625 = vmatpush1.msra.mxu0 0.0
        %7626 = vmatprep.subr.mxu0 0.0
        %7627 = vmatpush1.msra.mxu0 0.0
        %7628 = vmatprep.subr.mxu0 0.0
        %7629 = vmatpush1.msra.mxu0 0.0
        %7630 = vmatprep.subr.mxu0 0.0
        %7631 = vmatpush1.msra.mxu0 0.0
        %7632 = vmatprep.subr.mxu0 0.0
        %7633 = vmatpush1.msra.mxu0 0.0
        %7634 = vmatprep.subr.mxu0 0.0
        %7635 = vmatpush1.msra.mxu0 %v7518
        %7636 = vmatprep.subr.mxu0 0.0
        %7637 = vmatpush1.msra.mxu0 %v7517
        %7638 = vmatprep.subr.mxu0 0.0
        %7639 = vmatpush1.msra.mxu0 %v7516
        %7640 = vmatprep.subr.mxu0 0.0
        %7641 = vmatpush1.msra.mxu0 %v7515
        %7642 = vmatprep.subr.mxu0 0.0
        %7643 = vmatpush2.msra.mxu0 0.0
        %7644 = vmatprep.subr.mxu0 0.0
        %7645 = vmatpush2.msra.mxu0 0.0
        %7646 = vmatprep.subr.mxu0 0.0
        %7647 = vmatpush2.msra.mxu0 0.0
        %7648 = vmatprep.subr.mxu0 0.0
        %7649 = vmatpush2.msra.mxu0 0.0
        %7650 = vmatprep.subr.mxu0 0.0
        %7651 = vmatpush2.msra.mxu0 0.0
        %7652 = vmatprep.subr.mxu0 0.0
        %7653 = vmatpush2.msra.mxu0 0.0
        %7654 = vmatprep.subr.mxu0 0.0
        %7655 = vmatpush2.msra.mxu0 0.0
        %7656 = vmatprep.subr.mxu0 0.0
        %7657 = vmatpush2.msra.mxu0 0.0
        %7658 = vmatprep.subr.mxu0 0.0
        %7659 = vmatpush2.msra.mxu0 0.0
        %7660 = vmatprep.subr.mxu0 0.0
        %7661 = vmatpush2.msra.mxu0 0.0
        %7662 = vmatprep.subr.mxu0 0.0
        %7663 = vmatpush2.msra.mxu0 0.0
        %7664 = vmatprep.subr.mxu0 0.0
        %7665 = vmatpush2.msra.mxu0 0.0
        %7666 = vmatprep.subr.mxu0 0.0
        %7667 = vmatpush2.msra.mxu0 0.0
        %7668 = vmatprep.subr.mxu0 0.0
        %7669 = vmatpush2.msra.mxu0 0.0
        %7670 = vmatprep.subr.mxu0 0.0
        %7671 = vmatpush2.msra.mxu0 0.0
        %7672 = vmatprep.subr.mxu0 0.0
        %7673 = vmatpush2.msra.mxu0 0.0
        %7674 = vmatprep.mubr.f32.mxu0 0.0
        %7675 = vmatmul.mubr.f32.gmra.mxu0 %v7605
        %v7676 = vpop.f32.mrf.mxu0
        %v7677 = vadd.f32 0.0, %v7676
        %v7678 = vpop.f32.mrf.mxu0
        %7679 = vmatprep.mubr.f32.mxu0 0.0
        %7680 = vmatmul.mubr.f32.gmra.mxu0 %v7608
        %v7681 = vpop.f32.mrf.mxu0
        %v7682 = vadd.f32 0.0, %v7681
        %v7683 = vpop.f32.mrf.mxu0
        %7684 = vdwg.mxu0
        %v7685 = vmax.f32 %v7594, %v7677
        %v7686 = vmax.f32 %v7599, %v7682
        %v7687 = vpack.c.bf16 %v7686, %v7685
        %v7688 = vld [vmem:[#allocation20] sm:$0xf]
        %v7689 = vld [vmem:[#allocation20 + $0x4] sm:$0xf]
        %v7690 = vld [vmem:[%s97] sm:$0x1]
        %v7692 = vlaneseq
        %v7693 = vshrl.u32 %v7692, 7
        %v7694 = vsub.s32 0, %v7693
        %v7695 = vrot.slane %v7690, %v7694
        %v7699 = vunpack.c.l.b16 %v7688
        %v7700 = vunpack.c.l.b16 %v7689
        %v7701 = vpack.c.b16 %v7700, %v7699
        %v7704 = vsel %vm1816, %v7687, 0
        %7706 = vmatprep.subr.bf16.mxu0 0
        %7707 = vmatpush1.bf16.msra.mxu0 0
        %7708 = vmatprep.subr.bf16.mxu0 0
        %7709 = vmatpush1.bf16.msra.mxu0 0
        %7710 = vmatprep.subr.bf16.mxu0 0
        %7711 = vmatpush1.bf16.msra.mxu0 0
        %7712 = vmatprep.subr.bf16.mxu0 0
        %7713 = vmatpush1.bf16.msra.mxu0 0
        %7714 = vmatprep.subr.bf16.mxu0 0
        %7715 = vmatpush1.bf16.msra.mxu0 0
        %7716 = vmatprep.subr.bf16.mxu0 0
        %7717 = vmatpush1.bf16.msra.mxu0 0
        %7718 = vmatprep.subr.bf16.mxu0 0
        %7719 = vmatpush1.bf16.msra.mxu0 0
        %7720 = vmatprep.subr.bf16.mxu0 0
        %7721 = vmatpush1.bf16.msra.mxu0 %v7701
        %7722 = vmatprep.subr.bf16.mxu0 0
        %7723 = vmatpush2.bf16.msra.mxu0 0
        %7724 = vmatprep.subr.bf16.mxu0 0
        %7725 = vmatpush2.bf16.msra.mxu0 0
        %7726 = vmatprep.subr.bf16.mxu0 0
        %7727 = vmatpush2.bf16.msra.mxu0 0
        %7728 = vmatprep.subr.bf16.mxu0 0
        %7729 = vmatpush2.bf16.msra.mxu0 0
        %7730 = vmatprep.subr.bf16.mxu0 0
        %7731 = vmatpush2.bf16.msra.mxu0 0
        %7732 = vmatprep.subr.bf16.mxu0 0
        %7733 = vmatpush2.bf16.msra.mxu0 0
        %7734 = vmatprep.subr.bf16.mxu0 0
        %7735 = vmatpush2.bf16.msra.mxu0 0
        %7736 = vmatprep.subr.bf16.mxu0 0
        %7737 = vmatpush2.bf16.msra.mxu0 0
        %7738 = vmatprep.mubr.bf16.mxu0 0
        %7739 = vmatmul.mubr.bf16.gmra.mxu0 %v7704
        %v7740 = vpop.f32.mrf.mxu0
        %v7741 = vadd.f32 %v7695, %v7740
        %v7742 = vpop.f32.mrf.mxu0
        %v7743 = vpop.f32.mrf.mxu0
        %v7744 = vadd.f32 %v7695, %v7743
        %v7745 = vpop.f32.mrf.mxu0
        %7746 = vdwg.mxu0
        %7747 = vst [vmem:[%s1657] sm:$0xff] %v7741
        %7748 = vst [vmem:[%s1657 + $0x8] sm:$0xff] %v7744
        %s7749 = sand.u32 %s1172, 1
        %s7750 = scalar_lea.sflag [#allocation4], %s7749
        %s7751 = sand.u32 %s1172, 1
        %s7752 = smul.addr %s7751, 16
        %s7753 = scalar_lea.vmem [#allocation22], %s7752
        // Predicated region
        $region265: #{tpu_custom_call.1} parent=215 // pred_check
          %p7754 = pneg %p1182
        $region266: #{tpu_custom_call.1} parent=215 // pred_check_branch
          %7756 = sbr.rel (%p7754) target = $region268
        $region267: #{tpu_custom_call.1} parent=215 // pred_region
          %s7757 = smul.u32 2, %s120
          %s7759 = ssub.s32 256, 256
          %7760 = vsyncadd %s7750, %s7759
          %s7761 = smul.addr %s7757, 128
          %s7762 = scalar_lea.hbm %s99, %s7761
          %s7763 = sshll.u32 %s7753, 4
          %s7764 = int_to_ptr.vmem [resolvable:$true] %s7763
          %7769 = dma.vmem_to_hbm [thread:$0]  %s7764, 256, %s7762, %s7750, 128, 128, 8
        $region268: #{tpu_custom_call.1} parent=215 // pred_fallthru
          _
      $region216: #{tpu_custom_call.1} parent=5 // pred_fallthru
        _
      %p7770 = scmp.le.s32.totalorder 2, %s115
      // Predicated region
      $region269: #{tpu_custom_call.1} parent=5 // pred_check
        %p7771 = pneg %p7770
      $region270: #{tpu_custom_call.1} parent=5 // pred_check_branch
        %7773 = sbr.rel (%p7771) target = $region272
      $region271: #{tpu_custom_call.1} parent=5 // pred_region
        %s7774 = ssub.s32 %s115, 2
        // Predicated region
        $region273: #{tpu_custom_call.1} parent=271 // pred_check
          %p7775 = pneg %p1188
        $region274: #{tpu_custom_call.1} parent=271 // pred_check_branch
          %7777 = sbr.rel (%p7775) target = $region276
        $region275: #{tpu_custom_call.1} parent=271 // pred_region
          %s7778 = sand.u32 %s1173, 1
          %s7779 = scalar_lea.sflag [#allocation4], %s7778
          %s7780 = sand.u32 %s1173, 1
          %s7781 = smul.addr %s7780, 16
          %s7782 = scalar_lea.vmem [#allocation22], %s7781
          %7783 = dma.done %s7779, 256
        $region276: #{tpu_custom_call.1} parent=271 // pred_fallthru
          _
      $region272: #{tpu_custom_call.1} parent=5 // pred_fallthru
        _
    $region6: #{tpu_custom_call.1} parent=1 // loop_footer
      %s119 = sadd.s32 1, %s115
    $region7: #{tpu_custom_call.1} parent=1 // loop_footer_branch
      %114 = sbr.rel target = $region3
    $region8: #{tpu_custom_call.1} parent=1 // loop_exit
      _
    %7784 = vsyncpa [#allocation3], 1
    %s7785 = scalar_lea.sflag [#allocation3], 1
    %7786 = vsyncpa %s7785, 1
    %7787 = vsyncpa [#allocation6], 1
    %7788 = vsyncpa [#allocation9], 1
    %7789 = vsyncpa [#allocation12], 1
    %7790 = vsyncpa [#allocation15], 1
    %7791 = vsyncpa [#allocation18], 1
    %7792 = vsyncpa [#allocation21], 1
    %7793 = vsyncpa [#allocation4], 1
    %s7794 = scalar_lea.sflag [#allocation4], 1
    %7795 = vsyncpa %s7794, 1

</llo_original>
